<compile_context>
chip_gen: v7x
topology: tpu7x:2x2x1
jax: 0.10.0
libtpu: 0.0.40
codegen_flags: <defaults>
</compile_context>

<pallas_src>
import functools
import math

import jax
import jax.numpy as jnp
from jax import lax
from jax.experimental import pallas as pl
from jax.experimental.pallas import tpu as pltpu

BN_EPS = 1e-5


# ---------------------------------------------------------------------------
# tiling helpers
# ---------------------------------------------------------------------------
def _row_tile(n):
    """Largest multiple-of-8 row tile giving >=2 grid steps (v7x megacore)."""
    for cand in (256, 128, 64, 32, 16, 8):
        if n % cand == 0 and n // cand >= 2:
            return cand
    return n


def _col_tile(c):
    """Output-channel tile: 128 on v5e (128-wide MXU), 256 on v6e/v7x."""
    kind = ""
    try:
        kind = jax.devices()[0].device_kind.lower()
    except Exception:
        pass
    prefer_wide = "v5" not in kind
    if prefer_wide and c % 256 == 0:
        return 256
    if c % 128 == 0:
        return 128
    return c


# ---------------------------------------------------------------------------
# Pallas kernels
# ---------------------------------------------------------------------------
def mm_bias_relu_kernel(x_ref, w_ref, s_ref, o_ref):
    """y = relu(x @ w_scaled + shift)   (1x1 conv + folded BN)."""
    y = jnp.dot(x_ref[...], w_ref[...], preferred_element_type=jnp.float32)
    o_ref[...] = jnp.maximum(y + s_ref[...], 0.0).astype(o_ref.dtype)


def mm2_bias_relu_kernel(a_ref, wa_ref, sa_ref, b_ref, wb_ref, sb_ref, o_ref):
    """y = relu((a @ wa + sa) + (b @ wb + sb)) : conv3 + downsample fused."""
    y = jnp.dot(a_ref[...], wa_ref[...], preferred_element_type=jnp.float32) + sa_ref[...]
    y = y + jnp.dot(b_ref[...], wb_ref[...], preferred_element_type=jnp.float32) + sb_ref[...]
    o_ref[...] = jnp.maximum(y, 0.0).astype(o_ref.dtype)


def conv3x3_s2_kernel(xe_ref, xo_ref, w_ref, s_ref, o_ref, *, ho, wo):
    """3x3 stride-2 pad-1 conv for one whole image.

    xe_ref/xo_ref: even / odd padded columns, shape (1, Hp, ceil(Wp/2), C).
    Column stride 2 is resolved by the even/odd split; row stride 2 by static
    row indices.  One K=9*C dot per output row; dense (ho*wo, C) output rows.
    """
    for r in range(ho):
        taps = []
        for kh in range(3):
            for kw in range(3):
                src = xe_ref if kw % 2 == 0 else xo_ref
                # padded column 2c+kw  ->  phase col index c + kw//2
                taps.append(src[0, 2 * r + kh, kw // 2: kw // 2 + wo, :])  # (wo, C)
        cols = jnp.concatenate(taps, axis=-1)                              # (wo, 9C)
        y = jnp.dot(cols, w_ref[...], preferred_element_type=jnp.float32) + s_ref[...]
        o_ref[0, r * wo:(r + 1) * wo, :] = jnp.maximum(y, 0.0).astype(o_ref.dtype)


def fused_block_kernel(x_ref, w1_ref, s1_ref, w2_ref, s2_ref, w3_ref, s3_ref,
                       o_ref, o1_sc, xp_sc, o2_sc, *, h, w):
    """Whole stride-1 Bottleneck (conv1 -> conv2 -> conv3 + id residual) for
    one image; all intermediates stay in VMEM scratch."""
    x = x_ref[0]                                                       # (h*w, cin) bf16
    # conv1 (1x1) + bn + relu
    y1 = jnp.dot(x, w1_ref[...], preferred_element_type=jnp.float32) + s1_ref[...]
    o1_sc[...] = jnp.maximum(y1, 0.0).astype(o1_sc.dtype)
    # zero-pad conv1 output into a (h+2, w+2, planes) spatial scratch (in-kernel pad)
    xp_sc[...] = jnp.zeros(xp_sc.shape, xp_sc.dtype)
    for r in range(h):
        xp_sc[1 + r, 1:1 + w, :] = o1_sc[r * w:(r + 1) * w, :]
    # conv2 (3x3, stride 1, pad 1) + bn + relu : one K=9*planes dot per output row
    for r in range(h):
        taps = []
        for kh in range(3):
            for kw in range(3):
                taps.append(xp_sc[r + kh, kw:kw + w, :])               # (w, planes)
        cols = jnp.concatenate(taps, axis=-1)                          # (w, 9*planes)
        y2 = jnp.dot(cols, w2_ref[...], preferred_element_type=jnp.float32) + s2_ref[...]
        o2_sc[r * w:(r + 1) * w, :] = jnp.maximum(y2, 0.0).astype(o2_sc.dtype)
    # conv3 (1x1) + bn + identity residual + relu
    y3 = jnp.dot(o2_sc[...], w3_ref[...], preferred_element_type=jnp.float32)
    y3 = y3 + s3_ref[...] + x.astype(jnp.float32)
    o_ref[0] = jnp.maximum(y3, 0.0).astype(o_ref.dtype)


def head_kernel(x_ref, w_ref, b_ref, o_ref, *, n_classes):
    """GAP (1/HW folded into w) + 1x1 conv (512->3, lane-padded to 128) + softmax."""
    feat = jnp.sum(x_ref[...].astype(jnp.float32), axis=1)            # (B, C)
    logits = jnp.dot(feat, w_ref[...], preferred_element_type=jnp.float32) + b_ref[...]
    col = lax.broadcasted_iota(jnp.int32, logits.shape, 1)
    logits = jnp.where(col < n_classes, logits, jnp.full_like(logits, -1e30))
    m = jnp.max(logits, axis=-1, keepdims=True)
    e = jnp.exp(logits - m)
    # TODO(synk): pl.reciprocal(approx=True) would move the divide to the EUP,
    # but it lacks an interpret-mode lowering; a plain divide keeps both paths working.
    o_ref[...] = e / jnp.sum(e, axis=-1, keepdims=True)


# ---------------------------------------------------------------------------
# Pallas wrappers
# ---------------------------------------------------------------------------
def conv1x1_bn_relu(x2d, w, shift):
    n, k = x2d.shape
    c = w.shape[1]
    bm, bc = _row_tile(n), _col_tile(c)
    return pl.pallas_call(
        mm_bias_relu_kernel,
        out_shape=jax.ShapeDtypeStruct((n, c), jnp.bfloat16),
        grid=(n // bm, c // bc),
        in_specs=[pl.BlockSpec((bm, k), lambda i, j: (i, 0)),
                  pl.BlockSpec((k, bc), lambda i, j: (0, j)),
                  pl.BlockSpec((1, bc), lambda i, j: (0, j))],
        out_specs=pl.BlockSpec((bm, bc), lambda i, j: (i, j)),
        compiler_params=pltpu.CompilerParams(
            dimension_semantics=("parallel", "parallel")),
    )(x2d, w, shift.reshape(1, c))


def conv3_plus_downsample(a2d, w3, sh3, b2d, wd, shd):
    """Fused conv3(1x1)+bn3 and downsample(1x1,stride2)+bn, add, ReLU."""
    n, ka = a2d.shape
    kb = b2d.shape[1]
    c = w3.shape[1]
    bm, bc = _row_tile(n), _col_tile(c)
    return pl.pallas_call(
        mm2_bias_relu_kernel,
        out_shape=jax.ShapeDtypeStruct((n, c), jnp.bfloat16),
        grid=(n // bm, c // bc),
        in_specs=[pl.BlockSpec((bm, ka), lambda i, j: (i, 0)),
                  pl.BlockSpec((ka, bc), lambda i, j: (0, j)),
                  pl.BlockSpec((1, bc), lambda i, j: (0, j)),
                  pl.BlockSpec((bm, kb), lambda i, j: (i, 0)),
                  pl.BlockSpec((kb, bc), lambda i, j: (0, j)),
                  pl.BlockSpec((1, bc), lambda i, j: (0, j))],
        out_specs=pl.BlockSpec((bm, bc), lambda i, j: (i, j)),
        compiler_params=pltpu.CompilerParams(
            dimension_semantics=("parallel", "parallel")),
    )(a2d, w3, sh3.reshape(1, c), b2d, wd, shd.reshape(1, c))


def conv3x3_s2_bn_relu(x_nhwc, w9, shift):
    """3x3 stride-2 pad-1 conv + folded BN shift + ReLU.  Whole image per step."""
    b, h, w_sp, cin = x_nhwc.shape
    assert h % 2 == 0 and w_sp % 2 == 0
    cout = w9.shape[1]
    ho, wo = h // 2, w_sp // 2
    xp = jnp.pad(x_nhwc, ((0, 0), (1, 1), (1, 1), (0, 0)))
    xe = xp[:, :, 0::2, :]                       # even padded columns
    xo = xp[:, :, 1::2, :]                       # odd padded columns
    hp, wc = h + 2, xe.shape[2]
    kern = functools.partial(conv3x3_s2_kernel, ho=ho, wo=wo)
    return pl.pallas_call(
        kern,
        out_shape=jax.ShapeDtypeStruct((b, ho * wo, cout), jnp.bfloat16),
        grid=(b,),
        in_specs=[pl.BlockSpec((1, hp, wc, cin), lambda i: (i, 0, 0, 0)),
                  pl.BlockSpec((1, hp, wc, cin), lambda i: (i, 0, 0, 0)),
                  pl.BlockSpec((9 * cin, cout), lambda i: (0, 0)),
                  pl.BlockSpec((1, cout), lambda i: (0, 0))],
        out_specs=pl.BlockSpec((1, ho * wo, cout), lambda i: (i, 0, 0)),
        compiler_params=pltpu.CompilerParams(dimension_semantics=("parallel",)),
    )(xe, xo, w9, shift.reshape(1, cout))


def fused_bottleneck_s1(x3d, p, h, w):
    """One fully fused stride-1 Bottleneck block: (B, H*W, 4*planes) -> same."""
    b, hw, cin = x3d.shape
    planes = p['w1'].shape[1]
    cout = planes * 4
    assert cin == cout and hw == h * w
    kern = functools.partial(fused_block_kernel, h=h, w=w)
    return pl.pallas_call(
        kern,
        out_shape=jax.ShapeDtypeStruct((b, hw, cout), jnp.bfloat16),
        grid=(b,),
        in_specs=[pl.BlockSpec((1, hw, cin), lambda i: (i, 0, 0)),
                  pl.BlockSpec((cin, planes), lambda i: (0, 0)),
                  pl.BlockSpec((1, planes), lambda i: (0, 0)),
                  pl.BlockSpec((9 * planes, planes), lambda i: (0, 0)),
                  pl.BlockSpec((1, planes), lambda i: (0, 0)),
                  pl.BlockSpec((planes, cout), lambda i: (0, 0)),
                  pl.BlockSpec((1, cout), lambda i: (0, 0))],
        out_specs=pl.BlockSpec((1, hw, cout), lambda i: (i, 0, 0)),
        scratch_shapes=[pltpu.VMEM((hw, planes), jnp.bfloat16),
                        pltpu.VMEM((h + 2, w + 2, planes), jnp.bfloat16),
                        pltpu.VMEM((hw, planes), jnp.bfloat16)],
        compiler_params=pltpu.CompilerParams(dimension_semantics=("parallel",)),
    )(x3d, p['w1'], p['sh1'].reshape(1, planes),
      p['w2'], p['sh2'].reshape(1, planes),
      p['w3'], p['sh3'].reshape(1, cout))


def head(x3d, w_pad, b_pad, n_classes=3):
    b, hw, c = x3d.shape
    cpad = w_pad.shape[1]
    w_scaled = w_pad * (1.0 / hw)                # fold GAP 1/HW into the head weight
    out = pl.pallas_call(
        functools.partial(head_kernel, n_classes=n_classes),
        out_shape=jax.ShapeDtypeStruct((b, cpad), jnp.float32),
        grid=(1,),
        in_specs=[pl.BlockSpec((b, hw, c), lambda i: (0, 0, 0)),
                  pl.BlockSpec((c, cpad), lambda i: (0, 0)),
                  pl.BlockSpec((1, cpad), lambda i: (0, 0))],
        out_specs=pl.BlockSpec((b, cpad), lambda i: (0, 0)),
    )(x3d, w_scaled, b_pad)
    return out[:, :n_classes]


# ---------------------------------------------------------------------------
# parameter init (kaiming + fresh-BN fold), matching the PyTorch module
# ---------------------------------------------------------------------------
def kaiming_fanin(key, cin, cout, k):
    """nn.init.kaiming_normal_(a=0, mode='fan_in'); layout (kh,kw,cin) x cout."""
    fan_in = cin * k * k
    std = math.sqrt(2.0 / fan_in)
    w = jax.random.normal(key, (k, k, cin, cout), jnp.float32) * std
    return w.reshape(k * k * cin, cout)


def fold_bn(c):
    """Fresh BatchNorm2d (gamma=1, beta=0, mean=0, var=1) -> scale/shift."""
    scale = jnp.ones((c,), jnp.float32) / jnp.sqrt(1.0 + BN_EPS)
    shift = jnp.zeros((c,), jnp.float32)
    return scale, shift


def conv_bn_weight(key, cin, cout, k):
    w = kaiming_fanin(key, cin, cout, k)
    scale, shift = fold_bn(cout)
    return (w * scale[None, :]).astype(jnp.bfloat16), shift


def init_params(key):
    planes, inplanes, n_blocks = 128, 256, 4
    keys = iter(jax.random.split(key, 16))
    blocks = []
    for i in range(n_blocks):
        blk = {}
        blk['w1'], blk['sh1'] = conv_bn_weight(next(keys), inplanes, planes, 1)
        blk['w2'], blk['sh2'] = conv_bn_weight(next(keys), planes, planes, 3)
        blk['w3'], blk['sh3'] = conv_bn_weight(next(keys), planes, planes * 4, 1)
        if i == 0:  # stride=2 / channel change -> downsample branch
            blk['wd'], blk['shd'] = conv_bn_weight(next(keys), inplanes, planes * 4, 1)
        blocks.append(blk)
        inplanes = planes * 4
    w_net2 = kaiming_fanin(next(keys), 512, 3, 1)               # (512, 3)
    w_pad = jnp.zeros((512, 128), jnp.float32).at[:, :3].set(w_net2)
    b_pad = jnp.zeros((1, 128), jnp.float32)                    # bias init 0.0
    return {'blocks': blocks, 'w_net2': w_pad, 'b_net2': b_pad}


# ---------------------------------------------------------------------------
# forward pass
# ---------------------------------------------------------------------------
def orientation_predictor(x_nchw, params):
    x = jnp.transpose(x_nchw, (0, 2, 3, 1)).astype(jnp.bfloat16)   # NHWC bf16
    b, h, w, cin = x.shape
    blk0 = params['blocks'][0]
    planes = blk0['w1'].shape[1]

    # ---- block 0 (stride 2, projection shortcut): 3 kernels
    o1 = conv1x1_bn_relu(x.reshape(b * h * w, cin), blk0['w1'], blk0['sh1'])
    o2 = conv3x3_s2_bn_relu(o1.reshape(b, h, w, planes), blk0['w2'], blk0['sh2'])
    ho, wo = h // 2, w // 2
    xs = x[:, ::2, ::2, :].reshape(b * ho * wo, cin)               # downsample taps
    act = conv3_plus_downsample(o2.reshape(b * ho * wo, planes),
                                blk0['w3'], blk0['sh3'], xs, blk0['wd'], blk0['shd'])
    act = act.reshape(b, ho * wo, planes * 4)

    # ---- blocks 1..3: one fused pallas_call each; activations stay in VMEM
    for blk in params['blocks'][1:]:
        act = fused_bottleneck_s1(act, blk, ho, wo)

    # ---- GAP + net2 (1x1 conv with bias) + softmax
    # TODO(synk): OP_train_dropout / training-mode BatchNorm (batch stats) not
    # modeled; module defaults (dropout off, fresh inference BN) are reproduced.
    return head(act, params['w_net2'], params['b_net2'])


# ---------------------------------------------------------------------------
# pure-JAX reference (same precision policy: bf16 activations, f32 accumulate)
# ---------------------------------------------------------------------------
def _ref_conv(x, w_kkio, stride, pad):
    return lax.conv_general_dilated(
        x, w_kkio, window_strides=(stride, stride),
        padding=((pad, pad), (pad, pad)),
        dimension_numbers=('NHWC', 'HWIO', 'NHWC'),
        preferred_element_type=jnp.float32)


def ref_forward(x_nchw, params):
    x = jnp.transpose(x_nchw, (0, 2, 3, 1)).astype(jnp.bfloat16)
    for i, p in enumerate(params['blocks']):
        stride = 2 if i == 0 else 1
        cin = x.shape[-1]
        planes = p['w1'].shape[1]
        o = _ref_conv(x, p['w1'].reshape(1, 1, cin, planes), 1, 0) + p['sh1']
        o = jnp.maximum(o, 0.0).astype(jnp.bfloat16)
        o = _ref_conv(o, p['w2'].reshape(3, 3, planes, planes), stride, 1) + p['sh2']
        o = jnp.maximum(o, 0.0).astype(jnp.bfloat16)
        o = _ref_conv(o, p['w3'].reshape(1, 1, planes, planes * 4), 1, 0) + p['sh3']
        if 'wd' in p:
            r = _ref_conv(x, p['wd'].reshape(1, 1, cin, planes * 4), stride, 0) + p['shd']
        else:
            r = x.astype(jnp.float32)
        x = jnp.maximum(o + r, 0.0).astype(jnp.bfloat16)
    feat = jnp.mean(x.astype(jnp.float32), axis=(1, 2))
    logits = feat @ params['w_net2'][:, :3] + params['b_net2'][0, :3]
    return jax.nn.softmax(logits, axis=-1)


# ---------------------------------------------------------------------------
if __name__ == "__main__":
    key = jax.random.PRNGKey(0)
    kp, kx = jax.random.split(key)
    params = init_params(kp)

    # small but architecture-consistent input: net1 requires 256 input channels
    x = jax.random.normal(kx, (2, 256, 8, 8), jnp.float32)

    fwd = jax.jit(lambda inp: orientation_predictor(inp, params))
    out = jax.block_until_ready(fwd(x))

    assert out.shape == (2, 3), out.shape
    assert bool(jnp.all(jnp.isfinite(out)))
    assert bool(jnp.allclose(jnp.sum(out, axis=1), 1.0, atol=1e-4))

    ref = jax.block_until_ready(jax.jit(lambda inp: ref_forward(inp, params))(x))
    assert bool(jnp.allclose(out, ref, atol=3e-2)), (out, ref)

    print("KERNEL_OK")
</pallas_src>

<mosaic_0001>
module attributes {stable_mosaic.version = 11 : i64} {
  func.func @mm_bias_relu_kernel(%arg0: i32, %arg1: i32, %arg2: memref<64x256xbf16, #tpu.memory_space<vmem>>, %arg3: memref<256x128xbf16, #tpu.memory_space<vmem>>, %arg4: memref<1x128xf32, #tpu.memory_space<vmem>>, %arg5: memref<64x128xbf16, #tpu.memory_space<vmem>>) attributes {dimension_semantics = [#tpu.dimension_semantics<parallel>, #tpu.dimension_semantics<parallel>], iteration_bounds = array<i64: 2, 1>, scalar_prefetch = 0 : i64, scratch_operands = 0 : i64, tpu.core_type = #tpu.core_type<tc>, window_params = [{transform_indices = @transform_0, window_bounds = array<i64: 64, 256>}, {transform_indices = @transform_1, window_bounds = array<i64: 256, 128>}, {transform_indices = @transform_2, window_bounds = array<i64: 1, 128>}, {transform_indices = @transform_3, window_bounds = array<i64: 64, 128>}]} {
    %c0 = arith.constant 0 : index
    %c0_0 = arith.constant 0 : index
    %0 = vector.load %arg2[%c0, %c0_0] : memref<64x256xbf16, #tpu.memory_space<vmem>>, vector<64x256xbf16>
    %c0_1 = arith.constant 0 : index
    %c0_2 = arith.constant 0 : index
    %1 = vector.load %arg3[%c0_1, %c0_2] : memref<256x128xbf16, #tpu.memory_space<vmem>>, vector<256x128xbf16>
    %cst = arith.constant dense<0.000000e+00> : vector<64x128xf32>
    %2 = tpu.matmul %0, %1, %cst {dimension_numbers = #tpu.dot_dimension_numbers<[1], [0], [0], [1], [0, 0, 1, 1], [], []>} : vector<64x256xbf16>, vector<256x128xbf16>, vector<64x128xf32> -> vector<64x128xf32>
    %c0_3 = arith.constant 0 : index
    %c0_4 = arith.constant 0 : index
    %3 = vector.load %arg4[%c0_3, %c0_4] : memref<1x128xf32, #tpu.memory_space<vmem>>, vector<1x128xf32>
    %4 = vector.broadcast %3 : vector<1x128xf32> to vector<64x128xf32>
    %5 = arith.addf %2, %4 : vector<64x128xf32>
    %cst_5 = arith.constant 0.000000e+00 : f32
    %6 = vector.broadcast %cst_5 : f32 to vector<64x128xf32>
    %7 = arith.maximumf %5, %6 : vector<64x128xf32>
    %8 = arith.truncf %7 : vector<64x128xf32> to vector<64x128xbf16>
    %c0_6 = arith.constant 0 : index
    %c0_7 = arith.constant 0 : index
    %9 = vector.load %arg5[%c0_6, %c0_7] : memref<64x128xbf16, #tpu.memory_space<vmem>>, vector<64x128xbf16>
    tpu.vector_store %arg5[%c0_6, %c0_7], %8 {strides = array<i32>} : memref<64x128xbf16, #tpu.memory_space<vmem>>, vector<64x128xbf16>,
    return
  }
  func.func @transform_0(%arg0: i32, %arg1: i32) -> (i32, i32) {
    %c0_i32 = arith.constant 0 : i32
    %c0_i32_0 = arith.constant 0 : i32
    return %arg0, %c0_i32 : i32, i32
  }
  func.func @transform_1(%arg0: i32, %arg1: i32) -> (i32, i32) {
    %c0_i32 = arith.constant 0 : i32
    %c0_i32_0 = arith.constant 0 : i32
    return %c0_i32, %arg1 : i32, i32
  }
  func.func @transform_2(%arg0: i32, %arg1: i32) -> (i32, i32) {
    %c0_i32 = arith.constant 0 : i32
    %c0_i32_0 = arith.constant 0 : i32
    return %c0_i32, %arg1 : i32, i32
  }
  func.func @transform_3(%arg0: i32, %arg1: i32) -> (i32, i32) {
    %c0_i32 = arith.constant 0 : i32
    return %arg0, %arg1 : i32, i32
  }
}

module attributes {stable_mosaic.version = 11 : i64} {
  func.func @conv3x3_s2_kernel(%arg0: i32, %arg1: memref<1x10x5x128xbf16, #tpu.memory_space<vmem>>, %arg2: memref<1x10x5x128xbf16, #tpu.memory_space<vmem>>, %arg3: memref<1152x128xbf16, #tpu.memory_space<vmem>>, %arg4: memref<1x128xf32, #tpu.memory_space<vmem>>, %arg5: memref<1x16x128xbf16, #tpu.memory_space<vmem>>) attributes {dimension_semantics = [#tpu.dimension_semantics<parallel>], iteration_bounds = array<i64: 2>, scalar_prefetch = 0 : i64, scratch_operands = 0 : i64, tpu.core_type = #tpu.core_type<tc>, window_params = [{transform_indices = @transform_0, window_bounds = array<i64: 1, 10, 5, 128>}, {transform_indices = @transform_1, window_bounds = array<i64: 1, 10, 5, 128>}, {pipeline_mode = #tpu.pipeline_mode<synchronous>, transform_indices = @transform_2, window_bounds = array<i64: 1152, 128>}, {pipeline_mode = #tpu.pipeline_mode<synchronous>, transform_indices = @transform_3, window_bounds = array<i64: 1, 128>}, {transform_indices = @transform_4, window_bounds = array<i64: 1, 16, 128>}]} {
    %c0 = arith.constant 0 : index
    %c0_0 = arith.constant 0 : index
    %c0_1 = arith.constant 0 : index
    %c0_2 = arith.constant 0 : index
    %0 = vector.load %arg1[%c0, %c0_0, %c0_1, %c0_2] : memref<1x10x5x128xbf16, #tpu.memory_space<vmem>>, vector<1x1x4x128xbf16>
    %1 = vector.shape_cast %0 : vector<1x1x4x128xbf16> to vector<4x128xbf16>
    %c0_3 = arith.constant 0 : index
    %c0_4 = arith.constant 0 : index
    %c0_5 = arith.constant 0 : index
    %c0_6 = arith.constant 0 : index
    %2 = vector.load %arg2[%c0_3, %c0_4, %c0_5, %c0_6] : memref<1x10x5x128xbf16, #tpu.memory_space<vmem>>, vector<1x1x4x128xbf16>
    %3 = vector.shape_cast %2 : vector<1x1x4x128xbf16> to vector<4x128xbf16>
    %c0_7 = arith.constant 0 : index
    %c0_8 = arith.constant 0 : index
    %c1 = arith.constant 1 : index
    %c0_9 = arith.constant 0 : index
    %4 = vector.load %arg1[%c0_7, %c0_8, %c1, %c0_9] : memref<1x10x5x128xbf16, #tpu.memory_space<vmem>>, vector<1x1x4x128xbf16>
    %5 = vector.shape_cast %4 : vector<1x1x4x128xbf16> to vector<4x128xbf16>
    %c0_10 = arith.constant 0 : index
    %c1_11 = arith.constant 1 : index
    %c0_12 = arith.constant 0 : index
    %c0_13 = arith.constant 0 : index
    %6 = vector.load %arg1[%c0_10, %c1_11, %c0_12, %c0_13] : memref<1x10x5x128xbf16, #tpu.memory_space<vmem>>, vector<1x1x4x128xbf16>
    %7 = vector.shape_cast %6 : vector<1x1x4x128xbf16> to vector<4x128xbf16>
    %c0_14 = arith.constant 0 : index
    %c1_15 = arith.constant 1 : index
    %c0_16 = arith.constant 0 : index
    %c0_17 = arith.constant 0 : index
    %8 = vector.load %arg2[%c0_14, %c1_15, %c0_16, %c0_17] : memref<1x10x5x128xbf16, #tpu.memory_space<vmem>>, vector<1x1x4x128xbf16>
    %9 = vector.shape_cast %8 : vector<1x1x4x128xbf16> to vector<4x128xbf16>
    %c0_18 = arith.constant 0 : index
    %c1_19 = arith.constant 1 : index
    %c1_20 = arith.constant 1 : index
    %c0_21 = arith.constant 0 : index
    %10 = vector.load %arg1[%c0_18, %c1_19, %c1_20, %c0_21] : memref<1x10x5x128xbf16, #tpu.memory_space<vmem>>, vector<1x1x4x128xbf16>
    %11 = vector.shape_cast %10 : vector<1x1x4x128xbf16> to vector<4x128xbf16>
    %c0_22 = arith.constant 0 : index
    %c2 = arith.constant 2 : index
    %c0_23 = arith.constant 0 : index
    %c0_24 = arith.constant 0 : index
    %12 = vector.load %arg1[%c0_22, %c2, %c0_23, %c0_24] : memref<1x10x5x128xbf16, #tpu.memory_space<vmem>>, vector<1x1x4x128xbf16>
    %13 = vector.shape_cast %12 : vector<1x1x4x128xbf16> to vector<4x128xbf16>
    %c0_25 = arith.constant 0 : index
    %c2_26 = arith.constant 2 : index
    %c0_27 = arith.constant 0 : index
    %c0_28 = arith.constant 0 : index
    %14 = vector.load %arg2[%c0_25, %c2_26, %c0_27, %c0_28] : memref<1x10x5x128xbf16, #tpu.memory_space<vmem>>, vector<1x1x4x128xbf16>
    %15 = vector.shape_cast %14 : vector<1x1x4x128xbf16> to vector<4x128xbf16>
    %c0_29 = arith.constant 0 : index
    %c2_30 = arith.constant 2 : index
    %c1_31 = arith.constant 1 : index
    %c0_32 = arith.constant 0 : index
    %16 = vector.load %arg1[%c0_29, %c2_30, %c1_31, %c0_32] : memref<1x10x5x128xbf16, #tpu.memory_space<vmem>>, vector<1x1x4x128xbf16>
    %17 = vector.shape_cast %16 : vector<1x1x4x128xbf16> to vector<4x128xbf16>
    %18 = tpu.concatenate %1, %3, %5, %7, %9, %11, %13, %15, %17 in 1 : vector<4x128xbf16>, vector<4x128xbf16>, vector<4x128xbf16>, vector<4x128xbf16>, vector<4x128xbf16>, vector<4x128xbf16>, vector<4x128xbf16>, vector<4x128xbf16>, vector<4x128xbf16> -> vector<4x1152xbf16>
    %c0_33 = arith.constant 0 : index
    %c0_34 = arith.constant 0 : index
    %19 = vector.load %arg3[%c0_33, %c0_34] : memref<1152x128xbf16, #tpu.memory_space<vmem>>, vector<1152x128xbf16>
    %cst = arith.constant dense<0.000000e+00> : vector<4x128xf32>
    %20 = tpu.matmul %18, %19, %cst {dimension_numbers = #tpu.dot_dimension_numbers<[1], [0], [0], [1], [0, 0, 1, 1], [], []>} : vector<4x1152xbf16>, vector<1152x128xbf16>, vector<4x128xf32> -> vector<4x128xf32>
    %c0_35 = arith.constant 0 : index
    %c0_36 = arith.constant 0 : index
    %21 = vector.load %arg4[%c0_35, %c0_36] : memref<1x128xf32, #tpu.memory_space<vmem>>, vector<1x128xf32>
    %22 = vector.broadcast %21 : vector<1x128xf32> to vector<4x128xf32>
    %23 = arith.addf %20, %22 : vector<4x128xf32>
    %cst_37 = arith.constant 0.000000e+00 : f32
    %24 = vector.broadcast %cst_37 : f32 to vector<4x128xf32>
    %25 = arith.maximumf %23, %24 : vector<4x128xf32>
    %26 = arith.truncf %25 : vector<4x128xf32> to vector<4x128xbf16>
    %c0_38 = arith.constant 0 : index
    %c0_39 = arith.constant 0 : index
    %c0_40 = arith.constant 0 : index
    %27 = vector.load %arg5[%c0_38, %c0_39, %c0_40] : memref<1x16x128xbf16, #tpu.memory_space<vmem>>, vector<1x4x128xbf16>
    %28 = vector.shape_cast %27 : vector<1x4x128xbf16> to vector<4x128xbf16>
    %29 = vector.shape_cast %26 : vector<4x128xbf16> to vector<1x4x128xbf16>
    tpu.vector_store %arg5[%c0_38, %c0_39, %c0_40], %29 {strides = array<i32>} : memref<1x16x128xbf16, #tpu.memory_space<vmem>>, vector<1x4x128xbf16>,
    %c0_41 = arith.constant 0 : index
    %c2_42 = arith.constant 2 : index
    %c0_43 = arith.constant 0 : index
    %c0_44 = arith.constant 0 : index
    %30 = vector.load %arg1[%c0_41, %c2_42, %c0_43, %c0_44] : memref<1x10x5x128xbf16, #tpu.memory_space<vmem>>, vector<1x1x4x128xbf16>
    %31 = vector.shape_cast %30 : vector<1x1x4x128xbf16> to vector<4x128xbf16>
    %c0_45 = arith.constant 0 : index
    %c2_46 = arith.constant 2 : index
    %c0_47 = arith.constant 0 : index
    %c0_48 = arith.constant 0 : index
    %32 = vector.load %arg2[%c0_45, %c2_46, %c0_47, %c0_48] : memref<1x10x5x128xbf16, #tpu.memory_space<vmem>>, vector<1x1x4x128xbf16>
    %33 = vector.shape_cast %32 : vector<1x1x4x128xbf16> to vector<4x128xbf16>
    %c0_49 = arith.constant 0 : index
    %c2_50 = arith.constant 2 : index
    %c1_51 = arith.constant 1 : index
    %c0_52 = arith.constant 0 : index
    %34 = vector.load %arg1[%c0_49, %c2_50, %c1_51, %c0_52] : memref<1x10x5x128xbf16, #tpu.memory_space<vmem>>, vector<1x1x4x128xbf16>
    %35 = vector.shape_cast %34 : vector<1x1x4x128xbf16> to vector<4x128xbf16>
    %c0_53 = arith.constant 0 : index
    %c3 = arith.constant 3 : index
    %c0_54 = arith.constant 0 : index
    %c0_55 = arith.constant 0 : index
    %36 = vector.load %arg1[%c0_53, %c3, %c0_54, %c0_55] : memref<1x10x5x128xbf16, #tpu.memory_space<vmem>>, vector<1x1x4x128xbf16>
    %37 = vector.shape_cast %36 : vector<1x1x4x128xbf16> to vector<4x128xbf16>
    %c0_56 = arith.constant 0 : index
    %c3_57 = arith.constant 3 : index
    %c0_58 = arith.constant 0 : index
    %c0_59 = arith.constant 0 : index
    %38 = vector.load %arg2[%c0_56, %c3_57, %c0_58, %c0_59] : memref<1x10x5x128xbf16, #tpu.memory_space<vmem>>, vector<1x1x4x128xbf16>
    %39 = vector.shape_cast %38 : vector<1x1x4x128xbf16> to vector<4x128xbf16>
    %c0_60 = arith.constant 0 : index
    %c3_61 = arith.constant 3 : index
    %c1_62 = arith.constant 1 : index
    %c0_63 = arith.constant 0 : index
    %40 = vector.load %arg1[%c0_60, %c3_61, %c1_62, %c0_63] : memref<1x10x5x128xbf16, #tpu.memory_space<vmem>>, vector<1x1x4x128xbf16>
    %41 = vector.shape_cast %40 : vector<1x1x4x128xbf16> to vector<4x128xbf16>
    %c0_64 = arith.constant 0 : index
    %c4 = arith.constant 4 : index
    %c0_65 = arith.constant 0 : index
    %c0_66 = arith.constant 0 : index
    %42 = vector.load %arg1[%c0_64, %c4, %c0_65, %c0_66] : memref<1x10x5x128xbf16, #tpu.memory_space<vmem>>, vector<1x1x4x128xbf16>
    %43 = vector.shape_cast %42 : vector<1x1x4x128xbf16> to vector<4x128xbf16>
    %c0_67 = arith.constant 0 : index
    %c4_68 = arith.constant 4 : index
    %c0_69 = arith.constant 0 : index
    %c0_70 = arith.constant 0 : index
    %44 = vector.load %arg2[%c0_67, %c4_68, %c0_69, %c0_70] : memref<1x10x5x128xbf16, #tpu.memory_space<vmem>>, vector<1x1x4x128xbf16>
    %45 = vector.shape_cast %44 : vector<1x1x4x128xbf16> to vector<4x128xbf16>
    %c0_71 = arith.constant 0 : index
    %c4_72 = arith.constant 4 : index
    %c1_73 = arith.constant 1 : index
    %c0_74 = arith.constant 0 : index
    %46 = vector.load %arg1[%c0_71, %c4_72, %c1_73, %c0_74] : memref<1x10x5x128xbf16, #tpu.memory_space<vmem>>, vector<1x1x4x128xbf16>
    %47 = vector.shape_cast %46 : vector<1x1x4x128xbf16> to vector<4x128xbf16>
    %48 = tpu.concatenate %31, %33, %35, %37, %39, %41, %43, %45, %47 in 1 : vector<4x128xbf16>, vector<4x128xbf16>, vector<4x128xbf16>, vector<4x128xbf16>, vector<4x128xbf16>, vector<4x128xbf16>, vector<4x128xbf16>, vector<4x128xbf16>, vector<4x128xbf16> -> vector<4x1152xbf16>
    %c0_75 = arith.constant 0 : index
    %c0_76 = arith.constant 0 : index
    %49 = vector.load %arg3[%c0_75, %c0_76] : memref<1152x128xbf16, #tpu.memory_space<vmem>>, vector<1152x128xbf16>
    %cst_77 = arith.constant dense<0.000000e+00> : vector<4x128xf32>
    %50 = tpu.matmul %48, %49, %cst_77 {dimension_numbers = #tpu.dot_dimension_numbers<[1], [0], [0], [1], [0, 0, 1, 1], [], []>} : vector<4x1152xbf16>, vector<1152x128xbf16>, vector<4x128xf32> -> vector<4x128xf32>
    %c0_78 = arith.constant 0 : index
    %c0_79 = arith.constant 0 : index
    %51 = vector.load %arg4[%c0_78, %c0_79] : memref<1x128xf32, #tpu.memory_space<vmem>>, vector<1x128xf32>
    %52 = vector.broadcast %51 : vector<1x128xf32> to vector<4x128xf32>
    %53 = arith.addf %50, %52 : vector<4x128xf32>
    %cst_80 = arith.constant 0.000000e+00 : f32
    %54 = vector.broadcast %cst_80 : f32 to vector<4x128xf32>
    %55 = arith.maximumf %53, %54 : vector<4x128xf32>
    %56 = arith.truncf %55 : vector<4x128xf32> to vector<4x128xbf16>
    %c0_81 = arith.constant 0 : index
    %c4_82 = arith.constant 4 : index
    %c0_83 = arith.constant 0 : index
    %57 = vector.load %arg5[%c0_81, %c4_82, %c0_83] : memref<1x16x128xbf16, #tpu.memory_space<vmem>>, vector<1x4x128xbf16>
    %58 = vector.shape_cast %57 : vector<1x4x128xbf16> to vector<4x128xbf16>
    %59 = vector.shape_cast %56 : vector<4x128xbf16> to vector<1x4x128xbf16>
    tpu.vector_store %arg5[%c0_81, %c4_82, %c0_83], %59 {strides = array<i32>} : memref<1x16x128xbf16, #tpu.memory_space<vmem>>, vector<1x4x128xbf16>,
    %c0_84 = arith.constant 0 : index
    %c4_85 = arith.constant 4 : index
    %c0_86 = arith.constant 0 : index
    %c0_87 = arith.constant 0 : index
    %60 = vector.load %arg1[%c0_84, %c4_85, %c0_86, %c0_87] : memref<1x10x5x128xbf16, #tpu.memory_space<vmem>>, vector<1x1x4x128xbf16>
    %61 = vector.shape_cast %60 : vector<1x1x4x128xbf16> to vector<4x128xbf16>
    %c0_88 = arith.constant 0 : index
    %c4_89 = arith.constant 4 : index
    %c0_90 = arith.constant 0 : index
    %c0_91 = arith.constant 0 : index
    %62 = vector.load %arg2[%c0_88, %c4_89, %c0_90, %c0_91] : memref<1x10x5x128xbf16, #tpu.memory_space<vmem>>, vector<1x1x4x128xbf16>
    %63 = vector.shape_cast %62 : vector<1x1x4x128xbf16> to vector<4x128xbf16>
    %c0_92 = arith.constant 0 : index
    %c4_93 = arith.constant 4 : index
    %c1_94 = arith.constant 1 : index
    %c0_95 = arith.constant 0 : index
    %64 = vector.load %arg1[%c0_92, %c4_93, %c1_94, %c0_95] : memref<1x10x5x128xbf16, #tpu.memory_space<vmem>>, vector<1x1x4x128xbf16>
    %65 = vector.shape_cast %64 : vector<1x1x4x128xbf16> to vector<4x128xbf16>
    %c0_96 = arith.constant 0 : index
    %c5 = arith.constant 5 : index
    %c0_97 = arith.constant 0 : index
    %c0_98 = arith.constant 0 : index
    %66 = vector.load %arg1[%c0_96, %c5, %c0_97, %c0_98] : memref<1x10x5x128xbf16, #tpu.memory_space<vmem>>, vector<1x1x4x128xbf16>
    %67 = vector.shape_cast %66 : vector<1x1x4x128xbf16> to vector<4x128xbf16>
    %c0_99 = arith.constant 0 : index
    %c5_100 = arith.constant 5 : index
    %c0_101 = arith.constant 0 : index
    %c0_102 = arith.constant 0 : index
    %68 = vector.load %arg2[%c0_99, %c5_100, %c0_101, %c0_102] : memref<1x10x5x128xbf16, #tpu.memory_space<vmem>>, vector<1x1x4x128xbf16>
    %69 = vector.shape_cast %68 : vector<1x1x4x128xbf16> to vector<4x128xbf16>
    %c0_103 = arith.constant 0 : index
    %c5_104 = arith.constant 5 : index
    %c1_105 = arith.constant 1 : index
    %c0_106 = arith.constant 0 : index
    %70 = vector.load %arg1[%c0_103, %c5_104, %c1_105, %c0_106] : memref<1x10x5x128xbf16, #tpu.memory_space<vmem>>, vector<1x1x4x128xbf16>
    %71 = vector.shape_cast %70 : vector<1x1x4x128xbf16> to vector<4x128xbf16>
    %c0_107 = arith.constant 0 : index
    %c6 = arith.constant 6 : index
    %c0_108 = arith.constant 0 : index
    %c0_109 = arith.constant 0 : index
    %72 = vector.load %arg1[%c0_107, %c6, %c0_108, %c0_109] : memref<1x10x5x128xbf16, #tpu.memory_space<vmem>>, vector<1x1x4x128xbf16>
    %73 = vector.shape_cast %72 : vector<1x1x4x128xbf16> to vector<4x128xbf16>
    %c0_110 = arith.constant 0 : index
    %c6_111 = arith.constant 6 : index
    %c0_112 = arith.constant 0 : index
    %c0_113 = arith.constant 0 : index
    %74 = vector.load %arg2[%c0_110, %c6_111, %c0_112, %c0_113] : memref<1x10x5x128xbf16, #tpu.memory_space<vmem>>, vector<1x1x4x128xbf16>
    %75 = vector.shape_cast %74 : vector<1x1x4x128xbf16> to vector<4x128xbf16>
    %c0_114 = arith.constant 0 : index
    %c6_115 = arith.constant 6 : index
    %c1_116 = arith.constant 1 : index
    %c0_117 = arith.constant 0 : index
    %76 = vector.load %arg1[%c0_114, %c6_115, %c1_116, %c0_117] : memref<1x10x5x128xbf16, #tpu.memory_space<vmem>>, vector<1x1x4x128xbf16>
    %77 = vector.shape_cast %76 : vector<1x1x4x128xbf16> to vector<4x128xbf16>
    %78 = tpu.concatenate %61, %63, %65, %67, %69, %71, %73, %75, %77 in 1 : vector<4x128xbf16>, vector<4x128xbf16>, vector<4x128xbf16>, vector<4x128xbf16>, vector<4x128xbf16>, vector<4x128xbf16>, vector<4x128xbf16>, vector<4x128xbf16>, vector<4x128xbf16> -> vector<4x1152xbf16>
    %c0_118 = arith.constant 0 : index
    %c0_119 = arith.constant 0 : index
    %79 = vector.load %arg3[%c0_118, %c0_119] : memref<1152x128xbf16, #tpu.memory_space<vmem>>, vector<1152x128xbf16>
    %cst_120 = arith.constant dense<0.000000e+00> : vector<4x128xf32>
    %80 = tpu.matmul %78, %79, %cst_120 {dimension_numbers = #tpu.dot_dimension_numbers<[1], [0], [0], [1], [0, 0, 1, 1], [], []>} : vector<4x1152xbf16>, vector<1152x128xbf16>, vector<4x128xf32> -> vector<4x128xf32>
    %c0_121 = arith.constant 0 : index
    %c0_122 = arith.constant 0 : index
    %81 = vector.load %arg4[%c0_121, %c0_122] : memref<1x128xf32, #tpu.memory_space<vmem>>, vector<1x128xf32>
    %82 = vector.broadcast %81 : vector<1x128xf32> to vector<4x128xf32>
    %83 = arith.addf %80, %82 : vector<4x128xf32>
    %cst_123 = arith.constant 0.000000e+00 : f32
    %84 = vector.broadcast %cst_123 : f32 to vector<4x128xf32>
    %85 = arith.maximumf %83, %84 : vector<4x128xf32>
    %86 = arith.truncf %85 : vector<4x128xf32> to vector<4x128xbf16>
    %c0_124 = arith.constant 0 : index
    %c8 = arith.constant 8 : index
    %c0_125 = arith.constant 0 : index
    %87 = vector.load %arg5[%c0_124, %c8, %c0_125] : memref<1x16x128xbf16, #tpu.memory_space<vmem>>, vector<1x4x128xbf16>
    %88 = vector.shape_cast %87 : vector<1x4x128xbf16> to vector<4x128xbf16>
    %89 = vector.shape_cast %86 : vector<4x128xbf16> to vector<1x4x128xbf16>
    tpu.vector_store %arg5[%c0_124, %c8, %c0_125], %89 {strides = array<i32>} : memref<1x16x128xbf16, #tpu.memory_space<vmem>>, vector<1x4x128xbf16>,
    %c0_126 = arith.constant 0 : index
    %c6_127 = arith.constant 6 : index
    %c0_128 = arith.constant 0 : index
    %c0_129 = arith.constant 0 : index
    %90 = vector.load %arg1[%c0_126, %c6_127, %c0_128, %c0_129] : memref<1x10x5x128xbf16, #tpu.memory_space<vmem>>, vector<1x1x4x128xbf16>
    %91 = vector.shape_cast %90 : vector<1x1x4x128xbf16> to vector<4x128xbf16>
    %c0_130 = arith.constant 0 : index
    %c6_131 = arith.constant 6 : index
    %c0_132 = arith.constant 0 : index
    %c0_133 = arith.constant 0 : index
    %92 = vector.load %arg2[%c0_130, %c6_131, %c0_132, %c0_133] : memref<1x10x5x128xbf16, #tpu.memory_space<vmem>>, vector<1x1x4x128xbf16>
    %93 = vector.shape_cast %92 : vector<1x1x4x128xbf16> to vector<4x128xbf16>
    %c0_134 = arith.constant 0 : index
    %c6_135 = arith.constant 6 : index
    %c1_136 = arith.constant 1 : index
    %c0_137 = arith.constant 0 : index
    %94 = vector.load %arg1[%c0_134, %c6_135, %c1_136, %c0_137] : memref<1x10x5x128xbf16, #tpu.memory_space<vmem>>, vector<1x1x4x128xbf16>
    %95 = vector.shape_cast %94 : vector<1x1x4x128xbf16> to vector<4x128xbf16>
    %c0_138 = arith.constant 0 : index
    %c7 = arith.constant 7 : index
    %c0_139 = arith.constant 0 : index
    %c0_140 = arith.constant 0 : index
    %96 = vector.load %arg1[%c0_138, %c7, %c0_139, %c0_140] : memref<1x10x5x128xbf16, #tpu.memory_space<vmem>>, vector<1x1x4x128xbf16>
    %97 = vector.shape_cast %96 : vector<1x1x4x128xbf16> to vector<4x128xbf16>
    %c0_141 = arith.constant 0 : index
    %c7_142 = arith.constant 7 : index
    %c0_143 = arith.constant 0 : index
    %c0_144 = arith.constant 0 : index
    %98 = vector.load %arg2[%c0_141, %c7_142, %c0_143, %c0_144] : memref<1x10x5x128xbf16, #tpu.memory_space<vmem>>, vector<1x1x4x128xbf16>
    %99 = vector.shape_cast %98 : vector<1x1x4x128xbf16> to vector<4x128xbf16>
    %c0_145 = arith.constant 0 : index
    %c7_146 = arith.constant 7 : index
    %c1_147 = arith.constant 1 : index
    %c0_148 = arith.constant 0 : index
    %100 = vector.load %arg1[%c0_145, %c7_146, %c1_147, %c0_148] : memref<1x10x5x128xbf16, #tpu.memory_space<vmem>>, vector<1x1x4x128xbf16>
    %101 = vector.shape_cast %100 : vector<1x1x4x128xbf16> to vector<4x128xbf16>
    %c0_149 = arith.constant 0 : index
    %c8_150 = arith.constant 8 : index
    %c0_151 = arith.constant 0 : index
    %c0_152 = arith.constant 0 : index
    %102 = vector.load %arg1[%c0_149, %c8_150, %c0_151, %c0_152] : memref<1x10x5x128xbf16, #tpu.memory_space<vmem>>, vector<1x1x4x128xbf16>
    %103 = vector.shape_cast %102 : vector<1x1x4x128xbf16> to vector<4x128xbf16>
    %c0_153 = arith.constant 0 : index
    %c8_154 = arith.constant 8 : index
    %c0_155 = arith.constant 0 : index
    %c0_156 = arith.constant 0 : index
    %104 = vector.load %arg2[%c0_153, %c8_154, %c0_155, %c0_156] : memref<1x10x5x128xbf16, #tpu.memory_space<vmem>>, vector<1x1x4x128xbf16>
    %105 = vector.shape_cast %104 : vector<1x1x4x128xbf16> to vector<4x128xbf16>
    %c0_157 = arith.constant 0 : index
    %c8_158 = arith.constant 8 : index
    %c1_159 = arith.constant 1 : index
    %c0_160 = arith.constant 0 : index
    %106 = vector.load %arg1[%c0_157, %c8_158, %c1_159, %c0_160] : memref<1x10x5x128xbf16, #tpu.memory_space<vmem>>, vector<1x1x4x128xbf16>
    %107 = vector.shape_cast %106 : vector<1x1x4x128xbf16> to vector<4x128xbf16>
    %108 = tpu.concatenate %91, %93, %95, %97, %99, %101, %103, %105, %107 in 1 : vector<4x128xbf16>, vector<4x128xbf16>, vector<4x128xbf16>, vector<4x128xbf16>, vector<4x128xbf16>, vector<4x128xbf16>, vector<4x128xbf16>, vector<4x128xbf16>, vector<4x128xbf16> -> vector<4x1152xbf16>
    %c0_161 = arith.constant 0 : index
    %c0_162 = arith.constant 0 : index
    %109 = vector.load %arg3[%c0_161, %c0_162] : memref<1152x128xbf16, #tpu.memory_space<vmem>>, vector<1152x128xbf16>
    %cst_163 = arith.constant dense<0.000000e+00> : vector<4x128xf32>
    %110 = tpu.matmul %108, %109, %cst_163 {dimension_numbers = #tpu.dot_dimension_numbers<[1], [0], [0], [1], [0, 0, 1, 1], [], []>} : vector<4x1152xbf16>, vector<1152x128xbf16>, vector<4x128xf32> -> vector<4x128xf32>
    %c0_164 = arith.constant 0 : index
    %c0_165 = arith.constant 0 : index
    %111 = vector.load %arg4[%c0_164, %c0_165] : memref<1x128xf32, #tpu.memory_space<vmem>>, vector<1x128xf32>
    %112 = vector.broadcast %111 : vector<1x128xf32> to vector<4x128xf32>
    %113 = arith.addf %110, %112 : vector<4x128xf32>
    %cst_166 = arith.constant 0.000000e+00 : f32
    %114 = vector.broadcast %cst_166 : f32 to vector<4x128xf32>
    %115 = arith.maximumf %113, %114 : vector<4x128xf32>
    %116 = arith.truncf %115 : vector<4x128xf32> to vector<4x128xbf16>
    %c0_167 = arith.constant 0 : index
    %c12 = arith.constant 12 : index
    %c0_168 = arith.constant 0 : index
    %117 = vector.load %arg5[%c0_167, %c12, %c0_168] : memref<1x16x128xbf16, #tpu.memory_space<vmem>>, vector<1x4x128xbf16>
    %118 = vector.shape_cast %117 : vector<1x4x128xbf16> to vector<4x128xbf16>
    %119 = vector.shape_cast %116 : vector<4x128xbf16> to vector<1x4x128xbf16>
    tpu.vector_store %arg5[%c0_167, %c12, %c0_168], %119 {strides = array<i32>} : memref<1x16x128xbf16, #tpu.memory_space<vmem>>, vector<1x4x128xbf16>,
    return
  }
  func.func @transform_0(%arg0: i32) -> (i32, i32, i32, i32) {
    %c0_i32 = arith.constant 0 : i32
    %c0_i32_0 = arith.constant 0 : i32
    %c0_i32_1 = arith.constant 0 : i32
    %c0_i32_2 = arith.constant 0 : i32
    return %arg0, %c0_i32, %c0_i32_0, %c0_i32_1 : i32, i32, i32, i32
  }
  func.func @transform_1(%arg0: i32) -> (i32, i32, i32, i32) {
    %c0_i32 = arith.constant 0 : i32
    %c0_i32_0 = arith.constant 0 : i32
    %c0_i32_1 = arith.constant 0 : i32
    %c0_i32_2 = arith.constant 0 : i32
    return %arg0, %c0_i32, %c0_i32_0, %c0_i32_1 : i32, i32, i32, i32
  }
  func.func @transform_2(%arg0: i32) -> (i32, i32) {
    %c0_i32 = arith.constant 0 : i32
    %c0_i32_0 = arith.constant 0 : i32
    %c0_i32_1 = arith.constant 0 : i32
    return %c0_i32, %c0_i32_0 : i32, i32
  }
  func.func @transform_3(%arg0: i32) -> (i32, i32) {
    %c0_i32 = arith.constant 0 : i32
    %c0_i32_0 = arith.constant 0 : i32
    %c0_i32_1 = arith.constant 0 : i32
    return %c0_i32, %c0_i32_0 : i32, i32
  }
  func.func @transform_4(%arg0: i32) -> (i32, i32, i32) {
    %c0_i32 = arith.constant 0 : i32
    %c0_i32_0 = arith.constant 0 : i32
    %c0_i32_1 = arith.constant 0 : i32
    return %arg0, %c0_i32, %c0_i32_0 : i32, i32, i32
  }
}

module attributes {stable_mosaic.version = 11 : i64} {
  func.func @mm2_bias_relu_kernel(%arg0: i32, %arg1: i32, %arg2: memref<16x128xbf16, #tpu.memory_space<vmem>>, %arg3: memref<128x256xbf16, #tpu.memory_space<vmem>>, %arg4: memref<1x256xf32, #tpu.memory_space<vmem>>, %arg5: memref<16x256xbf16, #tpu.memory_space<vmem>>, %arg6: memref<256x256xbf16, #tpu.memory_space<vmem>>, %arg7: memref<1x256xf32, #tpu.memory_space<vmem>>, %arg8: memref<16x256xbf16, #tpu.memory_space<vmem>>) attributes {dimension_semantics = [#tpu.dimension_semantics<parallel>, #tpu.dimension_semantics<parallel>], iteration_bounds = array<i64: 2, 2>, scalar_prefetch = 0 : i64, scratch_operands = 0 : i64, tpu.core_type = #tpu.core_type<tc>, window_params = [{transform_indices = @transform_0, window_bounds = array<i64: 16, 128>}, {transform_indices = @transform_1, window_bounds = array<i64: 128, 256>}, {transform_indices = @transform_2, window_bounds = array<i64: 1, 256>}, {transform_indices = @transform_3, window_bounds = array<i64: 16, 256>}, {transform_indices = @transform_4, window_bounds = array<i64: 256, 256>}, {transform_indices = @transform_5, window_bounds = array<i64: 1, 256>}, {transform_indices = @transform_6, window_bounds = array<i64: 16, 256>}]} {
    %c0 = arith.constant 0 : index
    %c0_0 = arith.constant 0 : index
    %0 = vector.load %arg2[%c0, %c0_0] : memref<16x128xbf16, #tpu.memory_space<vmem>>, vector<16x128xbf16>
    %c0_1 = arith.constant 0 : index
    %c0_2 = arith.constant 0 : index
    %1 = vector.load %arg3[%c0_1, %c0_2] : memref<128x256xbf16, #tpu.memory_space<vmem>>, vector<128x256xbf16>
    %cst = arith.constant dense<0.000000e+00> : vector<16x256xf32>
    %2 = tpu.matmul %0, %1, %cst {dimension_numbers = #tpu.dot_dimension_numbers<[1], [0], [0], [1], [0, 0, 1, 1], [], []>} : vector<16x128xbf16>, vector<128x256xbf16>, vector<16x256xf32> -> vector<16x256xf32>
    %c0_3 = arith.constant 0 : index
    %c0_4 = arith.constant 0 : index
    %3 = vector.load %arg4[%c0_3, %c0_4] : memref<1x256xf32, #tpu.memory_space<vmem>>, vector<1x256xf32>
    %4 = vector.broadcast %3 : vector<1x256xf32> to vector<16x256xf32>
    %5 = arith.addf %2, %4 : vector<16x256xf32>
    %c0_5 = arith.constant 0 : index
    %c0_6 = arith.constant 0 : index
    %6 = vector.load %arg5[%c0_5, %c0_6] : memref<16x256xbf16, #tpu.memory_space<vmem>>, vector<16x256xbf16>
    %c0_7 = arith.constant 0 : index
    %c0_8 = arith.constant 0 : index
    %7 = vector.load %arg6[%c0_7, %c0_8] : memref<256x256xbf16, #tpu.memory_space<vmem>>, vector<256x256xbf16>
    %cst_9 = arith.constant dense<0.000000e+00> : vector<16x256xf32>
    %8 = tpu.matmul %6, %7, %cst_9 {dimension_numbers = #tpu.dot_dimension_numbers<[1], [0], [0], [1], [0, 0, 1, 1], [], []>} : vector<16x256xbf16>, vector<256x256xbf16>, vector<16x256xf32> -> vector<16x256xf32>
    %9 = arith.addf %5, %8 : vector<16x256xf32>
    %c0_10 = arith.constant 0 : index
    %c0_11 = arith.constant 0 : index
    %10 = vector.load %arg7[%c0_10, %c0_11] : memref<1x256xf32, #tpu.memory_space<vmem>>, vector<1x256xf32>
    %11 = vector.broadcast %10 : vector<1x256xf32> to vector<16x256xf32>
    %12 = arith.addf %9, %11 : vector<16x256xf32>
    %cst_12 = arith.constant 0.000000e+00 : f32
    %13 = vector.broadcast %cst_12 : f32 to vector<16x256xf32>
    %14 = arith.maximumf %12, %13 : vector<16x256xf32>
    %15 = arith.truncf %14 : vector<16x256xf32> to vector<16x256xbf16>
    %c0_13 = arith.constant 0 : index
    %c0_14 = arith.constant 0 : index
    %16 = vector.load %arg8[%c0_13, %c0_14] : memref<16x256xbf16, #tpu.memory_space<vmem>>, vector<16x256xbf16>
    tpu.vector_store %arg8[%c0_13, %c0_14], %15 {strides = array<i32>} : memref<16x256xbf16, #tpu.memory_space<vmem>>, vector<16x256xbf16>,
    return
  }
  func.func @transform_0(%arg0: i32, %arg1: i32) -> (i32, i32) {
    %c0_i32 = arith.constant 0 : i32
    %c0_i32_0 = arith.constant 0 : i32
    return %arg0, %c0_i32 : i32, i32
  }
  func.func @transform_1(%arg0: i32, %arg1: i32) -> (i32, i32) {
    %c0_i32 = arith.constant 0 : i32
    %c0_i32_0 = arith.constant 0 : i32
    return %c0_i32, %arg1 : i32, i32
  }
  func.func @transform_2(%arg0: i32, %arg1: i32) -> (i32, i32) {
    %c0_i32 = arith.constant 0 : i32
    %c0_i32_0 = arith.constant 0 : i32
    return %c0_i32, %arg1 : i32, i32
  }
  func.func @transform_3(%arg0: i32, %arg1: i32) -> (i32, i32) {
    %c0_i32 = arith.constant 0 : i32
    %c0_i32_0 = arith.constant 0 : i32
    return %arg0, %c0_i32 : i32, i32
  }
  func.func @transform_4(%arg0: i32, %arg1: i32) -> (i32, i32) {
    %c0_i32 = arith.constant 0 : i32
    %c0_i32_0 = arith.constant 0 : i32
    return %c0_i32, %arg1 : i32, i32
  }
  func.func @transform_5(%arg0: i32, %arg1: i32) -> (i32, i32) {
    %c0_i32 = arith.constant 0 : i32
    %c0_i32_0 = arith.constant 0 : i32
    return %c0_i32, %arg1 : i32, i32
  }
  func.func @transform_6(%arg0: i32, %arg1: i32) -> (i32, i32) {
    %c0_i32 = arith.constant 0 : i32
    return %arg0, %arg1 : i32, i32
  }
}

module attributes {stable_mosaic.version = 11 : i64} {
  func.func @fused_block_kernel(%arg0: i32, %arg1: memref<1x16x512xbf16, #tpu.memory_space<vmem>>, %arg2: memref<512x128xbf16, #tpu.memory_space<vmem>>, %arg3: memref<1x128xf32, #tpu.memory_space<vmem>>, %arg4: memref<1152x128xbf16, #tpu.memory_space<vmem>>, %arg5: memref<1x128xf32, #tpu.memory_space<vmem>>, %arg6: memref<128x512xbf16, #tpu.memory_space<vmem>>, %arg7: memref<1x512xf32, #tpu.memory_space<vmem>>, %arg8: memref<1x16x512xbf16, #tpu.memory_space<vmem>>, %arg9: memref<16x128xbf16, #tpu.memory_space<vmem>>, %arg10: memref<6x6x128xbf16, #tpu.memory_space<vmem>>, %arg11: memref<16x128xbf16, #tpu.memory_space<vmem>>) attributes {dimension_semantics = [#tpu.dimension_semantics<parallel>], iteration_bounds = array<i64: 2>, scalar_prefetch = 0 : i64, scratch_operands = 3 : i64, tpu.core_type = #tpu.core_type<tc>, window_params = [{transform_indices = @transform_0, window_bounds = array<i64: 1, 16, 512>}, {pipeline_mode = #tpu.pipeline_mode<synchronous>, transform_indices = @transform_1, window_bounds = array<i64: 512, 128>}, {pipeline_mode = #tpu.pipeline_mode<synchronous>, transform_indices = @transform_2, window_bounds = array<i64: 1, 128>}, {pipeline_mode = #tpu.pipeline_mode<synchronous>, transform_indices = @transform_3, window_bounds = array<i64: 1152, 128>}, {pipeline_mode = #tpu.pipeline_mode<synchronous>, transform_indices = @transform_4, window_bounds = array<i64: 1, 128>}, {pipeline_mode = #tpu.pipeline_mode<synchronous>, transform_indices = @transform_5, window_bounds = array<i64: 128, 512>}, {pipeline_mode = #tpu.pipeline_mode<synchronous>, transform_indices = @transform_6, window_bounds = array<i64: 1, 512>}, {transform_indices = @transform_7, window_bounds = array<i64: 1, 16, 512>}]} {
    %c0 = arith.constant 0 : index
    %c0_0 = arith.constant 0 : index
    %c0_1 = arith.constant 0 : index
    %0 = vector.load %arg1[%c0, %c0_0, %c0_1] : memref<1x16x512xbf16, #tpu.memory_space<vmem>>, vector<1x16x512xbf16>
    %1 = vector.shape_cast %0 : vector<1x16x512xbf16> to vector<16x512xbf16>
    %c0_2 = arith.constant 0 : index
    %c0_3 = arith.constant 0 : index
    %2 = vector.load %arg2[%c0_2, %c0_3] : memref<512x128xbf16, #tpu.memory_space<vmem>>, vector<512x128xbf16>
    %cst = arith.constant dense<0.000000e+00> : vector<16x128xf32>
    %3 = tpu.matmul %1, %2, %cst {dimension_numbers = #tpu.dot_dimension_numbers<[1], [0], [0], [1], [0, 0, 1, 1], [], []>} : vector<16x512xbf16>, vector<512x128xbf16>, vector<16x128xf32> -> vector<16x128xf32>
    %c0_4 = arith.constant 0 : index
    %c0_5 = arith.constant 0 : index
    %4 = vector.load %arg3[%c0_4, %c0_5] : memref<1x128xf32, #tpu.memory_space<vmem>>, vector<1x128xf32>
    %5 = vector.broadcast %4 : vector<1x128xf32> to vector<16x128xf32>
    %6 = arith.addf %3, %5 : vector<16x128xf32>
    %cst_6 = arith.constant 0.000000e+00 : f32
    %7 = vector.broadcast %cst_6 : f32 to vector<16x128xf32>
    %8 = arith.maximumf %6, %7 : vector<16x128xf32>
    %9 = arith.truncf %8 : vector<16x128xf32> to vector<16x128xbf16>
    %c0_7 = arith.constant 0 : index
    %c0_8 = arith.constant 0 : index
    %10 = vector.load %arg9[%c0_7, %c0_8] : memref<16x128xbf16, #tpu.memory_space<vmem>>, vector<16x128xbf16>
    tpu.vector_store %arg9[%c0_7, %c0_8], %9 {strides = array<i32>} : memref<16x128xbf16, #tpu.memory_space<vmem>>, vector<16x128xbf16>,
    %cst_9 = arith.constant 0.000000e+00 : bf16
    %11 = vector.broadcast %cst_9 : bf16 to vector<6x6x128xbf16>
    %c0_10 = arith.constant 0 : index
    %c0_11 = arith.constant 0 : index
    %c0_12 = arith.constant 0 : index
    %12 = vector.load %arg10[%c0_10, %c0_11, %c0_12] : memref<6x6x128xbf16, #tpu.memory_space<vmem>>, vector<6x6x128xbf16>
    tpu.vector_store %arg10[%c0_10, %c0_11, %c0_12], %11 {strides = array<i32>} : memref<6x6x128xbf16, #tpu.memory_space<vmem>>, vector<6x6x128xbf16>,
    %c0_13 = arith.constant 0 : index
    %c0_14 = arith.constant 0 : index
    %13 = vector.load %arg9[%c0_13, %c0_14] : memref<16x128xbf16, #tpu.memory_space<vmem>>, vector<4x128xbf16>
    %c1 = arith.constant 1 : index
    %c1_15 = arith.constant 1 : index
    %c0_16 = arith.constant 0 : index
    %14 = vector.load %arg10[%c1, %c1_15, %c0_16] : memref<6x6x128xbf16, #tpu.memory_space<vmem>>, vector<1x4x128xbf16>
    %15 = vector.shape_cast %14 : vector<1x4x128xbf16> to vector<4x128xbf16>
    %16 = vector.shape_cast %13 : vector<4x128xbf16> to vector<1x4x128xbf16>
    tpu.vector_store %arg10[%c1, %c1_15, %c0_16], %16 {strides = array<i32>} : memref<6x6x128xbf16, #tpu.memory_space<vmem>>, vector<1x4x128xbf16>,
    %c4 = arith.constant 4 : index
    %c0_17 = arith.constant 0 : index
    %17 = vector.load %arg9[%c4, %c0_17] : memref<16x128xbf16, #tpu.memory_space<vmem>>, vector<4x128xbf16>
    %c2 = arith.constant 2 : index
    %c1_18 = arith.constant 1 : index
    %c0_19 = arith.constant 0 : index
    %18 = vector.load %arg10[%c2, %c1_18, %c0_19] : memref<6x6x128xbf16, #tpu.memory_space<vmem>>, vector<1x4x128xbf16>
    %19 = vector.shape_cast %18 : vector<1x4x128xbf16> to vector<4x128xbf16>
    %20 = vector.shape_cast %17 : vector<4x128xbf16> to vector<1x4x128xbf16>
    tpu.vector_store %arg10[%c2, %c1_18, %c0_19], %20 {strides = array<i32>} : memref<6x6x128xbf16, #tpu.memory_space<vmem>>, vector<1x4x128xbf16>,
    %c8 = arith.constant 8 : index
    %c0_20 = arith.constant 0 : index
    %21 = vector.load %arg9[%c8, %c0_20] : memref<16x128xbf16, #tpu.memory_space<vmem>>, vector<4x128xbf16>
    %c3 = arith.constant 3 : index
    %c1_21 = arith.constant 1 : index
    %c0_22 = arith.constant 0 : index
    %22 = vector.load %arg10[%c3, %c1_21, %c0_22] : memref<6x6x128xbf16, #tpu.memory_space<vmem>>, vector<1x4x128xbf16>
    %23 = vector.shape_cast %22 : vector<1x4x128xbf16> to vector<4x128xbf16>
    %24 = vector.shape_cast %21 : vector<4x128xbf16> to vector<1x4x128xbf16>
    tpu.vector_store %arg10[%c3, %c1_21, %c0_22], %24 {strides = array<i32>} : memref<6x6x128xbf16, #tpu.memory_space<vmem>>, vector<1x4x128xbf16>,
    %c12 = arith.constant 12 : index
    %c0_23 = arith.constant 0 : index
    %25 = vector.load %arg9[%c12, %c0_23] : memref<16x128xbf16, #tpu.memory_space<vmem>>, vector<4x128xbf16>
    %c4_24 = arith.constant 4 : index
    %c1_25 = arith.constant 1 : index
    %c0_26 = arith.constant 0 : index
    %26 = vector.load %arg10[%c4_24, %c1_25, %c0_26] : memref<6x6x128xbf16, #tpu.memory_space<vmem>>, vector<1x4x128xbf16>
    %27 = vector.shape_cast %26 : vector<1x4x128xbf16> to vector<4x128xbf16>
    %28 = vector.shape_cast %25 : vector<4x128xbf16> to vector<1x4x128xbf16>
    tpu.vector_store %arg10[%c4_24, %c1_25, %c0_26], %28 {strides = array<i32>} : memref<6x6x128xbf16, #tpu.memory_space<vmem>>, vector<1x4x128xbf16>,
    %c0_27 = arith.constant 0 : index
    %c0_28 = arith.constant 0 : index
    %c0_29 = arith.constant 0 : index
    %29 = vector.load %arg10[%c0_27, %c0_28, %c0_29] : memref<6x6x128xbf16, #tpu.memory_space<vmem>>, vector<1x4x128xbf16>
    %30 = vector.shape_cast %29 : vector<1x4x128xbf16> to vector<4x128xbf16>
    %c0_30 = arith.constant 0 : index
    %c1_31 = arith.constant 1 : index
    %c0_32 = arith.constant 0 : index
    %31 = vector.load %arg10[%c0_30, %c1_31, %c0_32] : memref<6x6x128xbf16, #tpu.memory_space<vmem>>, vector<1x4x128xbf16>
    %32 = vector.shape_cast %31 : vector<1x4x128xbf16> to vector<4x128xbf16>
    %c0_33 = arith.constant 0 : index
    %c2_34 = arith.constant 2 : index
    %c0_35 = arith.constant 0 : index
    %33 = vector.load %arg10[%c0_33, %c2_34, %c0_35] : memref<6x6x128xbf16, #tpu.memory_space<vmem>>, vector<1x4x128xbf16>
    %34 = vector.shape_cast %33 : vector<1x4x128xbf16> to vector<4x128xbf16>
    %c1_36 = arith.constant 1 : index
    %c0_37 = arith.constant 0 : index
    %c0_38 = arith.constant 0 : index
    %35 = vector.load %arg10[%c1_36, %c0_37, %c0_38] : memref<6x6x128xbf16, #tpu.memory_space<vmem>>, vector<1x4x128xbf16>
    %36 = vector.shape_cast %35 : vector<1x4x128xbf16> to vector<4x128xbf16>
    %c1_39 = arith.constant 1 : index
    %c1_40 = arith.constant 1 : index
    %c0_41 = arith.constant 0 : index
    %37 = vector.load %arg10[%c1_39, %c1_40, %c0_41] : memref<6x6x128xbf16, #tpu.memory_space<vmem>>, vector<1x4x128xbf16>
    %38 = vector.shape_cast %37 : vector<1x4x128xbf16> to vector<4x128xbf16>
    %c1_42 = arith.constant 1 : index
    %c2_43 = arith.constant 2 : index
    %c0_44 = arith.constant 0 : index
    %39 = vector.load %arg10[%c1_42, %c2_43, %c0_44] : memref<6x6x128xbf16, #tpu.memory_space<vmem>>, vector<1x4x128xbf16>
    %40 = vector.shape_cast %39 : vector<1x4x128xbf16> to vector<4x128xbf16>
    %c2_45 = arith.constant 2 : index
    %c0_46 = arith.constant 0 : index
    %c0_47 = arith.constant 0 : index
    %41 = vector.load %arg10[%c2_45, %c0_46, %c0_47] : memref<6x6x128xbf16, #tpu.memory_space<vmem>>, vector<1x4x128xbf16>
    %42 = vector.shape_cast %41 : vector<1x4x128xbf16> to vector<4x128xbf16>
    %c2_48 = arith.constant 2 : index
    %c1_49 = arith.constant 1 : index
    %c0_50 = arith.constant 0 : index
    %43 = vector.load %arg10[%c2_48, %c1_49, %c0_50] : memref<6x6x128xbf16, #tpu.memory_space<vmem>>, vector<1x4x128xbf16>
    %44 = vector.shape_cast %43 : vector<1x4x128xbf16> to vector<4x128xbf16>
    %c2_51 = arith.constant 2 : index
    %c2_52 = arith.constant 2 : index
    %c0_53 = arith.constant 0 : index
    %45 = vector.load %arg10[%c2_51, %c2_52, %c0_53] : memref<6x6x128xbf16, #tpu.memory_space<vmem>>, vector<1x4x128xbf16>
    %46 = vector.shape_cast %45 : vector<1x4x128xbf16> to vector<4x128xbf16>
    %47 = tpu.concatenate %30, %32, %34, %36, %38, %40, %42, %44, %46 in 1 : vector<4x128xbf16>, vector<4x128xbf16>, vector<4x128xbf16>, vector<4x128xbf16>, vector<4x128xbf16>, vector<4x128xbf16>, vector<4x128xbf16>, vector<4x128xbf16>, vector<4x128xbf16> -> vector<4x1152xbf16>
    %c0_54 = arith.constant 0 : index
    %c0_55 = arith.constant 0 : index
    %48 = vector.load %arg4[%c0_54, %c0_55] : memref<1152x128xbf16, #tpu.memory_space<vmem>>, vector<1152x128xbf16>
    %cst_56 = arith.constant dense<0.000000e+00> : vector<4x128xf32>
    %49 = tpu.matmul %47, %48, %cst_56 {dimension_numbers = #tpu.dot_dimension_numbers<[1], [0], [0], [1], [0, 0, 1, 1], [], []>} : vector<4x1152xbf16>, vector<1152x128xbf16>, vector<4x128xf32> -> vector<4x128xf32>
    %c0_57 = arith.constant 0 : index
    %c0_58 = arith.constant 0 : index
    %50 = vector.load %arg5[%c0_57, %c0_58] : memref<1x128xf32, #tpu.memory_space<vmem>>, vector<1x128xf32>
    %51 = vector.broadcast %50 : vector<1x128xf32> to vector<4x128xf32>
    %52 = arith.addf %49, %51 : vector<4x128xf32>
    %cst_59 = arith.constant 0.000000e+00 : f32
    %53 = vector.broadcast %cst_59 : f32 to vector<4x128xf32>
    %54 = arith.maximumf %52, %53 : vector<4x128xf32>
    %55 = arith.truncf %54 : vector<4x128xf32> to vector<4x128xbf16>
    %c0_60 = arith.constant 0 : index
    %c0_61 = arith.constant 0 : index
    %56 = vector.load %arg11[%c0_60, %c0_61] : memref<16x128xbf16, #tpu.memory_space<vmem>>, vector<4x128xbf16>
    tpu.vector_store %arg11[%c0_60, %c0_61], %55 {strides = array<i32>} : memref<16x128xbf16, #tpu.memory_space<vmem>>, vector<4x128xbf16>,
    %c1_62 = arith.constant 1 : index
    %c0_63 = arith.constant 0 : index
    %c0_64 = arith.constant 0 : index
    %57 = vector.load %arg10[%c1_62, %c0_63, %c0_64] : memref<6x6x128xbf16, #tpu.memory_space<vmem>>, vector<1x4x128xbf16>
    %58 = vector.shape_cast %57 : vector<1x4x128xbf16> to vector<4x128xbf16>
    %c1_65 = arith.constant 1 : index
    %c1_66 = arith.constant 1 : index
    %c0_67 = arith.constant 0 : index
    %59 = vector.load %arg10[%c1_65, %c1_66, %c0_67] : memref<6x6x128xbf16, #tpu.memory_space<vmem>>, vector<1x4x128xbf16>
    %60 = vector.shape_cast %59 : vector<1x4x128xbf16> to vector<4x128xbf16>
    %c1_68 = arith.constant 1 : index
    %c2_69 = arith.constant 2 : index
    %c0_70 = arith.constant 0 : index
    %61 = vector.load %arg10[%c1_68, %c2_69, %c0_70] : memref<6x6x128xbf16, #tpu.memory_space<vmem>>, vector<1x4x128xbf16>
    %62 = vector.shape_cast %61 : vector<1x4x128xbf16> to vector<4x128xbf16>
    %c2_71 = arith.constant 2 : index
    %c0_72 = arith.constant 0 : index
    %c0_73 = arith.constant 0 : index
    %63 = vector.load %arg10[%c2_71, %c0_72, %c0_73] : memref<6x6x128xbf16, #tpu.memory_space<vmem>>, vector<1x4x128xbf16>
    %64 = vector.shape_cast %63 : vector<1x4x128xbf16> to vector<4x128xbf16>
    %c2_74 = arith.constant 2 : index
    %c1_75 = arith.constant 1 : index
    %c0_76 = arith.constant 0 : index
    %65 = vector.load %arg10[%c2_74, %c1_75, %c0_76] : memref<6x6x128xbf16, #tpu.memory_space<vmem>>, vector<1x4x128xbf16>
    %66 = vector.shape_cast %65 : vector<1x4x128xbf16> to vector<4x128xbf16>
    %c2_77 = arith.constant 2 : index
    %c2_78 = arith.constant 2 : index
    %c0_79 = arith.constant 0 : index
    %67 = vector.load %arg10[%c2_77, %c2_78, %c0_79] : memref<6x6x128xbf16, #tpu.memory_space<vmem>>, vector<1x4x128xbf16>
    %68 = vector.shape_cast %67 : vector<1x4x128xbf16> to vector<4x128xbf16>
    %c3_80 = arith.constant 3 : index
    %c0_81 = arith.constant 0 : index
    %c0_82 = arith.constant 0 : index
    %69 = vector.load %arg10[%c3_80, %c0_81, %c0_82] : memref<6x6x128xbf16, #tpu.memory_space<vmem>>, vector<1x4x128xbf16>
    %70 = vector.shape_cast %69 : vector<1x4x128xbf16> to vector<4x128xbf16>
    %c3_83 = arith.constant 3 : index
    %c1_84 = arith.constant 1 : index
    %c0_85 = arith.constant 0 : index
    %71 = vector.load %arg10[%c3_83, %c1_84, %c0_85] : memref<6x6x128xbf16, #tpu.memory_space<vmem>>, vector<1x4x128xbf16>
    %72 = vector.shape_cast %71 : vector<1x4x128xbf16> to vector<4x128xbf16>
    %c3_86 = arith.constant 3 : index
    %c2_87 = arith.constant 2 : index
    %c0_88 = arith.constant 0 : index
    %73 = vector.load %arg10[%c3_86, %c2_87, %c0_88] : memref<6x6x128xbf16, #tpu.memory_space<vmem>>, vector<1x4x128xbf16>
    %74 = vector.shape_cast %73 : vector<1x4x128xbf16> to vector<4x128xbf16>
    %75 = tpu.concatenate %58, %60, %62, %64, %66, %68, %70, %72, %74 in 1 : vector<4x128xbf16>, vector<4x128xbf16>, vector<4x128xbf16>, vector<4x128xbf16>, vector<4x128xbf16>, vector<4x128xbf16>, vector<4x128xbf16>, vector<4x128xbf16>, vector<4x128xbf16> -> vector<4x1152xbf16>
    %c0_89 = arith.constant 0 : index
    %c0_90 = arith.constant 0 : index
    %76 = vector.load %arg4[%c0_89, %c0_90] : memref<1152x128xbf16, #tpu.memory_space<vmem>>, vector<1152x128xbf16>
    %cst_91 = arith.constant dense<0.000000e+00> : vector<4x128xf32>
    %77 = tpu.matmul %75, %76, %cst_91 {dimension_numbers = #tpu.dot_dimension_numbers<[1], [0], [0], [1], [0, 0, 1, 1], [], []>} : vector<4x1152xbf16>, vector<1152x128xbf16>, vector<4x128xf32> -> vector<4x128xf32>
    %c0_92 = arith.constant 0 : index
    %c0_93 = arith.constant 0 : index
    %78 = vector.load %arg5[%c0_92, %c0_93] : memref<1x128xf32, #tpu.memory_space<vmem>>, vector<1x128xf32>
    %79 = vector.broadcast %78 : vector<1x128xf32> to vector<4x128xf32>
    %80 = arith.addf %77, %79 : vector<4x128xf32>
    %cst_94 = arith.constant 0.000000e+00 : f32
    %81 = vector.broadcast %cst_94 : f32 to vector<4x128xf32>
    %82 = arith.maximumf %80, %81 : vector<4x128xf32>
    %83 = arith.truncf %82 : vector<4x128xf32> to vector<4x128xbf16>
    %c4_95 = arith.constant 4 : index
    %c0_96 = arith.constant 0 : index
    %84 = vector.load %arg11[%c4_95, %c0_96] : memref<16x128xbf16, #tpu.memory_space<vmem>>, vector<4x128xbf16>
    tpu.vector_store %arg11[%c4_95, %c0_96], %83 {strides = array<i32>} : memref<16x128xbf16, #tpu.memory_space<vmem>>, vector<4x128xbf16>,
    %c2_97 = arith.constant 2 : index
    %c0_98 = arith.constant 0 : index
    %c0_99 = arith.constant 0 : index
    %85 = vector.load %arg10[%c2_97, %c0_98, %c0_99] : memref<6x6x128xbf16, #tpu.memory_space<vmem>>, vector<1x4x128xbf16>
    %86 = vector.shape_cast %85 : vector<1x4x128xbf16> to vector<4x128xbf16>
    %c2_100 = arith.constant 2 : index
    %c1_101 = arith.constant 1 : index
    %c0_102 = arith.constant 0 : index
    %87 = vector.load %arg10[%c2_100, %c1_101, %c0_102] : memref<6x6x128xbf16, #tpu.memory_space<vmem>>, vector<1x4x128xbf16>
    %88 = vector.shape_cast %87 : vector<1x4x128xbf16> to vector<4x128xbf16>
    %c2_103 = arith.constant 2 : index
    %c2_104 = arith.constant 2 : index
    %c0_105 = arith.constant 0 : index
    %89 = vector.load %arg10[%c2_103, %c2_104, %c0_105] : memref<6x6x128xbf16, #tpu.memory_space<vmem>>, vector<1x4x128xbf16>
    %90 = vector.shape_cast %89 : vector<1x4x128xbf16> to vector<4x128xbf16>
    %c3_106 = arith.constant 3 : index
    %c0_107 = arith.constant 0 : index
    %c0_108 = arith.constant 0 : index
    %91 = vector.load %arg10[%c3_106, %c0_107, %c0_108] : memref<6x6x128xbf16, #tpu.memory_space<vmem>>, vector<1x4x128xbf16>
    %92 = vector.shape_cast %91 : vector<1x4x128xbf16> to vector<4x128xbf16>
    %c3_109 = arith.constant 3 : index
    %c1_110 = arith.constant 1 : index
    %c0_111 = arith.constant 0 : index
    %93 = vector.load %arg10[%c3_109, %c1_110, %c0_111] : memref<6x6x128xbf16, #tpu.memory_space<vmem>>, vector<1x4x128xbf16>
    %94 = vector.shape_cast %93 : vector<1x4x128xbf16> to vector<4x128xbf16>
    %c3_112 = arith.constant 3 : index
    %c2_113 = arith.constant 2 : index
    %c0_114 = arith.constant 0 : index
    %95 = vector.load %arg10[%c3_112, %c2_113, %c0_114] : memref<6x6x128xbf16, #tpu.memory_space<vmem>>, vector<1x4x128xbf16>
    %96 = vector.shape_cast %95 : vector<1x4x128xbf16> to vector<4x128xbf16>
    %c4_115 = arith.constant 4 : index
    %c0_116 = arith.constant 0 : index
    %c0_117 = arith.constant 0 : index
    %97 = vector.load %arg10[%c4_115, %c0_116, %c0_117] : memref<6x6x128xbf16, #tpu.memory_space<vmem>>, vector<1x4x128xbf16>
    %98 = vector.shape_cast %97 : vector<1x4x128xbf16> to vector<4x128xbf16>
    %c4_118 = arith.constant 4 : index
    %c1_119 = arith.constant 1 : index
    %c0_120 = arith.constant 0 : index
    %99 = vector.load %arg10[%c4_118, %c1_119, %c0_120] : memref<6x6x128xbf16, #tpu.memory_space<vmem>>, vector<1x4x128xbf16>
    %100 = vector.shape_cast %99 : vector<1x4x128xbf16> to vector<4x128xbf16>
    %c4_121 = arith.constant 4 : index
    %c2_122 = arith.constant 2 : index
    %c0_123 = arith.constant 0 : index
    %101 = vector.load %arg10[%c4_121, %c2_122, %c0_123] : memref<6x6x128xbf16, #tpu.memory_space<vmem>>, vector<1x4x128xbf16>
    %102 = vector.shape_cast %101 : vector<1x4x128xbf16> to vector<4x128xbf16>
    %103 = tpu.concatenate %86, %88, %90, %92, %94, %96, %98, %100, %102 in 1 : vector<4x128xbf16>, vector<4x128xbf16>, vector<4x128xbf16>, vector<4x128xbf16>, vector<4x128xbf16>, vector<4x128xbf16>, vector<4x128xbf16>, vector<4x128xbf16>, vector<4x128xbf16> -> vector<4x1152xbf16>
    %c0_124 = arith.constant 0 : index
    %c0_125 = arith.constant 0 : index
    %104 = vector.load %arg4[%c0_124, %c0_125] : memref<1152x128xbf16, #tpu.memory_space<vmem>>, vector<1152x128xbf16>
    %cst_126 = arith.constant dense<0.000000e+00> : vector<4x128xf32>
    %105 = tpu.matmul %103, %104, %cst_126 {dimension_numbers = #tpu.dot_dimension_numbers<[1], [0], [0], [1], [0, 0, 1, 1], [], []>} : vector<4x1152xbf16>, vector<1152x128xbf16>, vector<4x128xf32> -> vector<4x128xf32>
    %c0_127 = arith.constant 0 : index
    %c0_128 = arith.constant 0 : index
    %106 = vector.load %arg5[%c0_127, %c0_128] : memref<1x128xf32, #tpu.memory_space<vmem>>, vector<1x128xf32>
    %107 = vector.broadcast %106 : vector<1x128xf32> to vector<4x128xf32>
    %108 = arith.addf %105, %107 : vector<4x128xf32>
    %cst_129 = arith.constant 0.000000e+00 : f32
    %109 = vector.broadcast %cst_129 : f32 to vector<4x128xf32>
    %110 = arith.maximumf %108, %109 : vector<4x128xf32>
    %111 = arith.truncf %110 : vector<4x128xf32> to vector<4x128xbf16>
    %c8_130 = arith.constant 8 : index
    %c0_131 = arith.constant 0 : index
    %112 = vector.load %arg11[%c8_130, %c0_131] : memref<16x128xbf16, #tpu.memory_space<vmem>>, vector<4x128xbf16>
    tpu.vector_store %arg11[%c8_130, %c0_131], %111 {strides = array<i32>} : memref<16x128xbf16, #tpu.memory_space<vmem>>, vector<4x128xbf16>,
    %c3_132 = arith.constant 3 : index
    %c0_133 = arith.constant 0 : index
    %c0_134 = arith.constant 0 : index
    %113 = vector.load %arg10[%c3_132, %c0_133, %c0_134] : memref<6x6x128xbf16, #tpu.memory_space<vmem>>, vector<1x4x128xbf16>
    %114 = vector.shape_cast %113 : vector<1x4x128xbf16> to vector<4x128xbf16>
    %c3_135 = arith.constant 3 : index
    %c1_136 = arith.constant 1 : index
    %c0_137 = arith.constant 0 : index
    %115 = vector.load %arg10[%c3_135, %c1_136, %c0_137] : memref<6x6x128xbf16, #tpu.memory_space<vmem>>, vector<1x4x128xbf16>
    %116 = vector.shape_cast %115 : vector<1x4x128xbf16> to vector<4x128xbf16>
    %c3_138 = arith.constant 3 : index
    %c2_139 = arith.constant 2 : index
    %c0_140 = arith.constant 0 : index
    %117 = vector.load %arg10[%c3_138, %c2_139, %c0_140] : memref<6x6x128xbf16, #tpu.memory_space<vmem>>, vector<1x4x128xbf16>
    %118 = vector.shape_cast %117 : vector<1x4x128xbf16> to vector<4x128xbf16>
    %c4_141 = arith.constant 4 : index
    %c0_142 = arith.constant 0 : index
    %c0_143 = arith.constant 0 : index
    %119 = vector.load %arg10[%c4_141, %c0_142, %c0_143] : memref<6x6x128xbf16, #tpu.memory_space<vmem>>, vector<1x4x128xbf16>
    %120 = vector.shape_cast %119 : vector<1x4x128xbf16> to vector<4x128xbf16>
    %c4_144 = arith.constant 4 : index
    %c1_145 = arith.constant 1 : index
    %c0_146 = arith.constant 0 : index
    %121 = vector.load %arg10[%c4_144, %c1_145, %c0_146] : memref<6x6x128xbf16, #tpu.memory_space<vmem>>, vector<1x4x128xbf16>
    %122 = vector.shape_cast %121 : vector<1x4x128xbf16> to vector<4x128xbf16>
    %c4_147 = arith.constant 4 : index
    %c2_148 = arith.constant 2 : index
    %c0_149 = arith.constant 0 : index
    %123 = vector.load %arg10[%c4_147, %c2_148, %c0_149] : memref<6x6x128xbf16, #tpu.memory_space<vmem>>, vector<1x4x128xbf16>
    %124 = vector.shape_cast %123 : vector<1x4x128xbf16> to vector<4x128xbf16>
    %c5 = arith.constant 5 : index
    %c0_150 = arith.constant 0 : index
    %c0_151 = arith.constant 0 : index
    %125 = vector.load %arg10[%c5, %c0_150, %c0_151] : memref<6x6x128xbf16, #tpu.memory_space<vmem>>, vector<1x4x128xbf16>
    %126 = vector.shape_cast %125 : vector<1x4x128xbf16> to vector<4x128xbf16>
    %c5_152 = arith.constant 5 : index
    %c1_153 = arith.constant 1 : index
    %c0_154 = arith.constant 0 : index
    %127 = vector.load %arg10[%c5_152, %c1_153, %c0_154] : memref<6x6x128xbf16, #tpu.memory_space<vmem>>, vector<1x4x128xbf16>
    %128 = vector.shape_cast %127 : vector<1x4x128xbf16> to vector<4x128xbf16>
    %c5_155 = arith.constant 5 : index
    %c2_156 = arith.constant 2 : index
    %c0_157 = arith.constant 0 : index
    %129 = vector.load %arg10[%c5_155, %c2_156, %c0_157] : memref<6x6x128xbf16, #tpu.memory_space<vmem>>, vector<1x4x128xbf16>
    %130 = vector.shape_cast %129 : vector<1x4x128xbf16> to vector<4x128xbf16>
    %131 = tpu.concatenate %114, %116, %118, %120, %122, %124, %126, %128, %130 in 1 : vector<4x128xbf16>, vector<4x128xbf16>, vector<4x128xbf16>, vector<4x128xbf16>, vector<4x128xbf16>, vector<4x128xbf16>, vector<4x128xbf16>, vector<4x128xbf16>, vector<4x128xbf16> -> vector<4x1152xbf16>
    %c0_158 = arith.constant 0 : index
    %c0_159 = arith.constant 0 : index
    %132 = vector.load %arg4[%c0_158, %c0_159] : memref<1152x128xbf16, #tpu.memory_space<vmem>>, vector<1152x128xbf16>
    %cst_160 = arith.constant dense<0.000000e+00> : vector<4x128xf32>
    %133 = tpu.matmul %131, %132, %cst_160 {dimension_numbers = #tpu.dot_dimension_numbers<[1], [0], [0], [1], [0, 0, 1, 1], [], []>} : vector<4x1152xbf16>, vector<1152x128xbf16>, vector<4x128xf32> -> vector<4x128xf32>
    %c0_161 = arith.constant 0 : index
    %c0_162 = arith.constant 0 : index
    %134 = vector.load %arg5[%c0_161, %c0_162] : memref<1x128xf32, #tpu.memory_space<vmem>>, vector<1x128xf32>
    %135 = vector.broadcast %134 : vector<1x128xf32> to vector<4x128xf32>
    %136 = arith.addf %133, %135 : vector<4x128xf32>
    %cst_163 = arith.constant 0.000000e+00 : f32
    %137 = vector.broadcast %cst_163 : f32 to vector<4x128xf32>
    %138 = arith.maximumf %136, %137 : vector<4x128xf32>
    %139 = arith.truncf %138 : vector<4x128xf32> to vector<4x128xbf16>
    %c12_164 = arith.constant 12 : index
    %c0_165 = arith.constant 0 : index
    %140 = vector.load %arg11[%c12_164, %c0_165] : memref<16x128xbf16, #tpu.memory_space<vmem>>, vector<4x128xbf16>
    tpu.vector_store %arg11[%c12_164, %c0_165], %139 {strides = array<i32>} : memref<16x128xbf16, #tpu.memory_space<vmem>>, vector<4x128xbf16>,
    %c0_166 = arith.constant 0 : index
    %c0_167 = arith.constant 0 : index
    %141 = vector.load %arg11[%c0_166, %c0_167] : memref<16x128xbf16, #tpu.memory_space<vmem>>, vector<16x128xbf16>
    %c0_168 = arith.constant 0 : index
    %c0_169 = arith.constant 0 : index
    %142 = vector.load %arg6[%c0_168, %c0_169] : memref<128x512xbf16, #tpu.memory_space<vmem>>, vector<128x512xbf16>
    %cst_170 = arith.constant dense<0.000000e+00> : vector<16x512xf32>
    %143 = tpu.matmul %141, %142, %cst_170 {dimension_numbers = #tpu.dot_dimension_numbers<[1], [0], [0], [1], [0, 0, 1, 1], [], []>} : vector<16x128xbf16>, vector<128x512xbf16>, vector<16x512xf32> -> vector<16x512xf32>
    %c0_171 = arith.constant 0 : index
    %c0_172 = arith.constant 0 : index
    %144 = vector.load %arg7[%c0_171, %c0_172] : memref<1x512xf32, #tpu.memory_space<vmem>>, vector<1x512xf32>
    %145 = vector.broadcast %144 : vector<1x512xf32> to vector<16x512xf32>
    %146 = arith.addf %143, %145 : vector<16x512xf32>
    %147 = arith.extf %1 : vector<16x512xbf16> to vector<16x512xf32>
    %148 = arith.addf %146, %147 : vector<16x512xf32>
    %cst_173 = arith.constant 0.000000e+00 : f32
    %149 = vector.broadcast %cst_173 : f32 to vector<16x512xf32>
    %150 = arith.maximumf %148, %149 : vector<16x512xf32>
    %151 = arith.truncf %150 : vector<16x512xf32> to vector<16x512xbf16>
    %c0_174 = arith.constant 0 : index
    %c0_175 = arith.constant 0 : index
    %c0_176 = arith.constant 0 : index
    %152 = vector.load %arg8[%c0_174, %c0_175, %c0_176] : memref<1x16x512xbf16, #tpu.memory_space<vmem>>, vector<1x16x512xbf16>
    %153 = vector.shape_cast %152 : vector<1x16x512xbf16> to vector<16x512xbf16>
    %154 = vector.shape_cast %151 : vector<16x512xbf16> to vector<1x16x512xbf16>
    tpu.vector_store %arg8[%c0_174, %c0_175, %c0_176], %154 {strides = array<i32>} : memref<1x16x512xbf16, #tpu.memory_space<vmem>>, vector<1x16x512xbf16>,
    return
  }
  func.func @transform_0(%arg0: i32) -> (i32, i32, i32) {
    %c0_i32 = arith.constant 0 : i32
    %c0_i32_0 = arith.constant 0 : i32
    %c0_i32_1 = arith.constant 0 : i32
    return %arg0, %c0_i32, %c0_i32_0 : i32, i32, i32
  }
  func.func @transform_1(%arg0: i32) -> (i32, i32) {
    %c0_i32 = arith.constant 0 : i32
    %c0_i32_0 = arith.constant 0 : i32
    %c0_i32_1 = arith.constant 0 : i32
    return %c0_i32, %c0_i32_0 : i32, i32
  }
  func.func @transform_2(%arg0: i32) -> (i32, i32) {
    %c0_i32 = arith.constant 0 : i32
    %c0_i32_0 = arith.constant 0 : i32
    %c0_i32_1 = arith.constant 0 : i32
    return %c0_i32, %c0_i32_0 : i32, i32
  }
  func.func @transform_3(%arg0: i32) -> (i32, i32) {
    %c0_i32 = arith.constant 0 : i32
    %c0_i32_0 = arith.constant 0 : i32
    %c0_i32_1 = arith.constant 0 : i32
    return %c0_i32, %c0_i32_0 : i32, i32
  }
  func.func @transform_4(%arg0: i32) -> (i32, i32) {
    %c0_i32 = arith.constant 0 : i32
    %c0_i32_0 = arith.constant 0 : i32
    %c0_i32_1 = arith.constant 0 : i32
    return %c0_i32, %c0_i32_0 : i32, i32
  }
  func.func @transform_5(%arg0: i32) -> (i32, i32) {
    %c0_i32 = arith.constant 0 : i32
    %c0_i32_0 = arith.constant 0 : i32
    %c0_i32_1 = arith.constant 0 : i32
    return %c0_i32, %c0_i32_0 : i32, i32
  }
  func.func @transform_6(%arg0: i32) -> (i32, i32) {
    %c0_i32 = arith.constant 0 : i32
    %c0_i32_0 = arith.constant 0 : i32
    %c0_i32_1 = arith.constant 0 : i32
    return %c0_i32, %c0_i32_0 : i32, i32
  }
  func.func @transform_7(%arg0: i32) -> (i32, i32, i32) {
    %c0_i32 = arith.constant 0 : i32
    %c0_i32_0 = arith.constant 0 : i32
    %c0_i32_1 = arith.constant 0 : i32
    return %arg0, %c0_i32, %c0_i32_0 : i32, i32, i32
  }
}

module attributes {stable_mosaic.version = 11 : i64} {
  func.func @head_kernel(%arg0: i32, %arg1: memref<2x16x512xbf16, #tpu.memory_space<vmem>>, %arg2: memref<512x128xf32, #tpu.memory_space<vmem>>, %arg3: memref<1x128xf32, #tpu.memory_space<vmem>>, %arg4: memref<2x128xf32, #tpu.memory_space<vmem>>) attributes {dimension_semantics = [#tpu.dimension_semantics<arbitrary>], iteration_bounds = array<i64: 1>, scalar_prefetch = 0 : i64, scratch_operands = 0 : i64, tpu.core_type = #tpu.core_type<tc>, window_params = [{pipeline_mode = #tpu.pipeline_mode<synchronous>, transform_indices = @transform_0, window_bounds = array<i64: 2, 16, 512>}, {pipeline_mode = #tpu.pipeline_mode<synchronous>, transform_indices = @transform_1, window_bounds = array<i64: 512, 128>}, {pipeline_mode = #tpu.pipeline_mode<synchronous>, transform_indices = @transform_2, window_bounds = array<i64: 1, 128>}, {pipeline_mode = #tpu.pipeline_mode<synchronous>, transform_indices = @transform_3, window_bounds = array<i64: 2, 128>}]} {
    %c0 = arith.constant 0 : index
    %c0_0 = arith.constant 0 : index
    %c0_1 = arith.constant 0 : index
    %0 = vector.load %arg1[%c0, %c0_0, %c0_1] : memref<2x16x512xbf16, #tpu.memory_space<vmem>>, vector<2x16x512xbf16>
    %1 = arith.extf %0 : vector<2x16x512xbf16> to vector<2x16x512xf32>
    %cst = arith.constant dense<0.000000e+00> : vector<2x512xf32>
    %2 = vector.multi_reduction <add>, %1, %cst [1] : vector<2x16x512xf32> to vector<2x512xf32>
    %c0_2 = arith.constant 0 : index
    %c0_3 = arith.constant 0 : index
    %3 = vector.load %arg2[%c0_2, %c0_3] : memref<512x128xf32, #tpu.memory_space<vmem>>, vector<512x128xf32>
    %cst_4 = arith.constant dense<0.000000e+00> : vector<2x128xf32>
    %4 = tpu.matmul %2, %3, %cst_4 {dimension_numbers = #tpu.dot_dimension_numbers<[1], [0], [0], [1], [0, 0, 1, 1], [], []>} : vector<2x512xf32>, vector<512x128xf32>, vector<2x128xf32> -> vector<2x128xf32>
    %c0_5 = arith.constant 0 : index
    %c0_6 = arith.constant 0 : index
    %5 = vector.load %arg3[%c0_5, %c0_6] : memref<1x128xf32, #tpu.memory_space<vmem>>, vector<1x128xf32>
    %6 = vector.broadcast %5 : vector<1x128xf32> to vector<2x128xf32>
    %7 = arith.addf %4, %6 : vector<2x128xf32>
    %8 = tpu.iota {dimensions = array<i32: 1>} : vector<2x128xi32>
    %c3_i32 = arith.constant 3 : i32
    %9 = vector.broadcast %c3_i32 : i32 to vector<2x128xi32>
    %10 = arith.cmpi slt, %8, %9 : vector<2x128xi32>
    %cst_7 = arith.constant -1.000000e+30 : f32
    %11 = vector.broadcast %cst_7 : f32 to vector<2x128xf32>
    %12 = arith.select %10, %7, %11 : vector<2x128xi1>, vector<2x128xf32>
    %cst_8 = arith.constant dense<0xFF800000> : vector<2xf32>
    %13 = vector.multi_reduction <maximumf>, %12, %cst_8 [1] : vector<2x128xf32> to vector<2xf32>
    %14 = vector.shape_cast %13 : vector<2xf32> to vector<2x1xf32>
    %15 = vector.broadcast %14 : vector<2x1xf32> to vector<2x128xf32>
    %16 = arith.subf %12, %15 : vector<2x128xf32>
    %17 = math.exp %16 : vector<2x128xf32>
    %cst_9 = arith.constant dense<0.000000e+00> : vector<2xf32>
    %18 = vector.multi_reduction <add>, %17, %cst_9 [1] : vector<2x128xf32> to vector<2xf32>
    %19 = vector.shape_cast %18 : vector<2xf32> to vector<2x1xf32>
    %20 = vector.broadcast %19 : vector<2x1xf32> to vector<2x128xf32>
    %21 = arith.divf %17, %20 : vector<2x128xf32>
    %c0_10 = arith.constant 0 : index
    %c0_11 = arith.constant 0 : index
    %22 = vector.load %arg4[%c0_10, %c0_11] : memref<2x128xf32, #tpu.memory_space<vmem>>, vector<2x128xf32>
    tpu.vector_store %arg4[%c0_10, %c0_11], %21 {strides = array<i32>} : memref<2x128xf32, #tpu.memory_space<vmem>>, vector<2x128xf32>,
    return
  }
  func.func @transform_0(%arg0: i32) -> (i32, i32, i32) {
    %c0_i32 = arith.constant 0 : i32
    %c0_i32_0 = arith.constant 0 : i32
    %c0_i32_1 = arith.constant 0 : i32
    %c0_i32_2 = arith.constant 0 : i32
    return %c0_i32, %c0_i32_0, %c0_i32_1 : i32, i32, i32
  }
  func.func @transform_1(%arg0: i32) -> (i32, i32) {
    %c0_i32 = arith.constant 0 : i32
    %c0_i32_0 = arith.constant 0 : i32
    %c0_i32_1 = arith.constant 0 : i32
    return %c0_i32, %c0_i32_0 : i32, i32
  }
  func.func @transform_2(%arg0: i32) -> (i32, i32) {
    %c0_i32 = arith.constant 0 : i32
    %c0_i32_0 = arith.constant 0 : i32
    %c0_i32_1 = arith.constant 0 : i32
    return %c0_i32, %c0_i32_0 : i32, i32
  }
  func.func @transform_3(%arg0: i32) -> (i32, i32) {
    %c0_i32 = arith.constant 0 : i32
    %c0_i32_0 = arith.constant 0 : i32
    %c0_i32_1 = arith.constant 0 : i32
    return %c0_i32, %c0_i32_0 : i32, i32
  }
}

</mosaic_0001>

<llo_original>
// kernel: _lambda_.7
$region0: #{_lambda_.7}
  #allocation0 [shape = 'u32[]', space=smem, size = 0x4, offset = 0x4, fixed_abs, tag = 'smem constant byte address 0x4 - core index']
  #allocation1 [shape = 'u32[144,128]{1,0:T(1,128)}', space=vmem, size = 0x12000, scoped, tag = 'internal scratch']
  %s0 = inlined_call_operand.vmem [shape: bf16[128,256], index: 0, kind: input, shape index: {}]
  %s1 = inlined_call_operand.vmem [shape: bf16[256,128], index: 1, kind: input, shape index: {}]
  %s2 = inlined_call_operand.vmem [shape: f32[1,128], index: 2, kind: input, shape index: {}]
  %s3 = inlined_call_operand.vmem [shape: bf16[128,128], index: 3, kind: output, shape index: {}]
  %s4 = sld [smem:[#allocation0]]
  $region45: #{_lambda_.7} parent=0
    _
  %s6 = ssub.s32 1, %s4
  %s7 = scalar_select 0, %s6, %s4
  loop: start=0, step=1, limit=4
  $region2: #{_lambda_.7} parent=0 // loop_pre_header
    _
  $region3: #{_lambda_.7} parent=0 // loop_header
    %s9 = sphi 0, %s13
    %p10 = scmp.ge.s32.totalorder %s9, 4
    %s16 = sphi 0, %s28
    %s17 = sphi 0, %s24
    %s18 = sphi 0, %s16
    %s19 = sphi 0, %s17
    %s20 = sphi 0, %s18
    %s21 = sphi 0, %s19
    %s31 = sphi 0, %s33
    %s34 = sphi 0, %s31
    %s35 = sphi 0, %s34
    %s51 = sphi 0, %s35
    %s57 = sphi 0, %s59
    %s60 = sphi 0, %s57
    %s61 = sphi 0, %s60
    %s77 = sphi 0, %s61
    %s83 = sphi 0, %s85
    %s86 = sphi 0, %s83
    %s87 = sphi 0, %s86
    %s103 = sphi 0, %s87
    %s111 = sphi 0, %s113
    %s114 = sphi 0, %s111
    %s115 = sphi 0, %s114
    %s131 = sphi 0, %s115
  $region4: #{_lambda_.7} parent=0 // loop_header_branch
    %12 = sbr.rel (%p10) target = $region8
  $region5: #{_lambda_.7} parent=0 // loop_body
    %s14 = ssub.s32 %s9, 1
    %s15 = ssub.s32 %s9, 2
    %s22 = sadd.s32 1, %s17
    %p23 = scmp.ge.s32.totalorder %s22, 1
    %s24 = scalar_select %p23, 0, %s22
    %s25 = sadd.s32 1, %s16
    %s26 = scalar_select %p23, %s25, %s16
    %p27 = scmp.ge.s32.totalorder %s26, 2
    %s28 = scalar_select %p27, 0, %s26
    %s29 = ssub.s32 %s16, %s28
    %p30 = scmp.eq.s32.totalorder %s29, 0
    %s32 = sadd.s32 %s31, 1
    %s33 = scalar_select %p30, %s31, %s32
    %p36 = pneg %p30
    %p37 = scmp.eq.s32.totalorder %s9, 1
    %p38 = por %p36, %p37
    %p39 = scmp.ne.s32.totalorder %s31, %s34
    %p40 = scmp.eq.s32.totalorder %s9, 0
    %p41 = por %p39, %p40
    %p42 = scmp.ne.s32.totalorder %s31, %s34
    %p43 = scmp.eq.s32.totalorder %s14, 1
    %p44 = por %p42, %p43
    %p45 = scmp.ne.s32.totalorder %s34, %s35
    %p46 = scmp.eq.s32.totalorder %s14, 0
    %p47 = por %p45, %p46
    %p48 = scmp.ne.s32.totalorder %s34, %s35
    %p49 = scmp.eq.s32.totalorder %s15, 1
    %p50 = por %p48, %p49
    %p52 = scmp.ne.s32.totalorder %s35, %s51
    %p53 = scmp.eq.s32.totalorder %s15, 0
    %p54 = por %p52, %p53
    %s55 = ssub.s32 %s17, %s24
    %p56 = scmp.eq.s32.totalorder %s55, 0
    %s58 = sadd.s32 %s57, 1
    %s59 = scalar_select %p56, %s57, %s58
    %p62 = pneg %p56
    %p63 = scmp.eq.s32.totalorder %s9, 1
    %p64 = por %p62, %p63
    %p65 = scmp.ne.s32.totalorder %s57, %s60
    %p66 = scmp.eq.s32.totalorder %s9, 0
    %p67 = por %p65, %p66
    %p68 = scmp.ne.s32.totalorder %s57, %s60
    %p69 = scmp.eq.s32.totalorder %s14, 1
    %p70 = por %p68, %p69
    %p71 = scmp.ne.s32.totalorder %s60, %s61
    %p72 = scmp.eq.s32.totalorder %s14, 0
    %p73 = por %p71, %p72
    %p74 = scmp.ne.s32.totalorder %s60, %s61
    %p75 = scmp.eq.s32.totalorder %s15, 1
    %p76 = por %p74, %p75
    %p78 = scmp.ne.s32.totalorder %s61, %s77
    %p79 = scmp.eq.s32.totalorder %s15, 0
    %p80 = por %p78, %p79
    %s81 = ssub.s32 %s17, %s24
    %p82 = scmp.eq.s32.totalorder %s81, 0
    %s84 = sadd.s32 %s83, 1
    %s85 = scalar_select %p82, %s83, %s84
    %p88 = pneg %p82
    %p89 = scmp.eq.s32.totalorder %s9, 1
    %p90 = por %p88, %p89
    %p91 = scmp.ne.s32.totalorder %s83, %s86
    %p92 = scmp.eq.s32.totalorder %s9, 0
    %p93 = por %p91, %p92
    %p94 = scmp.ne.s32.totalorder %s83, %s86
    %p95 = scmp.eq.s32.totalorder %s14, 1
    %p96 = por %p94, %p95
    %p97 = scmp.ne.s32.totalorder %s86, %s87
    %p98 = scmp.eq.s32.totalorder %s14, 0
    %p99 = por %p97, %p98
    %p100 = scmp.ne.s32.totalorder %s86, %s87
    %p101 = scmp.eq.s32.totalorder %s15, 1
    %p102 = por %p100, %p101
    %p104 = scmp.ne.s32.totalorder %s87, %s103
    %p105 = scmp.eq.s32.totalorder %s15, 0
    %p106 = por %p104, %p105
    %s107 = ssub.s32 %s16, %s28
    %s108 = ssub.s32 %s17, %s24
    %s109 = sor.u32 %s107, %s108
    %p110 = scmp.eq.s32.totalorder %s109, 0
    %s112 = sadd.s32 %s111, 1
    %s113 = scalar_select %p110, %s111, %s112
    %p116 = pneg %p110
    %p117 = scmp.eq.s32.totalorder %s9, 1
    %p118 = por %p116, %p117
    %p119 = scmp.ne.s32.totalorder %s111, %s114
    %p120 = scmp.eq.s32.totalorder %s9, 0
    %p121 = por %p119, %p120
    %p122 = scmp.ne.s32.totalorder %s111, %s114
    %p123 = scmp.eq.s32.totalorder %s14, 1
    %p124 = por %p122, %p123
    %p125 = scmp.ne.s32.totalorder %s114, %s115
    %p126 = scmp.eq.s32.totalorder %s14, 0
    %p127 = por %p125, %p126
    %p128 = scmp.ne.s32.totalorder %s114, %s115
    %p129 = scmp.eq.s32.totalorder %s15, 1
    %p130 = por %p128, %p129
    %p132 = scmp.ne.s32.totalorder %s115, %s131
    %p133 = scmp.eq.s32.totalorder %s15, 0
    %p134 = por %p132, %p133
    %p135 = scmp.le.s32.totalorder 1, %s9
    %p136 = scmp.lt.s32.totalorder %s9, 3
    %p137 = pnand %p135, %p136
    %p138 = pneg %p137
    // Predicated region
    $region9: #{_lambda_.7} parent=5 // pred_check
      _
    $region10: #{_lambda_.7} parent=5 // pred_check_branch
      %140 = sbr.rel (%p137) target = $region12
    $region11: #{_lambda_.7} parent=5 // pred_region
      %s141 = ssub.s32 %s9, 1
      // Predicated region
      $region13: #{_lambda_.7} parent=11 // pred_check
        %p142 = pneg %p73
      $region14: #{_lambda_.7} parent=11 // pred_check_branch
        %144 = sbr.rel (%p142) target = $region16
      $region15: #{_lambda_.7} parent=11 // pred_region
        %p145 = scmp.lt.s32.totalorder %s19, 0
        %s146 = scalar_select %p145, %s19, 0
        %s147 = smul.addr %s146, 4
        %s148 = scalar_lea.vmem %s1, %s147
      $region16: #{_lambda_.7} parent=11 // pred_fallthru
        _
      // Predicated region
      $region17: #{_lambda_.7} parent=11 // pred_check
        %p149 = pneg %p99
      $region18: #{_lambda_.7} parent=11 // pred_check_branch
        %151 = sbr.rel (%p149) target = $region20
      $region19: #{_lambda_.7} parent=11 // pred_region
        %p152 = scmp.lt.s32.totalorder %s19, 0
        %s153 = scalar_select %p152, %s19, 0
        %s154 = scalar_lea.vmem %s2, %s153
      $region20: #{_lambda_.7} parent=11 // pred_fallthru
        _
    $region12: #{_lambda_.7} parent=5 // pred_fallthru
      _
    %p155 = scmp.lt.s32.totalorder %s9, 2
    // Predicated region
    $region21: #{_lambda_.7} parent=5 // pred_check
      %p156 = pneg %p155
    $region22: #{_lambda_.7} parent=5 // pred_check_branch
      %158 = sbr.rel (%p156) target = $region24
    $region23: #{_lambda_.7} parent=5 // pred_region
      // Predicated region
      $region25: #{_lambda_.7} parent=23 // pred_check
        %p159 = pneg %p41
      $region26: #{_lambda_.7} parent=23 // pred_check_branch
        %161 = sbr.rel (%p159) target = $region28
      $region27: #{_lambda_.7} parent=23 // pred_region
        %s162 = smul.u32 8, %s16
        %p163 = scmp.lt.s32.totalorder %s162, 15
        %s164 = scalar_select %p163, %s162, 15
        %s165 = smul.addr %s164, 2
        %s166 = smul.addr %s165, 4
        %s167 = scalar_lea.vmem %s0, %s166
        %s168 = smul.u32 8, %s16
      $region28: #{_lambda_.7} parent=23 // pred_fallthru
        _
    $region24: #{_lambda_.7} parent=5 // pred_fallthru
      _
    %p169 = scmp.le.s32.totalorder 1, %s9
    %p170 = scmp.lt.s32.totalorder %s9, 3
    %p171 = pnand %p169, %p170
    %p172 = pneg %p171
    // Predicated region
    $region29: #{_lambda_.7} parent=5 // pred_check
      _
    $region30: #{_lambda_.7} parent=5 // pred_check_branch
      %174 = sbr.rel (%p171) target = $region32
    $region31: #{_lambda_.7} parent=5 // pred_region
      %s175 = ssub.s32 %s9, 1
      %s176 = smul.u32 8, %s18
      %p177 = scmp.lt.s32.totalorder %s176, 15
      %s178 = scalar_select %p177, %s176, 15
      %s179 = smul.addr %s178, 2
      %s180 = smul.addr %s179, 4
      %s181 = scalar_lea.vmem %s0, %s180
      %p182 = pneg %p47
      %p183 = pneg %p44
      %p184 = scmp.lt.s32.totalorder %s19, 0
      %s185 = scalar_select %p184, %s19, 0
      %s186 = smul.addr %s185, 4
      %s187 = scalar_lea.vmem %s1, %s186
      %p188 = pneg %p73
      %p189 = pneg %p70
      %p190 = scmp.lt.s32.totalorder %s19, 0
      %s191 = scalar_select %p190, %s19, 0
      %s192 = scalar_lea.vmem %s2, %s191
      %p193 = pneg %p99
      %p194 = pneg %p96
      %p195 = pneg %p127
      %p196 = pneg %p124
      %s197 = smul.u32 8, %s18
      %p198 = scmp.lt.s32.totalorder %s197, 15
      %s199 = scalar_select %p198, %s197, 15
      %p200 = scmp.lt.s32.totalorder %s19, 0
      %s201 = scalar_select %p200, %s19, 0
      %s202 = sadd.s32 %s201, %s199
      %s203 = smul.addr %s202, 4
      %s204 = scalar_lea.vmem %s3, %s203
      %s205 = smul.u32 8, %s18
      %p206 = scmp.lt.s32.totalorder %s205, 15
      %s207 = scalar_select %p206, %s205, 15
      %s208 = smul.addr %s207, 2
      %s209 = smul.addr %s208, 4
      %s210 = scalar_lea.vmem %s0, %s209
      %s211 = smul.u32 8, %s18
      %p212 = scmp.lt.s32.totalorder %s19, 0
      %s213 = scalar_select %p212, %s19, 0
      %s214 = smul.addr %s213, 4
      %s215 = scalar_lea.vmem %s1, %s214
      %p216 = scmp.lt.s32.totalorder %s19, 0
      %s217 = scalar_select %p216, %s19, 0
      %s218 = scalar_lea.vmem %s2, %s217
      %s219 = smul.u32 8, %s18
      %p220 = scmp.lt.s32.totalorder %s219, 15
      %s221 = scalar_select %p220, %s219, 15
      %p222 = scmp.lt.s32.totalorder %s19, 0
      %s223 = scalar_select %p222, %s19, 0
      %s224 = sadd.s32 %s223, %s221
      %s225 = smul.addr %s224, 4
      %s226 = scalar_lea.vmem %s3, %s225
      %s227 = smul.u32 8, %s18
      %v229 = vld [vmem:[%s210] sm:$0xff]
      %v230 = vld [vmem:[%s210 + $0x8] sm:$0xff]
      %v231 = vld [vmem:[%s210 + $0x10] sm:$0xff]
      %v232 = vld [vmem:[%s210 + $0x18] sm:$0xff]
      %v233 = vld [vmem:[%s210 + $0x20] sm:$0xff]
      %v234 = vld [vmem:[%s210 + $0x28] sm:$0xff]
      %v235 = vld [vmem:[%s210 + $0x30] sm:$0xff]
      %v236 = vld [vmem:[%s210 + $0x38] sm:$0xff]
      %v237 = vld [vmem:[%s215] sm:$0xf]
      %v238 = vld [vmem:[%s215 + $0x4] sm:$0xf]
      %v239 = vld [vmem:[%s215 + $0x8] sm:$0xf]
      %v240 = vld [vmem:[%s215 + $0xc] sm:$0xf]
      %v241 = vld [vmem:[%s215 + $0x10] sm:$0xf]
      %v242 = vld [vmem:[%s215 + $0x14] sm:$0xf]
      %v243 = vld [vmem:[%s215 + $0x18] sm:$0xf]
      %v244 = vld [vmem:[%s215 + $0x1c] sm:$0xf]
      %v245 = vld [vmem:[%s215 + $0x20] sm:$0xf]
      %v246 = vld [vmem:[%s215 + $0x24] sm:$0xf]
      %v247 = vld [vmem:[%s215 + $0x28] sm:$0xf]
      %v248 = vld [vmem:[%s215 + $0x2c] sm:$0xf]
      %v249 = vld [vmem:[%s215 + $0x30] sm:$0xf]
      %v250 = vld [vmem:[%s215 + $0x34] sm:$0xf]
      %v251 = vld [vmem:[%s215 + $0x38] sm:$0xf]
      %v252 = vld [vmem:[%s215 + $0x3c] sm:$0xf]
      %v253 = vld [vmem:[%s215 + $0x40] sm:$0xf]
      %v254 = vld [vmem:[%s215 + $0x44] sm:$0xf]
      %v255 = vld [vmem:[%s215 + $0x48] sm:$0xf]
      %v256 = vld [vmem:[%s215 + $0x4c] sm:$0xf]
      %v257 = vld [vmem:[%s215 + $0x50] sm:$0xf]
      %v258 = vld [vmem:[%s215 + $0x54] sm:$0xf]
      %v259 = vld [vmem:[%s215 + $0x58] sm:$0xf]
      %v260 = vld [vmem:[%s215 + $0x5c] sm:$0xf]
      %v261 = vld [vmem:[%s215 + $0x60] sm:$0xf]
      %v262 = vld [vmem:[%s215 + $0x64] sm:$0xf]
      %v263 = vld [vmem:[%s215 + $0x68] sm:$0xf]
      %v264 = vld [vmem:[%s215 + $0x6c] sm:$0xf]
      %v265 = vld [vmem:[%s215 + $0x70] sm:$0xf]
      %v266 = vld [vmem:[%s215 + $0x74] sm:$0xf]
      %v267 = vld [vmem:[%s215 + $0x78] sm:$0xf]
      %v268 = vld [vmem:[%s215 + $0x7c] sm:$0xf]
      %v269 = vld [vmem:[%s218] sm:$0x1]
      %v271 = vlaneseq
      %v272 = vshrl.u32 %v271, 7
      %v273 = vsub.s32 0, %v272
      %v274 = vrot.slane %v269, %v273
      %v284 = vunpack.c.l.b16 %v229
      %v285 = vunpack.c.h.b16 %v229
      %v286 = vunpack.c.l.b16 %v230
      %v287 = vunpack.c.h.b16 %v230
      %v288 = vunpack.c.l.b16 %v231
      %v289 = vunpack.c.h.b16 %v231
      %v290 = vunpack.c.l.b16 %v232
      %v291 = vunpack.c.h.b16 %v232
      %v292 = vunpack.c.l.b16 %v233
      %v293 = vunpack.c.h.b16 %v233
      %v294 = vunpack.c.l.b16 %v234
      %v295 = vunpack.c.h.b16 %v234
      %v296 = vunpack.c.l.b16 %v235
      %v297 = vunpack.c.h.b16 %v235
      %v298 = vunpack.c.l.b16 %v236
      %v299 = vunpack.c.h.b16 %v236
      %v300 = vpack.c.b16 %v286, %v284
      %v301 = vpack.c.b16 %v287, %v285
      %v302 = vpack.c.b16 %v290, %v288
      %v303 = vpack.c.b16 %v291, %v289
      %v304 = vpack.c.b16 %v294, %v292
      %v305 = vpack.c.b16 %v295, %v293
      %v306 = vpack.c.b16 %v298, %v296
      %v307 = vpack.c.b16 %v299, %v297
      %v348 = vunpack.c.l.b16 %v237
      %v349 = vunpack.c.l.b16 %v238
      %v350 = vunpack.c.l.b16 %v239
      %v351 = vunpack.c.l.b16 %v240
      %v352 = vunpack.c.l.b16 %v241
      %v353 = vunpack.c.l.b16 %v242
      %v354 = vunpack.c.l.b16 %v243
      %v355 = vunpack.c.l.b16 %v244
      %v356 = vunpack.c.l.b16 %v245
      %v357 = vunpack.c.l.b16 %v246
      %v358 = vunpack.c.l.b16 %v247
      %v359 = vunpack.c.l.b16 %v248
      %v360 = vunpack.c.l.b16 %v249
      %v361 = vunpack.c.l.b16 %v250
      %v362 = vunpack.c.l.b16 %v251
      %v363 = vunpack.c.l.b16 %v252
      %v364 = vunpack.c.l.b16 %v253
      %v365 = vunpack.c.l.b16 %v254
      %v366 = vunpack.c.l.b16 %v255
      %v367 = vunpack.c.l.b16 %v256
      %v368 = vunpack.c.l.b16 %v257
      %v369 = vunpack.c.l.b16 %v258
      %v370 = vunpack.c.l.b16 %v259
      %v371 = vunpack.c.l.b16 %v260
      %v372 = vunpack.c.l.b16 %v261
      %v373 = vunpack.c.l.b16 %v262
      %v374 = vunpack.c.l.b16 %v263
      %v375 = vunpack.c.l.b16 %v264
      %v376 = vunpack.c.l.b16 %v265
      %v377 = vunpack.c.l.b16 %v266
      %v378 = vunpack.c.l.b16 %v267
      %v379 = vunpack.c.l.b16 %v268
      %v380 = vpack.c.b16 %v349, %v348
      %v381 = vpack.c.b16 %v351, %v350
      %v382 = vpack.c.b16 %v353, %v352
      %v383 = vpack.c.b16 %v355, %v354
      %v384 = vpack.c.b16 %v357, %v356
      %v385 = vpack.c.b16 %v359, %v358
      %v386 = vpack.c.b16 %v361, %v360
      %v387 = vpack.c.b16 %v363, %v362
      %v388 = vpack.c.b16 %v365, %v364
      %v389 = vpack.c.b16 %v367, %v366
      %v390 = vpack.c.b16 %v369, %v368
      %v391 = vpack.c.b16 %v371, %v370
      %v392 = vpack.c.b16 %v373, %v372
      %v393 = vpack.c.b16 %v375, %v374
      %v394 = vpack.c.b16 %v377, %v376
      %v395 = vpack.c.b16 %v379, %v378
      %412 = vmatprep.subr.bf16.mxu0 0
      %413 = vmatpush1.bf16.msra.mxu0 %v380
      %414 = vmatprep.subr.bf16.mxu0 0
      %415 = vmatpush1.bf16.msra.mxu0 %v381
      %416 = vmatprep.subr.bf16.mxu0 0
      %417 = vmatpush1.bf16.msra.mxu0 %v382
      %418 = vmatprep.subr.bf16.mxu0 0
      %419 = vmatpush1.bf16.msra.mxu0 %v383
      %420 = vmatprep.subr.bf16.mxu0 0
      %421 = vmatpush1.bf16.msra.mxu0 %v384
      %422 = vmatprep.subr.bf16.mxu0 0
      %423 = vmatpush1.bf16.msra.mxu0 %v385
      %424 = vmatprep.subr.bf16.mxu0 0
      %425 = vmatpush1.bf16.msra.mxu0 %v386
      %426 = vmatprep.subr.bf16.mxu0 0
      %427 = vmatpush1.bf16.msra.mxu0 %v387
      %428 = vmatprep.subr.bf16.mxu0 0
      %429 = vmatpush1.bf16.msra.mxu0 %v388
      %430 = vmatprep.subr.bf16.mxu0 0
      %431 = vmatpush1.bf16.msra.mxu0 %v389
      %432 = vmatprep.subr.bf16.mxu0 0
      %433 = vmatpush1.bf16.msra.mxu0 %v390
      %434 = vmatprep.subr.bf16.mxu0 0
      %435 = vmatpush1.bf16.msra.mxu0 %v391
      %436 = vmatprep.subr.bf16.mxu0 0
      %437 = vmatpush1.bf16.msra.mxu0 %v392
      %438 = vmatprep.subr.bf16.mxu0 0
      %439 = vmatpush1.bf16.msra.mxu0 %v393
      %440 = vmatprep.subr.bf16.mxu0 0
      %441 = vmatpush1.bf16.msra.mxu0 %v394
      %442 = vmatprep.subr.bf16.mxu0 0
      %443 = vmatpush1.bf16.msra.mxu0 %v395
      %444 = vmatprep.mubr.bf16.mxu0 %v301
      %445 = vmatmul.mubr.bf16.gmra.mrb[0].mxu0 %v300
      %v446 = vpop.f32.mrb[0].mxu0
      %v447 = vadd.f32 %v274, %v446
      %v448 = vpop.f32.mrb[0].mxu0
      %v449 = vpop.f32.mrb[0].mxu0
      %v450 = vadd.f32 %v274, %v449
      %v451 = vpop.f32.mrb[0].mxu0
      %452 = vmatprep.mubr.bf16.mxu0 %v303
      %453 = vmatmul.mubr.bf16.gmra.mrb[0].mxu0 %v302
      %v454 = vpop.f32.mrb[0].mxu0
      %v455 = vadd.f32 %v274, %v454
      %v456 = vpop.f32.mrb[0].mxu0
      %v457 = vpop.f32.mrb[0].mxu0
      %v458 = vadd.f32 %v274, %v457
      %v459 = vpop.f32.mrb[0].mxu0
      %460 = vmatprep.mubr.bf16.mxu0 %v305
      %461 = vmatmul.mubr.bf16.gmra.mrb[0].mxu0 %v304
      %v462 = vpop.f32.mrb[0].mxu0
      %v463 = vadd.f32 %v274, %v462
      %v464 = vpop.f32.mrb[0].mxu0
      %v465 = vpop.f32.mrb[0].mxu0
      %v466 = vadd.f32 %v274, %v465
      %v467 = vpop.f32.mrb[0].mxu0
      %468 = vmatprep.mubr.bf16.mxu0 %v307
      %469 = vmatmul.mubr.bf16.gmra.mrb[0].mxu0 %v306
      %v470 = vpop.f32.mrb[0].mxu0
      %v471 = vadd.f32 %v274, %v470
      %v472 = vpop.f32.mrb[0].mxu0
      %v473 = vpop.f32.mrb[0].mxu0
      %v474 = vadd.f32 %v274, %v473
      %v475 = vpop.f32.mrb[0].mxu0
      %476 = vdwg.mxu0
      %v477 = vmax.f32 %v447, 0.0
      %v478 = vmax.f32 %v450, 0.0
      %v479 = vmax.f32 %v455, 0.0
      %v480 = vmax.f32 %v458, 0.0
      %v481 = vmax.f32 %v463, 0.0
      %v482 = vmax.f32 %v466, 0.0
      %v483 = vmax.f32 %v471, 0.0
      %v484 = vmax.f32 %v474, 0.0
      %v485 = vpack.c.bf16 %v478, %v477
      %v486 = vpack.c.bf16 %v480, %v479
      %v487 = vpack.c.bf16 %v482, %v481
      %v488 = vpack.c.bf16 %v484, %v483
      %v493 = vunpack.c.l.b16 %v485
      %v494 = vunpack.c.h.b16 %v485
      %v495 = vunpack.c.l.b16 %v486
      %v496 = vunpack.c.h.b16 %v486
      %v497 = vunpack.c.l.b16 %v487
      %v498 = vunpack.c.h.b16 %v487
      %v499 = vunpack.c.l.b16 %v488
      %v500 = vunpack.c.h.b16 %v488
      %v501 = vpack.c.b16 %v493, %v493
      %v502 = vpack.c.b16 %v494, %v494
      %v503 = vpack.c.b16 %v495, %v495
      %v504 = vpack.c.b16 %v496, %v496
      %v505 = vpack.c.b16 %v497, %v497
      %v506 = vpack.c.b16 %v498, %v498
      %v507 = vpack.c.b16 %v499, %v499
      %v508 = vpack.c.b16 %v500, %v500
      %517 = vst [vmem:[%s226] sm:$0xf] %v501
      %518 = vst [vmem:[%s226 + $0x4] sm:$0xf] %v502
      %519 = vst [vmem:[%s226 + $0x8] sm:$0xf] %v503
      %520 = vst [vmem:[%s226 + $0xc] sm:$0xf] %v504
      %521 = vst [vmem:[%s226 + $0x10] sm:$0xf] %v505
      %522 = vst [vmem:[%s226 + $0x14] sm:$0xf] %v506
      %523 = vst [vmem:[%s226 + $0x18] sm:$0xf] %v507
      %524 = vst [vmem:[%s226 + $0x1c] sm:$0xf] %v508
      %s525 = smul.u32 8, %s18
      %p526 = scmp.lt.s32.totalorder %s525, 15
      %s527 = scalar_select %p526, %s525, 15
      %p528 = scmp.lt.s32.totalorder %s19, 0
      %s529 = scalar_select %p528, %s19, 0
      %s530 = sadd.s32 %s529, %s527
      %s531 = smul.addr %s530, 4
      %s532 = scalar_lea.vmem %s3, %s531
      // Predicated region
      $region33: #{_lambda_.7} parent=31 // pred_check
        %p533 = pneg %p124
      $region34: #{_lambda_.7} parent=31 // pred_check_branch
        %535 = sbr.rel (%p533) target = $region36
      $region35: #{_lambda_.7} parent=31 // pred_region
        %s536 = smul.u32 8, %s18
      $region36: #{_lambda_.7} parent=31 // pred_fallthru
        _
    $region32: #{_lambda_.7} parent=5 // pred_fallthru
      _
    %p537 = scmp.le.s32.totalorder 2, %s9
    // Predicated region
    $region37: #{_lambda_.7} parent=5 // pred_check
      %p538 = pneg %p537
    $region38: #{_lambda_.7} parent=5 // pred_check_branch
      %540 = sbr.rel (%p538) target = $region40
    $region39: #{_lambda_.7} parent=5 // pred_region
      %s541 = ssub.s32 %s9, 2
      // Predicated region
      $region41: #{_lambda_.7} parent=39 // pred_check
        %p542 = pneg %p130
      $region42: #{_lambda_.7} parent=39 // pred_check_branch
        %544 = sbr.rel (%p542) target = $region44
      $region43: #{_lambda_.7} parent=39 // pred_region
        %s545 = smul.u32 8, %s20
        %p546 = scmp.lt.s32.totalorder %s545, 15
        %s547 = scalar_select %p546, %s545, 15
        %p548 = scmp.lt.s32.totalorder %s21, 0
        %s549 = scalar_select %p548, %s21, 0
        %s550 = sadd.s32 %s549, %s547
        %s551 = smul.addr %s550, 4
        %s552 = scalar_lea.vmem %s3, %s551
      $region44: #{_lambda_.7} parent=39 // pred_fallthru
        _
    $region40: #{_lambda_.7} parent=5 // pred_fallthru
      _
  $region6: #{_lambda_.7} parent=0 // loop_footer
    %s13 = sadd.s32 1, %s9
  $region7: #{_lambda_.7} parent=0 // loop_footer_branch
    %8 = sbr.rel target = $region3
  $region8: #{_lambda_.7} parent=0 // loop_exit
    _

// kernel: _lambda_.9
$region0: #{_lambda_.9}
  #allocation0 [shape = 'u32[]', space=smem, size = 0x4, offset = 0x4, fixed_abs, tag = 'smem constant byte address 0x4 - core index']
  #allocation1 [shape = 'u32[144,128]{1,0:T(1,128)}', space=vmem, size = 0x12000, scoped, tag = 'internal scratch']
  %s0 = inlined_call_operand.vmem [shape: bf16[32,128], index: 0, kind: input, shape index: {}]
  %s1 = inlined_call_operand.vmem [shape: bf16[128,512], index: 1, kind: input, shape index: {}]
  %s2 = inlined_call_operand.vmem [shape: f32[1,512], index: 2, kind: input, shape index: {}, may-alias: {2,5}]
  %s3 = inlined_call_operand.vmem [shape: bf16[32,256], index: 3, kind: input, shape index: {}]
  %s4 = inlined_call_operand.vmem [shape: bf16[256,512], index: 4, kind: input, shape index: {}]
  %s5 = inlined_call_operand.vmem [shape: f32[1,512], index: 5, kind: input, shape index: {}, may-alias: {2,5}]
  %s6 = inlined_call_operand.vmem [shape: bf16[32,512], index: 6, kind: output, shape index: {}]
  %s7 = sld [smem:[#allocation0]]
  $region167: #{_lambda_.9} parent=0
    _
  %s9 = ssub.s32 1, %s7
  %s10 = scalar_select 0, %s9, %s7
  $region1: #{_lambda_.9} parent=0
    #allocation2 [shape = 'u8[131072]{0}', space=vmem, size = 0x20000, scoped, tag = 'input window, operand 1']
    #allocation3 [shape = 'u8[262144]{0}', space=vmem, size = 0x40000, scoped, tag = 'input window, operand 4']
    #allocation4 [shape = 'u8[16384]{0}', space=vmem, size = 0x4000, scoped, tag = 'output window, operand 0']
    loop: start=0, step=1, limit=6
    $region2: #{_lambda_.9} parent=1 // loop_pre_header
      _
    $region3: #{_lambda_.9} parent=1 // loop_header
      %s12 = sphi 0, %s16
      %p13 = scmp.ge.s32.totalorder %s12, 6
      %s19 = sphi 0, %s31
      %s20 = sphi 0, %s27
      %s21 = sphi 0, %s19
      %s22 = sphi 0, %s20
      %s23 = sphi 0, %s21
      %s24 = sphi 0, %s22
      %s34 = sphi 0, %s36
      %s37 = sphi 0, %s34
      %s38 = sphi 0, %s37
      %s54 = sphi 0, %s38
      %s60 = sphi 0, %s62
      %s63 = sphi 0, %s60
      %s64 = sphi 0, %s63
      %s80 = sphi 0, %s64
      %s86 = sphi 0, %s88
      %s89 = sphi 0, %s86
      %s90 = sphi 0, %s89
      %s106 = sphi 0, %s90
      %s112 = sphi 0, %s114
      %s115 = sphi 0, %s112
      %s116 = sphi 0, %s115
      %s132 = sphi 0, %s116
      %s138 = sphi 0, %s140
      %s141 = sphi 0, %s138
      %s142 = sphi 0, %s141
      %s158 = sphi 0, %s142
      %s164 = sphi 0, %s166
      %s167 = sphi 0, %s164
      %s168 = sphi 0, %s167
      %s184 = sphi 0, %s168
      %s192 = sphi 0, %s194
      %s195 = sphi 0, %s192
      %s196 = sphi 0, %s195
      %s212 = sphi 0, %s196
    $region4: #{_lambda_.9} parent=1 // loop_header_branch
      %15 = sbr.rel (%p13) target = $region8
    $region5: #{_lambda_.9} parent=1 // loop_body
      %s17 = ssub.s32 %s12, 1
      %s18 = ssub.s32 %s12, 2
      %s25 = sadd.s32 1, %s20
      %p26 = scmp.ge.s32.totalorder %s25, 2
      %s27 = scalar_select %p26, 0, %s25
      %s28 = sadd.s32 1, %s19
      %s29 = scalar_select %p26, %s28, %s19
      %p30 = scmp.ge.s32.totalorder %s29, 2
      %s31 = scalar_select %p30, 0, %s29
      %s32 = ssub.s32 %s19, %s31
      %p33 = scmp.eq.s32.totalorder %s32, 0
      %s35 = sadd.s32 %s34, 1
      %s36 = scalar_select %p33, %s34, %s35
      %p39 = pneg %p33
      %p40 = scmp.eq.s32.totalorder %s12, 3
      %p41 = por %p39, %p40
      %p42 = scmp.ne.s32.totalorder %s34, %s37
      %p43 = scmp.eq.s32.totalorder %s12, 0
      %p44 = por %p42, %p43
      %p45 = scmp.ne.s32.totalorder %s34, %s37
      %p46 = scmp.eq.s32.totalorder %s17, 3
      %p47 = por %p45, %p46
      %p48 = scmp.ne.s32.totalorder %s37, %s38
      %p49 = scmp.eq.s32.totalorder %s17, 0
      %p50 = por %p48, %p49
      %p51 = scmp.ne.s32.totalorder %s37, %s38
      %p52 = scmp.eq.s32.totalorder %s18, 3
      %p53 = por %p51, %p52
      %p55 = scmp.ne.s32.totalorder %s38, %s54
      %p56 = scmp.eq.s32.totalorder %s18, 0
      %p57 = por %p55, %p56
      %s58 = ssub.s32 %s20, %s27
      %p59 = scmp.eq.s32.totalorder %s58, 0
      %s61 = sadd.s32 %s60, 1
      %s62 = scalar_select %p59, %s60, %s61
      %p65 = pneg %p59
      %p66 = scmp.eq.s32.totalorder %s12, 3
      %p67 = por %p65, %p66
      %p68 = scmp.ne.s32.totalorder %s60, %s63
      %p69 = scmp.eq.s32.totalorder %s12, 0
      %p70 = por %p68, %p69
      %p71 = scmp.ne.s32.totalorder %s60, %s63
      %p72 = scmp.eq.s32.totalorder %s17, 3
      %p73 = por %p71, %p72
      %p74 = scmp.ne.s32.totalorder %s63, %s64
      %p75 = scmp.eq.s32.totalorder %s17, 0
      %p76 = por %p74, %p75
      %p77 = scmp.ne.s32.totalorder %s63, %s64
      %p78 = scmp.eq.s32.totalorder %s18, 3
      %p79 = por %p77, %p78
      %p81 = scmp.ne.s32.totalorder %s64, %s80
      %p82 = scmp.eq.s32.totalorder %s18, 0
      %p83 = por %p81, %p82
      %s84 = ssub.s32 %s20, %s27
      %p85 = scmp.eq.s32.totalorder %s84, 0
      %s87 = sadd.s32 %s86, 1
      %s88 = scalar_select %p85, %s86, %s87
      %p91 = pneg %p85
      %p92 = scmp.eq.s32.totalorder %s12, 3
      %p93 = por %p91, %p92
      %p94 = scmp.ne.s32.totalorder %s86, %s89
      %p95 = scmp.eq.s32.totalorder %s12, 0
      %p96 = por %p94, %p95
      %p97 = scmp.ne.s32.totalorder %s86, %s89
      %p98 = scmp.eq.s32.totalorder %s17, 3
      %p99 = por %p97, %p98
      %p100 = scmp.ne.s32.totalorder %s89, %s90
      %p101 = scmp.eq.s32.totalorder %s17, 0
      %p102 = por %p100, %p101
      %p103 = scmp.ne.s32.totalorder %s89, %s90
      %p104 = scmp.eq.s32.totalorder %s18, 3
      %p105 = por %p103, %p104
      %p107 = scmp.ne.s32.totalorder %s90, %s106
      %p108 = scmp.eq.s32.totalorder %s18, 0
      %p109 = por %p107, %p108
      %s110 = ssub.s32 %s19, %s31
      %p111 = scmp.eq.s32.totalorder %s110, 0
      %s113 = sadd.s32 %s112, 1
      %s114 = scalar_select %p111, %s112, %s113
      %p117 = pneg %p111
      %p118 = scmp.eq.s32.totalorder %s12, 3
      %p119 = por %p117, %p118
      %p120 = scmp.ne.s32.totalorder %s112, %s115
      %p121 = scmp.eq.s32.totalorder %s12, 0
      %p122 = por %p120, %p121
      %p123 = scmp.ne.s32.totalorder %s112, %s115
      %p124 = scmp.eq.s32.totalorder %s17, 3
      %p125 = por %p123, %p124
      %p126 = scmp.ne.s32.totalorder %s115, %s116
      %p127 = scmp.eq.s32.totalorder %s17, 0
      %p128 = por %p126, %p127
      %p129 = scmp.ne.s32.totalorder %s115, %s116
      %p130 = scmp.eq.s32.totalorder %s18, 3
      %p131 = por %p129, %p130
      %p133 = scmp.ne.s32.totalorder %s116, %s132
      %p134 = scmp.eq.s32.totalorder %s18, 0
      %p135 = por %p133, %p134
      %s136 = ssub.s32 %s20, %s27
      %p137 = scmp.eq.s32.totalorder %s136, 0
      %s139 = sadd.s32 %s138, 1
      %s140 = scalar_select %p137, %s138, %s139
      %p143 = pneg %p137
      %p144 = scmp.eq.s32.totalorder %s12, 3
      %p145 = por %p143, %p144
      %p146 = scmp.ne.s32.totalorder %s138, %s141
      %p147 = scmp.eq.s32.totalorder %s12, 0
      %p148 = por %p146, %p147
      %p149 = scmp.ne.s32.totalorder %s138, %s141
      %p150 = scmp.eq.s32.totalorder %s17, 3
      %p151 = por %p149, %p150
      %p152 = scmp.ne.s32.totalorder %s141, %s142
      %p153 = scmp.eq.s32.totalorder %s17, 0
      %p154 = por %p152, %p153
      %p155 = scmp.ne.s32.totalorder %s141, %s142
      %p156 = scmp.eq.s32.totalorder %s18, 3
      %p157 = por %p155, %p156
      %p159 = scmp.ne.s32.totalorder %s142, %s158
      %p160 = scmp.eq.s32.totalorder %s18, 0
      %p161 = por %p159, %p160
      %s162 = ssub.s32 %s20, %s27
      %p163 = scmp.eq.s32.totalorder %s162, 0
      %s165 = sadd.s32 %s164, 1
      %s166 = scalar_select %p163, %s164, %s165
      %p169 = pneg %p163
      %p170 = scmp.eq.s32.totalorder %s12, 3
      %p171 = por %p169, %p170
      %p172 = scmp.ne.s32.totalorder %s164, %s167
      %p173 = scmp.eq.s32.totalorder %s12, 0
      %p174 = por %p172, %p173
      %p175 = scmp.ne.s32.totalorder %s164, %s167
      %p176 = scmp.eq.s32.totalorder %s17, 3
      %p177 = por %p175, %p176
      %p178 = scmp.ne.s32.totalorder %s167, %s168
      %p179 = scmp.eq.s32.totalorder %s17, 0
      %p180 = por %p178, %p179
      %p181 = scmp.ne.s32.totalorder %s167, %s168
      %p182 = scmp.eq.s32.totalorder %s18, 3
      %p183 = por %p181, %p182
      %p185 = scmp.ne.s32.totalorder %s168, %s184
      %p186 = scmp.eq.s32.totalorder %s18, 0
      %p187 = por %p185, %p186
      %s188 = ssub.s32 %s19, %s31
      %s189 = ssub.s32 %s20, %s27
      %s190 = sor.u32 %s188, %s189
      %p191 = scmp.eq.s32.totalorder %s190, 0
      %s193 = sadd.s32 %s192, 1
      %s194 = scalar_select %p191, %s192, %s193
      %p197 = pneg %p191
      %p198 = scmp.eq.s32.totalorder %s12, 3
      %p199 = por %p197, %p198
      %p200 = scmp.ne.s32.totalorder %s192, %s195
      %p201 = scmp.eq.s32.totalorder %s12, 0
      %p202 = por %p200, %p201
      %p203 = scmp.ne.s32.totalorder %s192, %s195
      %p204 = scmp.eq.s32.totalorder %s17, 3
      %p205 = por %p203, %p204
      %p206 = scmp.ne.s32.totalorder %s195, %s196
      %p207 = scmp.eq.s32.totalorder %s17, 0
      %p208 = por %p206, %p207
      %p209 = scmp.ne.s32.totalorder %s195, %s196
      %p210 = scmp.eq.s32.totalorder %s18, 3
      %p211 = por %p209, %p210
      %p213 = scmp.ne.s32.totalorder %s196, %s212
      %p214 = scmp.eq.s32.totalorder %s18, 0
      %p215 = por %p213, %p214
      %p216 = scmp.le.s32.totalorder 1, %s12
      %p217 = scmp.lt.s32.totalorder %s12, 5
      %p218 = pnand %p216, %p217
      %p219 = pneg %p218
      // Predicated region
      $region9: #{_lambda_.9} parent=5 // pred_check
        _
      $region10: #{_lambda_.9} parent=5 // pred_check_branch
        %221 = sbr.rel (%p218) target = $region12
      $region11: #{_lambda_.9} parent=5 // pred_region
        %s222 = ssub.s32 %s12, 1
      $region12: #{_lambda_.9} parent=5 // pred_fallthru
        _
      %p223 = scmp.lt.s32.totalorder %s12, 4
      // Predicated region
      $region13: #{_lambda_.9} parent=5 // pred_check
        %p224 = pneg %p223
      $region14: #{_lambda_.9} parent=5 // pred_check_branch
        %226 = sbr.rel (%p224) target = $region16
      $region15: #{_lambda_.9} parent=5 // pred_region
        // Predicated region
        $region17: #{_lambda_.9} parent=15 // pred_check
          %p227 = pneg %p44
        $region18: #{_lambda_.9} parent=15 // pred_check_branch
          %229 = sbr.rel (%p227) target = $region20
        $region19: #{_lambda_.9} parent=15 // pred_region
          %s230 = smul.u32 2, %s19
          %p231 = scmp.lt.s32.totalorder %s230, 3
          %s232 = scalar_select %p231, %s230, 3
          %s233 = smul.addr %s232, 4
          %s234 = scalar_lea.vmem %s0, %s233
          %s235 = smul.u32 2, %s19
        $region20: #{_lambda_.9} parent=15 // pred_fallthru
          _
        // Predicated region
        $region21: #{_lambda_.9} parent=15 // pred_check
          %p236 = pneg %p70
        $region22: #{_lambda_.9} parent=15 // pred_check_branch
          %238 = sbr.rel (%p236) target = $region24
        $region23: #{_lambda_.9} parent=15 // pred_region
          %s239 = sand.u32 %s60, 1
          %s240 = sand.u32 %s60, 1
          %s241 = smul.addr %s240, 128
          %s242 = scalar_lea.vmem [#allocation2], %s241
          %s243 = smul.u32 2, %s20
          %s244 = smul.addr %s243, 4
          %s245 = scalar_lea.vmem %s1, %s244
          // Predicated region
          $region25: #{_lambda_.9} parent=23 // pred_check
            _
          $region26: #{_lambda_.9} parent=23 // pred_check_branch
            %247 = sbr.rel (0) target = $region28
          $region27: #{_lambda_.9} parent=23 // pred_region
            // Predicated region
            $region29: #{_lambda_.9} parent=27 // pred_check
              _
            $region30: #{_lambda_.9} parent=27 // pred_check_branch
              %249 = sbr.rel (0) target = $region32
            $region31: #{_lambda_.9} parent=27 // pred_region
              // Predicated region
              $region44: #{_lambda_.9} parent=31 // pred_check
                _
              $region45: #{_lambda_.9} parent=31 // pred_check_branch
                %294 = sbr.rel (0) target = $region47
              $region46: #{_lambda_.9} parent=31 // pred_region
                loop: start=0, step=1, limit=1
                $region48: #{_lambda_.9} parent=46 // loop_pre_header
                  _
                $region49: #{_lambda_.9} parent=46 // loop_header
                  %s296 = sphi 0, %s300
                  %p297 = scmp.ge.s32.totalorder %s296, 1
                  %s301 = sphi %s245, %s245
                  %s302 = sphi %s242, %s242
                $region50: #{_lambda_.9} parent=46 // loop_header_branch
                  %299 = sbr.rel (%p297) target = $region54
                $region51: #{_lambda_.9} parent=46 // loop_body
                  %v303 = vld [vmem:[%s301] sm:$0xff]
                  %304 = vst [vmem:[%s302] sm:$0xff] %v303
                  %v305 = vld [vmem:[%s301 + $0x10] sm:$0xff]
                  %306 = vst [vmem:[%s302 + $0x8] sm:$0xff] %v305
                  %v307 = vld [vmem:[%s301 + $0x20] sm:$0xff]
                  %308 = vst [vmem:[%s302 + $0x10] sm:$0xff] %v307
                  %v309 = vld [vmem:[%s301 + $0x30] sm:$0xff]
                  %310 = vst [vmem:[%s302 + $0x18] sm:$0xff] %v309
                  %v311 = vld [vmem:[%s301 + $0x40] sm:$0xff]
                  %312 = vst [vmem:[%s302 + $0x20] sm:$0xff] %v311
                  %v313 = vld [vmem:[%s301 + $0x50] sm:$0xff]
                  %314 = vst [vmem:[%s302 + $0x28] sm:$0xff] %v313
                  %v315 = vld [vmem:[%s301 + $0x60] sm:$0xff]
                  %316 = vst [vmem:[%s302 + $0x30] sm:$0xff] %v315
                  %v317 = vld [vmem:[%s301 + $0x70] sm:$0xff]
                  %318 = vst [vmem:[%s302 + $0x38] sm:$0xff] %v317
                  %v319 = vld [vmem:[%s301 + $0x80] sm:$0xff]
                  %320 = vst [vmem:[%s302 + $0x40] sm:$0xff] %v319
                  %v321 = vld [vmem:[%s301 + $0x90] sm:$0xff]
                  %322 = vst [vmem:[%s302 + $0x48] sm:$0xff] %v321
                  %v323 = vld [vmem:[%s301 + $0xa0] sm:$0xff]
                  %324 = vst [vmem:[%s302 + $0x50] sm:$0xff] %v323
                  %v325 = vld [vmem:[%s301 + $0xb0] sm:$0xff]
                  %326 = vst [vmem:[%s302 + $0x58] sm:$0xff] %v325
                  %v327 = vld [vmem:[%s301 + $0xc0] sm:$0xff]
                  %328 = vst [vmem:[%s302 + $0x60] sm:$0xff] %v327
                  %v329 = vld [vmem:[%s301 + $0xd0] sm:$0xff]
                  %330 = vst [vmem:[%s302 + $0x68] sm:$0xff] %v329
                  %v331 = vld [vmem:[%s301 + $0xe0] sm:$0xff]
                  %332 = vst [vmem:[%s302 + $0x70] sm:$0xff] %v331
                  %v333 = vld [vmem:[%s301 + $0xf0] sm:$0xff]
                  %334 = vst [vmem:[%s302 + $0x78] sm:$0xff] %v333
                $region52: #{_lambda_.9} parent=46 // loop_footer
                  %s300 = sadd.s32 1, %s296
                $region53: #{_lambda_.9} parent=46 // loop_footer_branch
                  %295 = sbr.rel target = $region49
                $region54: #{_lambda_.9} parent=46 // loop_exit
                  _
              $region47: #{_lambda_.9} parent=31 // pred_fallthru
                _
              // Predicated region
              $region55: #{_lambda_.9} parent=31 // pred_check
                _
              $region56: #{_lambda_.9} parent=31 // pred_check_branch
                %336 = sbr.rel target = $region58
              $region57: #{_lambda_.9} parent=31 // pred_region
                _
              $region58: #{_lambda_.9} parent=31 // pred_fallthru
                _
            $region32: #{_lambda_.9} parent=27 // pred_fallthru
              _
            // Predicated region
            $region33: #{_lambda_.9} parent=27 // pred_check
              _
            $region34: #{_lambda_.9} parent=27 // pred_check_branch
              %251 = sbr.rel target = $region36
            $region35: #{_lambda_.9} parent=27 // pred_region
              loop: start=0, step=1, limit=1
              $region37: #{_lambda_.9} parent=35 // loop_pre_header
                _
              $region38: #{_lambda_.9} parent=35 // loop_header
                %s254 = sphi 0, %s258
                %p255 = scmp.ge.s32.totalorder %s254, 1
                %s259 = sphi %s245, %s245
                %s260 = sphi %s242, %s242
              $region39: #{_lambda_.9} parent=35 // loop_header_branch
                %257 = sbr.rel (%p255) target = $region43
              $region40: #{_lambda_.9} parent=35 // loop_body
                %v261 = vld [vmem:[%s259] sm:$0xff]
                %262 = vst [vmem:[%s260] sm:$0xff] %v261
                %v263 = vld [vmem:[%s259 + $0x10] sm:$0xff]
                %264 = vst [vmem:[%s260 + $0x8] sm:$0xff] %v263
                %v265 = vld [vmem:[%s259 + $0x20] sm:$0xff]
                %266 = vst [vmem:[%s260 + $0x10] sm:$0xff] %v265
                %v267 = vld [vmem:[%s259 + $0x30] sm:$0xff]
                %268 = vst [vmem:[%s260 + $0x18] sm:$0xff] %v267
                %v269 = vld [vmem:[%s259 + $0x40] sm:$0xff]
                %270 = vst [vmem:[%s260 + $0x20] sm:$0xff] %v269
                %v271 = vld [vmem:[%s259 + $0x50] sm:$0xff]
                %272 = vst [vmem:[%s260 + $0x28] sm:$0xff] %v271
                %v273 = vld [vmem:[%s259 + $0x60] sm:$0xff]
                %274 = vst [vmem:[%s260 + $0x30] sm:$0xff] %v273
                %v275 = vld [vmem:[%s259 + $0x70] sm:$0xff]
                %276 = vst [vmem:[%s260 + $0x38] sm:$0xff] %v275
                %v277 = vld [vmem:[%s259 + $0x80] sm:$0xff]
                %278 = vst [vmem:[%s260 + $0x40] sm:$0xff] %v277
                %v279 = vld [vmem:[%s259 + $0x90] sm:$0xff]
                %280 = vst [vmem:[%s260 + $0x48] sm:$0xff] %v279
                %v281 = vld [vmem:[%s259 + $0xa0] sm:$0xff]
                %282 = vst [vmem:[%s260 + $0x50] sm:$0xff] %v281
                %v283 = vld [vmem:[%s259 + $0xb0] sm:$0xff]
                %284 = vst [vmem:[%s260 + $0x58] sm:$0xff] %v283
                %v285 = vld [vmem:[%s259 + $0xc0] sm:$0xff]
                %286 = vst [vmem:[%s260 + $0x60] sm:$0xff] %v285
                %v287 = vld [vmem:[%s259 + $0xd0] sm:$0xff]
                %288 = vst [vmem:[%s260 + $0x68] sm:$0xff] %v287
                %v289 = vld [vmem:[%s259 + $0xe0] sm:$0xff]
                %290 = vst [vmem:[%s260 + $0x70] sm:$0xff] %v289
                %v291 = vld [vmem:[%s259 + $0xf0] sm:$0xff]
                %292 = vst [vmem:[%s260 + $0x78] sm:$0xff] %v291
              $region41: #{_lambda_.9} parent=35 // loop_footer
                %s258 = sadd.s32 1, %s254
              $region42: #{_lambda_.9} parent=35 // loop_footer_branch
                %253 = sbr.rel target = $region38
              $region43: #{_lambda_.9} parent=35 // loop_exit
                _
            $region36: #{_lambda_.9} parent=27 // pred_fallthru
              _
          $region28: #{_lambda_.9} parent=23 // pred_fallthru
            _
          %337 = vnop
        $region24: #{_lambda_.9} parent=15 // pred_fallthru
          _
        // Predicated region
        $region59: #{_lambda_.9} parent=15 // pred_check
          %p338 = pneg %p96
        $region60: #{_lambda_.9} parent=15 // pred_check_branch
          %340 = sbr.rel (%p338) target = $region62
        $region61: #{_lambda_.9} parent=15 // pred_region
          %s341 = smul.u32 2, %s20
          %p342 = scmp.lt.s32.totalorder %s341, 3
          %s343 = scalar_select %p342, %s341, 3
          %s344 = scalar_lea.vmem %s2, %s343
          %s345 = smul.u32 2, %s20
        $region62: #{_lambda_.9} parent=15 // pred_fallthru
          _
        // Predicated region
        $region63: #{_lambda_.9} parent=15 // pred_check
          %p346 = pneg %p122
        $region64: #{_lambda_.9} parent=15 // pred_check_branch
          %348 = sbr.rel (%p346) target = $region66
        $region65: #{_lambda_.9} parent=15 // pred_region
          %s349 = smul.u32 2, %s19
          %p350 = scmp.lt.s32.totalorder %s349, 3
          %s351 = scalar_select %p350, %s349, 3
          %s352 = smul.addr %s351, 2
          %s353 = smul.addr %s352, 4
          %s354 = scalar_lea.vmem %s3, %s353
          %s355 = smul.u32 2, %s19
        $region66: #{_lambda_.9} parent=15 // pred_fallthru
          _
        // Predicated region
        $region67: #{_lambda_.9} parent=15 // pred_check
          %p356 = pneg %p148
        $region68: #{_lambda_.9} parent=15 // pred_check_branch
          %358 = sbr.rel (%p356) target = $region70
        $region69: #{_lambda_.9} parent=15 // pred_region
          %s359 = sand.u32 %s138, 1
          %s360 = sand.u32 %s138, 1
          %s361 = smul.addr %s360, 256
          %s362 = scalar_lea.vmem [#allocation3], %s361
          %s363 = smul.u32 2, %s20
          %s364 = smul.addr %s363, 4
          %s365 = scalar_lea.vmem %s4, %s364
          // Predicated region
          $region71: #{_lambda_.9} parent=69 // pred_check
            _
          $region72: #{_lambda_.9} parent=69 // pred_check_branch
            %367 = sbr.rel (0) target = $region74
          $region73: #{_lambda_.9} parent=69 // pred_region
            // Predicated region
            $region75: #{_lambda_.9} parent=73 // pred_check
              _
            $region76: #{_lambda_.9} parent=73 // pred_check_branch
              %369 = sbr.rel (0) target = $region78
            $region77: #{_lambda_.9} parent=73 // pred_region
              // Predicated region
              $region90: #{_lambda_.9} parent=77 // pred_check
                _
              $region91: #{_lambda_.9} parent=77 // pred_check_branch
                %446 = sbr.rel (0) target = $region93
              $region92: #{_lambda_.9} parent=77 // pred_region
                loop: start=0, step=1, limit=1
                $region94: #{_lambda_.9} parent=92 // loop_pre_header
                  _
                $region95: #{_lambda_.9} parent=92 // loop_header
                  %s448 = sphi 0, %s452
                  %p449 = scmp.ge.s32.totalorder %s448, 1
                  %s453 = sphi %s365, %s365
                  %s454 = sphi %s362, %s362
                $region96: #{_lambda_.9} parent=92 // loop_header_branch
                  %451 = sbr.rel (%p449) target = $region100
                $region97: #{_lambda_.9} parent=92 // loop_body
                  %v455 = vld [vmem:[%s453] sm:$0xff]
                  %456 = vst [vmem:[%s454] sm:$0xff] %v455
                  %v457 = vld [vmem:[%s453 + $0x10] sm:$0xff]
                  %458 = vst [vmem:[%s454 + $0x8] sm:$0xff] %v457
                  %v459 = vld [vmem:[%s453 + $0x20] sm:$0xff]
                  %460 = vst [vmem:[%s454 + $0x10] sm:$0xff] %v459
                  %v461 = vld [vmem:[%s453 + $0x30] sm:$0xff]
                  %462 = vst [vmem:[%s454 + $0x18] sm:$0xff] %v461
                  %v463 = vld [vmem:[%s453 + $0x40] sm:$0xff]
                  %464 = vst [vmem:[%s454 + $0x20] sm:$0xff] %v463
                  %v465 = vld [vmem:[%s453 + $0x50] sm:$0xff]
                  %466 = vst [vmem:[%s454 + $0x28] sm:$0xff] %v465
                  %v467 = vld [vmem:[%s453 + $0x60] sm:$0xff]
                  %468 = vst [vmem:[%s454 + $0x30] sm:$0xff] %v467
                  %v469 = vld [vmem:[%s453 + $0x70] sm:$0xff]
                  %470 = vst [vmem:[%s454 + $0x38] sm:$0xff] %v469
                  %v471 = vld [vmem:[%s453 + $0x80] sm:$0xff]
                  %472 = vst [vmem:[%s454 + $0x40] sm:$0xff] %v471
                  %v473 = vld [vmem:[%s453 + $0x90] sm:$0xff]
                  %474 = vst [vmem:[%s454 + $0x48] sm:$0xff] %v473
                  %v475 = vld [vmem:[%s453 + $0xa0] sm:$0xff]
                  %476 = vst [vmem:[%s454 + $0x50] sm:$0xff] %v475
                  %v477 = vld [vmem:[%s453 + $0xb0] sm:$0xff]
                  %478 = vst [vmem:[%s454 + $0x58] sm:$0xff] %v477
                  %v479 = vld [vmem:[%s453 + $0xc0] sm:$0xff]
                  %480 = vst [vmem:[%s454 + $0x60] sm:$0xff] %v479
                  %v481 = vld [vmem:[%s453 + $0xd0] sm:$0xff]
                  %482 = vst [vmem:[%s454 + $0x68] sm:$0xff] %v481
                  %v483 = vld [vmem:[%s453 + $0xe0] sm:$0xff]
                  %484 = vst [vmem:[%s454 + $0x70] sm:$0xff] %v483
                  %v485 = vld [vmem:[%s453 + $0xf0] sm:$0xff]
                  %486 = vst [vmem:[%s454 + $0x78] sm:$0xff] %v485
                  %v487 = vld [vmem:[%s453 + $0x100] sm:$0xff]
                  %488 = vst [vmem:[%s454 + $0x80] sm:$0xff] %v487
                  %v489 = vld [vmem:[%s453 + $0x110] sm:$0xff]
                  %490 = vst [vmem:[%s454 + $0x88] sm:$0xff] %v489
                  %v491 = vld [vmem:[%s453 + $0x120] sm:$0xff]
                  %492 = vst [vmem:[%s454 + $0x90] sm:$0xff] %v491
                  %v493 = vld [vmem:[%s453 + $0x130] sm:$0xff]
                  %494 = vst [vmem:[%s454 + $0x98] sm:$0xff] %v493
                  %v495 = vld [vmem:[%s453 + $0x140] sm:$0xff]
                  %496 = vst [vmem:[%s454 + $0xa0] sm:$0xff] %v495
                  %v497 = vld [vmem:[%s453 + $0x150] sm:$0xff]
                  %498 = vst [vmem:[%s454 + $0xa8] sm:$0xff] %v497
                  %v499 = vld [vmem:[%s453 + $0x160] sm:$0xff]
                  %500 = vst [vmem:[%s454 + $0xb0] sm:$0xff] %v499
                  %v501 = vld [vmem:[%s453 + $0x170] sm:$0xff]
                  %502 = vst [vmem:[%s454 + $0xb8] sm:$0xff] %v501
                  %v503 = vld [vmem:[%s453 + $0x180] sm:$0xff]
                  %504 = vst [vmem:[%s454 + $0xc0] sm:$0xff] %v503
                  %v505 = vld [vmem:[%s453 + $0x190] sm:$0xff]
                  %506 = vst [vmem:[%s454 + $0xc8] sm:$0xff] %v505
                  %v507 = vld [vmem:[%s453 + $0x1a0] sm:$0xff]
                  %508 = vst [vmem:[%s454 + $0xd0] sm:$0xff] %v507
                  %v509 = vld [vmem:[%s453 + $0x1b0] sm:$0xff]
                  %510 = vst [vmem:[%s454 + $0xd8] sm:$0xff] %v509
                  %v511 = vld [vmem:[%s453 + $0x1c0] sm:$0xff]
                  %512 = vst [vmem:[%s454 + $0xe0] sm:$0xff] %v511
                  %v513 = vld [vmem:[%s453 + $0x1d0] sm:$0xff]
                  %514 = vst [vmem:[%s454 + $0xe8] sm:$0xff] %v513
                  %v515 = vld [vmem:[%s453 + $0x1e0] sm:$0xff]
                  %516 = vst [vmem:[%s454 + $0xf0] sm:$0xff] %v515
                  %v517 = vld [vmem:[%s453 + $0x1f0] sm:$0xff]
                  %518 = vst [vmem:[%s454 + $0xf8] sm:$0xff] %v517
                $region98: #{_lambda_.9} parent=92 // loop_footer
                  %s452 = sadd.s32 1, %s448
                $region99: #{_lambda_.9} parent=92 // loop_footer_branch
                  %447 = sbr.rel target = $region95
                $region100: #{_lambda_.9} parent=92 // loop_exit
                  _
              $region93: #{_lambda_.9} parent=77 // pred_fallthru
                _
              // Predicated region
              $region101: #{_lambda_.9} parent=77 // pred_check
                _
              $region102: #{_lambda_.9} parent=77 // pred_check_branch
                %520 = sbr.rel target = $region104
              $region103: #{_lambda_.9} parent=77 // pred_region
                _
              $region104: #{_lambda_.9} parent=77 // pred_fallthru
                _
            $region78: #{_lambda_.9} parent=73 // pred_fallthru
              _
            // Predicated region
            $region79: #{_lambda_.9} parent=73 // pred_check
              _
            $region80: #{_lambda_.9} parent=73 // pred_check_branch
              %371 = sbr.rel target = $region82
            $region81: #{_lambda_.9} parent=73 // pred_region
              loop: start=0, step=1, limit=1
              $region83: #{_lambda_.9} parent=81 // loop_pre_header
                _
              $region84: #{_lambda_.9} parent=81 // loop_header
                %s374 = sphi 0, %s378
                %p375 = scmp.ge.s32.totalorder %s374, 1
                %s379 = sphi %s365, %s365
                %s380 = sphi %s362, %s362
              $region85: #{_lambda_.9} parent=81 // loop_header_branch
                %377 = sbr.rel (%p375) target = $region89
              $region86: #{_lambda_.9} parent=81 // loop_body
                %v381 = vld [vmem:[%s379] sm:$0xff]
                %382 = vst [vmem:[%s380] sm:$0xff] %v381
                %v383 = vld [vmem:[%s379 + $0x10] sm:$0xff]
                %384 = vst [vmem:[%s380 + $0x8] sm:$0xff] %v383
                %v385 = vld [vmem:[%s379 + $0x20] sm:$0xff]
                %386 = vst [vmem:[%s380 + $0x10] sm:$0xff] %v385
                %v387 = vld [vmem:[%s379 + $0x30] sm:$0xff]
                %388 = vst [vmem:[%s380 + $0x18] sm:$0xff] %v387
                %v389 = vld [vmem:[%s379 + $0x40] sm:$0xff]
                %390 = vst [vmem:[%s380 + $0x20] sm:$0xff] %v389
                %v391 = vld [vmem:[%s379 + $0x50] sm:$0xff]
                %392 = vst [vmem:[%s380 + $0x28] sm:$0xff] %v391
                %v393 = vld [vmem:[%s379 + $0x60] sm:$0xff]
                %394 = vst [vmem:[%s380 + $0x30] sm:$0xff] %v393
                %v395 = vld [vmem:[%s379 + $0x70] sm:$0xff]
                %396 = vst [vmem:[%s380 + $0x38] sm:$0xff] %v395
                %v397 = vld [vmem:[%s379 + $0x80] sm:$0xff]
                %398 = vst [vmem:[%s380 + $0x40] sm:$0xff] %v397
                %v399 = vld [vmem:[%s379 + $0x90] sm:$0xff]
                %400 = vst [vmem:[%s380 + $0x48] sm:$0xff] %v399
                %v401 = vld [vmem:[%s379 + $0xa0] sm:$0xff]
                %402 = vst [vmem:[%s380 + $0x50] sm:$0xff] %v401
                %v403 = vld [vmem:[%s379 + $0xb0] sm:$0xff]
                %404 = vst [vmem:[%s380 + $0x58] sm:$0xff] %v403
                %v405 = vld [vmem:[%s379 + $0xc0] sm:$0xff]
                %406 = vst [vmem:[%s380 + $0x60] sm:$0xff] %v405
                %v407 = vld [vmem:[%s379 + $0xd0] sm:$0xff]
                %408 = vst [vmem:[%s380 + $0x68] sm:$0xff] %v407
                %v409 = vld [vmem:[%s379 + $0xe0] sm:$0xff]
                %410 = vst [vmem:[%s380 + $0x70] sm:$0xff] %v409
                %v411 = vld [vmem:[%s379 + $0xf0] sm:$0xff]
                %412 = vst [vmem:[%s380 + $0x78] sm:$0xff] %v411
                %v413 = vld [vmem:[%s379 + $0x100] sm:$0xff]
                %414 = vst [vmem:[%s380 + $0x80] sm:$0xff] %v413
                %v415 = vld [vmem:[%s379 + $0x110] sm:$0xff]
                %416 = vst [vmem:[%s380 + $0x88] sm:$0xff] %v415
                %v417 = vld [vmem:[%s379 + $0x120] sm:$0xff]
                %418 = vst [vmem:[%s380 + $0x90] sm:$0xff] %v417
                %v419 = vld [vmem:[%s379 + $0x130] sm:$0xff]
                %420 = vst [vmem:[%s380 + $0x98] sm:$0xff] %v419
                %v421 = vld [vmem:[%s379 + $0x140] sm:$0xff]
                %422 = vst [vmem:[%s380 + $0xa0] sm:$0xff] %v421
                %v423 = vld [vmem:[%s379 + $0x150] sm:$0xff]
                %424 = vst [vmem:[%s380 + $0xa8] sm:$0xff] %v423
                %v425 = vld [vmem:[%s379 + $0x160] sm:$0xff]
                %426 = vst [vmem:[%s380 + $0xb0] sm:$0xff] %v425
                %v427 = vld [vmem:[%s379 + $0x170] sm:$0xff]
                %428 = vst [vmem:[%s380 + $0xb8] sm:$0xff] %v427
                %v429 = vld [vmem:[%s379 + $0x180] sm:$0xff]
                %430 = vst [vmem:[%s380 + $0xc0] sm:$0xff] %v429
                %v431 = vld [vmem:[%s379 + $0x190] sm:$0xff]
                %432 = vst [vmem:[%s380 + $0xc8] sm:$0xff] %v431
                %v433 = vld [vmem:[%s379 + $0x1a0] sm:$0xff]
                %434 = vst [vmem:[%s380 + $0xd0] sm:$0xff] %v433
                %v435 = vld [vmem:[%s379 + $0x1b0] sm:$0xff]
                %436 = vst [vmem:[%s380 + $0xd8] sm:$0xff] %v435
                %v437 = vld [vmem:[%s379 + $0x1c0] sm:$0xff]
                %438 = vst [vmem:[%s380 + $0xe0] sm:$0xff] %v437
                %v439 = vld [vmem:[%s379 + $0x1d0] sm:$0xff]
                %440 = vst [vmem:[%s380 + $0xe8] sm:$0xff] %v439
                %v441 = vld [vmem:[%s379 + $0x1e0] sm:$0xff]
                %442 = vst [vmem:[%s380 + $0xf0] sm:$0xff] %v441
                %v443 = vld [vmem:[%s379 + $0x1f0] sm:$0xff]
                %444 = vst [vmem:[%s380 + $0xf8] sm:$0xff] %v443
              $region87: #{_lambda_.9} parent=81 // loop_footer
                %s378 = sadd.s32 1, %s374
              $region88: #{_lambda_.9} parent=81 // loop_footer_branch
                %373 = sbr.rel target = $region84
              $region89: #{_lambda_.9} parent=81 // loop_exit
                _
            $region82: #{_lambda_.9} parent=73 // pred_fallthru
              _
          $region74: #{_lambda_.9} parent=69 // pred_fallthru
            _
          %521 = vnop
        $region70: #{_lambda_.9} parent=15 // pred_fallthru
          _
        // Predicated region
        $region105: #{_lambda_.9} parent=15 // pred_check
          %p522 = pneg %p174
        $region106: #{_lambda_.9} parent=15 // pred_check_branch
          %524 = sbr.rel (%p522) target = $region108
        $region107: #{_lambda_.9} parent=15 // pred_region
          %s525 = smul.u32 2, %s20
          %p526 = scmp.lt.s32.totalorder %s525, 3
          %s527 = scalar_select %p526, %s525, 3
          %s528 = scalar_lea.vmem %s5, %s527
          %s529 = smul.u32 2, %s20
        $region108: #{_lambda_.9} parent=15 // pred_fallthru
          _
      $region16: #{_lambda_.9} parent=5 // pred_fallthru
        _
      %p530 = scmp.le.s32.totalorder 1, %s12
      %p531 = scmp.lt.s32.totalorder %s12, 5
      %p532 = pnand %p530, %p531
      %p533 = pneg %p532
      // Predicated region
      $region109: #{_lambda_.9} parent=5 // pred_check
        _
      $region110: #{_lambda_.9} parent=5 // pred_check_branch
        %535 = sbr.rel (%p532) target = $region112
      $region111: #{_lambda_.9} parent=5 // pred_region
        %s536 = ssub.s32 %s12, 1
        %s537 = sand.u32 %s63, 1
        %s538 = sand.u32 %s63, 1
        %s539 = smul.addr %s538, 128
        %s540 = scalar_lea.vmem [#allocation2], %s539
        // Predicated region
        $region113: #{_lambda_.9} parent=111 // pred_check
          %p541 = pneg %p76
        $region114: #{_lambda_.9} parent=111 // pred_check_branch
          %543 = sbr.rel (%p541) target = $region116
        $region115: #{_lambda_.9} parent=111 // pred_region
          _
        $region116: #{_lambda_.9} parent=111 // pred_fallthru
          _
        %s544 = sand.u32 %s141, 1
        %s545 = sand.u32 %s141, 1
        %s546 = smul.addr %s545, 256
        %s547 = scalar_lea.vmem [#allocation3], %s546
        // Predicated region
        $region117: #{_lambda_.9} parent=111 // pred_check
          %p548 = pneg %p154
        $region118: #{_lambda_.9} parent=111 // pred_check_branch
          %550 = sbr.rel (%p548) target = $region120
        $region119: #{_lambda_.9} parent=111 // pred_region
          _
        $region120: #{_lambda_.9} parent=111 // pred_fallthru
          _
        %s551 = smul.u32 2, %s21
        %p552 = scmp.lt.s32.totalorder %s551, 3
        %s553 = scalar_select %p552, %s551, 3
        %s554 = smul.addr %s553, 4
        %s555 = scalar_lea.vmem %s0, %s554
        %p556 = pneg %p50
        %p557 = pneg %p47
        %s558 = sand.u32 %s63, 1
        %s559 = sand.u32 %s63, 1
        %s560 = smul.addr %s559, 128
        %s561 = scalar_lea.vmem [#allocation2], %s560
        %p562 = pneg %p76
        %p563 = pneg %p73
        %s564 = smul.u32 2, %s22
        %p565 = scmp.lt.s32.totalorder %s564, 3
        %s566 = scalar_select %p565, %s564, 3
        %s567 = scalar_lea.vmem %s2, %s566
        %p568 = pneg %p102
        %p569 = pneg %p99
        %s570 = smul.u32 2, %s21
        %p571 = scmp.lt.s32.totalorder %s570, 3
        %s572 = scalar_select %p571, %s570, 3
        %s573 = smul.addr %s572, 2
        %s574 = smul.addr %s573, 4
        %s575 = scalar_lea.vmem %s3, %s574
        %p576 = pneg %p128
        %p577 = pneg %p125
        %s578 = sand.u32 %s141, 1
        %s579 = sand.u32 %s141, 1
        %s580 = smul.addr %s579, 256
        %s581 = scalar_lea.vmem [#allocation3], %s580
        %p582 = pneg %p154
        %p583 = pneg %p151
        %s584 = smul.u32 2, %s22
        %p585 = scmp.lt.s32.totalorder %s584, 3
        %s586 = scalar_select %p585, %s584, 3
        %s587 = scalar_lea.vmem %s5, %s586
        %p588 = pneg %p180
        %p589 = pneg %p177
        %p590 = pneg %p208
        %p591 = pneg %p205
        %s592 = sand.u32 %s195, 1
        %s593 = sand.u32 %s195, 1
        %s594 = smul.addr %s593, 16
        %s595 = scalar_lea.vmem [#allocation4], %s594
        %s596 = smul.u32 2, %s21
        %p597 = scmp.lt.s32.totalorder %s596, 3
        %s598 = scalar_select %p597, %s596, 3
        %s599 = smul.addr %s598, 4
        %s600 = scalar_lea.vmem %s0, %s599
        %s601 = smul.u32 2, %s21
        %s602 = smul.u32 2, %s22
        %s603 = smul.u32 2, %s22
        %p604 = scmp.lt.s32.totalorder %s603, 3
        %s605 = scalar_select %p604, %s603, 3
        %s606 = scalar_lea.vmem %s2, %s605
        %s607 = smul.u32 2, %s22
        %s608 = smul.u32 2, %s21
        %p609 = scmp.lt.s32.totalorder %s608, 3
        %s610 = scalar_select %p609, %s608, 3
        %s611 = smul.addr %s610, 2
        %s612 = smul.addr %s611, 4
        %s613 = scalar_lea.vmem %s3, %s612
        %s614 = smul.u32 2, %s21
        %s615 = smul.u32 2, %s22
        %s616 = smul.u32 2, %s22
        %p617 = scmp.lt.s32.totalorder %s616, 3
        %s618 = scalar_select %p617, %s616, 3
        %s619 = scalar_lea.vmem %s5, %s618
        %s620 = smul.u32 2, %s22
        %s621 = smul.u32 2, %s21
        %s622 = smul.u32 2, %s22
        %v624 = vld [vmem:[%s600] sm:$0xf]
        %v625 = vld [vmem:[%s600 + $0x4] sm:$0xf]
        %v626 = vld [vmem:[%s540] sm:$0xff]
        %v627 = vld [vmem:[%s540 + $0x8] sm:$0xff]
        %v628 = vld [vmem:[%s540 + $0x10] sm:$0xff]
        %v629 = vld [vmem:[%s540 + $0x18] sm:$0xff]
        %v630 = vld [vmem:[%s540 + $0x20] sm:$0xff]
        %v631 = vld [vmem:[%s540 + $0x28] sm:$0xff]
        %v632 = vld [vmem:[%s540 + $0x30] sm:$0xff]
        %v633 = vld [vmem:[%s540 + $0x38] sm:$0xff]
        %v634 = vld [vmem:[%s540 + $0x40] sm:$0xff]
        %v635 = vld [vmem:[%s540 + $0x48] sm:$0xff]
        %v636 = vld [vmem:[%s540 + $0x50] sm:$0xff]
        %v637 = vld [vmem:[%s540 + $0x58] sm:$0xff]
        %v638 = vld [vmem:[%s540 + $0x60] sm:$0xff]
        %v639 = vld [vmem:[%s540 + $0x68] sm:$0xff]
        %v640 = vld [vmem:[%s540 + $0x70] sm:$0xff]
        %v641 = vld [vmem:[%s540 + $0x78] sm:$0xff]
        %v642 = vld [vmem:[%s606] sm:$0x3]
        %v644 = vlaneseq
        %v645 = vshrl.u32 %v644, 7
        %v646 = vsub.s32 0, %v645
        %v647 = vrot.slane %v642, %v646
        %v648 = vlaneseq
        %v649 = vshrl.u32 %v648, 7
        %v650 = vsub.s32 1, %v649
        %v651 = vrot.slane %v642, %v650
        %v656 = vunpack.c.l.b16 %v624
        %v657 = vunpack.c.l.b16 %v625
        %v658 = vpack.c.b16 %v657, %v656
        %v676 = vunpack.c.l.b16 %v626
        %v677 = vunpack.c.h.b16 %v626
        %v678 = vunpack.c.l.b16 %v627
        %v679 = vunpack.c.h.b16 %v627
        %v680 = vunpack.c.l.b16 %v628
        %v681 = vunpack.c.h.b16 %v628
        %v682 = vunpack.c.l.b16 %v629
        %v683 = vunpack.c.h.b16 %v629
        %v684 = vunpack.c.l.b16 %v630
        %v685 = vunpack.c.h.b16 %v630
        %v686 = vunpack.c.l.b16 %v631
        %v687 = vunpack.c.h.b16 %v631
        %v688 = vunpack.c.l.b16 %v632
        %v689 = vunpack.c.h.b16 %v632
        %v690 = vunpack.c.l.b16 %v633
        %v691 = vunpack.c.h.b16 %v633
        %v692 = vunpack.c.l.b16 %v634
        %v693 = vunpack.c.h.b16 %v634
        %v694 = vunpack.c.l.b16 %v635
        %v695 = vunpack.c.h.b16 %v635
        %v696 = vunpack.c.l.b16 %v636
        %v697 = vunpack.c.h.b16 %v636
        %v698 = vunpack.c.l.b16 %v637
        %v699 = vunpack.c.h.b16 %v637
        %v700 = vunpack.c.l.b16 %v638
        %v701 = vunpack.c.h.b16 %v638
        %v702 = vunpack.c.l.b16 %v639
        %v703 = vunpack.c.h.b16 %v639
        %v704 = vunpack.c.l.b16 %v640
        %v705 = vunpack.c.h.b16 %v640
        %v706 = vunpack.c.l.b16 %v641
        %v707 = vunpack.c.h.b16 %v641
        %v708 = vpack.c.b16 %v678, %v676
        %v709 = vpack.c.b16 %v679, %v677
        %v710 = vpack.c.b16 %v682, %v680
        %v711 = vpack.c.b16 %v683, %v681
        %v712 = vpack.c.b16 %v686, %v684
        %v713 = vpack.c.b16 %v687, %v685
        %v714 = vpack.c.b16 %v690, %v688
        %v715 = vpack.c.b16 %v691, %v689
        %v716 = vpack.c.b16 %v694, %v692
        %v717 = vpack.c.b16 %v695, %v693
        %v718 = vpack.c.b16 %v698, %v696
        %v719 = vpack.c.b16 %v699, %v697
        %v720 = vpack.c.b16 %v702, %v700
        %v721 = vpack.c.b16 %v703, %v701
        %v722 = vpack.c.b16 %v706, %v704
        %v723 = vpack.c.b16 %v707, %v705
        %740 = vmatprep.subr.bf16.mxu0 %v709
        %741 = vmatpush1.bf16.msra.mxu0 %v708
        %742 = vmatprep.subr.bf16.mxu0 %v711
        %743 = vmatpush1.bf16.msra.mxu0 %v710
        %744 = vmatprep.subr.bf16.mxu0 %v713
        %745 = vmatpush1.bf16.msra.mxu0 %v712
        %746 = vmatprep.subr.bf16.mxu0 %v715
        %747 = vmatpush1.bf16.msra.mxu0 %v714
        %748 = vmatprep.subr.bf16.mxu0 %v717
        %749 = vmatpush1.bf16.msra.mxu0 %v716
        %750 = vmatprep.subr.bf16.mxu0 %v719
        %751 = vmatpush1.bf16.msra.mxu0 %v718
        %752 = vmatprep.subr.bf16.mxu0 %v721
        %753 = vmatpush1.bf16.msra.mxu0 %v720
        %754 = vmatprep.subr.bf16.mxu0 %v723
        %755 = vmatpush1.bf16.msra.mxu0 %v722
        %756 = vmatprep.subr.bf16.mxu0 0
        %757 = vmatpush1.bf16.msra.mxu0 0
        %758 = vmatprep.subr.bf16.mxu0 0
        %759 = vmatpush1.bf16.msra.mxu0 0
        %760 = vmatprep.subr.bf16.mxu0 0
        %761 = vmatpush1.bf16.msra.mxu0 0
        %762 = vmatprep.subr.bf16.mxu0 0
        %763 = vmatpush1.bf16.msra.mxu0 0
        %764 = vmatprep.subr.bf16.mxu0 0
        %765 = vmatpush1.bf16.msra.mxu0 0
        %766 = vmatprep.subr.bf16.mxu0 0
        %767 = vmatpush1.bf16.msra.mxu0 0
        %768 = vmatprep.subr.bf16.mxu0 0
        %769 = vmatpush1.bf16.msra.mxu0 0
        %770 = vmatprep.subr.bf16.mxu0 0
        %771 = vmatpush1.bf16.msra.mxu0 0
        %772 = vmatprep.mubr.bf16.mxu0 0
        %773 = vmatmul.mubr.bf16.gmra.mrb[0].mxu0 %v658
        %v774 = vpop.f32.mrb[0].mxu0
        %v775 = vadd.f32 %v647, %v774
        %v776 = vpop.f32.mrb[0].mxu0
        %v777 = vadd.f32 %v651, %v776
        %v778 = vpop.f32.mrb[0].mxu0
        %v779 = vadd.f32 %v647, %v778
        %v780 = vpop.f32.mrb[0].mxu0
        %v781 = vadd.f32 %v651, %v780
        %782 = vdwg.mxu0
        %v783 = vld [vmem:[%s613] sm:$0xff]
        %v784 = vld [vmem:[%s613 + $0x8] sm:$0xff]
        %v785 = vld [vmem:[%s547] sm:$0xff]
        %v786 = vld [vmem:[%s547 + $0x8] sm:$0xff]
        %v787 = vld [vmem:[%s547 + $0x10] sm:$0xff]
        %v788 = vld [vmem:[%s547 + $0x18] sm:$0xff]
        %v789 = vld [vmem:[%s547 + $0x20] sm:$0xff]
        %v790 = vld [vmem:[%s547 + $0x28] sm:$0xff]
        %v791 = vld [vmem:[%s547 + $0x30] sm:$0xff]
        %v792 = vld [vmem:[%s547 + $0x38] sm:$0xff]
        %v793 = vld [vmem:[%s547 + $0x40] sm:$0xff]
        %v794 = vld [vmem:[%s547 + $0x48] sm:$0xff]
        %v795 = vld [vmem:[%s547 + $0x50] sm:$0xff]
        %v796 = vld [vmem:[%s547 + $0x58] sm:$0xff]
        %v797 = vld [vmem:[%s547 + $0x60] sm:$0xff]
        %v798 = vld [vmem:[%s547 + $0x68] sm:$0xff]
        %v799 = vld [vmem:[%s547 + $0x70] sm:$0xff]
        %v800 = vld [vmem:[%s547 + $0x78] sm:$0xff]
        %v801 = vld [vmem:[%s547 + $0x80] sm:$0xff]
        %v802 = vld [vmem:[%s547 + $0x88] sm:$0xff]
        %v803 = vld [vmem:[%s547 + $0x90] sm:$0xff]
        %v804 = vld [vmem:[%s547 + $0x98] sm:$0xff]
        %v805 = vld [vmem:[%s547 + $0xa0] sm:$0xff]
        %v806 = vld [vmem:[%s547 + $0xa8] sm:$0xff]
        %v807 = vld [vmem:[%s547 + $0xb0] sm:$0xff]
        %v808 = vld [vmem:[%s547 + $0xb8] sm:$0xff]
        %v809 = vld [vmem:[%s547 + $0xc0] sm:$0xff]
        %v810 = vld [vmem:[%s547 + $0xc8] sm:$0xff]
        %v811 = vld [vmem:[%s547 + $0xd0] sm:$0xff]
        %v812 = vld [vmem:[%s547 + $0xd8] sm:$0xff]
        %v813 = vld [vmem:[%s547 + $0xe0] sm:$0xff]
        %v814 = vld [vmem:[%s547 + $0xe8] sm:$0xff]
        %v815 = vld [vmem:[%s547 + $0xf0] sm:$0xff]
        %v816 = vld [vmem:[%s547 + $0xf8] sm:$0xff]
        %v819 = vunpack.c.l.b16 %v783
        %v820 = vunpack.c.h.b16 %v783
        %v821 = vunpack.c.l.b16 %v784
        %v822 = vunpack.c.h.b16 %v784
        %v823 = vpack.c.b16 %v821, %v819
        %v824 = vpack.c.b16 %v822, %v820
        %v859 = vunpack.c.l.b16 %v785
        %v860 = vunpack.c.h.b16 %v785
        %v861 = vunpack.c.l.b16 %v786
        %v862 = vunpack.c.h.b16 %v786
        %v863 = vunpack.c.l.b16 %v787
        %v864 = vunpack.c.h.b16 %v787
        %v865 = vunpack.c.l.b16 %v788
        %v866 = vunpack.c.h.b16 %v788
        %v867 = vunpack.c.l.b16 %v789
        %v868 = vunpack.c.h.b16 %v789
        %v869 = vunpack.c.l.b16 %v790
        %v870 = vunpack.c.h.b16 %v790
        %v871 = vunpack.c.l.b16 %v791
        %v872 = vunpack.c.h.b16 %v791
        %v873 = vunpack.c.l.b16 %v792
        %v874 = vunpack.c.h.b16 %v792
        %v875 = vunpack.c.l.b16 %v793
        %v876 = vunpack.c.h.b16 %v793
        %v877 = vunpack.c.l.b16 %v794
        %v878 = vunpack.c.h.b16 %v794
        %v879 = vunpack.c.l.b16 %v795
        %v880 = vunpack.c.h.b16 %v795
        %v881 = vunpack.c.l.b16 %v796
        %v882 = vunpack.c.h.b16 %v796
        %v883 = vunpack.c.l.b16 %v797
        %v884 = vunpack.c.h.b16 %v797
        %v885 = vunpack.c.l.b16 %v798
        %v886 = vunpack.c.h.b16 %v798
        %v887 = vunpack.c.l.b16 %v799
        %v888 = vunpack.c.h.b16 %v799
        %v889 = vunpack.c.l.b16 %v800
        %v890 = vunpack.c.h.b16 %v800
        %v891 = vunpack.c.l.b16 %v801
        %v892 = vunpack.c.h.b16 %v801
        %v893 = vunpack.c.l.b16 %v802
        %v894 = vunpack.c.h.b16 %v802
        %v895 = vunpack.c.l.b16 %v803
        %v896 = vunpack.c.h.b16 %v803
        %v897 = vunpack.c.l.b16 %v804
        %v898 = vunpack.c.h.b16 %v804
        %v899 = vunpack.c.l.b16 %v805
        %v900 = vunpack.c.h.b16 %v805
        %v901 = vunpack.c.l.b16 %v806
        %v902 = vunpack.c.h.b16 %v806
        %v903 = vunpack.c.l.b16 %v807
        %v904 = vunpack.c.h.b16 %v807
        %v905 = vunpack.c.l.b16 %v808
        %v906 = vunpack.c.h.b16 %v808
        %v907 = vunpack.c.l.b16 %v809
        %v908 = vunpack.c.h.b16 %v809
        %v909 = vunpack.c.l.b16 %v810
        %v910 = vunpack.c.h.b16 %v810
        %v911 = vunpack.c.l.b16 %v811
        %v912 = vunpack.c.h.b16 %v811
        %v913 = vunpack.c.l.b16 %v812
        %v914 = vunpack.c.h.b16 %v812
        %v915 = vunpack.c.l.b16 %v813
        %v916 = vunpack.c.h.b16 %v813
        %v917 = vunpack.c.l.b16 %v814
        %v918 = vunpack.c.h.b16 %v814
        %v919 = vunpack.c.l.b16 %v815
        %v920 = vunpack.c.h.b16 %v815
        %v921 = vunpack.c.l.b16 %v816
        %v922 = vunpack.c.h.b16 %v816
        %v923 = vpack.c.b16 %v861, %v859
        %v924 = vpack.c.b16 %v862, %v860
        %v925 = vpack.c.b16 %v865, %v863
        %v926 = vpack.c.b16 %v866, %v864
        %v927 = vpack.c.b16 %v869, %v867
        %v928 = vpack.c.b16 %v870, %v868
        %v929 = vpack.c.b16 %v873, %v871
        %v930 = vpack.c.b16 %v874, %v872
        %v931 = vpack.c.b16 %v877, %v875
        %v932 = vpack.c.b16 %v878, %v876
        %v933 = vpack.c.b16 %v881, %v879
        %v934 = vpack.c.b16 %v882, %v880
        %v935 = vpack.c.b16 %v885, %v883
        %v936 = vpack.c.b16 %v886, %v884
        %v937 = vpack.c.b16 %v889, %v887
        %v938 = vpack.c.b16 %v890, %v888
        %v939 = vpack.c.b16 %v893, %v891
        %v940 = vpack.c.b16 %v894, %v892
        %v941 = vpack.c.b16 %v897, %v895
        %v942 = vpack.c.b16 %v898, %v896
        %v943 = vpack.c.b16 %v901, %v899
        %v944 = vpack.c.b16 %v902, %v900
        %v945 = vpack.c.b16 %v905, %v903
        %v946 = vpack.c.b16 %v906, %v904
        %v947 = vpack.c.b16 %v909, %v907
        %v948 = vpack.c.b16 %v910, %v908
        %v949 = vpack.c.b16 %v913, %v911
        %v950 = vpack.c.b16 %v914, %v912
        %v951 = vpack.c.b16 %v917, %v915
        %v952 = vpack.c.b16 %v918, %v916
        %v953 = vpack.c.b16 %v921, %v919
        %v954 = vpack.c.b16 %v922, %v920
        %987 = vmatprep.subr.bf16.mxu0 %v924
        %988 = vmatpush1.bf16.msra.mxu0 %v923
        %989 = vmatprep.subr.bf16.mxu0 %v926
        %990 = vmatpush1.bf16.msra.mxu0 %v925
        %991 = vmatprep.subr.bf16.mxu0 %v928
        %992 = vmatpush1.bf16.msra.mxu0 %v927
        %993 = vmatprep.subr.bf16.mxu0 %v930
        %994 = vmatpush1.bf16.msra.mxu0 %v929
        %995 = vmatprep.subr.bf16.mxu0 %v932
        %996 = vmatpush1.bf16.msra.mxu0 %v931
        %997 = vmatprep.subr.bf16.mxu0 %v934
        %998 = vmatpush1.bf16.msra.mxu0 %v933
        %999 = vmatprep.subr.bf16.mxu0 %v936
        %1000 = vmatpush1.bf16.msra.mxu0 %v935
        %1001 = vmatprep.subr.bf16.mxu0 %v938
        %1002 = vmatpush1.bf16.msra.mxu0 %v937
        %1003 = vmatprep.subr.bf16.mxu0 %v940
        %1004 = vmatpush1.bf16.msra.mxu0 %v939
        %1005 = vmatprep.subr.bf16.mxu0 %v942
        %1006 = vmatpush1.bf16.msra.mxu0 %v941
        %1007 = vmatprep.subr.bf16.mxu0 %v944
        %1008 = vmatpush1.bf16.msra.mxu0 %v943
        %1009 = vmatprep.subr.bf16.mxu0 %v946
        %1010 = vmatpush1.bf16.msra.mxu0 %v945
        %1011 = vmatprep.subr.bf16.mxu0 %v948
        %1012 = vmatpush1.bf16.msra.mxu0 %v947
        %1013 = vmatprep.subr.bf16.mxu0 %v950
        %1014 = vmatpush1.bf16.msra.mxu0 %v949
        %1015 = vmatprep.subr.bf16.mxu0 %v952
        %1016 = vmatpush1.bf16.msra.mxu0 %v951
        %1017 = vmatprep.subr.bf16.mxu0 %v954
        %1018 = vmatpush1.bf16.msra.mxu0 %v953
        %1019 = vmatprep.mubr.bf16.mxu0 %v824
        %1020 = vmatmul.mubr.bf16.gmra.mrb[0].mxu0 %v823
        %v1021 = vpop.f32.mrb[0].mxu0
        %v1022 = vadd.f32 0.0, %v1021
        %v1023 = vpop.f32.mrb[0].mxu0
        %v1024 = vadd.f32 0.0, %v1023
        %v1025 = vpop.f32.mrb[0].mxu0
        %v1026 = vadd.f32 0.0, %v1025
        %v1027 = vpop.f32.mrb[0].mxu0
        %v1028 = vadd.f32 0.0, %v1027
        %1029 = vdwg.mxu0
        %v1030 = vadd.f32 %v775, %v1022
        %v1031 = vadd.f32 %v777, %v1024
        %v1032 = vadd.f32 %v779, %v1026
        %v1033 = vadd.f32 %v781, %v1028
        %v1034 = vld [vmem:[%s619] sm:$0x3]
        %v1036 = vlaneseq
        %v1037 = vshrl.u32 %v1036, 7
        %v1038 = vsub.s32 0, %v1037
        %v1039 = vrot.slane %v1034, %v1038
        %v1040 = vlaneseq
        %v1041 = vshrl.u32 %v1040, 7
        %v1042 = vsub.s32 1, %v1041
        %v1043 = vrot.slane %v1034, %v1042
        %v1046 = vadd.f32 %v1030, %v1039
        %v1047 = vadd.f32 %v1031, %v1043
        %v1048 = vadd.f32 %v1032, %v1039
        %v1049 = vadd.f32 %v1033, %v1043
        %v1050 = vmax.f32 %v1046, 0.0
        %v1051 = vmax.f32 %v1047, 0.0
        %v1052 = vmax.f32 %v1048, 0.0
        %v1053 = vmax.f32 %v1049, 0.0
        %v1054 = vpack.c.bf16 %v1052, %v1050
        %v1055 = vpack.c.bf16 %v1053, %v1051
        %v1058 = vunpack.c.l.b16 %v1054
        %v1059 = vunpack.c.l.b16 %v1055
        %v1060 = vunpack.c.h.b16 %v1054
        %v1061 = vunpack.c.h.b16 %v1055
        %v1062 = vpack.c.b16 %v1059, %v1058
        %v1063 = vpack.c.b16 %v1061, %v1060
        %1066 = vst [vmem:[%s595] sm:$0xff] %v1062
        %1067 = vst [vmem:[%s595 + $0x8] sm:$0xff] %v1063
        %s1068 = sand.u32 %s195, 1
        %s1069 = sand.u32 %s195, 1
        %s1070 = smul.addr %s1069, 16
        %s1071 = scalar_lea.vmem [#allocation4], %s1070
        // Predicated region
        $region121: #{_lambda_.9} parent=111 // pred_check
          %p1072 = pneg %p205
        $region122: #{_lambda_.9} parent=111 // pred_check_branch
          %1074 = sbr.rel (%p1072) target = $region124
        $region123: #{_lambda_.9} parent=111 // pred_region
          %s1075 = smul.u32 2, %s21
          %s1076 = smul.u32 2, %s22
          %s1077 = smul.addr %s1075, 4
          %s1078 = sadd.s32 %s1076, %s1077
          %s1079 = smul.addr %s1078, 4
          %s1080 = scalar_lea.vmem %s6, %s1079
          // Predicated region
          $region125: #{_lambda_.9} parent=123 // pred_check
            _
          $region126: #{_lambda_.9} parent=123 // pred_check_branch
            %1082 = sbr.rel (0) target = $region128
          $region127: #{_lambda_.9} parent=123 // pred_region
            // Predicated region
            $region129: #{_lambda_.9} parent=127 // pred_check
              _
            $region130: #{_lambda_.9} parent=127 // pred_check_branch
              %1084 = sbr.rel (0) target = $region132
            $region131: #{_lambda_.9} parent=127 // pred_region
              // Predicated region
              $region144: #{_lambda_.9} parent=131 // pred_check
                _
              $region145: #{_lambda_.9} parent=131 // pred_check_branch
                %1101 = sbr.rel (0) target = $region147
              $region146: #{_lambda_.9} parent=131 // pred_region
                loop: start=0, step=1, limit=1
                $region148: #{_lambda_.9} parent=146 // loop_pre_header
                  _
                $region149: #{_lambda_.9} parent=146 // loop_header
                  %s1103 = sphi 0, %s1107
                  %p1104 = scmp.ge.s32.totalorder %s1103, 1
                  %s1108 = sphi %s1071, %s1071
                  %s1109 = sphi %s1080, %s1080
                $region150: #{_lambda_.9} parent=146 // loop_header_branch
                  %1106 = sbr.rel (%p1104) target = $region154
                $region151: #{_lambda_.9} parent=146 // loop_body
                  %v1110 = vld [vmem:[%s1108] sm:$0xff]
                  %1111 = vst [vmem:[%s1109] sm:$0xff] %v1110
                  %v1112 = vld [vmem:[%s1108 + $0x8] sm:$0xff]
                  %1113 = vst [vmem:[%s1109 + $0x10] sm:$0xff] %v1112
                $region152: #{_lambda_.9} parent=146 // loop_footer
                  %s1107 = sadd.s32 1, %s1103
                $region153: #{_lambda_.9} parent=146 // loop_footer_branch
                  %1102 = sbr.rel target = $region149
                $region154: #{_lambda_.9} parent=146 // loop_exit
                  _
              $region147: #{_lambda_.9} parent=131 // pred_fallthru
                _
              // Predicated region
              $region155: #{_lambda_.9} parent=131 // pred_check
                _
              $region156: #{_lambda_.9} parent=131 // pred_check_branch
                %1115 = sbr.rel target = $region158
              $region157: #{_lambda_.9} parent=131 // pred_region
                _
              $region158: #{_lambda_.9} parent=131 // pred_fallthru
                _
            $region132: #{_lambda_.9} parent=127 // pred_fallthru
              _
            // Predicated region
            $region133: #{_lambda_.9} parent=127 // pred_check
              _
            $region134: #{_lambda_.9} parent=127 // pred_check_branch
              %1086 = sbr.rel target = $region136
            $region135: #{_lambda_.9} parent=127 // pred_region
              loop: start=0, step=1, limit=1
              $region137: #{_lambda_.9} parent=135 // loop_pre_header
                _
              $region138: #{_lambda_.9} parent=135 // loop_header
                %s1089 = sphi 0, %s1093
                %p1090 = scmp.ge.s32.totalorder %s1089, 1
                %s1094 = sphi %s1071, %s1071
                %s1095 = sphi %s1080, %s1080
              $region139: #{_lambda_.9} parent=135 // loop_header_branch
                %1092 = sbr.rel (%p1090) target = $region143
              $region140: #{_lambda_.9} parent=135 // loop_body
                %v1096 = vld [vmem:[%s1094] sm:$0xff]
                %1097 = vst [vmem:[%s1095] sm:$0xff] %v1096
                %v1098 = vld [vmem:[%s1094 + $0x8] sm:$0xff]
                %1099 = vst [vmem:[%s1095 + $0x10] sm:$0xff] %v1098
              $region141: #{_lambda_.9} parent=135 // loop_footer
                %s1093 = sadd.s32 1, %s1089
              $region142: #{_lambda_.9} parent=135 // loop_footer_branch
                %1088 = sbr.rel target = $region138
              $region143: #{_lambda_.9} parent=135 // loop_exit
                _
            $region136: #{_lambda_.9} parent=127 // pred_fallthru
              _
          $region128: #{_lambda_.9} parent=123 // pred_fallthru
            _
          %1116 = vnop
        $region124: #{_lambda_.9} parent=111 // pred_fallthru
          _
      $region112: #{_lambda_.9} parent=5 // pred_fallthru
        _
      %p1117 = scmp.le.s32.totalorder 2, %s12
      // Predicated region
      $region159: #{_lambda_.9} parent=5 // pred_check
        %p1118 = pneg %p1117
      $region160: #{_lambda_.9} parent=5 // pred_check_branch
        %1120 = sbr.rel (%p1118) target = $region162
      $region161: #{_lambda_.9} parent=5 // pred_region
        %s1121 = ssub.s32 %s12, 2
        // Predicated region
        $region163: #{_lambda_.9} parent=161 // pred_check
          %p1122 = pneg %p211
        $region164: #{_lambda_.9} parent=161 // pred_check_branch
          %1124 = sbr.rel (%p1122) target = $region166
        $region165: #{_lambda_.9} parent=161 // pred_region
          %s1125 = sand.u32 %s196, 1
          %s1126 = sand.u32 %s196, 1
          %s1127 = smul.addr %s1126, 16
          %s1128 = scalar_lea.vmem [#allocation4], %s1127
        $region166: #{_lambda_.9} parent=161 // pred_fallthru
          _
      $region162: #{_lambda_.9} parent=5 // pred_fallthru
        _
    $region6: #{_lambda_.9} parent=1 // loop_footer
      %s16 = sadd.s32 1, %s12
    $region7: #{_lambda_.9} parent=1 // loop_footer_branch
      %11 = sbr.rel target = $region3
    $region8: #{_lambda_.9} parent=1 // loop_exit
      _

// kernel: _lambda_.13
$region0: #{_lambda_.13}
  #allocation0 [shape = 'u32[]', space=smem, size = 0x4, offset = 0x4, fixed_abs, tag = 'smem constant byte address 0x4 - core index']
  #allocation1 [shape = 'u32[144,128]{1,0:T(1,128)}', space=vmem, size = 0x12000, scoped, tag = 'internal scratch']
  %s0 = inlined_call_operand.vmem [shape: bf16[2,16,512], index: 0, kind: input, shape index: {}]
  %s1 = inlined_call_operand.vmem [shape: f32[512,128], index: 1, kind: input, shape index: {}]
  %s2 = inlined_call_operand.vmem [shape: f32[1,128], index: 2, kind: input, shape index: {}]
  %s3 = inlined_call_operand.hbm [shape: f32[2,128], index: 3, kind: output, shape index: {}]
  %s4 = sld [smem:[#allocation0]]
  $region22: #{_lambda_.13} parent=0
    _
  %s6 = ssub.s32 1, %s4
  %s7 = scalar_select 0, %s6, %s4
  $region1: #{_lambda_.13} parent=0
    #allocation2 [shape = 'u8[1024]{0}', space=vmem, size = 0x400, scoped, tag = 'output window, operand 0, single buffered']
    #allocation3 [shape = 's32[1]{0}', space=sflag, size = 0x4, scoped, tag = 'scoped memory for _lambda_.13']
    %8 = vsyncpa [#allocation3], 0
    // Predicated region
    $region2: #{_lambda_.13} parent=1 // pred_check
      _
    $region3: #{_lambda_.13} parent=1 // pred_check_branch
      %10 = sbr.rel (0) target = $region5
    $region4: #{_lambda_.13} parent=1 // pred_region
      _
    $region5: #{_lambda_.13} parent=1 // pred_fallthru
      _
    // Predicated region
    $region6: #{_lambda_.13} parent=1 // pred_check
      _
    $region7: #{_lambda_.13} parent=1 // pred_check_branch
      %12 = sbr.rel (0) target = $region9
    $region8: #{_lambda_.13} parent=1 // pred_region
      _
    $region9: #{_lambda_.13} parent=1 // pred_fallthru
      _
    // Predicated region
    $region10: #{_lambda_.13} parent=1 // pred_check
      _
    $region11: #{_lambda_.13} parent=1 // pred_check_branch
      %14 = sbr.rel (0) target = $region13
    $region12: #{_lambda_.13} parent=1 // pred_region
      _
    $region13: #{_lambda_.13} parent=1 // pred_fallthru
      _
    %v15 = vld [vmem:[%s0] sm:$0xff]
    %v16 = vld [vmem:[%s0 + $0x8] sm:$0xff]
    %v17 = vld [vmem:[%s0 + $0x10] sm:$0xff]
    %v18 = vld [vmem:[%s0 + $0x18] sm:$0xff]
    %v19 = vld [vmem:[%s0 + $0x20] sm:$0xff]
    %v20 = vld [vmem:[%s0 + $0x28] sm:$0xff]
    %v21 = vld [vmem:[%s0 + $0x30] sm:$0xff]
    %v22 = vld [vmem:[%s0 + $0x38] sm:$0xff]
    %v23 = vunpack.c.l.bf16 %v15
    %v24 = vunpack.c.h.bf16 %v15
    %v25 = vunpack.c.l.bf16 %v16
    %v26 = vunpack.c.h.bf16 %v16
    %v27 = vunpack.c.l.bf16 %v17
    %v28 = vunpack.c.h.bf16 %v17
    %v29 = vunpack.c.l.bf16 %v18
    %v30 = vunpack.c.h.bf16 %v18
    %v31 = vunpack.c.l.bf16 %v19
    %v32 = vunpack.c.h.bf16 %v19
    %v33 = vunpack.c.l.bf16 %v20
    %v34 = vunpack.c.h.bf16 %v20
    %v35 = vunpack.c.l.bf16 %v21
    %v36 = vunpack.c.h.bf16 %v21
    %v37 = vunpack.c.l.bf16 %v22
    %v38 = vunpack.c.h.bf16 %v22
    %v39 = vadd.f32 %v23, %v27
    %v40 = vrot.slane %v39, 4
    %v41 = vadd.f32 %v39, %v40
    %v42 = vrot.slane %v41, 2
    %v43 = vadd.f32 %v41, %v42
    %v44 = vrot.slane %v43, 1
    %v45 = vadd.f32 %v43, %v44
    %v46 = vadd.f32 %v24, %v28
    %v47 = vrot.slane %v46, 4
    %v48 = vadd.f32 %v46, %v47
    %v49 = vrot.slane %v48, 2
    %v50 = vadd.f32 %v48, %v49
    %v51 = vrot.slane %v50, 1
    %v52 = vadd.f32 %v50, %v51
    %v53 = vadd.f32 %v25, %v29
    %v54 = vrot.slane %v53, 4
    %v55 = vadd.f32 %v53, %v54
    %v56 = vrot.slane %v55, 2
    %v57 = vadd.f32 %v55, %v56
    %v58 = vrot.slane %v57, 1
    %v59 = vadd.f32 %v57, %v58
    %v60 = vadd.f32 %v26, %v30
    %v61 = vrot.slane %v60, 4
    %v62 = vadd.f32 %v60, %v61
    %v63 = vrot.slane %v62, 2
    %v64 = vadd.f32 %v62, %v63
    %v65 = vrot.slane %v64, 1
    %v66 = vadd.f32 %v64, %v65
    %v67 = vadd.f32 %v31, %v35
    %v68 = vrot.slane %v67, 4
    %v69 = vadd.f32 %v67, %v68
    %v70 = vrot.slane %v69, 2
    %v71 = vadd.f32 %v69, %v70
    %v72 = vrot.slane %v71, 1
    %v73 = vadd.f32 %v71, %v72
    %v74 = vadd.f32 %v32, %v36
    %v75 = vrot.slane %v74, 4
    %v76 = vadd.f32 %v74, %v75
    %v77 = vrot.slane %v76, 2
    %v78 = vadd.f32 %v76, %v77
    %v79 = vrot.slane %v78, 1
    %v80 = vadd.f32 %v78, %v79
    %v81 = vadd.f32 %v33, %v37
    %v82 = vrot.slane %v81, 4
    %v83 = vadd.f32 %v81, %v82
    %v84 = vrot.slane %v83, 2
    %v85 = vadd.f32 %v83, %v84
    %v86 = vrot.slane %v85, 1
    %v87 = vadd.f32 %v85, %v86
    %v88 = vadd.f32 %v34, %v38
    %v89 = vrot.slane %v88, 4
    %v90 = vadd.f32 %v88, %v89
    %v91 = vrot.slane %v90, 2
    %v92 = vadd.f32 %v90, %v91
    %v93 = vrot.slane %v92, 1
    %v94 = vadd.f32 %v92, %v93
    %v95 = vld [vmem:[%s1] sm:$0xff]
    %v96 = vld [vmem:[%s1 + $0x8] sm:$0xff]
    %v97 = vld [vmem:[%s1 + $0x10] sm:$0xff]
    %v98 = vld [vmem:[%s1 + $0x18] sm:$0xff]
    %v99 = vld [vmem:[%s1 + $0x20] sm:$0xff]
    %v100 = vld [vmem:[%s1 + $0x28] sm:$0xff]
    %v101 = vld [vmem:[%s1 + $0x30] sm:$0xff]
    %v102 = vld [vmem:[%s1 + $0x38] sm:$0xff]
    %v103 = vld [vmem:[%s1 + $0x40] sm:$0xff]
    %v104 = vld [vmem:[%s1 + $0x48] sm:$0xff]
    %v105 = vld [vmem:[%s1 + $0x50] sm:$0xff]
    %v106 = vld [vmem:[%s1 + $0x58] sm:$0xff]
    %v107 = vld [vmem:[%s1 + $0x60] sm:$0xff]
    %v108 = vld [vmem:[%s1 + $0x68] sm:$0xff]
    %v109 = vld [vmem:[%s1 + $0x70] sm:$0xff]
    %v110 = vld [vmem:[%s1 + $0x78] sm:$0xff]
    %v111 = vld [vmem:[%s1 + $0x80] sm:$0xff]
    %v112 = vld [vmem:[%s1 + $0x88] sm:$0xff]
    %v113 = vld [vmem:[%s1 + $0x90] sm:$0xff]
    %v114 = vld [vmem:[%s1 + $0x98] sm:$0xff]
    %v115 = vld [vmem:[%s1 + $0xa0] sm:$0xff]
    %v116 = vld [vmem:[%s1 + $0xa8] sm:$0xff]
    %v117 = vld [vmem:[%s1 + $0xb0] sm:$0xff]
    %v118 = vld [vmem:[%s1 + $0xb8] sm:$0xff]
    %v119 = vld [vmem:[%s1 + $0xc0] sm:$0xff]
    %v120 = vld [vmem:[%s1 + $0xc8] sm:$0xff]
    %v121 = vld [vmem:[%s1 + $0xd0] sm:$0xff]
    %v122 = vld [vmem:[%s1 + $0xd8] sm:$0xff]
    %v123 = vld [vmem:[%s1 + $0xe0] sm:$0xff]
    %v124 = vld [vmem:[%s1 + $0xe8] sm:$0xff]
    %v125 = vld [vmem:[%s1 + $0xf0] sm:$0xff]
    %v126 = vld [vmem:[%s1 + $0xf8] sm:$0xff]
    %v127 = vld [vmem:[%s1 + $0x100] sm:$0xff]
    %v128 = vld [vmem:[%s1 + $0x108] sm:$0xff]
    %v129 = vld [vmem:[%s1 + $0x110] sm:$0xff]
    %v130 = vld [vmem:[%s1 + $0x118] sm:$0xff]
    %v131 = vld [vmem:[%s1 + $0x120] sm:$0xff]
    %v132 = vld [vmem:[%s1 + $0x128] sm:$0xff]
    %v133 = vld [vmem:[%s1 + $0x130] sm:$0xff]
    %v134 = vld [vmem:[%s1 + $0x138] sm:$0xff]
    %v135 = vld [vmem:[%s1 + $0x140] sm:$0xff]
    %v136 = vld [vmem:[%s1 + $0x148] sm:$0xff]
    %v137 = vld [vmem:[%s1 + $0x150] sm:$0xff]
    %v138 = vld [vmem:[%s1 + $0x158] sm:$0xff]
    %v139 = vld [vmem:[%s1 + $0x160] sm:$0xff]
    %v140 = vld [vmem:[%s1 + $0x168] sm:$0xff]
    %v141 = vld [vmem:[%s1 + $0x170] sm:$0xff]
    %v142 = vld [vmem:[%s1 + $0x178] sm:$0xff]
    %v143 = vld [vmem:[%s1 + $0x180] sm:$0xff]
    %v144 = vld [vmem:[%s1 + $0x188] sm:$0xff]
    %v145 = vld [vmem:[%s1 + $0x190] sm:$0xff]
    %v146 = vld [vmem:[%s1 + $0x198] sm:$0xff]
    %v147 = vld [vmem:[%s1 + $0x1a0] sm:$0xff]
    %v148 = vld [vmem:[%s1 + $0x1a8] sm:$0xff]
    %v149 = vld [vmem:[%s1 + $0x1b0] sm:$0xff]
    %v150 = vld [vmem:[%s1 + $0x1b8] sm:$0xff]
    %v151 = vld [vmem:[%s1 + $0x1c0] sm:$0xff]
    %v152 = vld [vmem:[%s1 + $0x1c8] sm:$0xff]
    %v153 = vld [vmem:[%s1 + $0x1d0] sm:$0xff]
    %v154 = vld [vmem:[%s1 + $0x1d8] sm:$0xff]
    %v155 = vld [vmem:[%s1 + $0x1e0] sm:$0xff]
    %v156 = vld [vmem:[%s1 + $0x1e8] sm:$0xff]
    %v157 = vld [vmem:[%s1 + $0x1f0] sm:$0xff]
    %v158 = vld [vmem:[%s1 + $0x1f8] sm:$0xff]
    %v159 = vld [vmem:[%s2] sm:$0x1]
    %v161 = vlaneseq
    %v162 = vshrl.u32 %v161, 7
    %v163 = vsub.s32 0, %v162
    %v164 = vrot.slane %v159, %v163
    %vm174 = vcmask 1041409
    %v175 = vsel %vm174, %v73, %v45
    %v176 = vsel %vm174, %v80, %v52
    %v177 = vsel %vm174, %v87, %v59
    %v178 = vsel %vm174, %v94, %v66
    %183 = vmatprep.subr.mxu0 0.0
    %184 = vmatpush1.msra.mxu0 %v95
    %185 = vmatprep.subr.mxu0 0.0
    %186 = vmatpush1.msra.mxu0 %v96
    %187 = vmatprep.subr.mxu0 0.0
    %188 = vmatpush1.msra.mxu0 %v97
    %189 = vmatprep.subr.mxu0 0.0
    %190 = vmatpush1.msra.mxu0 %v98
    %191 = vmatprep.subr.mxu0 0.0
    %192 = vmatpush1.msra.mxu0 %v99
    %193 = vmatprep.subr.mxu0 0.0
    %194 = vmatpush1.msra.mxu0 %v100
    %195 = vmatprep.subr.mxu0 0.0
    %196 = vmatpush1.msra.mxu0 %v101
    %197 = vmatprep.subr.mxu0 0.0
    %198 = vmatpush1.msra.mxu0 %v102
    %199 = vmatprep.subr.mxu0 0.0
    %200 = vmatpush1.msra.mxu0 %v103
    %201 = vmatprep.subr.mxu0 0.0
    %202 = vmatpush1.msra.mxu0 %v104
    %203 = vmatprep.subr.mxu0 0.0
    %204 = vmatpush1.msra.mxu0 %v105
    %205 = vmatprep.subr.mxu0 0.0
    %206 = vmatpush1.msra.mxu0 %v106
    %207 = vmatprep.subr.mxu0 0.0
    %208 = vmatpush1.msra.mxu0 %v107
    %209 = vmatprep.subr.mxu0 0.0
    %210 = vmatpush1.msra.mxu0 %v108
    %211 = vmatprep.subr.mxu0 0.0
    %212 = vmatpush1.msra.mxu0 %v109
    %213 = vmatprep.subr.mxu0 0.0
    %214 = vmatpush1.msra.mxu0 %v110
    %215 = vmatprep.subr.mxu0 0.0
    %216 = vmatpush1.msra.mxu0 %v111
    %217 = vmatprep.subr.mxu0 0.0
    %218 = vmatpush1.msra.mxu0 %v112
    %219 = vmatprep.subr.mxu0 0.0
    %220 = vmatpush1.msra.mxu0 %v113
    %221 = vmatprep.subr.mxu0 0.0
    %222 = vmatpush1.msra.mxu0 %v114
    %223 = vmatprep.subr.mxu0 0.0
    %224 = vmatpush1.msra.mxu0 %v115
    %225 = vmatprep.subr.mxu0 0.0
    %226 = vmatpush1.msra.mxu0 %v116
    %227 = vmatprep.subr.mxu0 0.0
    %228 = vmatpush1.msra.mxu0 %v117
    %229 = vmatprep.subr.mxu0 0.0
    %230 = vmatpush1.msra.mxu0 %v118
    %231 = vmatprep.subr.mxu0 0.0
    %232 = vmatpush1.msra.mxu0 %v119
    %233 = vmatprep.subr.mxu0 0.0
    %234 = vmatpush1.msra.mxu0 %v120
    %235 = vmatprep.subr.mxu0 0.0
    %236 = vmatpush1.msra.mxu0 %v121
    %237 = vmatprep.subr.mxu0 0.0
    %238 = vmatpush1.msra.mxu0 %v122
    %239 = vmatprep.subr.mxu0 0.0
    %240 = vmatpush1.msra.mxu0 %v123
    %241 = vmatprep.subr.mxu0 0.0
    %242 = vmatpush1.msra.mxu0 %v124
    %243 = vmatprep.subr.mxu0 0.0
    %244 = vmatpush1.msra.mxu0 %v125
    %245 = vmatprep.subr.mxu0 0.0
    %246 = vmatpush1.msra.mxu0 %v126
    %247 = vmatprep.mubr.f32.mxu0 %v176
    %248 = vmatmul.mubr.f32.gmra.mrb[0].mxu0 %v175
    %v249 = vpop.f32.mrb[0].mxu0
    %v250 = vadd.f32 %v164, %v249
    %v251 = vpop.f32.mrb[0].mxu0
    %252 = vdwg.mxu0
    %253 = vmatprep.subr.mxu0 0.0
    %254 = vmatpush1.msra.mxu0 %v127
    %255 = vmatprep.subr.mxu0 0.0
    %256 = vmatpush1.msra.mxu0 %v128
    %257 = vmatprep.subr.mxu0 0.0
    %258 = vmatpush1.msra.mxu0 %v129
    %259 = vmatprep.subr.mxu0 0.0
    %260 = vmatpush1.msra.mxu0 %v130
    %261 = vmatprep.subr.mxu0 0.0
    %262 = vmatpush1.msra.mxu0 %v131
    %263 = vmatprep.subr.mxu0 0.0
    %264 = vmatpush1.msra.mxu0 %v132
    %265 = vmatprep.subr.mxu0 0.0
    %266 = vmatpush1.msra.mxu0 %v133
    %267 = vmatprep.subr.mxu0 0.0
    %268 = vmatpush1.msra.mxu0 %v134
    %269 = vmatprep.subr.mxu0 0.0
    %270 = vmatpush1.msra.mxu0 %v135
    %271 = vmatprep.subr.mxu0 0.0
    %272 = vmatpush1.msra.mxu0 %v136
    %273 = vmatprep.subr.mxu0 0.0
    %274 = vmatpush1.msra.mxu0 %v137
    %275 = vmatprep.subr.mxu0 0.0
    %276 = vmatpush1.msra.mxu0 %v138
    %277 = vmatprep.subr.mxu0 0.0
    %278 = vmatpush1.msra.mxu0 %v139
    %279 = vmatprep.subr.mxu0 0.0
    %280 = vmatpush1.msra.mxu0 %v140
    %281 = vmatprep.subr.mxu0 0.0
    %282 = vmatpush1.msra.mxu0 %v141
    %283 = vmatprep.subr.mxu0 0.0
    %284 = vmatpush1.msra.mxu0 %v142
    %285 = vmatprep.subr.mxu0 0.0
    %286 = vmatpush1.msra.mxu0 %v143
    %287 = vmatprep.subr.mxu0 0.0
    %288 = vmatpush1.msra.mxu0 %v144
    %289 = vmatprep.subr.mxu0 0.0
    %290 = vmatpush1.msra.mxu0 %v145
    %291 = vmatprep.subr.mxu0 0.0
    %292 = vmatpush1.msra.mxu0 %v146
    %293 = vmatprep.subr.mxu0 0.0
    %294 = vmatpush1.msra.mxu0 %v147
    %295 = vmatprep.subr.mxu0 0.0
    %296 = vmatpush1.msra.mxu0 %v148
    %297 = vmatprep.subr.mxu0 0.0
    %298 = vmatpush1.msra.mxu0 %v149
    %299 = vmatprep.subr.mxu0 0.0
    %300 = vmatpush1.msra.mxu0 %v150
    %301 = vmatprep.subr.mxu0 0.0
    %302 = vmatpush1.msra.mxu0 %v151
    %303 = vmatprep.subr.mxu0 0.0
    %304 = vmatpush1.msra.mxu0 %v152
    %305 = vmatprep.subr.mxu0 0.0
    %306 = vmatpush1.msra.mxu0 %v153
    %307 = vmatprep.subr.mxu0 0.0
    %308 = vmatpush1.msra.mxu0 %v154
    %309 = vmatprep.subr.mxu0 0.0
    %310 = vmatpush1.msra.mxu0 %v155
    %311 = vmatprep.subr.mxu0 0.0
    %312 = vmatpush1.msra.mxu0 %v156
    %313 = vmatprep.subr.mxu0 0.0
    %314 = vmatpush1.msra.mxu0 %v157
    %315 = vmatprep.subr.mxu0 0.0
    %316 = vmatpush1.msra.mxu0 %v158
    %317 = vmatprep.mubr.f32.mxu0 %v178
    %318 = vmatmul.mubr.f32.gmra.mrb[0].mxu0 %v177
    %v319 = vpop.f32.mrb[0].mxu0
    %v320 = vadd.f32 %v250, %v319
    %v321 = vpop.f32.mrb[0].mxu0
    %322 = vdwg.mxu0
    %v323 = vlaneseq
    %v324 = vand.u32 %v323, 127
    %vm325 = vcmp.lt.s32.totalorder %v324, 3
    %v326 = vsel %vm325, %v320, -1e+30
    %vm327 = vcmask 1041408
    %v328 = vsel %vm327, %v326, -inf
    %329 = vmax.xlane.f32.xlu0 %v328
    %v330 = vpop.xlane.xlu0 %329
    %v331 = vsub.f32 %v326, %v330
    %v332 = vmul.f32 %v331, 1.442695
    %v333 = vpow.pop %v332
    %v334 = vsel %vm327, %v333, 0.0
    %335 = vadd.xlane.f32.xlu0 %v334
    %v336 = vpop.xlane.xlu0 %335
    %v337 = vrcp.pop %v336
    %v338 = vmul.f32 %v333, %v337
    %339 = vst [vmem:[#allocation2] sm:$0x3] %v338
    // Predicated region
    $region14: #{_lambda_.13} parent=1 // pred_check
      _
    $region15: #{_lambda_.13} parent=1 // pred_check_branch
      %341 = sbr.rel (0) target = $region17
    $region16: #{_lambda_.13} parent=1 // pred_region
      %s343 = ssub.s32 32, 32
      %344 = vsyncadd [#allocation3], %s343
      %s346 = sshll.u32 [#allocation2], 4
      %s347 = int_to_ptr.vmem [resolvable:$true] %s346
      %349 = dma.vmem_to_hbm [thread:$0]  %s347, 32, %s3, [#allocation3]
    $region17: #{_lambda_.13} parent=1 // pred_fallthru
      _
    // Predicated region
    $region18: #{_lambda_.13} parent=1 // pred_check
      _
    $region19: #{_lambda_.13} parent=1 // pred_check_branch
      %351 = sbr.rel (0) target = $region21
    $region20: #{_lambda_.13} parent=1 // pred_region
      %352 = dma.done [#allocation3], 32
    $region21: #{_lambda_.13} parent=1 // pred_fallthru
      _
    %353 = vsyncpa [#allocation3], 1

// kernel: _lambda_.8
$region0: #{_lambda_.8}
  #allocation0 [shape = 'u32[]', space=smem, size = 0x4, offset = 0x4, fixed_abs, tag = 'smem constant byte address 0x4 - core index']
  #allocation1 [shape = 'u32[144,128]{1,0:T(1,128)}', space=vmem, size = 0x12000, scoped, tag = 'internal scratch']
  %s0 = inlined_call_operand.vmem [shape: bf16[2,10,5,128], index: 0, kind: input, shape index: {}]
  %s1 = inlined_call_operand.vmem [shape: bf16[2,10,5,128], index: 1, kind: input, shape index: {}]
  %s2 = inlined_call_operand.vmem [shape: bf16[1152,128], index: 2, kind: input, shape index: {}]
  %s3 = inlined_call_operand.vmem [shape: f32[1,128], index: 3, kind: input, shape index: {}]
  %s4 = inlined_call_operand.vmem [shape: bf16[2,16,128], index: 4, kind: output, shape index: {}]
  %s5 = sld [smem:[#allocation0]]
  $region49: #{_lambda_.8} parent=0
    _
  %s7 = ssub.s32 1, %s5
  %s8 = scalar_select 0, %s7, %s5
  loop: start=0, step=1, limit=4
  $region2: #{_lambda_.8} parent=0 // loop_pre_header
    _
  $region3: #{_lambda_.8} parent=0 // loop_header
    %s10 = sphi 0, %s14
    %p11 = scmp.ge.s32.totalorder %s10, 4
    %s20 = sphi 0, %s22
    %s23 = sphi 0, %s20
    %s24 = sphi 0, %s23
    %s40 = sphi 0, %s24
    %s46 = sphi 0, %s48
    %s49 = sphi 0, %s46
    %s50 = sphi 0, %s49
    %s66 = sphi 0, %s50
    %s70 = sphi 0, %s70
    %s72 = sphi 0, %s70
    %s73 = sphi 0, %s72
    %s87 = sphi 0, %s73
    %s91 = sphi 0, %s91
    %s93 = sphi 0, %s91
    %s94 = sphi 0, %s93
    %s108 = sphi 0, %s94
    %s114 = sphi 0, %s116
    %s117 = sphi 0, %s114
    %s118 = sphi 0, %s117
    %s134 = sphi 0, %s118
  $region4: #{_lambda_.8} parent=0 // loop_header_branch
    %13 = sbr.rel (%p11) target = $region8
  $region5: #{_lambda_.8} parent=0 // loop_body
    %s15 = ssub.s32 %s10, 1
    %s16 = ssub.s32 %s10, 2
    %s17 = sadd.s32 %s10, 1
    %s18 = ssub.s32 %s10, %s17
    %p19 = scmp.eq.s32.totalorder %s18, 0
    %s21 = sadd.s32 %s20, 1
    %s22 = scalar_select %p19, %s20, %s21
    %p25 = pneg %p19
    %p26 = scmp.eq.s32.totalorder %s10, 1
    %p27 = por %p25, %p26
    %p28 = scmp.ne.s32.totalorder %s20, %s23
    %p29 = scmp.eq.s32.totalorder %s10, 0
    %p30 = por %p28, %p29
    %p31 = scmp.ne.s32.totalorder %s20, %s23
    %p32 = scmp.eq.s32.totalorder %s15, 1
    %p33 = por %p31, %p32
    %p34 = scmp.ne.s32.totalorder %s23, %s24
    %p35 = scmp.eq.s32.totalorder %s15, 0
    %p36 = por %p34, %p35
    %p37 = scmp.ne.s32.totalorder %s23, %s24
    %p38 = scmp.eq.s32.totalorder %s16, 1
    %p39 = por %p37, %p38
    %p41 = scmp.ne.s32.totalorder %s24, %s40
    %p42 = scmp.eq.s32.totalorder %s16, 0
    %p43 = por %p41, %p42
    %s44 = ssub.s32 %s10, %s17
    %p45 = scmp.eq.s32.totalorder %s44, 0
    %s47 = sadd.s32 %s46, 1
    %s48 = scalar_select %p45, %s46, %s47
    %p51 = pneg %p45
    %p52 = scmp.eq.s32.totalorder %s10, 1
    %p53 = por %p51, %p52
    %p54 = scmp.ne.s32.totalorder %s46, %s49
    %p55 = scmp.eq.s32.totalorder %s10, 0
    %p56 = por %p54, %p55
    %p57 = scmp.ne.s32.totalorder %s46, %s49
    %p58 = scmp.eq.s32.totalorder %s15, 1
    %p59 = por %p57, %p58
    %p60 = scmp.ne.s32.totalorder %s49, %s50
    %p61 = scmp.eq.s32.totalorder %s15, 0
    %p62 = por %p60, %p61
    %p63 = scmp.ne.s32.totalorder %s49, %s50
    %p64 = scmp.eq.s32.totalorder %s16, 1
    %p65 = por %p63, %p64
    %p67 = scmp.ne.s32.totalorder %s50, %s66
    %p68 = scmp.eq.s32.totalorder %s16, 0
    %p69 = por %p67, %p68
    %s71 = sadd.s32 %s70, 1
    %p74 = scmp.eq.s32.totalorder %s10, 1
    %p75 = scmp.ne.s32.totalorder %s70, %s72
    %p76 = scmp.eq.s32.totalorder %s10, 0
    %p77 = por %p75, %p76
    %p78 = scmp.ne.s32.totalorder %s70, %s72
    %p79 = scmp.eq.s32.totalorder %s15, 1
    %p80 = por %p78, %p79
    %p81 = scmp.ne.s32.totalorder %s72, %s73
    %p82 = scmp.eq.s32.totalorder %s15, 0
    %p83 = por %p81, %p82
    %p84 = scmp.ne.s32.totalorder %s72, %s73
    %p85 = scmp.eq.s32.totalorder %s16, 1
    %p86 = por %p84, %p85
    %p88 = scmp.ne.s32.totalorder %s73, %s87
    %p89 = scmp.eq.s32.totalorder %s16, 0
    %p90 = por %p88, %p89
    %s92 = sadd.s32 %s91, 1
    %p95 = scmp.eq.s32.totalorder %s10, 1
    %p96 = scmp.ne.s32.totalorder %s91, %s93
    %p97 = scmp.eq.s32.totalorder %s10, 0
    %p98 = por %p96, %p97
    %p99 = scmp.ne.s32.totalorder %s91, %s93
    %p100 = scmp.eq.s32.totalorder %s15, 1
    %p101 = por %p99, %p100
    %p102 = scmp.ne.s32.totalorder %s93, %s94
    %p103 = scmp.eq.s32.totalorder %s15, 0
    %p104 = por %p102, %p103
    %p105 = scmp.ne.s32.totalorder %s93, %s94
    %p106 = scmp.eq.s32.totalorder %s16, 1
    %p107 = por %p105, %p106
    %p109 = scmp.ne.s32.totalorder %s94, %s108
    %p110 = scmp.eq.s32.totalorder %s16, 0
    %p111 = por %p109, %p110
    %s112 = ssub.s32 %s10, %s17
    %p113 = scmp.eq.s32.totalorder %s112, 0
    %s115 = sadd.s32 %s114, 1
    %s116 = scalar_select %p113, %s114, %s115
    %p119 = pneg %p113
    %p120 = scmp.eq.s32.totalorder %s10, 1
    %p121 = por %p119, %p120
    %p122 = scmp.ne.s32.totalorder %s114, %s117
    %p123 = scmp.eq.s32.totalorder %s10, 0
    %p124 = por %p122, %p123
    %p125 = scmp.ne.s32.totalorder %s114, %s117
    %p126 = scmp.eq.s32.totalorder %s15, 1
    %p127 = por %p125, %p126
    %p128 = scmp.ne.s32.totalorder %s117, %s118
    %p129 = scmp.eq.s32.totalorder %s15, 0
    %p130 = por %p128, %p129
    %p131 = scmp.ne.s32.totalorder %s117, %s118
    %p132 = scmp.eq.s32.totalorder %s16, 1
    %p133 = por %p131, %p132
    %p135 = scmp.ne.s32.totalorder %s118, %s134
    %p136 = scmp.eq.s32.totalorder %s16, 0
    %p137 = por %p135, %p136
    %p138 = scmp.le.s32.totalorder 1, %s10
    %p139 = scmp.lt.s32.totalorder %s10, 3
    %p140 = pnand %p138, %p139
    %p141 = pneg %p140
    // Predicated region
    $region9: #{_lambda_.8} parent=5 // pred_check
      _
    $region10: #{_lambda_.8} parent=5 // pred_check_branch
      %143 = sbr.rel (%p140) target = $region12
    $region11: #{_lambda_.8} parent=5 // pred_region
      %s144 = ssub.s32 %s10, 1
      // Predicated region
      $region13: #{_lambda_.8} parent=11 // pred_check
        %p145 = pneg %p83
      $region14: #{_lambda_.8} parent=11 // pred_check_branch
        %147 = sbr.rel (%p145) target = $region16
      $region15: #{_lambda_.8} parent=11 // pred_region
        _
      $region16: #{_lambda_.8} parent=11 // pred_fallthru
        _
      // Predicated region
      $region17: #{_lambda_.8} parent=11 // pred_check
        %p148 = pneg %p104
      $region18: #{_lambda_.8} parent=11 // pred_check_branch
        %150 = sbr.rel (%p148) target = $region20
      $region19: #{_lambda_.8} parent=11 // pred_region
        _
      $region20: #{_lambda_.8} parent=11 // pred_fallthru
        _
    $region12: #{_lambda_.8} parent=5 // pred_fallthru
      _
    %p151 = scmp.lt.s32.totalorder %s10, 2
    // Predicated region
    $region21: #{_lambda_.8} parent=5 // pred_check
      %p152 = pneg %p151
    $region22: #{_lambda_.8} parent=5 // pred_check_branch
      %154 = sbr.rel (%p152) target = $region24
    $region23: #{_lambda_.8} parent=5 // pred_region
      // Predicated region
      $region25: #{_lambda_.8} parent=23 // pred_check
        %p155 = pneg %p30
      $region26: #{_lambda_.8} parent=23 // pred_check_branch
        %157 = sbr.rel (%p155) target = $region28
      $region27: #{_lambda_.8} parent=23 // pred_region
        %p158 = scmp.lt.s32.totalorder %s10, 1
        %s159 = scalar_select %p158, %s10, 1
        %s160 = smul.addr %s159, 10
        %s161 = smul.addr %s160, 4
        %s162 = scalar_lea.vmem %s0, %s161
      $region28: #{_lambda_.8} parent=23 // pred_fallthru
        _
      // Predicated region
      $region29: #{_lambda_.8} parent=23 // pred_check
        %p163 = pneg %p56
      $region30: #{_lambda_.8} parent=23 // pred_check_branch
        %165 = sbr.rel (%p163) target = $region32
      $region31: #{_lambda_.8} parent=23 // pred_region
        %p166 = scmp.lt.s32.totalorder %s10, 1
        %s167 = scalar_select %p166, %s10, 1
        %s168 = smul.addr %s167, 10
        %s169 = smul.addr %s168, 4
        %s170 = scalar_lea.vmem %s1, %s169
      $region32: #{_lambda_.8} parent=23 // pred_fallthru
        _
    $region24: #{_lambda_.8} parent=5 // pred_fallthru
      _
    %p171 = scmp.le.s32.totalorder 1, %s10
    %p172 = scmp.lt.s32.totalorder %s10, 3
    %p173 = pnand %p171, %p172
    %p174 = pneg %p173
    // Predicated region
    $region33: #{_lambda_.8} parent=5 // pred_check
      _
    $region34: #{_lambda_.8} parent=5 // pred_check_branch
      %176 = sbr.rel (%p173) target = $region36
    $region35: #{_lambda_.8} parent=5 // pred_region
      %s177 = ssub.s32 %s10, 1
      %p178 = scmp.lt.s32.totalorder %s15, 1
      %s179 = scalar_select %p178, %s15, 1
      %s180 = smul.addr %s179, 10
      %s181 = smul.addr %s180, 4
      %s182 = scalar_lea.vmem %s0, %s181
      %p183 = pneg %p36
      %p184 = pneg %p33
      %p185 = scmp.lt.s32.totalorder %s15, 1
      %s186 = scalar_select %p185, %s15, 1
      %s187 = smul.addr %s186, 10
      %s188 = smul.addr %s187, 4
      %s189 = scalar_lea.vmem %s1, %s188
      %p190 = pneg %p62
      %p191 = pneg %p59
      %p192 = pneg %p83
      %p193 = pneg %p80
      %p194 = pneg %p104
      %p195 = pneg %p101
      %p196 = pneg %p130
      %p197 = pneg %p127
      %p198 = scmp.lt.s32.totalorder %s15, 1
      %s199 = scalar_select %p198, %s15, 1
      %s200 = smul.addr %s199, 2
      %s201 = smul.addr %s200, 4
      %s202 = scalar_lea.vmem %s4, %s201
      %p203 = scmp.lt.s32.totalorder %s15, 1
      %s204 = scalar_select %p203, %s15, 1
      %s205 = smul.addr %s204, 10
      %s206 = smul.addr %s205, 4
      %s207 = scalar_lea.vmem %s0, %s206
      %p208 = scmp.lt.s32.totalorder %s15, 1
      %s209 = scalar_select %p208, %s15, 1
      %s210 = smul.addr %s209, 10
      %s211 = smul.addr %s210, 4
      %s212 = scalar_lea.vmem %s1, %s211
      %p213 = scmp.lt.s32.totalorder %s15, 1
      %s214 = scalar_select %p213, %s15, 1
      %s215 = smul.addr %s214, 2
      %s216 = smul.addr %s215, 4
      %s217 = scalar_lea.vmem %s4, %s216
      %v219 = vld [vmem:[%s207] sm:$0x3]
      %v220 = vld [vmem:[%s212] sm:$0x3]
      %v221 = vld [vmem:[%s207] sm:$0x7]
      %s222 = scalar_lea.vmem %s207, 4
      %v223 = vld [vmem:[%s222] sm:$0x3]
      %s224 = scalar_lea.vmem %s212, 4
      %v225 = vld [vmem:[%s224] sm:$0x3]
      %v226 = vld [vmem:[%s222] sm:$0x7]
      %s227 = scalar_lea.vmem %s207, 8
      %v228 = vld [vmem:[%s227] sm:$0x3]
      %s229 = scalar_lea.vmem %s212, 8
      %v230 = vld [vmem:[%s229] sm:$0x3]
      %v231 = vld [vmem:[%s227] sm:$0x7]
      %v233 = vunpack.c.l.b16 %v221
      %v234 = vpack.c.b16 %v233, %v233
      %v236 = vshrl.u32 %v234, 16
      %v238 = vshll.u32 %v234, 16
      %v240 = vrot.slane %v238, 1
      %v241 = vor.u32 %v236, %v240
      %v244 = vunpack.c.l.b16 %v226
      %v245 = vpack.c.b16 %v244, %v244
      %v247 = vshrl.u32 %v245, 16
      %v249 = vshll.u32 %v245, 16
      %v251 = vrot.slane %v249, 1
      %v252 = vor.u32 %v247, %v251
      %v255 = vunpack.c.l.b16 %v231
      %v256 = vpack.c.b16 %v255, %v255
      %v258 = vshrl.u32 %v256, 16
      %v260 = vshll.u32 %v256, 16
      %v262 = vrot.slane %v260, 1
      %v263 = vor.u32 %v258, %v262
      %v265 = vld [vmem:[%s2] sm:$0xf]
      %v266 = vld [vmem:[%s2 + $0x4] sm:$0xf]
      %v267 = vld [vmem:[%s2 + $0x8] sm:$0xf]
      %v268 = vld [vmem:[%s2 + $0xc] sm:$0xf]
      %v269 = vld [vmem:[%s2 + $0x10] sm:$0xf]
      %v270 = vld [vmem:[%s2 + $0x14] sm:$0xf]
      %v271 = vld [vmem:[%s2 + $0x18] sm:$0xf]
      %v272 = vld [vmem:[%s2 + $0x1c] sm:$0xf]
      %v273 = vld [vmem:[%s2 + $0x20] sm:$0xf]
      %v274 = vld [vmem:[%s2 + $0x24] sm:$0xf]
      %v275 = vld [vmem:[%s2 + $0x28] sm:$0xf]
      %v276 = vld [vmem:[%s2 + $0x2c] sm:$0xf]
      %v277 = vld [vmem:[%s2 + $0x30] sm:$0xf]
      %v278 = vld [vmem:[%s2 + $0x34] sm:$0xf]
      %v279 = vld [vmem:[%s2 + $0x38] sm:$0xf]
      %v280 = vld [vmem:[%s2 + $0x3c] sm:$0xf]
      %v281 = vld [vmem:[%s2 + $0x40] sm:$0xf]
      %v282 = vld [vmem:[%s2 + $0x44] sm:$0xf]
      %v283 = vld [vmem:[%s2 + $0x48] sm:$0xf]
      %v284 = vld [vmem:[%s2 + $0x4c] sm:$0xf]
      %v285 = vld [vmem:[%s2 + $0x50] sm:$0xf]
      %v286 = vld [vmem:[%s2 + $0x54] sm:$0xf]
      %v287 = vld [vmem:[%s2 + $0x58] sm:$0xf]
      %v288 = vld [vmem:[%s2 + $0x5c] sm:$0xf]
      %v289 = vld [vmem:[%s2 + $0x60] sm:$0xf]
      %v290 = vld [vmem:[%s2 + $0x64] sm:$0xf]
      %v291 = vld [vmem:[%s2 + $0x68] sm:$0xf]
      %v292 = vld [vmem:[%s2 + $0x6c] sm:$0xf]
      %v293 = vld [vmem:[%s2 + $0x70] sm:$0xf]
      %v294 = vld [vmem:[%s2 + $0x74] sm:$0xf]
      %v295 = vld [vmem:[%s2 + $0x78] sm:$0xf]
      %v296 = vld [vmem:[%s2 + $0x7c] sm:$0xf]
      %v297 = vld [vmem:[%s2 + $0x80] sm:$0xf]
      %v298 = vld [vmem:[%s2 + $0x84] sm:$0xf]
      %v299 = vld [vmem:[%s2 + $0x88] sm:$0xf]
      %v300 = vld [vmem:[%s2 + $0x8c] sm:$0xf]
      %v301 = vld [vmem:[%s2 + $0x90] sm:$0xf]
      %v302 = vld [vmem:[%s2 + $0x94] sm:$0xf]
      %v303 = vld [vmem:[%s2 + $0x98] sm:$0xf]
      %v304 = vld [vmem:[%s2 + $0x9c] sm:$0xf]
      %v305 = vld [vmem:[%s2 + $0xa0] sm:$0xf]
      %v306 = vld [vmem:[%s2 + $0xa4] sm:$0xf]
      %v307 = vld [vmem:[%s2 + $0xa8] sm:$0xf]
      %v308 = vld [vmem:[%s2 + $0xac] sm:$0xf]
      %v309 = vld [vmem:[%s2 + $0xb0] sm:$0xf]
      %v310 = vld [vmem:[%s2 + $0xb4] sm:$0xf]
      %v311 = vld [vmem:[%s2 + $0xb8] sm:$0xf]
      %v312 = vld [vmem:[%s2 + $0xbc] sm:$0xf]
      %v313 = vld [vmem:[%s2 + $0xc0] sm:$0xf]
      %v314 = vld [vmem:[%s2 + $0xc4] sm:$0xf]
      %v315 = vld [vmem:[%s2 + $0xc8] sm:$0xf]
      %v316 = vld [vmem:[%s2 + $0xcc] sm:$0xf]
      %v317 = vld [vmem:[%s2 + $0xd0] sm:$0xf]
      %v318 = vld [vmem:[%s2 + $0xd4] sm:$0xf]
      %v319 = vld [vmem:[%s2 + $0xd8] sm:$0xf]
      %v320 = vld [vmem:[%s2 + $0xdc] sm:$0xf]
      %v321 = vld [vmem:[%s2 + $0xe0] sm:$0xf]
      %v322 = vld [vmem:[%s2 + $0xe4] sm:$0xf]
      %v323 = vld [vmem:[%s2 + $0xe8] sm:$0xf]
      %v324 = vld [vmem:[%s2 + $0xec] sm:$0xf]
      %v325 = vld [vmem:[%s2 + $0xf0] sm:$0xf]
      %v326 = vld [vmem:[%s2 + $0xf4] sm:$0xf]
      %v327 = vld [vmem:[%s2 + $0xf8] sm:$0xf]
      %v328 = vld [vmem:[%s2 + $0xfc] sm:$0xf]
      %v329 = vld [vmem:[%s2 + $0x100] sm:$0xf]
      %v330 = vld [vmem:[%s2 + $0x104] sm:$0xf]
      %v331 = vld [vmem:[%s2 + $0x108] sm:$0xf]
      %v332 = vld [vmem:[%s2 + $0x10c] sm:$0xf]
      %v333 = vld [vmem:[%s2 + $0x110] sm:$0xf]
      %v334 = vld [vmem:[%s2 + $0x114] sm:$0xf]
      %v335 = vld [vmem:[%s2 + $0x118] sm:$0xf]
      %v336 = vld [vmem:[%s2 + $0x11c] sm:$0xf]
      %v337 = vld [vmem:[%s2 + $0x120] sm:$0xf]
      %v338 = vld [vmem:[%s2 + $0x124] sm:$0xf]
      %v339 = vld [vmem:[%s2 + $0x128] sm:$0xf]
      %v340 = vld [vmem:[%s2 + $0x12c] sm:$0xf]
      %v341 = vld [vmem:[%s2 + $0x130] sm:$0xf]
      %v342 = vld [vmem:[%s2 + $0x134] sm:$0xf]
      %v343 = vld [vmem:[%s2 + $0x138] sm:$0xf]
      %v344 = vld [vmem:[%s2 + $0x13c] sm:$0xf]
      %v345 = vld [vmem:[%s2 + $0x140] sm:$0xf]
      %v346 = vld [vmem:[%s2 + $0x144] sm:$0xf]
      %v347 = vld [vmem:[%s2 + $0x148] sm:$0xf]
      %v348 = vld [vmem:[%s2 + $0x14c] sm:$0xf]
      %v349 = vld [vmem:[%s2 + $0x150] sm:$0xf]
      %v350 = vld [vmem:[%s2 + $0x154] sm:$0xf]
      %v351 = vld [vmem:[%s2 + $0x158] sm:$0xf]
      %v352 = vld [vmem:[%s2 + $0x15c] sm:$0xf]
      %v353 = vld [vmem:[%s2 + $0x160] sm:$0xf]
      %v354 = vld [vmem:[%s2 + $0x164] sm:$0xf]
      %v355 = vld [vmem:[%s2 + $0x168] sm:$0xf]
      %v356 = vld [vmem:[%s2 + $0x16c] sm:$0xf]
      %v357 = vld [vmem:[%s2 + $0x170] sm:$0xf]
      %v358 = vld [vmem:[%s2 + $0x174] sm:$0xf]
      %v359 = vld [vmem:[%s2 + $0x178] sm:$0xf]
      %v360 = vld [vmem:[%s2 + $0x17c] sm:$0xf]
      %v361 = vld [vmem:[%s2 + $0x180] sm:$0xf]
      %v362 = vld [vmem:[%s2 + $0x184] sm:$0xf]
      %v363 = vld [vmem:[%s2 + $0x188] sm:$0xf]
      %v364 = vld [vmem:[%s2 + $0x18c] sm:$0xf]
      %v365 = vld [vmem:[%s2 + $0x190] sm:$0xf]
      %v366 = vld [vmem:[%s2 + $0x194] sm:$0xf]
      %v367 = vld [vmem:[%s2 + $0x198] sm:$0xf]
      %v368 = vld [vmem:[%s2 + $0x19c] sm:$0xf]
      %v369 = vld [vmem:[%s2 + $0x1a0] sm:$0xf]
      %v370 = vld [vmem:[%s2 + $0x1a4] sm:$0xf]
      %v371 = vld [vmem:[%s2 + $0x1a8] sm:$0xf]
      %v372 = vld [vmem:[%s2 + $0x1ac] sm:$0xf]
      %v373 = vld [vmem:[%s2 + $0x1b0] sm:$0xf]
      %v374 = vld [vmem:[%s2 + $0x1b4] sm:$0xf]
      %v375 = vld [vmem:[%s2 + $0x1b8] sm:$0xf]
      %v376 = vld [vmem:[%s2 + $0x1bc] sm:$0xf]
      %v377 = vld [vmem:[%s2 + $0x1c0] sm:$0xf]
      %v378 = vld [vmem:[%s2 + $0x1c4] sm:$0xf]
      %v379 = vld [vmem:[%s2 + $0x1c8] sm:$0xf]
      %v380 = vld [vmem:[%s2 + $0x1cc] sm:$0xf]
      %v381 = vld [vmem:[%s2 + $0x1d0] sm:$0xf]
      %v382 = vld [vmem:[%s2 + $0x1d4] sm:$0xf]
      %v383 = vld [vmem:[%s2 + $0x1d8] sm:$0xf]
      %v384 = vld [vmem:[%s2 + $0x1dc] sm:$0xf]
      %v385 = vld [vmem:[%s2 + $0x1e0] sm:$0xf]
      %v386 = vld [vmem:[%s2 + $0x1e4] sm:$0xf]
      %v387 = vld [vmem:[%s2 + $0x1e8] sm:$0xf]
      %v388 = vld [vmem:[%s2 + $0x1ec] sm:$0xf]
      %v389 = vld [vmem:[%s2 + $0x1f0] sm:$0xf]
      %v390 = vld [vmem:[%s2 + $0x1f4] sm:$0xf]
      %v391 = vld [vmem:[%s2 + $0x1f8] sm:$0xf]
      %v392 = vld [vmem:[%s2 + $0x1fc] sm:$0xf]
      %v393 = vld [vmem:[%s2 + $0x200] sm:$0xf]
      %v394 = vld [vmem:[%s2 + $0x204] sm:$0xf]
      %v395 = vld [vmem:[%s2 + $0x208] sm:$0xf]
      %v396 = vld [vmem:[%s2 + $0x20c] sm:$0xf]
      %v397 = vld [vmem:[%s2 + $0x210] sm:$0xf]
      %v398 = vld [vmem:[%s2 + $0x214] sm:$0xf]
      %v399 = vld [vmem:[%s2 + $0x218] sm:$0xf]
      %v400 = vld [vmem:[%s2 + $0x21c] sm:$0xf]
      %v401 = vld [vmem:[%s2 + $0x220] sm:$0xf]
      %v402 = vld [vmem:[%s2 + $0x224] sm:$0xf]
      %v403 = vld [vmem:[%s2 + $0x228] sm:$0xf]
      %v404 = vld [vmem:[%s2 + $0x22c] sm:$0xf]
      %v405 = vld [vmem:[%s2 + $0x230] sm:$0xf]
      %v406 = vld [vmem:[%s2 + $0x234] sm:$0xf]
      %v407 = vld [vmem:[%s2 + $0x238] sm:$0xf]
      %v408 = vld [vmem:[%s2 + $0x23c] sm:$0xf]
      %v409 = vld [vmem:[%s3] sm:$0x1]
      %v411 = vlaneseq
      %v412 = vshrl.u32 %v411, 7
      %v413 = vsub.s32 0, %v412
      %v414 = vrot.slane %v409, %v413
      %v560 = vunpack.c.l.b16 %v265
      %v561 = vunpack.c.l.b16 %v266
      %v562 = vunpack.c.l.b16 %v267
      %v563 = vunpack.c.l.b16 %v268
      %v564 = vunpack.c.l.b16 %v269
      %v565 = vunpack.c.l.b16 %v270
      %v566 = vunpack.c.l.b16 %v271
      %v567 = vunpack.c.l.b16 %v272
      %v568 = vunpack.c.l.b16 %v273
      %v569 = vunpack.c.l.b16 %v274
      %v570 = vunpack.c.l.b16 %v275
      %v571 = vunpack.c.l.b16 %v276
      %v572 = vunpack.c.l.b16 %v277
      %v573 = vunpack.c.l.b16 %v278
      %v574 = vunpack.c.l.b16 %v279
      %v575 = vunpack.c.l.b16 %v280
      %v576 = vunpack.c.l.b16 %v281
      %v577 = vunpack.c.l.b16 %v282
      %v578 = vunpack.c.l.b16 %v283
      %v579 = vunpack.c.l.b16 %v284
      %v580 = vunpack.c.l.b16 %v285
      %v581 = vunpack.c.l.b16 %v286
      %v582 = vunpack.c.l.b16 %v287
      %v583 = vunpack.c.l.b16 %v288
      %v584 = vunpack.c.l.b16 %v289
      %v585 = vunpack.c.l.b16 %v290
      %v586 = vunpack.c.l.b16 %v291
      %v587 = vunpack.c.l.b16 %v292
      %v588 = vunpack.c.l.b16 %v293
      %v589 = vunpack.c.l.b16 %v294
      %v590 = vunpack.c.l.b16 %v295
      %v591 = vunpack.c.l.b16 %v296
      %v592 = vunpack.c.l.b16 %v297
      %v593 = vunpack.c.l.b16 %v298
      %v594 = vunpack.c.l.b16 %v299
      %v595 = vunpack.c.l.b16 %v300
      %v596 = vunpack.c.l.b16 %v301
      %v597 = vunpack.c.l.b16 %v302
      %v598 = vunpack.c.l.b16 %v303
      %v599 = vunpack.c.l.b16 %v304
      %v600 = vunpack.c.l.b16 %v305
      %v601 = vunpack.c.l.b16 %v306
      %v602 = vunpack.c.l.b16 %v307
      %v603 = vunpack.c.l.b16 %v308
      %v604 = vunpack.c.l.b16 %v309
      %v605 = vunpack.c.l.b16 %v310
      %v606 = vunpack.c.l.b16 %v311
      %v607 = vunpack.c.l.b16 %v312
      %v608 = vunpack.c.l.b16 %v313
      %v609 = vunpack.c.l.b16 %v314
      %v610 = vunpack.c.l.b16 %v315
      %v611 = vunpack.c.l.b16 %v316
      %v612 = vunpack.c.l.b16 %v317
      %v613 = vunpack.c.l.b16 %v318
      %v614 = vunpack.c.l.b16 %v319
      %v615 = vunpack.c.l.b16 %v320
      %v616 = vunpack.c.l.b16 %v321
      %v617 = vunpack.c.l.b16 %v322
      %v618 = vunpack.c.l.b16 %v323
      %v619 = vunpack.c.l.b16 %v324
      %v620 = vunpack.c.l.b16 %v325
      %v621 = vunpack.c.l.b16 %v326
      %v622 = vunpack.c.l.b16 %v327
      %v623 = vunpack.c.l.b16 %v328
      %v624 = vunpack.c.l.b16 %v329
      %v625 = vunpack.c.l.b16 %v330
      %v626 = vunpack.c.l.b16 %v331
      %v627 = vunpack.c.l.b16 %v332
      %v628 = vunpack.c.l.b16 %v333
      %v629 = vunpack.c.l.b16 %v334
      %v630 = vunpack.c.l.b16 %v335
      %v631 = vunpack.c.l.b16 %v336
      %v632 = vunpack.c.l.b16 %v337
      %v633 = vunpack.c.l.b16 %v338
      %v634 = vunpack.c.l.b16 %v339
      %v635 = vunpack.c.l.b16 %v340
      %v636 = vunpack.c.l.b16 %v341
      %v637 = vunpack.c.l.b16 %v342
      %v638 = vunpack.c.l.b16 %v343
      %v639 = vunpack.c.l.b16 %v344
      %v640 = vunpack.c.l.b16 %v345
      %v641 = vunpack.c.l.b16 %v346
      %v642 = vunpack.c.l.b16 %v347
      %v643 = vunpack.c.l.b16 %v348
      %v644 = vunpack.c.l.b16 %v349
      %v645 = vunpack.c.l.b16 %v350
      %v646 = vunpack.c.l.b16 %v351
      %v647 = vunpack.c.l.b16 %v352
      %v648 = vunpack.c.l.b16 %v353
      %v649 = vunpack.c.l.b16 %v354
      %v650 = vunpack.c.l.b16 %v355
      %v651 = vunpack.c.l.b16 %v356
      %v652 = vunpack.c.l.b16 %v357
      %v653 = vunpack.c.l.b16 %v358
      %v654 = vunpack.c.l.b16 %v359
      %v655 = vunpack.c.l.b16 %v360
      %v656 = vunpack.c.l.b16 %v361
      %v657 = vunpack.c.l.b16 %v362
      %v658 = vunpack.c.l.b16 %v363
      %v659 = vunpack.c.l.b16 %v364
      %v660 = vunpack.c.l.b16 %v365
      %v661 = vunpack.c.l.b16 %v366
      %v662 = vunpack.c.l.b16 %v367
      %v663 = vunpack.c.l.b16 %v368
      %v664 = vunpack.c.l.b16 %v369
      %v665 = vunpack.c.l.b16 %v370
      %v666 = vunpack.c.l.b16 %v371
      %v667 = vunpack.c.l.b16 %v372
      %v668 = vunpack.c.l.b16 %v373
      %v669 = vunpack.c.l.b16 %v374
      %v670 = vunpack.c.l.b16 %v375
      %v671 = vunpack.c.l.b16 %v376
      %v672 = vunpack.c.l.b16 %v377
      %v673 = vunpack.c.l.b16 %v378
      %v674 = vunpack.c.l.b16 %v379
      %v675 = vunpack.c.l.b16 %v380
      %v676 = vunpack.c.l.b16 %v381
      %v677 = vunpack.c.l.b16 %v382
      %v678 = vunpack.c.l.b16 %v383
      %v679 = vunpack.c.l.b16 %v384
      %v680 = vunpack.c.l.b16 %v385
      %v681 = vunpack.c.l.b16 %v386
      %v682 = vunpack.c.l.b16 %v387
      %v683 = vunpack.c.l.b16 %v388
      %v684 = vunpack.c.l.b16 %v389
      %v685 = vunpack.c.l.b16 %v390
      %v686 = vunpack.c.l.b16 %v391
      %v687 = vunpack.c.l.b16 %v392
      %v688 = vunpack.c.l.b16 %v393
      %v689 = vunpack.c.l.b16 %v394
      %v690 = vunpack.c.l.b16 %v395
      %v691 = vunpack.c.l.b16 %v396
      %v692 = vunpack.c.l.b16 %v397
      %v693 = vunpack.c.l.b16 %v398
      %v694 = vunpack.c.l.b16 %v399
      %v695 = vunpack.c.l.b16 %v400
      %v696 = vunpack.c.l.b16 %v401
      %v697 = vunpack.c.l.b16 %v402
      %v698 = vunpack.c.l.b16 %v403
      %v699 = vunpack.c.l.b16 %v404
      %v700 = vunpack.c.l.b16 %v405
      %v701 = vunpack.c.l.b16 %v406
      %v702 = vunpack.c.l.b16 %v407
      %v703 = vunpack.c.l.b16 %v408
      %v704 = vpack.c.b16 %v561, %v560
      %v705 = vpack.c.b16 %v563, %v562
      %v706 = vpack.c.b16 %v565, %v564
      %v707 = vpack.c.b16 %v567, %v566
      %v708 = vpack.c.b16 %v569, %v568
      %v709 = vpack.c.b16 %v571, %v570
      %v710 = vpack.c.b16 %v573, %v572
      %v711 = vpack.c.b16 %v575, %v574
      %v712 = vpack.c.b16 %v577, %v576
      %v713 = vpack.c.b16 %v579, %v578
      %v714 = vpack.c.b16 %v581, %v580
      %v715 = vpack.c.b16 %v583, %v582
      %v716 = vpack.c.b16 %v585, %v584
      %v717 = vpack.c.b16 %v587, %v586
      %v718 = vpack.c.b16 %v589, %v588
      %v719 = vpack.c.b16 %v591, %v590
      %v720 = vpack.c.b16 %v593, %v592
      %v721 = vpack.c.b16 %v595, %v594
      %v722 = vpack.c.b16 %v597, %v596
      %v723 = vpack.c.b16 %v599, %v598
      %v724 = vpack.c.b16 %v601, %v600
      %v725 = vpack.c.b16 %v603, %v602
      %v726 = vpack.c.b16 %v605, %v604
      %v727 = vpack.c.b16 %v607, %v606
      %v728 = vpack.c.b16 %v609, %v608
      %v729 = vpack.c.b16 %v611, %v610
      %v730 = vpack.c.b16 %v613, %v612
      %v731 = vpack.c.b16 %v615, %v614
      %v732 = vpack.c.b16 %v617, %v616
      %v733 = vpack.c.b16 %v619, %v618
      %v734 = vpack.c.b16 %v621, %v620
      %v735 = vpack.c.b16 %v623, %v622
      %v736 = vpack.c.b16 %v625, %v624
      %v737 = vpack.c.b16 %v627, %v626
      %v738 = vpack.c.b16 %v629, %v628
      %v739 = vpack.c.b16 %v631, %v630
      %v740 = vpack.c.b16 %v633, %v632
      %v741 = vpack.c.b16 %v635, %v634
      %v742 = vpack.c.b16 %v637, %v636
      %v743 = vpack.c.b16 %v639, %v638
      %v744 = vpack.c.b16 %v641, %v640
      %v745 = vpack.c.b16 %v643, %v642
      %v746 = vpack.c.b16 %v645, %v644
      %v747 = vpack.c.b16 %v647, %v646
      %v748 = vpack.c.b16 %v649, %v648
      %v749 = vpack.c.b16 %v651, %v650
      %v750 = vpack.c.b16 %v653, %v652
      %v751 = vpack.c.b16 %v655, %v654
      %v752 = vpack.c.b16 %v657, %v656
      %v753 = vpack.c.b16 %v659, %v658
      %v754 = vpack.c.b16 %v661, %v660
      %v755 = vpack.c.b16 %v663, %v662
      %v756 = vpack.c.b16 %v665, %v664
      %v757 = vpack.c.b16 %v667, %v666
      %v758 = vpack.c.b16 %v669, %v668
      %v759 = vpack.c.b16 %v671, %v670
      %v760 = vpack.c.b16 %v673, %v672
      %v761 = vpack.c.b16 %v675, %v674
      %v762 = vpack.c.b16 %v677, %v676
      %v763 = vpack.c.b16 %v679, %v678
      %v764 = vpack.c.b16 %v681, %v680
      %v765 = vpack.c.b16 %v683, %v682
      %v766 = vpack.c.b16 %v685, %v684
      %v767 = vpack.c.b16 %v687, %v686
      %v768 = vpack.c.b16 %v689, %v688
      %v769 = vpack.c.b16 %v691, %v690
      %v770 = vpack.c.b16 %v693, %v692
      %v771 = vpack.c.b16 %v695, %v694
      %v772 = vpack.c.b16 %v697, %v696
      %v773 = vpack.c.b16 %v699, %v698
      %v774 = vpack.c.b16 %v701, %v700
      %v775 = vpack.c.b16 %v703, %v702
      %848 = vmatprep.subr.bf16.mxu0 0
      %849 = vmatpush1.bf16.msra.mxu0 %v704
      %850 = vmatprep.subr.bf16.mxu0 0
      %851 = vmatpush1.bf16.msra.mxu0 %v705
      %852 = vmatprep.subr.bf16.mxu0 0
      %853 = vmatpush1.bf16.msra.mxu0 %v706
      %854 = vmatprep.subr.bf16.mxu0 0
      %855 = vmatpush1.bf16.msra.mxu0 %v707
      %856 = vmatprep.subr.bf16.mxu0 0
      %857 = vmatpush1.bf16.msra.mxu0 %v708
      %858 = vmatprep.subr.bf16.mxu0 0
      %859 = vmatpush1.bf16.msra.mxu0 %v709
      %860 = vmatprep.subr.bf16.mxu0 0
      %861 = vmatpush1.bf16.msra.mxu0 %v710
      %862 = vmatprep.subr.bf16.mxu0 0
      %863 = vmatpush1.bf16.msra.mxu0 %v711
      %864 = vmatprep.subr.bf16.mxu0 0
      %865 = vmatpush1.bf16.msra.mxu0 %v712
      %866 = vmatprep.subr.bf16.mxu0 0
      %867 = vmatpush1.bf16.msra.mxu0 %v713
      %868 = vmatprep.subr.bf16.mxu0 0
      %869 = vmatpush1.bf16.msra.mxu0 %v714
      %870 = vmatprep.subr.bf16.mxu0 0
      %871 = vmatpush1.bf16.msra.mxu0 %v715
      %872 = vmatprep.subr.bf16.mxu0 0
      %873 = vmatpush1.bf16.msra.mxu0 %v716
      %874 = vmatprep.subr.bf16.mxu0 0
      %875 = vmatpush1.bf16.msra.mxu0 %v717
      %876 = vmatprep.subr.bf16.mxu0 0
      %877 = vmatpush1.bf16.msra.mxu0 %v718
      %878 = vmatprep.subr.bf16.mxu0 0
      %879 = vmatpush1.bf16.msra.mxu0 %v719
      %880 = vmatprep.mubr.bf16.mxu0 %v220
      %881 = vmatmul.mubr.bf16.gmra.mrb[0].mxu0 %v219
      %v882 = vpop.f32.mrb[0].mxu0
      %v883 = vadd.f32 %v414, %v882
      %v884 = vpop.f32.mrb[0].mxu0
      %v885 = vpop.f32.mrb[0].mxu0
      %v886 = vpop.f32.mrb[0].mxu0
      %887 = vdwg.mxu0
      %888 = vmatprep.subr.bf16.mxu0 0
      %889 = vmatpush1.bf16.msra.mxu0 %v720
      %890 = vmatprep.subr.bf16.mxu0 0
      %891 = vmatpush1.bf16.msra.mxu0 %v721
      %892 = vmatprep.subr.bf16.mxu0 0
      %893 = vmatpush1.bf16.msra.mxu0 %v722
      %894 = vmatprep.subr.bf16.mxu0 0
      %895 = vmatpush1.bf16.msra.mxu0 %v723
      %896 = vmatprep.subr.bf16.mxu0 0
      %897 = vmatpush1.bf16.msra.mxu0 %v724
      %898 = vmatprep.subr.bf16.mxu0 0
      %899 = vmatpush1.bf16.msra.mxu0 %v725
      %900 = vmatprep.subr.bf16.mxu0 0
      %901 = vmatpush1.bf16.msra.mxu0 %v726
      %902 = vmatprep.subr.bf16.mxu0 0
      %903 = vmatpush1.bf16.msra.mxu0 %v727
      %904 = vmatprep.subr.bf16.mxu0 0
      %905 = vmatpush1.bf16.msra.mxu0 %v728
      %906 = vmatprep.subr.bf16.mxu0 0
      %907 = vmatpush1.bf16.msra.mxu0 %v729
      %908 = vmatprep.subr.bf16.mxu0 0
      %909 = vmatpush1.bf16.msra.mxu0 %v730
      %910 = vmatprep.subr.bf16.mxu0 0
      %911 = vmatpush1.bf16.msra.mxu0 %v731
      %912 = vmatprep.subr.bf16.mxu0 0
      %913 = vmatpush1.bf16.msra.mxu0 %v732
      %914 = vmatprep.subr.bf16.mxu0 0
      %915 = vmatpush1.bf16.msra.mxu0 %v733
      %916 = vmatprep.subr.bf16.mxu0 0
      %917 = vmatpush1.bf16.msra.mxu0 %v734
      %918 = vmatprep.subr.bf16.mxu0 0
      %919 = vmatpush1.bf16.msra.mxu0 %v735
      %920 = vmatprep.mubr.bf16.mxu0 %v223
      %921 = vmatmul.mubr.bf16.gmra.mrb[0].mxu0 %v241
      %v922 = vpop.f32.mrb[0].mxu0
      %v923 = vadd.f32 %v883, %v922
      %v924 = vpop.f32.mrb[0].mxu0
      %v925 = vpop.f32.mrb[0].mxu0
      %v926 = vpop.f32.mrb[0].mxu0
      %927 = vdwg.mxu0
      %928 = vmatprep.subr.bf16.mxu0 0
      %929 = vmatpush1.bf16.msra.mxu0 %v736
      %930 = vmatprep.subr.bf16.mxu0 0
      %931 = vmatpush1.bf16.msra.mxu0 %v737
      %932 = vmatprep.subr.bf16.mxu0 0
      %933 = vmatpush1.bf16.msra.mxu0 %v738
      %934 = vmatprep.subr.bf16.mxu0 0
      %935 = vmatpush1.bf16.msra.mxu0 %v739
      %936 = vmatprep.subr.bf16.mxu0 0
      %937 = vmatpush1.bf16.msra.mxu0 %v740
      %938 = vmatprep.subr.bf16.mxu0 0
      %939 = vmatpush1.bf16.msra.mxu0 %v741
      %940 = vmatprep.subr.bf16.mxu0 0
      %941 = vmatpush1.bf16.msra.mxu0 %v742
      %942 = vmatprep.subr.bf16.mxu0 0
      %943 = vmatpush1.bf16.msra.mxu0 %v743
      %944 = vmatprep.subr.bf16.mxu0 0
      %945 = vmatpush1.bf16.msra.mxu0 %v744
      %946 = vmatprep.subr.bf16.mxu0 0
      %947 = vmatpush1.bf16.msra.mxu0 %v745
      %948 = vmatprep.subr.bf16.mxu0 0
      %949 = vmatpush1.bf16.msra.mxu0 %v746
      %950 = vmatprep.subr.bf16.mxu0 0
      %951 = vmatpush1.bf16.msra.mxu0 %v747
      %952 = vmatprep.subr.bf16.mxu0 0
      %953 = vmatpush1.bf16.msra.mxu0 %v748
      %954 = vmatprep.subr.bf16.mxu0 0
      %955 = vmatpush1.bf16.msra.mxu0 %v749
      %956 = vmatprep.subr.bf16.mxu0 0
      %957 = vmatpush1.bf16.msra.mxu0 %v750
      %958 = vmatprep.subr.bf16.mxu0 0
      %959 = vmatpush1.bf16.msra.mxu0 %v751
      %960 = vmatprep.mubr.bf16.mxu0 %v252
      %961 = vmatmul.mubr.bf16.gmra.mrb[0].mxu0 %v225
      %v962 = vpop.f32.mrb[0].mxu0
      %v963 = vadd.f32 %v923, %v962
      %v964 = vpop.f32.mrb[0].mxu0
      %v965 = vpop.f32.mrb[0].mxu0
      %v966 = vpop.f32.mrb[0].mxu0
      %967 = vdwg.mxu0
      %968 = vmatprep.subr.bf16.mxu0 0
      %969 = vmatpush1.bf16.msra.mxu0 %v752
      %970 = vmatprep.subr.bf16.mxu0 0
      %971 = vmatpush1.bf16.msra.mxu0 %v753
      %972 = vmatprep.subr.bf16.mxu0 0
      %973 = vmatpush1.bf16.msra.mxu0 %v754
      %974 = vmatprep.subr.bf16.mxu0 0
      %975 = vmatpush1.bf16.msra.mxu0 %v755
      %976 = vmatprep.subr.bf16.mxu0 0
      %977 = vmatpush1.bf16.msra.mxu0 %v756
      %978 = vmatprep.subr.bf16.mxu0 0
      %979 = vmatpush1.bf16.msra.mxu0 %v757
      %980 = vmatprep.subr.bf16.mxu0 0
      %981 = vmatpush1.bf16.msra.mxu0 %v758
      %982 = vmatprep.subr.bf16.mxu0 0
      %983 = vmatpush1.bf16.msra.mxu0 %v759
      %984 = vmatprep.subr.bf16.mxu0 0
      %985 = vmatpush1.bf16.msra.mxu0 %v760
      %986 = vmatprep.subr.bf16.mxu0 0
      %987 = vmatpush1.bf16.msra.mxu0 %v761
      %988 = vmatprep.subr.bf16.mxu0 0
      %989 = vmatpush1.bf16.msra.mxu0 %v762
      %990 = vmatprep.subr.bf16.mxu0 0
      %991 = vmatpush1.bf16.msra.mxu0 %v763
      %992 = vmatprep.subr.bf16.mxu0 0
      %993 = vmatpush1.bf16.msra.mxu0 %v764
      %994 = vmatprep.subr.bf16.mxu0 0
      %995 = vmatpush1.bf16.msra.mxu0 %v765
      %996 = vmatprep.subr.bf16.mxu0 0
      %997 = vmatpush1.bf16.msra.mxu0 %v766
      %998 = vmatprep.subr.bf16.mxu0 0
      %999 = vmatpush1.bf16.msra.mxu0 %v767
      %1000 = vmatprep.mubr.bf16.mxu0 %v230
      %1001 = vmatmul.mubr.bf16.gmra.mrb[0].mxu0 %v228
      %v1002 = vpop.f32.mrb[0].mxu0
      %v1003 = vadd.f32 %v963, %v1002
      %v1004 = vpop.f32.mrb[0].mxu0
      %v1005 = vpop.f32.mrb[0].mxu0
      %v1006 = vpop.f32.mrb[0].mxu0
      %1007 = vdwg.mxu0
      %1008 = vmatprep.subr.bf16.mxu0 0
      %1009 = vmatpush1.bf16.msra.mxu0 %v768
      %1010 = vmatprep.subr.bf16.mxu0 0
      %1011 = vmatpush1.bf16.msra.mxu0 %v769
      %1012 = vmatprep.subr.bf16.mxu0 0
      %1013 = vmatpush1.bf16.msra.mxu0 %v770
      %1014 = vmatprep.subr.bf16.mxu0 0
      %1015 = vmatpush1.bf16.msra.mxu0 %v771
      %1016 = vmatprep.subr.bf16.mxu0 0
      %1017 = vmatpush1.bf16.msra.mxu0 %v772
      %1018 = vmatprep.subr.bf16.mxu0 0
      %1019 = vmatpush1.bf16.msra.mxu0 %v773
      %1020 = vmatprep.subr.bf16.mxu0 0
      %1021 = vmatpush1.bf16.msra.mxu0 %v774
      %1022 = vmatprep.subr.bf16.mxu0 0
      %1023 = vmatpush1.bf16.msra.mxu0 %v775
      %1024 = vmatprep.subr.bf16.mxu0 0
      %1025 = vmatpush1.bf16.msra.mxu0 0
      %1026 = vmatprep.subr.bf16.mxu0 0
      %1027 = vmatpush1.bf16.msra.mxu0 0
      %1028 = vmatprep.subr.bf16.mxu0 0
      %1029 = vmatpush1.bf16.msra.mxu0 0
      %1030 = vmatprep.subr.bf16.mxu0 0
      %1031 = vmatpush1.bf16.msra.mxu0 0
      %1032 = vmatprep.subr.bf16.mxu0 0
      %1033 = vmatpush1.bf16.msra.mxu0 0
      %1034 = vmatprep.subr.bf16.mxu0 0
      %1035 = vmatpush1.bf16.msra.mxu0 0
      %1036 = vmatprep.subr.bf16.mxu0 0
      %1037 = vmatpush1.bf16.msra.mxu0 0
      %1038 = vmatprep.subr.bf16.mxu0 0
      %1039 = vmatpush1.bf16.msra.mxu0 0
      %1040 = vmatprep.mubr.bf16.mxu0 0
      %1041 = vmatmul.mubr.bf16.gmra.mrb[0].mxu0 %v263
      %v1042 = vpop.f32.mrb[0].mxu0
      %v1043 = vadd.f32 %v1003, %v1042
      %v1044 = vpop.f32.mrb[0].mxu0
      %v1045 = vpop.f32.mrb[0].mxu0
      %v1046 = vpop.f32.mrb[0].mxu0
      %1047 = vdwg.mxu0
      %v1048 = vmax.f32 %v1043, 0.0
      %v1049 = vpack.c.bf16 %v1048, %v1048
      %1050 = vst [vmem:[%s217] sm:$0x3] %v1049
      %v1051 = vld [vmem:[%s227] sm:$0x3]
      %v1052 = vld [vmem:[%s229] sm:$0x3]
      %v1053 = vld [vmem:[%s227] sm:$0x7]
      %s1054 = scalar_lea.vmem %s207, 12
      %v1055 = vld [vmem:[%s1054] sm:$0x3]
      %s1056 = scalar_lea.vmem %s212, 12
      %v1057 = vld [vmem:[%s1056] sm:$0x3]
      %v1058 = vld [vmem:[%s1054] sm:$0x7]
      %s1059 = scalar_lea.vmem %s207, 16
      %v1060 = vld [vmem:[%s1059] sm:$0x3]
      %s1061 = scalar_lea.vmem %s212, 16
      %v1062 = vld [vmem:[%s1061] sm:$0x3]
      %v1063 = vld [vmem:[%s1059] sm:$0x7]
      %v1065 = vunpack.c.l.b16 %v1053
      %v1066 = vpack.c.b16 %v1065, %v1065
      %v1068 = vshrl.u32 %v1066, 16
      %v1070 = vshll.u32 %v1066, 16
      %v1072 = vrot.slane %v1070, 1
      %v1073 = vor.u32 %v1068, %v1072
      %v1076 = vunpack.c.l.b16 %v1058
      %v1077 = vpack.c.b16 %v1076, %v1076
      %v1079 = vshrl.u32 %v1077, 16
      %v1081 = vshll.u32 %v1077, 16
      %v1083 = vrot.slane %v1081, 1
      %v1084 = vor.u32 %v1079, %v1083
      %v1087 = vunpack.c.l.b16 %v1063
      %v1088 = vpack.c.b16 %v1087, %v1087
      %v1090 = vshrl.u32 %v1088, 16
      %v1092 = vshll.u32 %v1088, 16
      %v1094 = vrot.slane %v1092, 1
      %v1095 = vor.u32 %v1090, %v1094
      %v1097 = vld [vmem:[%s2] sm:$0xf]
      %v1098 = vld [vmem:[%s2 + $0x4] sm:$0xf]
      %v1099 = vld [vmem:[%s2 + $0x8] sm:$0xf]
      %v1100 = vld [vmem:[%s2 + $0xc] sm:$0xf]
      %v1101 = vld [vmem:[%s2 + $0x10] sm:$0xf]
      %v1102 = vld [vmem:[%s2 + $0x14] sm:$0xf]
      %v1103 = vld [vmem:[%s2 + $0x18] sm:$0xf]
      %v1104 = vld [vmem:[%s2 + $0x1c] sm:$0xf]
      %v1105 = vld [vmem:[%s2 + $0x20] sm:$0xf]
      %v1106 = vld [vmem:[%s2 + $0x24] sm:$0xf]
      %v1107 = vld [vmem:[%s2 + $0x28] sm:$0xf]
      %v1108 = vld [vmem:[%s2 + $0x2c] sm:$0xf]
      %v1109 = vld [vmem:[%s2 + $0x30] sm:$0xf]
      %v1110 = vld [vmem:[%s2 + $0x34] sm:$0xf]
      %v1111 = vld [vmem:[%s2 + $0x38] sm:$0xf]
      %v1112 = vld [vmem:[%s2 + $0x3c] sm:$0xf]
      %v1113 = vld [vmem:[%s2 + $0x40] sm:$0xf]
      %v1114 = vld [vmem:[%s2 + $0x44] sm:$0xf]
      %v1115 = vld [vmem:[%s2 + $0x48] sm:$0xf]
      %v1116 = vld [vmem:[%s2 + $0x4c] sm:$0xf]
      %v1117 = vld [vmem:[%s2 + $0x50] sm:$0xf]
      %v1118 = vld [vmem:[%s2 + $0x54] sm:$0xf]
      %v1119 = vld [vmem:[%s2 + $0x58] sm:$0xf]
      %v1120 = vld [vmem:[%s2 + $0x5c] sm:$0xf]
      %v1121 = vld [vmem:[%s2 + $0x60] sm:$0xf]
      %v1122 = vld [vmem:[%s2 + $0x64] sm:$0xf]
      %v1123 = vld [vmem:[%s2 + $0x68] sm:$0xf]
      %v1124 = vld [vmem:[%s2 + $0x6c] sm:$0xf]
      %v1125 = vld [vmem:[%s2 + $0x70] sm:$0xf]
      %v1126 = vld [vmem:[%s2 + $0x74] sm:$0xf]
      %v1127 = vld [vmem:[%s2 + $0x78] sm:$0xf]
      %v1128 = vld [vmem:[%s2 + $0x7c] sm:$0xf]
      %v1129 = vld [vmem:[%s2 + $0x80] sm:$0xf]
      %v1130 = vld [vmem:[%s2 + $0x84] sm:$0xf]
      %v1131 = vld [vmem:[%s2 + $0x88] sm:$0xf]
      %v1132 = vld [vmem:[%s2 + $0x8c] sm:$0xf]
      %v1133 = vld [vmem:[%s2 + $0x90] sm:$0xf]
      %v1134 = vld [vmem:[%s2 + $0x94] sm:$0xf]
      %v1135 = vld [vmem:[%s2 + $0x98] sm:$0xf]
      %v1136 = vld [vmem:[%s2 + $0x9c] sm:$0xf]
      %v1137 = vld [vmem:[%s2 + $0xa0] sm:$0xf]
      %v1138 = vld [vmem:[%s2 + $0xa4] sm:$0xf]
      %v1139 = vld [vmem:[%s2 + $0xa8] sm:$0xf]
      %v1140 = vld [vmem:[%s2 + $0xac] sm:$0xf]
      %v1141 = vld [vmem:[%s2 + $0xb0] sm:$0xf]
      %v1142 = vld [vmem:[%s2 + $0xb4] sm:$0xf]
      %v1143 = vld [vmem:[%s2 + $0xb8] sm:$0xf]
      %v1144 = vld [vmem:[%s2 + $0xbc] sm:$0xf]
      %v1145 = vld [vmem:[%s2 + $0xc0] sm:$0xf]
      %v1146 = vld [vmem:[%s2 + $0xc4] sm:$0xf]
      %v1147 = vld [vmem:[%s2 + $0xc8] sm:$0xf]
      %v1148 = vld [vmem:[%s2 + $0xcc] sm:$0xf]
      %v1149 = vld [vmem:[%s2 + $0xd0] sm:$0xf]
      %v1150 = vld [vmem:[%s2 + $0xd4] sm:$0xf]
      %v1151 = vld [vmem:[%s2 + $0xd8] sm:$0xf]
      %v1152 = vld [vmem:[%s2 + $0xdc] sm:$0xf]
      %v1153 = vld [vmem:[%s2 + $0xe0] sm:$0xf]
      %v1154 = vld [vmem:[%s2 + $0xe4] sm:$0xf]
      %v1155 = vld [vmem:[%s2 + $0xe8] sm:$0xf]
      %v1156 = vld [vmem:[%s2 + $0xec] sm:$0xf]
      %v1157 = vld [vmem:[%s2 + $0xf0] sm:$0xf]
      %v1158 = vld [vmem:[%s2 + $0xf4] sm:$0xf]
      %v1159 = vld [vmem:[%s2 + $0xf8] sm:$0xf]
      %v1160 = vld [vmem:[%s2 + $0xfc] sm:$0xf]
      %v1161 = vld [vmem:[%s2 + $0x100] sm:$0xf]
      %v1162 = vld [vmem:[%s2 + $0x104] sm:$0xf]
      %v1163 = vld [vmem:[%s2 + $0x108] sm:$0xf]
      %v1164 = vld [vmem:[%s2 + $0x10c] sm:$0xf]
      %v1165 = vld [vmem:[%s2 + $0x110] sm:$0xf]
      %v1166 = vld [vmem:[%s2 + $0x114] sm:$0xf]
      %v1167 = vld [vmem:[%s2 + $0x118] sm:$0xf]
      %v1168 = vld [vmem:[%s2 + $0x11c] sm:$0xf]
      %v1169 = vld [vmem:[%s2 + $0x120] sm:$0xf]
      %v1170 = vld [vmem:[%s2 + $0x124] sm:$0xf]
      %v1171 = vld [vmem:[%s2 + $0x128] sm:$0xf]
      %v1172 = vld [vmem:[%s2 + $0x12c] sm:$0xf]
      %v1173 = vld [vmem:[%s2 + $0x130] sm:$0xf]
      %v1174 = vld [vmem:[%s2 + $0x134] sm:$0xf]
      %v1175 = vld [vmem:[%s2 + $0x138] sm:$0xf]
      %v1176 = vld [vmem:[%s2 + $0x13c] sm:$0xf]
      %v1177 = vld [vmem:[%s2 + $0x140] sm:$0xf]
      %v1178 = vld [vmem:[%s2 + $0x144] sm:$0xf]
      %v1179 = vld [vmem:[%s2 + $0x148] sm:$0xf]
      %v1180 = vld [vmem:[%s2 + $0x14c] sm:$0xf]
      %v1181 = vld [vmem:[%s2 + $0x150] sm:$0xf]
      %v1182 = vld [vmem:[%s2 + $0x154] sm:$0xf]
      %v1183 = vld [vmem:[%s2 + $0x158] sm:$0xf]
      %v1184 = vld [vmem:[%s2 + $0x15c] sm:$0xf]
      %v1185 = vld [vmem:[%s2 + $0x160] sm:$0xf]
      %v1186 = vld [vmem:[%s2 + $0x164] sm:$0xf]
      %v1187 = vld [vmem:[%s2 + $0x168] sm:$0xf]
      %v1188 = vld [vmem:[%s2 + $0x16c] sm:$0xf]
      %v1189 = vld [vmem:[%s2 + $0x170] sm:$0xf]
      %v1190 = vld [vmem:[%s2 + $0x174] sm:$0xf]
      %v1191 = vld [vmem:[%s2 + $0x178] sm:$0xf]
      %v1192 = vld [vmem:[%s2 + $0x17c] sm:$0xf]
      %v1193 = vld [vmem:[%s2 + $0x180] sm:$0xf]
      %v1194 = vld [vmem:[%s2 + $0x184] sm:$0xf]
      %v1195 = vld [vmem:[%s2 + $0x188] sm:$0xf]
      %v1196 = vld [vmem:[%s2 + $0x18c] sm:$0xf]
      %v1197 = vld [vmem:[%s2 + $0x190] sm:$0xf]
      %v1198 = vld [vmem:[%s2 + $0x194] sm:$0xf]
      %v1199 = vld [vmem:[%s2 + $0x198] sm:$0xf]
      %v1200 = vld [vmem:[%s2 + $0x19c] sm:$0xf]
      %v1201 = vld [vmem:[%s2 + $0x1a0] sm:$0xf]
      %v1202 = vld [vmem:[%s2 + $0x1a4] sm:$0xf]
      %v1203 = vld [vmem:[%s2 + $0x1a8] sm:$0xf]
      %v1204 = vld [vmem:[%s2 + $0x1ac] sm:$0xf]
      %v1205 = vld [vmem:[%s2 + $0x1b0] sm:$0xf]
      %v1206 = vld [vmem:[%s2 + $0x1b4] sm:$0xf]
      %v1207 = vld [vmem:[%s2 + $0x1b8] sm:$0xf]
      %v1208 = vld [vmem:[%s2 + $0x1bc] sm:$0xf]
      %v1209 = vld [vmem:[%s2 + $0x1c0] sm:$0xf]
      %v1210 = vld [vmem:[%s2 + $0x1c4] sm:$0xf]
      %v1211 = vld [vmem:[%s2 + $0x1c8] sm:$0xf]
      %v1212 = vld [vmem:[%s2 + $0x1cc] sm:$0xf]
      %v1213 = vld [vmem:[%s2 + $0x1d0] sm:$0xf]
      %v1214 = vld [vmem:[%s2 + $0x1d4] sm:$0xf]
      %v1215 = vld [vmem:[%s2 + $0x1d8] sm:$0xf]
      %v1216 = vld [vmem:[%s2 + $0x1dc] sm:$0xf]
      %v1217 = vld [vmem:[%s2 + $0x1e0] sm:$0xf]
      %v1218 = vld [vmem:[%s2 + $0x1e4] sm:$0xf]
      %v1219 = vld [vmem:[%s2 + $0x1e8] sm:$0xf]
      %v1220 = vld [vmem:[%s2 + $0x1ec] sm:$0xf]
      %v1221 = vld [vmem:[%s2 + $0x1f0] sm:$0xf]
      %v1222 = vld [vmem:[%s2 + $0x1f4] sm:$0xf]
      %v1223 = vld [vmem:[%s2 + $0x1f8] sm:$0xf]
      %v1224 = vld [vmem:[%s2 + $0x1fc] sm:$0xf]
      %v1225 = vld [vmem:[%s2 + $0x200] sm:$0xf]
      %v1226 = vld [vmem:[%s2 + $0x204] sm:$0xf]
      %v1227 = vld [vmem:[%s2 + $0x208] sm:$0xf]
      %v1228 = vld [vmem:[%s2 + $0x20c] sm:$0xf]
      %v1229 = vld [vmem:[%s2 + $0x210] sm:$0xf]
      %v1230 = vld [vmem:[%s2 + $0x214] sm:$0xf]
      %v1231 = vld [vmem:[%s2 + $0x218] sm:$0xf]
      %v1232 = vld [vmem:[%s2 + $0x21c] sm:$0xf]
      %v1233 = vld [vmem:[%s2 + $0x220] sm:$0xf]
      %v1234 = vld [vmem:[%s2 + $0x224] sm:$0xf]
      %v1235 = vld [vmem:[%s2 + $0x228] sm:$0xf]
      %v1236 = vld [vmem:[%s2 + $0x22c] sm:$0xf]
      %v1237 = vld [vmem:[%s2 + $0x230] sm:$0xf]
      %v1238 = vld [vmem:[%s2 + $0x234] sm:$0xf]
      %v1239 = vld [vmem:[%s2 + $0x238] sm:$0xf]
      %v1240 = vld [vmem:[%s2 + $0x23c] sm:$0xf]
      %v1241 = vld [vmem:[%s3] sm:$0x1]
      %v1243 = vlaneseq
      %v1244 = vshrl.u32 %v1243, 7
      %v1245 = vsub.s32 0, %v1244
      %v1246 = vrot.slane %v1241, %v1245
      %v1392 = vunpack.c.l.b16 %v1097
      %v1393 = vunpack.c.l.b16 %v1098
      %v1394 = vunpack.c.l.b16 %v1099
      %v1395 = vunpack.c.l.b16 %v1100
      %v1396 = vunpack.c.l.b16 %v1101
      %v1397 = vunpack.c.l.b16 %v1102
      %v1398 = vunpack.c.l.b16 %v1103
      %v1399 = vunpack.c.l.b16 %v1104
      %v1400 = vunpack.c.l.b16 %v1105
      %v1401 = vunpack.c.l.b16 %v1106
      %v1402 = vunpack.c.l.b16 %v1107
      %v1403 = vunpack.c.l.b16 %v1108
      %v1404 = vunpack.c.l.b16 %v1109
      %v1405 = vunpack.c.l.b16 %v1110
      %v1406 = vunpack.c.l.b16 %v1111
      %v1407 = vunpack.c.l.b16 %v1112
      %v1408 = vunpack.c.l.b16 %v1113
      %v1409 = vunpack.c.l.b16 %v1114
      %v1410 = vunpack.c.l.b16 %v1115
      %v1411 = vunpack.c.l.b16 %v1116
      %v1412 = vunpack.c.l.b16 %v1117
      %v1413 = vunpack.c.l.b16 %v1118
      %v1414 = vunpack.c.l.b16 %v1119
      %v1415 = vunpack.c.l.b16 %v1120
      %v1416 = vunpack.c.l.b16 %v1121
      %v1417 = vunpack.c.l.b16 %v1122
      %v1418 = vunpack.c.l.b16 %v1123
      %v1419 = vunpack.c.l.b16 %v1124
      %v1420 = vunpack.c.l.b16 %v1125
      %v1421 = vunpack.c.l.b16 %v1126
      %v1422 = vunpack.c.l.b16 %v1127
      %v1423 = vunpack.c.l.b16 %v1128
      %v1424 = vunpack.c.l.b16 %v1129
      %v1425 = vunpack.c.l.b16 %v1130
      %v1426 = vunpack.c.l.b16 %v1131
      %v1427 = vunpack.c.l.b16 %v1132
      %v1428 = vunpack.c.l.b16 %v1133
      %v1429 = vunpack.c.l.b16 %v1134
      %v1430 = vunpack.c.l.b16 %v1135
      %v1431 = vunpack.c.l.b16 %v1136
      %v1432 = vunpack.c.l.b16 %v1137
      %v1433 = vunpack.c.l.b16 %v1138
      %v1434 = vunpack.c.l.b16 %v1139
      %v1435 = vunpack.c.l.b16 %v1140
      %v1436 = vunpack.c.l.b16 %v1141
      %v1437 = vunpack.c.l.b16 %v1142
      %v1438 = vunpack.c.l.b16 %v1143
      %v1439 = vunpack.c.l.b16 %v1144
      %v1440 = vunpack.c.l.b16 %v1145
      %v1441 = vunpack.c.l.b16 %v1146
      %v1442 = vunpack.c.l.b16 %v1147
      %v1443 = vunpack.c.l.b16 %v1148
      %v1444 = vunpack.c.l.b16 %v1149
      %v1445 = vunpack.c.l.b16 %v1150
      %v1446 = vunpack.c.l.b16 %v1151
      %v1447 = vunpack.c.l.b16 %v1152
      %v1448 = vunpack.c.l.b16 %v1153
      %v1449 = vunpack.c.l.b16 %v1154
      %v1450 = vunpack.c.l.b16 %v1155
      %v1451 = vunpack.c.l.b16 %v1156
      %v1452 = vunpack.c.l.b16 %v1157
      %v1453 = vunpack.c.l.b16 %v1158
      %v1454 = vunpack.c.l.b16 %v1159
      %v1455 = vunpack.c.l.b16 %v1160
      %v1456 = vunpack.c.l.b16 %v1161
      %v1457 = vunpack.c.l.b16 %v1162
      %v1458 = vunpack.c.l.b16 %v1163
      %v1459 = vunpack.c.l.b16 %v1164
      %v1460 = vunpack.c.l.b16 %v1165
      %v1461 = vunpack.c.l.b16 %v1166
      %v1462 = vunpack.c.l.b16 %v1167
      %v1463 = vunpack.c.l.b16 %v1168
      %v1464 = vunpack.c.l.b16 %v1169
      %v1465 = vunpack.c.l.b16 %v1170
      %v1466 = vunpack.c.l.b16 %v1171
      %v1467 = vunpack.c.l.b16 %v1172
      %v1468 = vunpack.c.l.b16 %v1173
      %v1469 = vunpack.c.l.b16 %v1174
      %v1470 = vunpack.c.l.b16 %v1175
      %v1471 = vunpack.c.l.b16 %v1176
      %v1472 = vunpack.c.l.b16 %v1177
      %v1473 = vunpack.c.l.b16 %v1178
      %v1474 = vunpack.c.l.b16 %v1179
      %v1475 = vunpack.c.l.b16 %v1180
      %v1476 = vunpack.c.l.b16 %v1181
      %v1477 = vunpack.c.l.b16 %v1182
      %v1478 = vunpack.c.l.b16 %v1183
      %v1479 = vunpack.c.l.b16 %v1184
      %v1480 = vunpack.c.l.b16 %v1185
      %v1481 = vunpack.c.l.b16 %v1186
      %v1482 = vunpack.c.l.b16 %v1187
      %v1483 = vunpack.c.l.b16 %v1188
      %v1484 = vunpack.c.l.b16 %v1189
      %v1485 = vunpack.c.l.b16 %v1190
      %v1486 = vunpack.c.l.b16 %v1191
      %v1487 = vunpack.c.l.b16 %v1192
      %v1488 = vunpack.c.l.b16 %v1193
      %v1489 = vunpack.c.l.b16 %v1194
      %v1490 = vunpack.c.l.b16 %v1195
      %v1491 = vunpack.c.l.b16 %v1196
      %v1492 = vunpack.c.l.b16 %v1197
      %v1493 = vunpack.c.l.b16 %v1198
      %v1494 = vunpack.c.l.b16 %v1199
      %v1495 = vunpack.c.l.b16 %v1200
      %v1496 = vunpack.c.l.b16 %v1201
      %v1497 = vunpack.c.l.b16 %v1202
      %v1498 = vunpack.c.l.b16 %v1203
      %v1499 = vunpack.c.l.b16 %v1204
      %v1500 = vunpack.c.l.b16 %v1205
      %v1501 = vunpack.c.l.b16 %v1206
      %v1502 = vunpack.c.l.b16 %v1207
      %v1503 = vunpack.c.l.b16 %v1208
      %v1504 = vunpack.c.l.b16 %v1209
      %v1505 = vunpack.c.l.b16 %v1210
      %v1506 = vunpack.c.l.b16 %v1211
      %v1507 = vunpack.c.l.b16 %v1212
      %v1508 = vunpack.c.l.b16 %v1213
      %v1509 = vunpack.c.l.b16 %v1214
      %v1510 = vunpack.c.l.b16 %v1215
      %v1511 = vunpack.c.l.b16 %v1216
      %v1512 = vunpack.c.l.b16 %v1217
      %v1513 = vunpack.c.l.b16 %v1218
      %v1514 = vunpack.c.l.b16 %v1219
      %v1515 = vunpack.c.l.b16 %v1220
      %v1516 = vunpack.c.l.b16 %v1221
      %v1517 = vunpack.c.l.b16 %v1222
      %v1518 = vunpack.c.l.b16 %v1223
      %v1519 = vunpack.c.l.b16 %v1224
      %v1520 = vunpack.c.l.b16 %v1225
      %v1521 = vunpack.c.l.b16 %v1226
      %v1522 = vunpack.c.l.b16 %v1227
      %v1523 = vunpack.c.l.b16 %v1228
      %v1524 = vunpack.c.l.b16 %v1229
      %v1525 = vunpack.c.l.b16 %v1230
      %v1526 = vunpack.c.l.b16 %v1231
      %v1527 = vunpack.c.l.b16 %v1232
      %v1528 = vunpack.c.l.b16 %v1233
      %v1529 = vunpack.c.l.b16 %v1234
      %v1530 = vunpack.c.l.b16 %v1235
      %v1531 = vunpack.c.l.b16 %v1236
      %v1532 = vunpack.c.l.b16 %v1237
      %v1533 = vunpack.c.l.b16 %v1238
      %v1534 = vunpack.c.l.b16 %v1239
      %v1535 = vunpack.c.l.b16 %v1240
      %v1536 = vpack.c.b16 %v1393, %v1392
      %v1537 = vpack.c.b16 %v1395, %v1394
      %v1538 = vpack.c.b16 %v1397, %v1396
      %v1539 = vpack.c.b16 %v1399, %v1398
      %v1540 = vpack.c.b16 %v1401, %v1400
      %v1541 = vpack.c.b16 %v1403, %v1402
      %v1542 = vpack.c.b16 %v1405, %v1404
      %v1543 = vpack.c.b16 %v1407, %v1406
      %v1544 = vpack.c.b16 %v1409, %v1408
      %v1545 = vpack.c.b16 %v1411, %v1410
      %v1546 = vpack.c.b16 %v1413, %v1412
      %v1547 = vpack.c.b16 %v1415, %v1414
      %v1548 = vpack.c.b16 %v1417, %v1416
      %v1549 = vpack.c.b16 %v1419, %v1418
      %v1550 = vpack.c.b16 %v1421, %v1420
      %v1551 = vpack.c.b16 %v1423, %v1422
      %v1552 = vpack.c.b16 %v1425, %v1424
      %v1553 = vpack.c.b16 %v1427, %v1426
      %v1554 = vpack.c.b16 %v1429, %v1428
      %v1555 = vpack.c.b16 %v1431, %v1430
      %v1556 = vpack.c.b16 %v1433, %v1432
      %v1557 = vpack.c.b16 %v1435, %v1434
      %v1558 = vpack.c.b16 %v1437, %v1436
      %v1559 = vpack.c.b16 %v1439, %v1438
      %v1560 = vpack.c.b16 %v1441, %v1440
      %v1561 = vpack.c.b16 %v1443, %v1442
      %v1562 = vpack.c.b16 %v1445, %v1444
      %v1563 = vpack.c.b16 %v1447, %v1446
      %v1564 = vpack.c.b16 %v1449, %v1448
      %v1565 = vpack.c.b16 %v1451, %v1450
      %v1566 = vpack.c.b16 %v1453, %v1452
      %v1567 = vpack.c.b16 %v1455, %v1454
      %v1568 = vpack.c.b16 %v1457, %v1456
      %v1569 = vpack.c.b16 %v1459, %v1458
      %v1570 = vpack.c.b16 %v1461, %v1460
      %v1571 = vpack.c.b16 %v1463, %v1462
      %v1572 = vpack.c.b16 %v1465, %v1464
      %v1573 = vpack.c.b16 %v1467, %v1466
      %v1574 = vpack.c.b16 %v1469, %v1468
      %v1575 = vpack.c.b16 %v1471, %v1470
      %v1576 = vpack.c.b16 %v1473, %v1472
      %v1577 = vpack.c.b16 %v1475, %v1474
      %v1578 = vpack.c.b16 %v1477, %v1476
      %v1579 = vpack.c.b16 %v1479, %v1478
      %v1580 = vpack.c.b16 %v1481, %v1480
      %v1581 = vpack.c.b16 %v1483, %v1482
      %v1582 = vpack.c.b16 %v1485, %v1484
      %v1583 = vpack.c.b16 %v1487, %v1486
      %v1584 = vpack.c.b16 %v1489, %v1488
      %v1585 = vpack.c.b16 %v1491, %v1490
      %v1586 = vpack.c.b16 %v1493, %v1492
      %v1587 = vpack.c.b16 %v1495, %v1494
      %v1588 = vpack.c.b16 %v1497, %v1496
      %v1589 = vpack.c.b16 %v1499, %v1498
      %v1590 = vpack.c.b16 %v1501, %v1500
      %v1591 = vpack.c.b16 %v1503, %v1502
      %v1592 = vpack.c.b16 %v1505, %v1504
      %v1593 = vpack.c.b16 %v1507, %v1506
      %v1594 = vpack.c.b16 %v1509, %v1508
      %v1595 = vpack.c.b16 %v1511, %v1510
      %v1596 = vpack.c.b16 %v1513, %v1512
      %v1597 = vpack.c.b16 %v1515, %v1514
      %v1598 = vpack.c.b16 %v1517, %v1516
      %v1599 = vpack.c.b16 %v1519, %v1518
      %v1600 = vpack.c.b16 %v1521, %v1520
      %v1601 = vpack.c.b16 %v1523, %v1522
      %v1602 = vpack.c.b16 %v1525, %v1524
      %v1603 = vpack.c.b16 %v1527, %v1526
      %v1604 = vpack.c.b16 %v1529, %v1528
      %v1605 = vpack.c.b16 %v1531, %v1530
      %v1606 = vpack.c.b16 %v1533, %v1532
      %v1607 = vpack.c.b16 %v1535, %v1534
      %1680 = vmatprep.subr.bf16.mxu0 0
      %1681 = vmatpush1.bf16.msra.mxu0 %v1536
      %1682 = vmatprep.subr.bf16.mxu0 0
      %1683 = vmatpush1.bf16.msra.mxu0 %v1537
      %1684 = vmatprep.subr.bf16.mxu0 0
      %1685 = vmatpush1.bf16.msra.mxu0 %v1538
      %1686 = vmatprep.subr.bf16.mxu0 0
      %1687 = vmatpush1.bf16.msra.mxu0 %v1539
      %1688 = vmatprep.subr.bf16.mxu0 0
      %1689 = vmatpush1.bf16.msra.mxu0 %v1540
      %1690 = vmatprep.subr.bf16.mxu0 0
      %1691 = vmatpush1.bf16.msra.mxu0 %v1541
      %1692 = vmatprep.subr.bf16.mxu0 0
      %1693 = vmatpush1.bf16.msra.mxu0 %v1542
      %1694 = vmatprep.subr.bf16.mxu0 0
      %1695 = vmatpush1.bf16.msra.mxu0 %v1543
      %1696 = vmatprep.subr.bf16.mxu0 0
      %1697 = vmatpush1.bf16.msra.mxu0 %v1544
      %1698 = vmatprep.subr.bf16.mxu0 0
      %1699 = vmatpush1.bf16.msra.mxu0 %v1545
      %1700 = vmatprep.subr.bf16.mxu0 0
      %1701 = vmatpush1.bf16.msra.mxu0 %v1546
      %1702 = vmatprep.subr.bf16.mxu0 0
      %1703 = vmatpush1.bf16.msra.mxu0 %v1547
      %1704 = vmatprep.subr.bf16.mxu0 0
      %1705 = vmatpush1.bf16.msra.mxu0 %v1548
      %1706 = vmatprep.subr.bf16.mxu0 0
      %1707 = vmatpush1.bf16.msra.mxu0 %v1549
      %1708 = vmatprep.subr.bf16.mxu0 0
      %1709 = vmatpush1.bf16.msra.mxu0 %v1550
      %1710 = vmatprep.subr.bf16.mxu0 0
      %1711 = vmatpush1.bf16.msra.mxu0 %v1551
      %1712 = vmatprep.mubr.bf16.mxu0 %v1052
      %1713 = vmatmul.mubr.bf16.gmra.mrb[0].mxu0 %v1051
      %v1714 = vpop.f32.mrb[0].mxu0
      %v1715 = vadd.f32 %v1246, %v1714
      %v1716 = vpop.f32.mrb[0].mxu0
      %v1717 = vpop.f32.mrb[0].mxu0
      %v1718 = vpop.f32.mrb[0].mxu0
      %1719 = vdwg.mxu0
      %1720 = vmatprep.subr.bf16.mxu0 0
      %1721 = vmatpush1.bf16.msra.mxu0 %v1552
      %1722 = vmatprep.subr.bf16.mxu0 0
      %1723 = vmatpush1.bf16.msra.mxu0 %v1553
      %1724 = vmatprep.subr.bf16.mxu0 0
      %1725 = vmatpush1.bf16.msra.mxu0 %v1554
      %1726 = vmatprep.subr.bf16.mxu0 0
      %1727 = vmatpush1.bf16.msra.mxu0 %v1555
      %1728 = vmatprep.subr.bf16.mxu0 0
      %1729 = vmatpush1.bf16.msra.mxu0 %v1556
      %1730 = vmatprep.subr.bf16.mxu0 0
      %1731 = vmatpush1.bf16.msra.mxu0 %v1557
      %1732 = vmatprep.subr.bf16.mxu0 0
      %1733 = vmatpush1.bf16.msra.mxu0 %v1558
      %1734 = vmatprep.subr.bf16.mxu0 0
      %1735 = vmatpush1.bf16.msra.mxu0 %v1559
      %1736 = vmatprep.subr.bf16.mxu0 0
      %1737 = vmatpush1.bf16.msra.mxu0 %v1560
      %1738 = vmatprep.subr.bf16.mxu0 0
      %1739 = vmatpush1.bf16.msra.mxu0 %v1561
      %1740 = vmatprep.subr.bf16.mxu0 0
      %1741 = vmatpush1.bf16.msra.mxu0 %v1562
      %1742 = vmatprep.subr.bf16.mxu0 0
      %1743 = vmatpush1.bf16.msra.mxu0 %v1563
      %1744 = vmatprep.subr.bf16.mxu0 0
      %1745 = vmatpush1.bf16.msra.mxu0 %v1564
      %1746 = vmatprep.subr.bf16.mxu0 0
      %1747 = vmatpush1.bf16.msra.mxu0 %v1565
      %1748 = vmatprep.subr.bf16.mxu0 0
      %1749 = vmatpush1.bf16.msra.mxu0 %v1566
      %1750 = vmatprep.subr.bf16.mxu0 0
      %1751 = vmatpush1.bf16.msra.mxu0 %v1567
      %1752 = vmatprep.mubr.bf16.mxu0 %v1055
      %1753 = vmatmul.mubr.bf16.gmra.mrb[0].mxu0 %v1073
      %v1754 = vpop.f32.mrb[0].mxu0
      %v1755 = vadd.f32 %v1715, %v1754
      %v1756 = vpop.f32.mrb[0].mxu0
      %v1757 = vpop.f32.mrb[0].mxu0
      %v1758 = vpop.f32.mrb[0].mxu0
      %1759 = vdwg.mxu0
      %1760 = vmatprep.subr.bf16.mxu0 0
      %1761 = vmatpush1.bf16.msra.mxu0 %v1568
      %1762 = vmatprep.subr.bf16.mxu0 0
      %1763 = vmatpush1.bf16.msra.mxu0 %v1569
      %1764 = vmatprep.subr.bf16.mxu0 0
      %1765 = vmatpush1.bf16.msra.mxu0 %v1570
      %1766 = vmatprep.subr.bf16.mxu0 0
      %1767 = vmatpush1.bf16.msra.mxu0 %v1571
      %1768 = vmatprep.subr.bf16.mxu0 0
      %1769 = vmatpush1.bf16.msra.mxu0 %v1572
      %1770 = vmatprep.subr.bf16.mxu0 0
      %1771 = vmatpush1.bf16.msra.mxu0 %v1573
      %1772 = vmatprep.subr.bf16.mxu0 0
      %1773 = vmatpush1.bf16.msra.mxu0 %v1574
      %1774 = vmatprep.subr.bf16.mxu0 0
      %1775 = vmatpush1.bf16.msra.mxu0 %v1575
      %1776 = vmatprep.subr.bf16.mxu0 0
      %1777 = vmatpush1.bf16.msra.mxu0 %v1576
      %1778 = vmatprep.subr.bf16.mxu0 0
      %1779 = vmatpush1.bf16.msra.mxu0 %v1577
      %1780 = vmatprep.subr.bf16.mxu0 0
      %1781 = vmatpush1.bf16.msra.mxu0 %v1578
      %1782 = vmatprep.subr.bf16.mxu0 0
      %1783 = vmatpush1.bf16.msra.mxu0 %v1579
      %1784 = vmatprep.subr.bf16.mxu0 0
      %1785 = vmatpush1.bf16.msra.mxu0 %v1580
      %1786 = vmatprep.subr.bf16.mxu0 0
      %1787 = vmatpush1.bf16.msra.mxu0 %v1581
      %1788 = vmatprep.subr.bf16.mxu0 0
      %1789 = vmatpush1.bf16.msra.mxu0 %v1582
      %1790 = vmatprep.subr.bf16.mxu0 0
      %1791 = vmatpush1.bf16.msra.mxu0 %v1583
      %1792 = vmatprep.mubr.bf16.mxu0 %v1084
      %1793 = vmatmul.mubr.bf16.gmra.mrb[0].mxu0 %v1057
      %v1794 = vpop.f32.mrb[0].mxu0
      %v1795 = vadd.f32 %v1755, %v1794
      %v1796 = vpop.f32.mrb[0].mxu0
      %v1797 = vpop.f32.mrb[0].mxu0
      %v1798 = vpop.f32.mrb[0].mxu0
      %1799 = vdwg.mxu0
      %1800 = vmatprep.subr.bf16.mxu0 0
      %1801 = vmatpush1.bf16.msra.mxu0 %v1584
      %1802 = vmatprep.subr.bf16.mxu0 0
      %1803 = vmatpush1.bf16.msra.mxu0 %v1585
      %1804 = vmatprep.subr.bf16.mxu0 0
      %1805 = vmatpush1.bf16.msra.mxu0 %v1586
      %1806 = vmatprep.subr.bf16.mxu0 0
      %1807 = vmatpush1.bf16.msra.mxu0 %v1587
      %1808 = vmatprep.subr.bf16.mxu0 0
      %1809 = vmatpush1.bf16.msra.mxu0 %v1588
      %1810 = vmatprep.subr.bf16.mxu0 0
      %1811 = vmatpush1.bf16.msra.mxu0 %v1589
      %1812 = vmatprep.subr.bf16.mxu0 0
      %1813 = vmatpush1.bf16.msra.mxu0 %v1590
      %1814 = vmatprep.subr.bf16.mxu0 0
      %1815 = vmatpush1.bf16.msra.mxu0 %v1591
      %1816 = vmatprep.subr.bf16.mxu0 0
      %1817 = vmatpush1.bf16.msra.mxu0 %v1592
      %1818 = vmatprep.subr.bf16.mxu0 0
      %1819 = vmatpush1.bf16.msra.mxu0 %v1593
      %1820 = vmatprep.subr.bf16.mxu0 0
      %1821 = vmatpush1.bf16.msra.mxu0 %v1594
      %1822 = vmatprep.subr.bf16.mxu0 0
      %1823 = vmatpush1.bf16.msra.mxu0 %v1595
      %1824 = vmatprep.subr.bf16.mxu0 0
      %1825 = vmatpush1.bf16.msra.mxu0 %v1596
      %1826 = vmatprep.subr.bf16.mxu0 0
      %1827 = vmatpush1.bf16.msra.mxu0 %v1597
      %1828 = vmatprep.subr.bf16.mxu0 0
      %1829 = vmatpush1.bf16.msra.mxu0 %v1598
      %1830 = vmatprep.subr.bf16.mxu0 0
      %1831 = vmatpush1.bf16.msra.mxu0 %v1599
      %1832 = vmatprep.mubr.bf16.mxu0 %v1062
      %1833 = vmatmul.mubr.bf16.gmra.mrb[0].mxu0 %v1060
      %v1834 = vpop.f32.mrb[0].mxu0
      %v1835 = vadd.f32 %v1795, %v1834
      %v1836 = vpop.f32.mrb[0].mxu0
      %v1837 = vpop.f32.mrb[0].mxu0
      %v1838 = vpop.f32.mrb[0].mxu0
      %1839 = vdwg.mxu0
      %1840 = vmatprep.subr.bf16.mxu0 0
      %1841 = vmatpush1.bf16.msra.mxu0 %v1600
      %1842 = vmatprep.subr.bf16.mxu0 0
      %1843 = vmatpush1.bf16.msra.mxu0 %v1601
      %1844 = vmatprep.subr.bf16.mxu0 0
      %1845 = vmatpush1.bf16.msra.mxu0 %v1602
      %1846 = vmatprep.subr.bf16.mxu0 0
      %1847 = vmatpush1.bf16.msra.mxu0 %v1603
      %1848 = vmatprep.subr.bf16.mxu0 0
      %1849 = vmatpush1.bf16.msra.mxu0 %v1604
      %1850 = vmatprep.subr.bf16.mxu0 0
      %1851 = vmatpush1.bf16.msra.mxu0 %v1605
      %1852 = vmatprep.subr.bf16.mxu0 0
      %1853 = vmatpush1.bf16.msra.mxu0 %v1606
      %1854 = vmatprep.subr.bf16.mxu0 0
      %1855 = vmatpush1.bf16.msra.mxu0 %v1607
      %1856 = vmatprep.subr.bf16.mxu0 0
      %1857 = vmatpush1.bf16.msra.mxu0 0
      %1858 = vmatprep.subr.bf16.mxu0 0
      %1859 = vmatpush1.bf16.msra.mxu0 0
      %1860 = vmatprep.subr.bf16.mxu0 0
      %1861 = vmatpush1.bf16.msra.mxu0 0
      %1862 = vmatprep.subr.bf16.mxu0 0
      %1863 = vmatpush1.bf16.msra.mxu0 0
      %1864 = vmatprep.subr.bf16.mxu0 0
      %1865 = vmatpush1.bf16.msra.mxu0 0
      %1866 = vmatprep.subr.bf16.mxu0 0
      %1867 = vmatpush1.bf16.msra.mxu0 0
      %1868 = vmatprep.subr.bf16.mxu0 0
      %1869 = vmatpush1.bf16.msra.mxu0 0
      %1870 = vmatprep.subr.bf16.mxu0 0
      %1871 = vmatpush1.bf16.msra.mxu0 0
      %1872 = vmatprep.mubr.bf16.mxu0 0
      %1873 = vmatmul.mubr.bf16.gmra.mrb[0].mxu0 %v1095
      %v1874 = vpop.f32.mrb[0].mxu0
      %v1875 = vadd.f32 %v1835, %v1874
      %v1876 = vpop.f32.mrb[0].mxu0
      %v1877 = vpop.f32.mrb[0].mxu0
      %v1878 = vpop.f32.mrb[0].mxu0
      %1879 = vdwg.mxu0
      %v1880 = vmax.f32 %v1875, 0.0
      %v1881 = vpack.c.bf16 %v1880, %v1880
      %v1883 = vunpack.c.l.b16 %v1881
      %v1884 = vpack.c.b16 %v1883, %v1883
      %v1885 = vrot.slane %v1884, 6
      %1887 = vst [vmem:[%s217] sm:$0xc] %v1885
      %v1888 = vld [vmem:[%s1059] sm:$0x3]
      %v1889 = vld [vmem:[%s1061] sm:$0x3]
      %v1890 = vld [vmem:[%s1059] sm:$0x7]
      %s1891 = scalar_lea.vmem %s207, 20
      %v1892 = vld [vmem:[%s1891] sm:$0x3]
      %s1893 = scalar_lea.vmem %s212, 20
      %v1894 = vld [vmem:[%s1893] sm:$0x3]
      %v1895 = vld [vmem:[%s1891] sm:$0x7]
      %s1896 = scalar_lea.vmem %s207, 24
      %v1897 = vld [vmem:[%s1896] sm:$0x3]
      %s1898 = scalar_lea.vmem %s212, 24
      %v1899 = vld [vmem:[%s1898] sm:$0x3]
      %v1900 = vld [vmem:[%s1896] sm:$0x7]
      %v1902 = vunpack.c.l.b16 %v1890
      %v1903 = vpack.c.b16 %v1902, %v1902
      %v1905 = vshrl.u32 %v1903, 16
      %v1907 = vshll.u32 %v1903, 16
      %v1909 = vrot.slane %v1907, 1
      %v1910 = vor.u32 %v1905, %v1909
      %v1913 = vunpack.c.l.b16 %v1895
      %v1914 = vpack.c.b16 %v1913, %v1913
      %v1916 = vshrl.u32 %v1914, 16
      %v1918 = vshll.u32 %v1914, 16
      %v1920 = vrot.slane %v1918, 1
      %v1921 = vor.u32 %v1916, %v1920
      %v1924 = vunpack.c.l.b16 %v1900
      %v1925 = vpack.c.b16 %v1924, %v1924
      %v1927 = vshrl.u32 %v1925, 16
      %v1929 = vshll.u32 %v1925, 16
      %v1931 = vrot.slane %v1929, 1
      %v1932 = vor.u32 %v1927, %v1931
      %v1934 = vld [vmem:[%s2] sm:$0xf]
      %v1935 = vld [vmem:[%s2 + $0x4] sm:$0xf]
      %v1936 = vld [vmem:[%s2 + $0x8] sm:$0xf]
      %v1937 = vld [vmem:[%s2 + $0xc] sm:$0xf]
      %v1938 = vld [vmem:[%s2 + $0x10] sm:$0xf]
      %v1939 = vld [vmem:[%s2 + $0x14] sm:$0xf]
      %v1940 = vld [vmem:[%s2 + $0x18] sm:$0xf]
      %v1941 = vld [vmem:[%s2 + $0x1c] sm:$0xf]
      %v1942 = vld [vmem:[%s2 + $0x20] sm:$0xf]
      %v1943 = vld [vmem:[%s2 + $0x24] sm:$0xf]
      %v1944 = vld [vmem:[%s2 + $0x28] sm:$0xf]
      %v1945 = vld [vmem:[%s2 + $0x2c] sm:$0xf]
      %v1946 = vld [vmem:[%s2 + $0x30] sm:$0xf]
      %v1947 = vld [vmem:[%s2 + $0x34] sm:$0xf]
      %v1948 = vld [vmem:[%s2 + $0x38] sm:$0xf]
      %v1949 = vld [vmem:[%s2 + $0x3c] sm:$0xf]
      %v1950 = vld [vmem:[%s2 + $0x40] sm:$0xf]
      %v1951 = vld [vmem:[%s2 + $0x44] sm:$0xf]
      %v1952 = vld [vmem:[%s2 + $0x48] sm:$0xf]
      %v1953 = vld [vmem:[%s2 + $0x4c] sm:$0xf]
      %v1954 = vld [vmem:[%s2 + $0x50] sm:$0xf]
      %v1955 = vld [vmem:[%s2 + $0x54] sm:$0xf]
      %v1956 = vld [vmem:[%s2 + $0x58] sm:$0xf]
      %v1957 = vld [vmem:[%s2 + $0x5c] sm:$0xf]
      %v1958 = vld [vmem:[%s2 + $0x60] sm:$0xf]
      %v1959 = vld [vmem:[%s2 + $0x64] sm:$0xf]
      %v1960 = vld [vmem:[%s2 + $0x68] sm:$0xf]
      %v1961 = vld [vmem:[%s2 + $0x6c] sm:$0xf]
      %v1962 = vld [vmem:[%s2 + $0x70] sm:$0xf]
      %v1963 = vld [vmem:[%s2 + $0x74] sm:$0xf]
      %v1964 = vld [vmem:[%s2 + $0x78] sm:$0xf]
      %v1965 = vld [vmem:[%s2 + $0x7c] sm:$0xf]
      %v1966 = vld [vmem:[%s2 + $0x80] sm:$0xf]
      %v1967 = vld [vmem:[%s2 + $0x84] sm:$0xf]
      %v1968 = vld [vmem:[%s2 + $0x88] sm:$0xf]
      %v1969 = vld [vmem:[%s2 + $0x8c] sm:$0xf]
      %v1970 = vld [vmem:[%s2 + $0x90] sm:$0xf]
      %v1971 = vld [vmem:[%s2 + $0x94] sm:$0xf]
      %v1972 = vld [vmem:[%s2 + $0x98] sm:$0xf]
      %v1973 = vld [vmem:[%s2 + $0x9c] sm:$0xf]
      %v1974 = vld [vmem:[%s2 + $0xa0] sm:$0xf]
      %v1975 = vld [vmem:[%s2 + $0xa4] sm:$0xf]
      %v1976 = vld [vmem:[%s2 + $0xa8] sm:$0xf]
      %v1977 = vld [vmem:[%s2 + $0xac] sm:$0xf]
      %v1978 = vld [vmem:[%s2 + $0xb0] sm:$0xf]
      %v1979 = vld [vmem:[%s2 + $0xb4] sm:$0xf]
      %v1980 = vld [vmem:[%s2 + $0xb8] sm:$0xf]
      %v1981 = vld [vmem:[%s2 + $0xbc] sm:$0xf]
      %v1982 = vld [vmem:[%s2 + $0xc0] sm:$0xf]
      %v1983 = vld [vmem:[%s2 + $0xc4] sm:$0xf]
      %v1984 = vld [vmem:[%s2 + $0xc8] sm:$0xf]
      %v1985 = vld [vmem:[%s2 + $0xcc] sm:$0xf]
      %v1986 = vld [vmem:[%s2 + $0xd0] sm:$0xf]
      %v1987 = vld [vmem:[%s2 + $0xd4] sm:$0xf]
      %v1988 = vld [vmem:[%s2 + $0xd8] sm:$0xf]
      %v1989 = vld [vmem:[%s2 + $0xdc] sm:$0xf]
      %v1990 = vld [vmem:[%s2 + $0xe0] sm:$0xf]
      %v1991 = vld [vmem:[%s2 + $0xe4] sm:$0xf]
      %v1992 = vld [vmem:[%s2 + $0xe8] sm:$0xf]
      %v1993 = vld [vmem:[%s2 + $0xec] sm:$0xf]
      %v1994 = vld [vmem:[%s2 + $0xf0] sm:$0xf]
      %v1995 = vld [vmem:[%s2 + $0xf4] sm:$0xf]
      %v1996 = vld [vmem:[%s2 + $0xf8] sm:$0xf]
      %v1997 = vld [vmem:[%s2 + $0xfc] sm:$0xf]
      %v1998 = vld [vmem:[%s2 + $0x100] sm:$0xf]
      %v1999 = vld [vmem:[%s2 + $0x104] sm:$0xf]
      %v2000 = vld [vmem:[%s2 + $0x108] sm:$0xf]
      %v2001 = vld [vmem:[%s2 + $0x10c] sm:$0xf]
      %v2002 = vld [vmem:[%s2 + $0x110] sm:$0xf]
      %v2003 = vld [vmem:[%s2 + $0x114] sm:$0xf]
      %v2004 = vld [vmem:[%s2 + $0x118] sm:$0xf]
      %v2005 = vld [vmem:[%s2 + $0x11c] sm:$0xf]
      %v2006 = vld [vmem:[%s2 + $0x120] sm:$0xf]
      %v2007 = vld [vmem:[%s2 + $0x124] sm:$0xf]
      %v2008 = vld [vmem:[%s2 + $0x128] sm:$0xf]
      %v2009 = vld [vmem:[%s2 + $0x12c] sm:$0xf]
      %v2010 = vld [vmem:[%s2 + $0x130] sm:$0xf]
      %v2011 = vld [vmem:[%s2 + $0x134] sm:$0xf]
      %v2012 = vld [vmem:[%s2 + $0x138] sm:$0xf]
      %v2013 = vld [vmem:[%s2 + $0x13c] sm:$0xf]
      %v2014 = vld [vmem:[%s2 + $0x140] sm:$0xf]
      %v2015 = vld [vmem:[%s2 + $0x144] sm:$0xf]
      %v2016 = vld [vmem:[%s2 + $0x148] sm:$0xf]
      %v2017 = vld [vmem:[%s2 + $0x14c] sm:$0xf]
      %v2018 = vld [vmem:[%s2 + $0x150] sm:$0xf]
      %v2019 = vld [vmem:[%s2 + $0x154] sm:$0xf]
      %v2020 = vld [vmem:[%s2 + $0x158] sm:$0xf]
      %v2021 = vld [vmem:[%s2 + $0x15c] sm:$0xf]
      %v2022 = vld [vmem:[%s2 + $0x160] sm:$0xf]
      %v2023 = vld [vmem:[%s2 + $0x164] sm:$0xf]
      %v2024 = vld [vmem:[%s2 + $0x168] sm:$0xf]
      %v2025 = vld [vmem:[%s2 + $0x16c] sm:$0xf]
      %v2026 = vld [vmem:[%s2 + $0x170] sm:$0xf]
      %v2027 = vld [vmem:[%s2 + $0x174] sm:$0xf]
      %v2028 = vld [vmem:[%s2 + $0x178] sm:$0xf]
      %v2029 = vld [vmem:[%s2 + $0x17c] sm:$0xf]
      %v2030 = vld [vmem:[%s2 + $0x180] sm:$0xf]
      %v2031 = vld [vmem:[%s2 + $0x184] sm:$0xf]
      %v2032 = vld [vmem:[%s2 + $0x188] sm:$0xf]
      %v2033 = vld [vmem:[%s2 + $0x18c] sm:$0xf]
      %v2034 = vld [vmem:[%s2 + $0x190] sm:$0xf]
      %v2035 = vld [vmem:[%s2 + $0x194] sm:$0xf]
      %v2036 = vld [vmem:[%s2 + $0x198] sm:$0xf]
      %v2037 = vld [vmem:[%s2 + $0x19c] sm:$0xf]
      %v2038 = vld [vmem:[%s2 + $0x1a0] sm:$0xf]
      %v2039 = vld [vmem:[%s2 + $0x1a4] sm:$0xf]
      %v2040 = vld [vmem:[%s2 + $0x1a8] sm:$0xf]
      %v2041 = vld [vmem:[%s2 + $0x1ac] sm:$0xf]
      %v2042 = vld [vmem:[%s2 + $0x1b0] sm:$0xf]
      %v2043 = vld [vmem:[%s2 + $0x1b4] sm:$0xf]
      %v2044 = vld [vmem:[%s2 + $0x1b8] sm:$0xf]
      %v2045 = vld [vmem:[%s2 + $0x1bc] sm:$0xf]
      %v2046 = vld [vmem:[%s2 + $0x1c0] sm:$0xf]
      %v2047 = vld [vmem:[%s2 + $0x1c4] sm:$0xf]
      %v2048 = vld [vmem:[%s2 + $0x1c8] sm:$0xf]
      %v2049 = vld [vmem:[%s2 + $0x1cc] sm:$0xf]
      %v2050 = vld [vmem:[%s2 + $0x1d0] sm:$0xf]
      %v2051 = vld [vmem:[%s2 + $0x1d4] sm:$0xf]
      %v2052 = vld [vmem:[%s2 + $0x1d8] sm:$0xf]
      %v2053 = vld [vmem:[%s2 + $0x1dc] sm:$0xf]
      %v2054 = vld [vmem:[%s2 + $0x1e0] sm:$0xf]
      %v2055 = vld [vmem:[%s2 + $0x1e4] sm:$0xf]
      %v2056 = vld [vmem:[%s2 + $0x1e8] sm:$0xf]
      %v2057 = vld [vmem:[%s2 + $0x1ec] sm:$0xf]
      %v2058 = vld [vmem:[%s2 + $0x1f0] sm:$0xf]
      %v2059 = vld [vmem:[%s2 + $0x1f4] sm:$0xf]
      %v2060 = vld [vmem:[%s2 + $0x1f8] sm:$0xf]
      %v2061 = vld [vmem:[%s2 + $0x1fc] sm:$0xf]
      %v2062 = vld [vmem:[%s2 + $0x200] sm:$0xf]
      %v2063 = vld [vmem:[%s2 + $0x204] sm:$0xf]
      %v2064 = vld [vmem:[%s2 + $0x208] sm:$0xf]
      %v2065 = vld [vmem:[%s2 + $0x20c] sm:$0xf]
      %v2066 = vld [vmem:[%s2 + $0x210] sm:$0xf]
      %v2067 = vld [vmem:[%s2 + $0x214] sm:$0xf]
      %v2068 = vld [vmem:[%s2 + $0x218] sm:$0xf]
      %v2069 = vld [vmem:[%s2 + $0x21c] sm:$0xf]
      %v2070 = vld [vmem:[%s2 + $0x220] sm:$0xf]
      %v2071 = vld [vmem:[%s2 + $0x224] sm:$0xf]
      %v2072 = vld [vmem:[%s2 + $0x228] sm:$0xf]
      %v2073 = vld [vmem:[%s2 + $0x22c] sm:$0xf]
      %v2074 = vld [vmem:[%s2 + $0x230] sm:$0xf]
      %v2075 = vld [vmem:[%s2 + $0x234] sm:$0xf]
      %v2076 = vld [vmem:[%s2 + $0x238] sm:$0xf]
      %v2077 = vld [vmem:[%s2 + $0x23c] sm:$0xf]
      %v2078 = vld [vmem:[%s3] sm:$0x1]
      %v2080 = vlaneseq
      %v2081 = vshrl.u32 %v2080, 7
      %v2082 = vsub.s32 0, %v2081
      %v2083 = vrot.slane %v2078, %v2082
      %v2229 = vunpack.c.l.b16 %v1934
      %v2230 = vunpack.c.l.b16 %v1935
      %v2231 = vunpack.c.l.b16 %v1936
      %v2232 = vunpack.c.l.b16 %v1937
      %v2233 = vunpack.c.l.b16 %v1938
      %v2234 = vunpack.c.l.b16 %v1939
      %v2235 = vunpack.c.l.b16 %v1940
      %v2236 = vunpack.c.l.b16 %v1941
      %v2237 = vunpack.c.l.b16 %v1942
      %v2238 = vunpack.c.l.b16 %v1943
      %v2239 = vunpack.c.l.b16 %v1944
      %v2240 = vunpack.c.l.b16 %v1945
      %v2241 = vunpack.c.l.b16 %v1946
      %v2242 = vunpack.c.l.b16 %v1947
      %v2243 = vunpack.c.l.b16 %v1948
      %v2244 = vunpack.c.l.b16 %v1949
      %v2245 = vunpack.c.l.b16 %v1950
      %v2246 = vunpack.c.l.b16 %v1951
      %v2247 = vunpack.c.l.b16 %v1952
      %v2248 = vunpack.c.l.b16 %v1953
      %v2249 = vunpack.c.l.b16 %v1954
      %v2250 = vunpack.c.l.b16 %v1955
      %v2251 = vunpack.c.l.b16 %v1956
      %v2252 = vunpack.c.l.b16 %v1957
      %v2253 = vunpack.c.l.b16 %v1958
      %v2254 = vunpack.c.l.b16 %v1959
      %v2255 = vunpack.c.l.b16 %v1960
      %v2256 = vunpack.c.l.b16 %v1961
      %v2257 = vunpack.c.l.b16 %v1962
      %v2258 = vunpack.c.l.b16 %v1963
      %v2259 = vunpack.c.l.b16 %v1964
      %v2260 = vunpack.c.l.b16 %v1965
      %v2261 = vunpack.c.l.b16 %v1966
      %v2262 = vunpack.c.l.b16 %v1967
      %v2263 = vunpack.c.l.b16 %v1968
      %v2264 = vunpack.c.l.b16 %v1969
      %v2265 = vunpack.c.l.b16 %v1970
      %v2266 = vunpack.c.l.b16 %v1971
      %v2267 = vunpack.c.l.b16 %v1972
      %v2268 = vunpack.c.l.b16 %v1973
      %v2269 = vunpack.c.l.b16 %v1974
      %v2270 = vunpack.c.l.b16 %v1975
      %v2271 = vunpack.c.l.b16 %v1976
      %v2272 = vunpack.c.l.b16 %v1977
      %v2273 = vunpack.c.l.b16 %v1978
      %v2274 = vunpack.c.l.b16 %v1979
      %v2275 = vunpack.c.l.b16 %v1980
      %v2276 = vunpack.c.l.b16 %v1981
      %v2277 = vunpack.c.l.b16 %v1982
      %v2278 = vunpack.c.l.b16 %v1983
      %v2279 = vunpack.c.l.b16 %v1984
      %v2280 = vunpack.c.l.b16 %v1985
      %v2281 = vunpack.c.l.b16 %v1986
      %v2282 = vunpack.c.l.b16 %v1987
      %v2283 = vunpack.c.l.b16 %v1988
      %v2284 = vunpack.c.l.b16 %v1989
      %v2285 = vunpack.c.l.b16 %v1990
      %v2286 = vunpack.c.l.b16 %v1991
      %v2287 = vunpack.c.l.b16 %v1992
      %v2288 = vunpack.c.l.b16 %v1993
      %v2289 = vunpack.c.l.b16 %v1994
      %v2290 = vunpack.c.l.b16 %v1995
      %v2291 = vunpack.c.l.b16 %v1996
      %v2292 = vunpack.c.l.b16 %v1997
      %v2293 = vunpack.c.l.b16 %v1998
      %v2294 = vunpack.c.l.b16 %v1999
      %v2295 = vunpack.c.l.b16 %v2000
      %v2296 = vunpack.c.l.b16 %v2001
      %v2297 = vunpack.c.l.b16 %v2002
      %v2298 = vunpack.c.l.b16 %v2003
      %v2299 = vunpack.c.l.b16 %v2004
      %v2300 = vunpack.c.l.b16 %v2005
      %v2301 = vunpack.c.l.b16 %v2006
      %v2302 = vunpack.c.l.b16 %v2007
      %v2303 = vunpack.c.l.b16 %v2008
      %v2304 = vunpack.c.l.b16 %v2009
      %v2305 = vunpack.c.l.b16 %v2010
      %v2306 = vunpack.c.l.b16 %v2011
      %v2307 = vunpack.c.l.b16 %v2012
      %v2308 = vunpack.c.l.b16 %v2013
      %v2309 = vunpack.c.l.b16 %v2014
      %v2310 = vunpack.c.l.b16 %v2015
      %v2311 = vunpack.c.l.b16 %v2016
      %v2312 = vunpack.c.l.b16 %v2017
      %v2313 = vunpack.c.l.b16 %v2018
      %v2314 = vunpack.c.l.b16 %v2019
      %v2315 = vunpack.c.l.b16 %v2020
      %v2316 = vunpack.c.l.b16 %v2021
      %v2317 = vunpack.c.l.b16 %v2022
      %v2318 = vunpack.c.l.b16 %v2023
      %v2319 = vunpack.c.l.b16 %v2024
      %v2320 = vunpack.c.l.b16 %v2025
      %v2321 = vunpack.c.l.b16 %v2026
      %v2322 = vunpack.c.l.b16 %v2027
      %v2323 = vunpack.c.l.b16 %v2028
      %v2324 = vunpack.c.l.b16 %v2029
      %v2325 = vunpack.c.l.b16 %v2030
      %v2326 = vunpack.c.l.b16 %v2031
      %v2327 = vunpack.c.l.b16 %v2032
      %v2328 = vunpack.c.l.b16 %v2033
      %v2329 = vunpack.c.l.b16 %v2034
      %v2330 = vunpack.c.l.b16 %v2035
      %v2331 = vunpack.c.l.b16 %v2036
      %v2332 = vunpack.c.l.b16 %v2037
      %v2333 = vunpack.c.l.b16 %v2038
      %v2334 = vunpack.c.l.b16 %v2039
      %v2335 = vunpack.c.l.b16 %v2040
      %v2336 = vunpack.c.l.b16 %v2041
      %v2337 = vunpack.c.l.b16 %v2042
      %v2338 = vunpack.c.l.b16 %v2043
      %v2339 = vunpack.c.l.b16 %v2044
      %v2340 = vunpack.c.l.b16 %v2045
      %v2341 = vunpack.c.l.b16 %v2046
      %v2342 = vunpack.c.l.b16 %v2047
      %v2343 = vunpack.c.l.b16 %v2048
      %v2344 = vunpack.c.l.b16 %v2049
      %v2345 = vunpack.c.l.b16 %v2050
      %v2346 = vunpack.c.l.b16 %v2051
      %v2347 = vunpack.c.l.b16 %v2052
      %v2348 = vunpack.c.l.b16 %v2053
      %v2349 = vunpack.c.l.b16 %v2054
      %v2350 = vunpack.c.l.b16 %v2055
      %v2351 = vunpack.c.l.b16 %v2056
      %v2352 = vunpack.c.l.b16 %v2057
      %v2353 = vunpack.c.l.b16 %v2058
      %v2354 = vunpack.c.l.b16 %v2059
      %v2355 = vunpack.c.l.b16 %v2060
      %v2356 = vunpack.c.l.b16 %v2061
      %v2357 = vunpack.c.l.b16 %v2062
      %v2358 = vunpack.c.l.b16 %v2063
      %v2359 = vunpack.c.l.b16 %v2064
      %v2360 = vunpack.c.l.b16 %v2065
      %v2361 = vunpack.c.l.b16 %v2066
      %v2362 = vunpack.c.l.b16 %v2067
      %v2363 = vunpack.c.l.b16 %v2068
      %v2364 = vunpack.c.l.b16 %v2069
      %v2365 = vunpack.c.l.b16 %v2070
      %v2366 = vunpack.c.l.b16 %v2071
      %v2367 = vunpack.c.l.b16 %v2072
      %v2368 = vunpack.c.l.b16 %v2073
      %v2369 = vunpack.c.l.b16 %v2074
      %v2370 = vunpack.c.l.b16 %v2075
      %v2371 = vunpack.c.l.b16 %v2076
      %v2372 = vunpack.c.l.b16 %v2077
      %v2373 = vpack.c.b16 %v2230, %v2229
      %v2374 = vpack.c.b16 %v2232, %v2231
      %v2375 = vpack.c.b16 %v2234, %v2233
      %v2376 = vpack.c.b16 %v2236, %v2235
      %v2377 = vpack.c.b16 %v2238, %v2237
      %v2378 = vpack.c.b16 %v2240, %v2239
      %v2379 = vpack.c.b16 %v2242, %v2241
      %v2380 = vpack.c.b16 %v2244, %v2243
      %v2381 = vpack.c.b16 %v2246, %v2245
      %v2382 = vpack.c.b16 %v2248, %v2247
      %v2383 = vpack.c.b16 %v2250, %v2249
      %v2384 = vpack.c.b16 %v2252, %v2251
      %v2385 = vpack.c.b16 %v2254, %v2253
      %v2386 = vpack.c.b16 %v2256, %v2255
      %v2387 = vpack.c.b16 %v2258, %v2257
      %v2388 = vpack.c.b16 %v2260, %v2259
      %v2389 = vpack.c.b16 %v2262, %v2261
      %v2390 = vpack.c.b16 %v2264, %v2263
      %v2391 = vpack.c.b16 %v2266, %v2265
      %v2392 = vpack.c.b16 %v2268, %v2267
      %v2393 = vpack.c.b16 %v2270, %v2269
      %v2394 = vpack.c.b16 %v2272, %v2271
      %v2395 = vpack.c.b16 %v2274, %v2273
      %v2396 = vpack.c.b16 %v2276, %v2275
      %v2397 = vpack.c.b16 %v2278, %v2277
      %v2398 = vpack.c.b16 %v2280, %v2279
      %v2399 = vpack.c.b16 %v2282, %v2281
      %v2400 = vpack.c.b16 %v2284, %v2283
      %v2401 = vpack.c.b16 %v2286, %v2285
      %v2402 = vpack.c.b16 %v2288, %v2287
      %v2403 = vpack.c.b16 %v2290, %v2289
      %v2404 = vpack.c.b16 %v2292, %v2291
      %v2405 = vpack.c.b16 %v2294, %v2293
      %v2406 = vpack.c.b16 %v2296, %v2295
      %v2407 = vpack.c.b16 %v2298, %v2297
      %v2408 = vpack.c.b16 %v2300, %v2299
      %v2409 = vpack.c.b16 %v2302, %v2301
      %v2410 = vpack.c.b16 %v2304, %v2303
      %v2411 = vpack.c.b16 %v2306, %v2305
      %v2412 = vpack.c.b16 %v2308, %v2307
      %v2413 = vpack.c.b16 %v2310, %v2309
      %v2414 = vpack.c.b16 %v2312, %v2311
      %v2415 = vpack.c.b16 %v2314, %v2313
      %v2416 = vpack.c.b16 %v2316, %v2315
      %v2417 = vpack.c.b16 %v2318, %v2317
      %v2418 = vpack.c.b16 %v2320, %v2319
      %v2419 = vpack.c.b16 %v2322, %v2321
      %v2420 = vpack.c.b16 %v2324, %v2323
      %v2421 = vpack.c.b16 %v2326, %v2325
      %v2422 = vpack.c.b16 %v2328, %v2327
      %v2423 = vpack.c.b16 %v2330, %v2329
      %v2424 = vpack.c.b16 %v2332, %v2331
      %v2425 = vpack.c.b16 %v2334, %v2333
      %v2426 = vpack.c.b16 %v2336, %v2335
      %v2427 = vpack.c.b16 %v2338, %v2337
      %v2428 = vpack.c.b16 %v2340, %v2339
      %v2429 = vpack.c.b16 %v2342, %v2341
      %v2430 = vpack.c.b16 %v2344, %v2343
      %v2431 = vpack.c.b16 %v2346, %v2345
      %v2432 = vpack.c.b16 %v2348, %v2347
      %v2433 = vpack.c.b16 %v2350, %v2349
      %v2434 = vpack.c.b16 %v2352, %v2351
      %v2435 = vpack.c.b16 %v2354, %v2353
      %v2436 = vpack.c.b16 %v2356, %v2355
      %v2437 = vpack.c.b16 %v2358, %v2357
      %v2438 = vpack.c.b16 %v2360, %v2359
      %v2439 = vpack.c.b16 %v2362, %v2361
      %v2440 = vpack.c.b16 %v2364, %v2363
      %v2441 = vpack.c.b16 %v2366, %v2365
      %v2442 = vpack.c.b16 %v2368, %v2367
      %v2443 = vpack.c.b16 %v2370, %v2369
      %v2444 = vpack.c.b16 %v2372, %v2371
      %2517 = vmatprep.subr.bf16.mxu0 0
      %2518 = vmatpush1.bf16.msra.mxu0 %v2373
      %2519 = vmatprep.subr.bf16.mxu0 0
      %2520 = vmatpush1.bf16.msra.mxu0 %v2374
      %2521 = vmatprep.subr.bf16.mxu0 0
      %2522 = vmatpush1.bf16.msra.mxu0 %v2375
      %2523 = vmatprep.subr.bf16.mxu0 0
      %2524 = vmatpush1.bf16.msra.mxu0 %v2376
      %2525 = vmatprep.subr.bf16.mxu0 0
      %2526 = vmatpush1.bf16.msra.mxu0 %v2377
      %2527 = vmatprep.subr.bf16.mxu0 0
      %2528 = vmatpush1.bf16.msra.mxu0 %v2378
      %2529 = vmatprep.subr.bf16.mxu0 0
      %2530 = vmatpush1.bf16.msra.mxu0 %v2379
      %2531 = vmatprep.subr.bf16.mxu0 0
      %2532 = vmatpush1.bf16.msra.mxu0 %v2380
      %2533 = vmatprep.subr.bf16.mxu0 0
      %2534 = vmatpush1.bf16.msra.mxu0 %v2381
      %2535 = vmatprep.subr.bf16.mxu0 0
      %2536 = vmatpush1.bf16.msra.mxu0 %v2382
      %2537 = vmatprep.subr.bf16.mxu0 0
      %2538 = vmatpush1.bf16.msra.mxu0 %v2383
      %2539 = vmatprep.subr.bf16.mxu0 0
      %2540 = vmatpush1.bf16.msra.mxu0 %v2384
      %2541 = vmatprep.subr.bf16.mxu0 0
      %2542 = vmatpush1.bf16.msra.mxu0 %v2385
      %2543 = vmatprep.subr.bf16.mxu0 0
      %2544 = vmatpush1.bf16.msra.mxu0 %v2386
      %2545 = vmatprep.subr.bf16.mxu0 0
      %2546 = vmatpush1.bf16.msra.mxu0 %v2387
      %2547 = vmatprep.subr.bf16.mxu0 0
      %2548 = vmatpush1.bf16.msra.mxu0 %v2388
      %2549 = vmatprep.mubr.bf16.mxu0 %v1889
      %2550 = vmatmul.mubr.bf16.gmra.mrb[0].mxu0 %v1888
      %v2551 = vpop.f32.mrb[0].mxu0
      %v2552 = vadd.f32 %v2083, %v2551
      %v2553 = vpop.f32.mrb[0].mxu0
      %v2554 = vpop.f32.mrb[0].mxu0
      %v2555 = vpop.f32.mrb[0].mxu0
      %2556 = vdwg.mxu0
      %2557 = vmatprep.subr.bf16.mxu0 0
      %2558 = vmatpush1.bf16.msra.mxu0 %v2389
      %2559 = vmatprep.subr.bf16.mxu0 0
      %2560 = vmatpush1.bf16.msra.mxu0 %v2390
      %2561 = vmatprep.subr.bf16.mxu0 0
      %2562 = vmatpush1.bf16.msra.mxu0 %v2391
      %2563 = vmatprep.subr.bf16.mxu0 0
      %2564 = vmatpush1.bf16.msra.mxu0 %v2392
      %2565 = vmatprep.subr.bf16.mxu0 0
      %2566 = vmatpush1.bf16.msra.mxu0 %v2393
      %2567 = vmatprep.subr.bf16.mxu0 0
      %2568 = vmatpush1.bf16.msra.mxu0 %v2394
      %2569 = vmatprep.subr.bf16.mxu0 0
      %2570 = vmatpush1.bf16.msra.mxu0 %v2395
      %2571 = vmatprep.subr.bf16.mxu0 0
      %2572 = vmatpush1.bf16.msra.mxu0 %v2396
      %2573 = vmatprep.subr.bf16.mxu0 0
      %2574 = vmatpush1.bf16.msra.mxu0 %v2397
      %2575 = vmatprep.subr.bf16.mxu0 0
      %2576 = vmatpush1.bf16.msra.mxu0 %v2398
      %2577 = vmatprep.subr.bf16.mxu0 0
      %2578 = vmatpush1.bf16.msra.mxu0 %v2399
      %2579 = vmatprep.subr.bf16.mxu0 0
      %2580 = vmatpush1.bf16.msra.mxu0 %v2400
      %2581 = vmatprep.subr.bf16.mxu0 0
      %2582 = vmatpush1.bf16.msra.mxu0 %v2401
      %2583 = vmatprep.subr.bf16.mxu0 0
      %2584 = vmatpush1.bf16.msra.mxu0 %v2402
      %2585 = vmatprep.subr.bf16.mxu0 0
      %2586 = vmatpush1.bf16.msra.mxu0 %v2403
      %2587 = vmatprep.subr.bf16.mxu0 0
      %2588 = vmatpush1.bf16.msra.mxu0 %v2404
      %2589 = vmatprep.mubr.bf16.mxu0 %v1892
      %2590 = vmatmul.mubr.bf16.gmra.mrb[0].mxu0 %v1910
      %v2591 = vpop.f32.mrb[0].mxu0
      %v2592 = vadd.f32 %v2552, %v2591
      %v2593 = vpop.f32.mrb[0].mxu0
      %v2594 = vpop.f32.mrb[0].mxu0
      %v2595 = vpop.f32.mrb[0].mxu0
      %2596 = vdwg.mxu0
      %2597 = vmatprep.subr.bf16.mxu0 0
      %2598 = vmatpush1.bf16.msra.mxu0 %v2405
      %2599 = vmatprep.subr.bf16.mxu0 0
      %2600 = vmatpush1.bf16.msra.mxu0 %v2406
      %2601 = vmatprep.subr.bf16.mxu0 0
      %2602 = vmatpush1.bf16.msra.mxu0 %v2407
      %2603 = vmatprep.subr.bf16.mxu0 0
      %2604 = vmatpush1.bf16.msra.mxu0 %v2408
      %2605 = vmatprep.subr.bf16.mxu0 0
      %2606 = vmatpush1.bf16.msra.mxu0 %v2409
      %2607 = vmatprep.subr.bf16.mxu0 0
      %2608 = vmatpush1.bf16.msra.mxu0 %v2410
      %2609 = vmatprep.subr.bf16.mxu0 0
      %2610 = vmatpush1.bf16.msra.mxu0 %v2411
      %2611 = vmatprep.subr.bf16.mxu0 0
      %2612 = vmatpush1.bf16.msra.mxu0 %v2412
      %2613 = vmatprep.subr.bf16.mxu0 0
      %2614 = vmatpush1.bf16.msra.mxu0 %v2413
      %2615 = vmatprep.subr.bf16.mxu0 0
      %2616 = vmatpush1.bf16.msra.mxu0 %v2414
      %2617 = vmatprep.subr.bf16.mxu0 0
      %2618 = vmatpush1.bf16.msra.mxu0 %v2415
      %2619 = vmatprep.subr.bf16.mxu0 0
      %2620 = vmatpush1.bf16.msra.mxu0 %v2416
      %2621 = vmatprep.subr.bf16.mxu0 0
      %2622 = vmatpush1.bf16.msra.mxu0 %v2417
      %2623 = vmatprep.subr.bf16.mxu0 0
      %2624 = vmatpush1.bf16.msra.mxu0 %v2418
      %2625 = vmatprep.subr.bf16.mxu0 0
      %2626 = vmatpush1.bf16.msra.mxu0 %v2419
      %2627 = vmatprep.subr.bf16.mxu0 0
      %2628 = vmatpush1.bf16.msra.mxu0 %v2420
      %2629 = vmatprep.mubr.bf16.mxu0 %v1921
      %2630 = vmatmul.mubr.bf16.gmra.mrb[0].mxu0 %v1894
      %v2631 = vpop.f32.mrb[0].mxu0
      %v2632 = vadd.f32 %v2592, %v2631
      %v2633 = vpop.f32.mrb[0].mxu0
      %v2634 = vpop.f32.mrb[0].mxu0
      %v2635 = vpop.f32.mrb[0].mxu0
      %2636 = vdwg.mxu0
      %2637 = vmatprep.subr.bf16.mxu0 0
      %2638 = vmatpush1.bf16.msra.mxu0 %v2421
      %2639 = vmatprep.subr.bf16.mxu0 0
      %2640 = vmatpush1.bf16.msra.mxu0 %v2422
      %2641 = vmatprep.subr.bf16.mxu0 0
      %2642 = vmatpush1.bf16.msra.mxu0 %v2423
      %2643 = vmatprep.subr.bf16.mxu0 0
      %2644 = vmatpush1.bf16.msra.mxu0 %v2424
      %2645 = vmatprep.subr.bf16.mxu0 0
      %2646 = vmatpush1.bf16.msra.mxu0 %v2425
      %2647 = vmatprep.subr.bf16.mxu0 0
      %2648 = vmatpush1.bf16.msra.mxu0 %v2426
      %2649 = vmatprep.subr.bf16.mxu0 0
      %2650 = vmatpush1.bf16.msra.mxu0 %v2427
      %2651 = vmatprep.subr.bf16.mxu0 0
      %2652 = vmatpush1.bf16.msra.mxu0 %v2428
      %2653 = vmatprep.subr.bf16.mxu0 0
      %2654 = vmatpush1.bf16.msra.mxu0 %v2429
      %2655 = vmatprep.subr.bf16.mxu0 0
      %2656 = vmatpush1.bf16.msra.mxu0 %v2430
      %2657 = vmatprep.subr.bf16.mxu0 0
      %2658 = vmatpush1.bf16.msra.mxu0 %v2431
      %2659 = vmatprep.subr.bf16.mxu0 0
      %2660 = vmatpush1.bf16.msra.mxu0 %v2432
      %2661 = vmatprep.subr.bf16.mxu0 0
      %2662 = vmatpush1.bf16.msra.mxu0 %v2433
      %2663 = vmatprep.subr.bf16.mxu0 0
      %2664 = vmatpush1.bf16.msra.mxu0 %v2434
      %2665 = vmatprep.subr.bf16.mxu0 0
      %2666 = vmatpush1.bf16.msra.mxu0 %v2435
      %2667 = vmatprep.subr.bf16.mxu0 0
      %2668 = vmatpush1.bf16.msra.mxu0 %v2436
      %2669 = vmatprep.mubr.bf16.mxu0 %v1899
      %2670 = vmatmul.mubr.bf16.gmra.mrb[0].mxu0 %v1897
      %v2671 = vpop.f32.mrb[0].mxu0
      %v2672 = vadd.f32 %v2632, %v2671
      %v2673 = vpop.f32.mrb[0].mxu0
      %v2674 = vpop.f32.mrb[0].mxu0
      %v2675 = vpop.f32.mrb[0].mxu0
      %2676 = vdwg.mxu0
      %2677 = vmatprep.subr.bf16.mxu0 0
      %2678 = vmatpush1.bf16.msra.mxu0 %v2437
      %2679 = vmatprep.subr.bf16.mxu0 0
      %2680 = vmatpush1.bf16.msra.mxu0 %v2438
      %2681 = vmatprep.subr.bf16.mxu0 0
      %2682 = vmatpush1.bf16.msra.mxu0 %v2439
      %2683 = vmatprep.subr.bf16.mxu0 0
      %2684 = vmatpush1.bf16.msra.mxu0 %v2440
      %2685 = vmatprep.subr.bf16.mxu0 0
      %2686 = vmatpush1.bf16.msra.mxu0 %v2441
      %2687 = vmatprep.subr.bf16.mxu0 0
      %2688 = vmatpush1.bf16.msra.mxu0 %v2442
      %2689 = vmatprep.subr.bf16.mxu0 0
      %2690 = vmatpush1.bf16.msra.mxu0 %v2443
      %2691 = vmatprep.subr.bf16.mxu0 0
      %2692 = vmatpush1.bf16.msra.mxu0 %v2444
      %2693 = vmatprep.subr.bf16.mxu0 0
      %2694 = vmatpush1.bf16.msra.mxu0 0
      %2695 = vmatprep.subr.bf16.mxu0 0
      %2696 = vmatpush1.bf16.msra.mxu0 0
      %2697 = vmatprep.subr.bf16.mxu0 0
      %2698 = vmatpush1.bf16.msra.mxu0 0
      %2699 = vmatprep.subr.bf16.mxu0 0
      %2700 = vmatpush1.bf16.msra.mxu0 0
      %2701 = vmatprep.subr.bf16.mxu0 0
      %2702 = vmatpush1.bf16.msra.mxu0 0
      %2703 = vmatprep.subr.bf16.mxu0 0
      %2704 = vmatpush1.bf16.msra.mxu0 0
      %2705 = vmatprep.subr.bf16.mxu0 0
      %2706 = vmatpush1.bf16.msra.mxu0 0
      %2707 = vmatprep.subr.bf16.mxu0 0
      %2708 = vmatpush1.bf16.msra.mxu0 0
      %2709 = vmatprep.mubr.bf16.mxu0 0
      %2710 = vmatmul.mubr.bf16.gmra.mrb[0].mxu0 %v1932
      %v2711 = vpop.f32.mrb[0].mxu0
      %v2712 = vadd.f32 %v2672, %v2711
      %v2713 = vpop.f32.mrb[0].mxu0
      %v2714 = vpop.f32.mrb[0].mxu0
      %v2715 = vpop.f32.mrb[0].mxu0
      %2716 = vdwg.mxu0
      %v2717 = vmax.f32 %v2712, 0.0
      %v2718 = vpack.c.bf16 %v2717, %v2717
      %2719 = vst [vmem:[%s217 + $0x4] sm:$0x3] %v2718
      %v2720 = vld [vmem:[%s1896] sm:$0x3]
      %v2721 = vld [vmem:[%s1898] sm:$0x3]
      %v2722 = vld [vmem:[%s1896] sm:$0x7]
      %s2723 = scalar_lea.vmem %s207, 28
      %v2724 = vld [vmem:[%s2723] sm:$0x3]
      %s2725 = scalar_lea.vmem %s212, 28
      %v2726 = vld [vmem:[%s2725] sm:$0x3]
      %v2727 = vld [vmem:[%s2723] sm:$0x7]
      %s2728 = scalar_lea.vmem %s207, 32
      %v2729 = vld [vmem:[%s2728] sm:$0x3]
      %s2730 = scalar_lea.vmem %s212, 32
      %v2731 = vld [vmem:[%s2730] sm:$0x3]
      %v2732 = vld [vmem:[%s2728] sm:$0x7]
      %v2734 = vunpack.c.l.b16 %v2722
      %v2735 = vpack.c.b16 %v2734, %v2734
      %v2737 = vshrl.u32 %v2735, 16
      %v2739 = vshll.u32 %v2735, 16
      %v2741 = vrot.slane %v2739, 1
      %v2742 = vor.u32 %v2737, %v2741
      %v2745 = vunpack.c.l.b16 %v2727
      %v2746 = vpack.c.b16 %v2745, %v2745
      %v2748 = vshrl.u32 %v2746, 16
      %v2750 = vshll.u32 %v2746, 16
      %v2752 = vrot.slane %v2750, 1
      %v2753 = vor.u32 %v2748, %v2752
      %v2756 = vunpack.c.l.b16 %v2732
      %v2757 = vpack.c.b16 %v2756, %v2756
      %v2759 = vshrl.u32 %v2757, 16
      %v2761 = vshll.u32 %v2757, 16
      %v2763 = vrot.slane %v2761, 1
      %v2764 = vor.u32 %v2759, %v2763
      %v2766 = vld [vmem:[%s2] sm:$0xf]
      %v2767 = vld [vmem:[%s2 + $0x4] sm:$0xf]
      %v2768 = vld [vmem:[%s2 + $0x8] sm:$0xf]
      %v2769 = vld [vmem:[%s2 + $0xc] sm:$0xf]
      %v2770 = vld [vmem:[%s2 + $0x10] sm:$0xf]
      %v2771 = vld [vmem:[%s2 + $0x14] sm:$0xf]
      %v2772 = vld [vmem:[%s2 + $0x18] sm:$0xf]
      %v2773 = vld [vmem:[%s2 + $0x1c] sm:$0xf]
      %v2774 = vld [vmem:[%s2 + $0x20] sm:$0xf]
      %v2775 = vld [vmem:[%s2 + $0x24] sm:$0xf]
      %v2776 = vld [vmem:[%s2 + $0x28] sm:$0xf]
      %v2777 = vld [vmem:[%s2 + $0x2c] sm:$0xf]
      %v2778 = vld [vmem:[%s2 + $0x30] sm:$0xf]
      %v2779 = vld [vmem:[%s2 + $0x34] sm:$0xf]
      %v2780 = vld [vmem:[%s2 + $0x38] sm:$0xf]
      %v2781 = vld [vmem:[%s2 + $0x3c] sm:$0xf]
      %v2782 = vld [vmem:[%s2 + $0x40] sm:$0xf]
      %v2783 = vld [vmem:[%s2 + $0x44] sm:$0xf]
      %v2784 = vld [vmem:[%s2 + $0x48] sm:$0xf]
      %v2785 = vld [vmem:[%s2 + $0x4c] sm:$0xf]
      %v2786 = vld [vmem:[%s2 + $0x50] sm:$0xf]
      %v2787 = vld [vmem:[%s2 + $0x54] sm:$0xf]
      %v2788 = vld [vmem:[%s2 + $0x58] sm:$0xf]
      %v2789 = vld [vmem:[%s2 + $0x5c] sm:$0xf]
      %v2790 = vld [vmem:[%s2 + $0x60] sm:$0xf]
      %v2791 = vld [vmem:[%s2 + $0x64] sm:$0xf]
      %v2792 = vld [vmem:[%s2 + $0x68] sm:$0xf]
      %v2793 = vld [vmem:[%s2 + $0x6c] sm:$0xf]
      %v2794 = vld [vmem:[%s2 + $0x70] sm:$0xf]
      %v2795 = vld [vmem:[%s2 + $0x74] sm:$0xf]
      %v2796 = vld [vmem:[%s2 + $0x78] sm:$0xf]
      %v2797 = vld [vmem:[%s2 + $0x7c] sm:$0xf]
      %v2798 = vld [vmem:[%s2 + $0x80] sm:$0xf]
      %v2799 = vld [vmem:[%s2 + $0x84] sm:$0xf]
      %v2800 = vld [vmem:[%s2 + $0x88] sm:$0xf]
      %v2801 = vld [vmem:[%s2 + $0x8c] sm:$0xf]
      %v2802 = vld [vmem:[%s2 + $0x90] sm:$0xf]
      %v2803 = vld [vmem:[%s2 + $0x94] sm:$0xf]
      %v2804 = vld [vmem:[%s2 + $0x98] sm:$0xf]
      %v2805 = vld [vmem:[%s2 + $0x9c] sm:$0xf]
      %v2806 = vld [vmem:[%s2 + $0xa0] sm:$0xf]
      %v2807 = vld [vmem:[%s2 + $0xa4] sm:$0xf]
      %v2808 = vld [vmem:[%s2 + $0xa8] sm:$0xf]
      %v2809 = vld [vmem:[%s2 + $0xac] sm:$0xf]
      %v2810 = vld [vmem:[%s2 + $0xb0] sm:$0xf]
      %v2811 = vld [vmem:[%s2 + $0xb4] sm:$0xf]
      %v2812 = vld [vmem:[%s2 + $0xb8] sm:$0xf]
      %v2813 = vld [vmem:[%s2 + $0xbc] sm:$0xf]
      %v2814 = vld [vmem:[%s2 + $0xc0] sm:$0xf]
      %v2815 = vld [vmem:[%s2 + $0xc4] sm:$0xf]
      %v2816 = vld [vmem:[%s2 + $0xc8] sm:$0xf]
      %v2817 = vld [vmem:[%s2 + $0xcc] sm:$0xf]
      %v2818 = vld [vmem:[%s2 + $0xd0] sm:$0xf]
      %v2819 = vld [vmem:[%s2 + $0xd4] sm:$0xf]
      %v2820 = vld [vmem:[%s2 + $0xd8] sm:$0xf]
      %v2821 = vld [vmem:[%s2 + $0xdc] sm:$0xf]
      %v2822 = vld [vmem:[%s2 + $0xe0] sm:$0xf]
      %v2823 = vld [vmem:[%s2 + $0xe4] sm:$0xf]
      %v2824 = vld [vmem:[%s2 + $0xe8] sm:$0xf]
      %v2825 = vld [vmem:[%s2 + $0xec] sm:$0xf]
      %v2826 = vld [vmem:[%s2 + $0xf0] sm:$0xf]
      %v2827 = vld [vmem:[%s2 + $0xf4] sm:$0xf]
      %v2828 = vld [vmem:[%s2 + $0xf8] sm:$0xf]
      %v2829 = vld [vmem:[%s2 + $0xfc] sm:$0xf]
      %v2830 = vld [vmem:[%s2 + $0x100] sm:$0xf]
      %v2831 = vld [vmem:[%s2 + $0x104] sm:$0xf]
      %v2832 = vld [vmem:[%s2 + $0x108] sm:$0xf]
      %v2833 = vld [vmem:[%s2 + $0x10c] sm:$0xf]
      %v2834 = vld [vmem:[%s2 + $0x110] sm:$0xf]
      %v2835 = vld [vmem:[%s2 + $0x114] sm:$0xf]
      %v2836 = vld [vmem:[%s2 + $0x118] sm:$0xf]
      %v2837 = vld [vmem:[%s2 + $0x11c] sm:$0xf]
      %v2838 = vld [vmem:[%s2 + $0x120] sm:$0xf]
      %v2839 = vld [vmem:[%s2 + $0x124] sm:$0xf]
      %v2840 = vld [vmem:[%s2 + $0x128] sm:$0xf]
      %v2841 = vld [vmem:[%s2 + $0x12c] sm:$0xf]
      %v2842 = vld [vmem:[%s2 + $0x130] sm:$0xf]
      %v2843 = vld [vmem:[%s2 + $0x134] sm:$0xf]
      %v2844 = vld [vmem:[%s2 + $0x138] sm:$0xf]
      %v2845 = vld [vmem:[%s2 + $0x13c] sm:$0xf]
      %v2846 = vld [vmem:[%s2 + $0x140] sm:$0xf]
      %v2847 = vld [vmem:[%s2 + $0x144] sm:$0xf]
      %v2848 = vld [vmem:[%s2 + $0x148] sm:$0xf]
      %v2849 = vld [vmem:[%s2 + $0x14c] sm:$0xf]
      %v2850 = vld [vmem:[%s2 + $0x150] sm:$0xf]
      %v2851 = vld [vmem:[%s2 + $0x154] sm:$0xf]
      %v2852 = vld [vmem:[%s2 + $0x158] sm:$0xf]
      %v2853 = vld [vmem:[%s2 + $0x15c] sm:$0xf]
      %v2854 = vld [vmem:[%s2 + $0x160] sm:$0xf]
      %v2855 = vld [vmem:[%s2 + $0x164] sm:$0xf]
      %v2856 = vld [vmem:[%s2 + $0x168] sm:$0xf]
      %v2857 = vld [vmem:[%s2 + $0x16c] sm:$0xf]
      %v2858 = vld [vmem:[%s2 + $0x170] sm:$0xf]
      %v2859 = vld [vmem:[%s2 + $0x174] sm:$0xf]
      %v2860 = vld [vmem:[%s2 + $0x178] sm:$0xf]
      %v2861 = vld [vmem:[%s2 + $0x17c] sm:$0xf]
      %v2862 = vld [vmem:[%s2 + $0x180] sm:$0xf]
      %v2863 = vld [vmem:[%s2 + $0x184] sm:$0xf]
      %v2864 = vld [vmem:[%s2 + $0x188] sm:$0xf]
      %v2865 = vld [vmem:[%s2 + $0x18c] sm:$0xf]
      %v2866 = vld [vmem:[%s2 + $0x190] sm:$0xf]
      %v2867 = vld [vmem:[%s2 + $0x194] sm:$0xf]
      %v2868 = vld [vmem:[%s2 + $0x198] sm:$0xf]
      %v2869 = vld [vmem:[%s2 + $0x19c] sm:$0xf]
      %v2870 = vld [vmem:[%s2 + $0x1a0] sm:$0xf]
      %v2871 = vld [vmem:[%s2 + $0x1a4] sm:$0xf]
      %v2872 = vld [vmem:[%s2 + $0x1a8] sm:$0xf]
      %v2873 = vld [vmem:[%s2 + $0x1ac] sm:$0xf]
      %v2874 = vld [vmem:[%s2 + $0x1b0] sm:$0xf]
      %v2875 = vld [vmem:[%s2 + $0x1b4] sm:$0xf]
      %v2876 = vld [vmem:[%s2 + $0x1b8] sm:$0xf]
      %v2877 = vld [vmem:[%s2 + $0x1bc] sm:$0xf]
      %v2878 = vld [vmem:[%s2 + $0x1c0] sm:$0xf]
      %v2879 = vld [vmem:[%s2 + $0x1c4] sm:$0xf]
      %v2880 = vld [vmem:[%s2 + $0x1c8] sm:$0xf]
      %v2881 = vld [vmem:[%s2 + $0x1cc] sm:$0xf]
      %v2882 = vld [vmem:[%s2 + $0x1d0] sm:$0xf]
      %v2883 = vld [vmem:[%s2 + $0x1d4] sm:$0xf]
      %v2884 = vld [vmem:[%s2 + $0x1d8] sm:$0xf]
      %v2885 = vld [vmem:[%s2 + $0x1dc] sm:$0xf]
      %v2886 = vld [vmem:[%s2 + $0x1e0] sm:$0xf]
      %v2887 = vld [vmem:[%s2 + $0x1e4] sm:$0xf]
      %v2888 = vld [vmem:[%s2 + $0x1e8] sm:$0xf]
      %v2889 = vld [vmem:[%s2 + $0x1ec] sm:$0xf]
      %v2890 = vld [vmem:[%s2 + $0x1f0] sm:$0xf]
      %v2891 = vld [vmem:[%s2 + $0x1f4] sm:$0xf]
      %v2892 = vld [vmem:[%s2 + $0x1f8] sm:$0xf]
      %v2893 = vld [vmem:[%s2 + $0x1fc] sm:$0xf]
      %v2894 = vld [vmem:[%s2 + $0x200] sm:$0xf]
      %v2895 = vld [vmem:[%s2 + $0x204] sm:$0xf]
      %v2896 = vld [vmem:[%s2 + $0x208] sm:$0xf]
      %v2897 = vld [vmem:[%s2 + $0x20c] sm:$0xf]
      %v2898 = vld [vmem:[%s2 + $0x210] sm:$0xf]
      %v2899 = vld [vmem:[%s2 + $0x214] sm:$0xf]
      %v2900 = vld [vmem:[%s2 + $0x218] sm:$0xf]
      %v2901 = vld [vmem:[%s2 + $0x21c] sm:$0xf]
      %v2902 = vld [vmem:[%s2 + $0x220] sm:$0xf]
      %v2903 = vld [vmem:[%s2 + $0x224] sm:$0xf]
      %v2904 = vld [vmem:[%s2 + $0x228] sm:$0xf]
      %v2905 = vld [vmem:[%s2 + $0x22c] sm:$0xf]
      %v2906 = vld [vmem:[%s2 + $0x230] sm:$0xf]
      %v2907 = vld [vmem:[%s2 + $0x234] sm:$0xf]
      %v2908 = vld [vmem:[%s2 + $0x238] sm:$0xf]
      %v2909 = vld [vmem:[%s2 + $0x23c] sm:$0xf]
      %v2910 = vld [vmem:[%s3] sm:$0x1]
      %v2912 = vlaneseq
      %v2913 = vshrl.u32 %v2912, 7
      %v2914 = vsub.s32 0, %v2913
      %v2915 = vrot.slane %v2910, %v2914
      %v3061 = vunpack.c.l.b16 %v2766
      %v3062 = vunpack.c.l.b16 %v2767
      %v3063 = vunpack.c.l.b16 %v2768
      %v3064 = vunpack.c.l.b16 %v2769
      %v3065 = vunpack.c.l.b16 %v2770
      %v3066 = vunpack.c.l.b16 %v2771
      %v3067 = vunpack.c.l.b16 %v2772
      %v3068 = vunpack.c.l.b16 %v2773
      %v3069 = vunpack.c.l.b16 %v2774
      %v3070 = vunpack.c.l.b16 %v2775
      %v3071 = vunpack.c.l.b16 %v2776
      %v3072 = vunpack.c.l.b16 %v2777
      %v3073 = vunpack.c.l.b16 %v2778
      %v3074 = vunpack.c.l.b16 %v2779
      %v3075 = vunpack.c.l.b16 %v2780
      %v3076 = vunpack.c.l.b16 %v2781
      %v3077 = vunpack.c.l.b16 %v2782
      %v3078 = vunpack.c.l.b16 %v2783
      %v3079 = vunpack.c.l.b16 %v2784
      %v3080 = vunpack.c.l.b16 %v2785
      %v3081 = vunpack.c.l.b16 %v2786
      %v3082 = vunpack.c.l.b16 %v2787
      %v3083 = vunpack.c.l.b16 %v2788
      %v3084 = vunpack.c.l.b16 %v2789
      %v3085 = vunpack.c.l.b16 %v2790
      %v3086 = vunpack.c.l.b16 %v2791
      %v3087 = vunpack.c.l.b16 %v2792
      %v3088 = vunpack.c.l.b16 %v2793
      %v3089 = vunpack.c.l.b16 %v2794
      %v3090 = vunpack.c.l.b16 %v2795
      %v3091 = vunpack.c.l.b16 %v2796
      %v3092 = vunpack.c.l.b16 %v2797
      %v3093 = vunpack.c.l.b16 %v2798
      %v3094 = vunpack.c.l.b16 %v2799
      %v3095 = vunpack.c.l.b16 %v2800
      %v3096 = vunpack.c.l.b16 %v2801
      %v3097 = vunpack.c.l.b16 %v2802
      %v3098 = vunpack.c.l.b16 %v2803
      %v3099 = vunpack.c.l.b16 %v2804
      %v3100 = vunpack.c.l.b16 %v2805
      %v3101 = vunpack.c.l.b16 %v2806
      %v3102 = vunpack.c.l.b16 %v2807
      %v3103 = vunpack.c.l.b16 %v2808
      %v3104 = vunpack.c.l.b16 %v2809
      %v3105 = vunpack.c.l.b16 %v2810
      %v3106 = vunpack.c.l.b16 %v2811
      %v3107 = vunpack.c.l.b16 %v2812
      %v3108 = vunpack.c.l.b16 %v2813
      %v3109 = vunpack.c.l.b16 %v2814
      %v3110 = vunpack.c.l.b16 %v2815
      %v3111 = vunpack.c.l.b16 %v2816
      %v3112 = vunpack.c.l.b16 %v2817
      %v3113 = vunpack.c.l.b16 %v2818
      %v3114 = vunpack.c.l.b16 %v2819
      %v3115 = vunpack.c.l.b16 %v2820
      %v3116 = vunpack.c.l.b16 %v2821
      %v3117 = vunpack.c.l.b16 %v2822
      %v3118 = vunpack.c.l.b16 %v2823
      %v3119 = vunpack.c.l.b16 %v2824
      %v3120 = vunpack.c.l.b16 %v2825
      %v3121 = vunpack.c.l.b16 %v2826
      %v3122 = vunpack.c.l.b16 %v2827
      %v3123 = vunpack.c.l.b16 %v2828
      %v3124 = vunpack.c.l.b16 %v2829
      %v3125 = vunpack.c.l.b16 %v2830
      %v3126 = vunpack.c.l.b16 %v2831
      %v3127 = vunpack.c.l.b16 %v2832
      %v3128 = vunpack.c.l.b16 %v2833
      %v3129 = vunpack.c.l.b16 %v2834
      %v3130 = vunpack.c.l.b16 %v2835
      %v3131 = vunpack.c.l.b16 %v2836
      %v3132 = vunpack.c.l.b16 %v2837
      %v3133 = vunpack.c.l.b16 %v2838
      %v3134 = vunpack.c.l.b16 %v2839
      %v3135 = vunpack.c.l.b16 %v2840
      %v3136 = vunpack.c.l.b16 %v2841
      %v3137 = vunpack.c.l.b16 %v2842
      %v3138 = vunpack.c.l.b16 %v2843
      %v3139 = vunpack.c.l.b16 %v2844
      %v3140 = vunpack.c.l.b16 %v2845
      %v3141 = vunpack.c.l.b16 %v2846
      %v3142 = vunpack.c.l.b16 %v2847
      %v3143 = vunpack.c.l.b16 %v2848
      %v3144 = vunpack.c.l.b16 %v2849
      %v3145 = vunpack.c.l.b16 %v2850
      %v3146 = vunpack.c.l.b16 %v2851
      %v3147 = vunpack.c.l.b16 %v2852
      %v3148 = vunpack.c.l.b16 %v2853
      %v3149 = vunpack.c.l.b16 %v2854
      %v3150 = vunpack.c.l.b16 %v2855
      %v3151 = vunpack.c.l.b16 %v2856
      %v3152 = vunpack.c.l.b16 %v2857
      %v3153 = vunpack.c.l.b16 %v2858
      %v3154 = vunpack.c.l.b16 %v2859
      %v3155 = vunpack.c.l.b16 %v2860
      %v3156 = vunpack.c.l.b16 %v2861
      %v3157 = vunpack.c.l.b16 %v2862
      %v3158 = vunpack.c.l.b16 %v2863
      %v3159 = vunpack.c.l.b16 %v2864
      %v3160 = vunpack.c.l.b16 %v2865
      %v3161 = vunpack.c.l.b16 %v2866
      %v3162 = vunpack.c.l.b16 %v2867
      %v3163 = vunpack.c.l.b16 %v2868
      %v3164 = vunpack.c.l.b16 %v2869
      %v3165 = vunpack.c.l.b16 %v2870
      %v3166 = vunpack.c.l.b16 %v2871
      %v3167 = vunpack.c.l.b16 %v2872
      %v3168 = vunpack.c.l.b16 %v2873
      %v3169 = vunpack.c.l.b16 %v2874
      %v3170 = vunpack.c.l.b16 %v2875
      %v3171 = vunpack.c.l.b16 %v2876
      %v3172 = vunpack.c.l.b16 %v2877
      %v3173 = vunpack.c.l.b16 %v2878
      %v3174 = vunpack.c.l.b16 %v2879
      %v3175 = vunpack.c.l.b16 %v2880
      %v3176 = vunpack.c.l.b16 %v2881
      %v3177 = vunpack.c.l.b16 %v2882
      %v3178 = vunpack.c.l.b16 %v2883
      %v3179 = vunpack.c.l.b16 %v2884
      %v3180 = vunpack.c.l.b16 %v2885
      %v3181 = vunpack.c.l.b16 %v2886
      %v3182 = vunpack.c.l.b16 %v2887
      %v3183 = vunpack.c.l.b16 %v2888
      %v3184 = vunpack.c.l.b16 %v2889
      %v3185 = vunpack.c.l.b16 %v2890
      %v3186 = vunpack.c.l.b16 %v2891
      %v3187 = vunpack.c.l.b16 %v2892
      %v3188 = vunpack.c.l.b16 %v2893
      %v3189 = vunpack.c.l.b16 %v2894
      %v3190 = vunpack.c.l.b16 %v2895
      %v3191 = vunpack.c.l.b16 %v2896
      %v3192 = vunpack.c.l.b16 %v2897
      %v3193 = vunpack.c.l.b16 %v2898
      %v3194 = vunpack.c.l.b16 %v2899
      %v3195 = vunpack.c.l.b16 %v2900
      %v3196 = vunpack.c.l.b16 %v2901
      %v3197 = vunpack.c.l.b16 %v2902
      %v3198 = vunpack.c.l.b16 %v2903
      %v3199 = vunpack.c.l.b16 %v2904
      %v3200 = vunpack.c.l.b16 %v2905
      %v3201 = vunpack.c.l.b16 %v2906
      %v3202 = vunpack.c.l.b16 %v2907
      %v3203 = vunpack.c.l.b16 %v2908
      %v3204 = vunpack.c.l.b16 %v2909
      %v3205 = vpack.c.b16 %v3062, %v3061
      %v3206 = vpack.c.b16 %v3064, %v3063
      %v3207 = vpack.c.b16 %v3066, %v3065
      %v3208 = vpack.c.b16 %v3068, %v3067
      %v3209 = vpack.c.b16 %v3070, %v3069
      %v3210 = vpack.c.b16 %v3072, %v3071
      %v3211 = vpack.c.b16 %v3074, %v3073
      %v3212 = vpack.c.b16 %v3076, %v3075
      %v3213 = vpack.c.b16 %v3078, %v3077
      %v3214 = vpack.c.b16 %v3080, %v3079
      %v3215 = vpack.c.b16 %v3082, %v3081
      %v3216 = vpack.c.b16 %v3084, %v3083
      %v3217 = vpack.c.b16 %v3086, %v3085
      %v3218 = vpack.c.b16 %v3088, %v3087
      %v3219 = vpack.c.b16 %v3090, %v3089
      %v3220 = vpack.c.b16 %v3092, %v3091
      %v3221 = vpack.c.b16 %v3094, %v3093
      %v3222 = vpack.c.b16 %v3096, %v3095
      %v3223 = vpack.c.b16 %v3098, %v3097
      %v3224 = vpack.c.b16 %v3100, %v3099
      %v3225 = vpack.c.b16 %v3102, %v3101
      %v3226 = vpack.c.b16 %v3104, %v3103
      %v3227 = vpack.c.b16 %v3106, %v3105
      %v3228 = vpack.c.b16 %v3108, %v3107
      %v3229 = vpack.c.b16 %v3110, %v3109
      %v3230 = vpack.c.b16 %v3112, %v3111
      %v3231 = vpack.c.b16 %v3114, %v3113
      %v3232 = vpack.c.b16 %v3116, %v3115
      %v3233 = vpack.c.b16 %v3118, %v3117
      %v3234 = vpack.c.b16 %v3120, %v3119
      %v3235 = vpack.c.b16 %v3122, %v3121
      %v3236 = vpack.c.b16 %v3124, %v3123
      %v3237 = vpack.c.b16 %v3126, %v3125
      %v3238 = vpack.c.b16 %v3128, %v3127
      %v3239 = vpack.c.b16 %v3130, %v3129
      %v3240 = vpack.c.b16 %v3132, %v3131
      %v3241 = vpack.c.b16 %v3134, %v3133
      %v3242 = vpack.c.b16 %v3136, %v3135
      %v3243 = vpack.c.b16 %v3138, %v3137
      %v3244 = vpack.c.b16 %v3140, %v3139
      %v3245 = vpack.c.b16 %v3142, %v3141
      %v3246 = vpack.c.b16 %v3144, %v3143
      %v3247 = vpack.c.b16 %v3146, %v3145
      %v3248 = vpack.c.b16 %v3148, %v3147
      %v3249 = vpack.c.b16 %v3150, %v3149
      %v3250 = vpack.c.b16 %v3152, %v3151
      %v3251 = vpack.c.b16 %v3154, %v3153
      %v3252 = vpack.c.b16 %v3156, %v3155
      %v3253 = vpack.c.b16 %v3158, %v3157
      %v3254 = vpack.c.b16 %v3160, %v3159
      %v3255 = vpack.c.b16 %v3162, %v3161
      %v3256 = vpack.c.b16 %v3164, %v3163
      %v3257 = vpack.c.b16 %v3166, %v3165
      %v3258 = vpack.c.b16 %v3168, %v3167
      %v3259 = vpack.c.b16 %v3170, %v3169
      %v3260 = vpack.c.b16 %v3172, %v3171
      %v3261 = vpack.c.b16 %v3174, %v3173
      %v3262 = vpack.c.b16 %v3176, %v3175
      %v3263 = vpack.c.b16 %v3178, %v3177
      %v3264 = vpack.c.b16 %v3180, %v3179
      %v3265 = vpack.c.b16 %v3182, %v3181
      %v3266 = vpack.c.b16 %v3184, %v3183
      %v3267 = vpack.c.b16 %v3186, %v3185
      %v3268 = vpack.c.b16 %v3188, %v3187
      %v3269 = vpack.c.b16 %v3190, %v3189
      %v3270 = vpack.c.b16 %v3192, %v3191
      %v3271 = vpack.c.b16 %v3194, %v3193
      %v3272 = vpack.c.b16 %v3196, %v3195
      %v3273 = vpack.c.b16 %v3198, %v3197
      %v3274 = vpack.c.b16 %v3200, %v3199
      %v3275 = vpack.c.b16 %v3202, %v3201
      %v3276 = vpack.c.b16 %v3204, %v3203
      %3349 = vmatprep.subr.bf16.mxu0 0
      %3350 = vmatpush1.bf16.msra.mxu0 %v3205
      %3351 = vmatprep.subr.bf16.mxu0 0
      %3352 = vmatpush1.bf16.msra.mxu0 %v3206
      %3353 = vmatprep.subr.bf16.mxu0 0
      %3354 = vmatpush1.bf16.msra.mxu0 %v3207
      %3355 = vmatprep.subr.bf16.mxu0 0
      %3356 = vmatpush1.bf16.msra.mxu0 %v3208
      %3357 = vmatprep.subr.bf16.mxu0 0
      %3358 = vmatpush1.bf16.msra.mxu0 %v3209
      %3359 = vmatprep.subr.bf16.mxu0 0
      %3360 = vmatpush1.bf16.msra.mxu0 %v3210
      %3361 = vmatprep.subr.bf16.mxu0 0
      %3362 = vmatpush1.bf16.msra.mxu0 %v3211
      %3363 = vmatprep.subr.bf16.mxu0 0
      %3364 = vmatpush1.bf16.msra.mxu0 %v3212
      %3365 = vmatprep.subr.bf16.mxu0 0
      %3366 = vmatpush1.bf16.msra.mxu0 %v3213
      %3367 = vmatprep.subr.bf16.mxu0 0
      %3368 = vmatpush1.bf16.msra.mxu0 %v3214
      %3369 = vmatprep.subr.bf16.mxu0 0
      %3370 = vmatpush1.bf16.msra.mxu0 %v3215
      %3371 = vmatprep.subr.bf16.mxu0 0
      %3372 = vmatpush1.bf16.msra.mxu0 %v3216
      %3373 = vmatprep.subr.bf16.mxu0 0
      %3374 = vmatpush1.bf16.msra.mxu0 %v3217
      %3375 = vmatprep.subr.bf16.mxu0 0
      %3376 = vmatpush1.bf16.msra.mxu0 %v3218
      %3377 = vmatprep.subr.bf16.mxu0 0
      %3378 = vmatpush1.bf16.msra.mxu0 %v3219
      %3379 = vmatprep.subr.bf16.mxu0 0
      %3380 = vmatpush1.bf16.msra.mxu0 %v3220
      %3381 = vmatprep.mubr.bf16.mxu0 %v2721
      %3382 = vmatmul.mubr.bf16.gmra.mrb[0].mxu0 %v2720
      %v3383 = vpop.f32.mrb[0].mxu0
      %v3384 = vadd.f32 %v2915, %v3383
      %v3385 = vpop.f32.mrb[0].mxu0
      %v3386 = vpop.f32.mrb[0].mxu0
      %v3387 = vpop.f32.mrb[0].mxu0
      %3388 = vdwg.mxu0
      %3389 = vmatprep.subr.bf16.mxu0 0
      %3390 = vmatpush1.bf16.msra.mxu0 %v3221
      %3391 = vmatprep.subr.bf16.mxu0 0
      %3392 = vmatpush1.bf16.msra.mxu0 %v3222
      %3393 = vmatprep.subr.bf16.mxu0 0
      %3394 = vmatpush1.bf16.msra.mxu0 %v3223
      %3395 = vmatprep.subr.bf16.mxu0 0
      %3396 = vmatpush1.bf16.msra.mxu0 %v3224
      %3397 = vmatprep.subr.bf16.mxu0 0
      %3398 = vmatpush1.bf16.msra.mxu0 %v3225
      %3399 = vmatprep.subr.bf16.mxu0 0
      %3400 = vmatpush1.bf16.msra.mxu0 %v3226
      %3401 = vmatprep.subr.bf16.mxu0 0
      %3402 = vmatpush1.bf16.msra.mxu0 %v3227
      %3403 = vmatprep.subr.bf16.mxu0 0
      %3404 = vmatpush1.bf16.msra.mxu0 %v3228
      %3405 = vmatprep.subr.bf16.mxu0 0
      %3406 = vmatpush1.bf16.msra.mxu0 %v3229
      %3407 = vmatprep.subr.bf16.mxu0 0
      %3408 = vmatpush1.bf16.msra.mxu0 %v3230
      %3409 = vmatprep.subr.bf16.mxu0 0
      %3410 = vmatpush1.bf16.msra.mxu0 %v3231
      %3411 = vmatprep.subr.bf16.mxu0 0
      %3412 = vmatpush1.bf16.msra.mxu0 %v3232
      %3413 = vmatprep.subr.bf16.mxu0 0
      %3414 = vmatpush1.bf16.msra.mxu0 %v3233
      %3415 = vmatprep.subr.bf16.mxu0 0
      %3416 = vmatpush1.bf16.msra.mxu0 %v3234
      %3417 = vmatprep.subr.bf16.mxu0 0
      %3418 = vmatpush1.bf16.msra.mxu0 %v3235
      %3419 = vmatprep.subr.bf16.mxu0 0
      %3420 = vmatpush1.bf16.msra.mxu0 %v3236
      %3421 = vmatprep.mubr.bf16.mxu0 %v2724
      %3422 = vmatmul.mubr.bf16.gmra.mrb[0].mxu0 %v2742
      %v3423 = vpop.f32.mrb[0].mxu0
      %v3424 = vadd.f32 %v3384, %v3423
      %v3425 = vpop.f32.mrb[0].mxu0
      %v3426 = vpop.f32.mrb[0].mxu0
      %v3427 = vpop.f32.mrb[0].mxu0
      %3428 = vdwg.mxu0
      %3429 = vmatprep.subr.bf16.mxu0 0
      %3430 = vmatpush1.bf16.msra.mxu0 %v3237
      %3431 = vmatprep.subr.bf16.mxu0 0
      %3432 = vmatpush1.bf16.msra.mxu0 %v3238
      %3433 = vmatprep.subr.bf16.mxu0 0
      %3434 = vmatpush1.bf16.msra.mxu0 %v3239
      %3435 = vmatprep.subr.bf16.mxu0 0
      %3436 = vmatpush1.bf16.msra.mxu0 %v3240
      %3437 = vmatprep.subr.bf16.mxu0 0
      %3438 = vmatpush1.bf16.msra.mxu0 %v3241
      %3439 = vmatprep.subr.bf16.mxu0 0
      %3440 = vmatpush1.bf16.msra.mxu0 %v3242
      %3441 = vmatprep.subr.bf16.mxu0 0
      %3442 = vmatpush1.bf16.msra.mxu0 %v3243
      %3443 = vmatprep.subr.bf16.mxu0 0
      %3444 = vmatpush1.bf16.msra.mxu0 %v3244
      %3445 = vmatprep.subr.bf16.mxu0 0
      %3446 = vmatpush1.bf16.msra.mxu0 %v3245
      %3447 = vmatprep.subr.bf16.mxu0 0
      %3448 = vmatpush1.bf16.msra.mxu0 %v3246
      %3449 = vmatprep.subr.bf16.mxu0 0
      %3450 = vmatpush1.bf16.msra.mxu0 %v3247
      %3451 = vmatprep.subr.bf16.mxu0 0
      %3452 = vmatpush1.bf16.msra.mxu0 %v3248
      %3453 = vmatprep.subr.bf16.mxu0 0
      %3454 = vmatpush1.bf16.msra.mxu0 %v3249
      %3455 = vmatprep.subr.bf16.mxu0 0
      %3456 = vmatpush1.bf16.msra.mxu0 %v3250
      %3457 = vmatprep.subr.bf16.mxu0 0
      %3458 = vmatpush1.bf16.msra.mxu0 %v3251
      %3459 = vmatprep.subr.bf16.mxu0 0
      %3460 = vmatpush1.bf16.msra.mxu0 %v3252
      %3461 = vmatprep.mubr.bf16.mxu0 %v2753
      %3462 = vmatmul.mubr.bf16.gmra.mrb[0].mxu0 %v2726
      %v3463 = vpop.f32.mrb[0].mxu0
      %v3464 = vadd.f32 %v3424, %v3463
      %v3465 = vpop.f32.mrb[0].mxu0
      %v3466 = vpop.f32.mrb[0].mxu0
      %v3467 = vpop.f32.mrb[0].mxu0
      %3468 = vdwg.mxu0
      %3469 = vmatprep.subr.bf16.mxu0 0
      %3470 = vmatpush1.bf16.msra.mxu0 %v3253
      %3471 = vmatprep.subr.bf16.mxu0 0
      %3472 = vmatpush1.bf16.msra.mxu0 %v3254
      %3473 = vmatprep.subr.bf16.mxu0 0
      %3474 = vmatpush1.bf16.msra.mxu0 %v3255
      %3475 = vmatprep.subr.bf16.mxu0 0
      %3476 = vmatpush1.bf16.msra.mxu0 %v3256
      %3477 = vmatprep.subr.bf16.mxu0 0
      %3478 = vmatpush1.bf16.msra.mxu0 %v3257
      %3479 = vmatprep.subr.bf16.mxu0 0
      %3480 = vmatpush1.bf16.msra.mxu0 %v3258
      %3481 = vmatprep.subr.bf16.mxu0 0
      %3482 = vmatpush1.bf16.msra.mxu0 %v3259
      %3483 = vmatprep.subr.bf16.mxu0 0
      %3484 = vmatpush1.bf16.msra.mxu0 %v3260
      %3485 = vmatprep.subr.bf16.mxu0 0
      %3486 = vmatpush1.bf16.msra.mxu0 %v3261
      %3487 = vmatprep.subr.bf16.mxu0 0
      %3488 = vmatpush1.bf16.msra.mxu0 %v3262
      %3489 = vmatprep.subr.bf16.mxu0 0
      %3490 = vmatpush1.bf16.msra.mxu0 %v3263
      %3491 = vmatprep.subr.bf16.mxu0 0
      %3492 = vmatpush1.bf16.msra.mxu0 %v3264
      %3493 = vmatprep.subr.bf16.mxu0 0
      %3494 = vmatpush1.bf16.msra.mxu0 %v3265
      %3495 = vmatprep.subr.bf16.mxu0 0
      %3496 = vmatpush1.bf16.msra.mxu0 %v3266
      %3497 = vmatprep.subr.bf16.mxu0 0
      %3498 = vmatpush1.bf16.msra.mxu0 %v3267
      %3499 = vmatprep.subr.bf16.mxu0 0
      %3500 = vmatpush1.bf16.msra.mxu0 %v3268
      %3501 = vmatprep.mubr.bf16.mxu0 %v2731
      %3502 = vmatmul.mubr.bf16.gmra.mrb[0].mxu0 %v2729
      %v3503 = vpop.f32.mrb[0].mxu0
      %v3504 = vadd.f32 %v3464, %v3503
      %v3505 = vpop.f32.mrb[0].mxu0
      %v3506 = vpop.f32.mrb[0].mxu0
      %v3507 = vpop.f32.mrb[0].mxu0
      %3508 = vdwg.mxu0
      %3509 = vmatprep.subr.bf16.mxu0 0
      %3510 = vmatpush1.bf16.msra.mxu0 %v3269
      %3511 = vmatprep.subr.bf16.mxu0 0
      %3512 = vmatpush1.bf16.msra.mxu0 %v3270
      %3513 = vmatprep.subr.bf16.mxu0 0
      %3514 = vmatpush1.bf16.msra.mxu0 %v3271
      %3515 = vmatprep.subr.bf16.mxu0 0
      %3516 = vmatpush1.bf16.msra.mxu0 %v3272
      %3517 = vmatprep.subr.bf16.mxu0 0
      %3518 = vmatpush1.bf16.msra.mxu0 %v3273
      %3519 = vmatprep.subr.bf16.mxu0 0
      %3520 = vmatpush1.bf16.msra.mxu0 %v3274
      %3521 = vmatprep.subr.bf16.mxu0 0
      %3522 = vmatpush1.bf16.msra.mxu0 %v3275
      %3523 = vmatprep.subr.bf16.mxu0 0
      %3524 = vmatpush1.bf16.msra.mxu0 %v3276
      %3525 = vmatprep.subr.bf16.mxu0 0
      %3526 = vmatpush1.bf16.msra.mxu0 0
      %3527 = vmatprep.subr.bf16.mxu0 0
      %3528 = vmatpush1.bf16.msra.mxu0 0
      %3529 = vmatprep.subr.bf16.mxu0 0
      %3530 = vmatpush1.bf16.msra.mxu0 0
      %3531 = vmatprep.subr.bf16.mxu0 0
      %3532 = vmatpush1.bf16.msra.mxu0 0
      %3533 = vmatprep.subr.bf16.mxu0 0
      %3534 = vmatpush1.bf16.msra.mxu0 0
      %3535 = vmatprep.subr.bf16.mxu0 0
      %3536 = vmatpush1.bf16.msra.mxu0 0
      %3537 = vmatprep.subr.bf16.mxu0 0
      %3538 = vmatpush1.bf16.msra.mxu0 0
      %3539 = vmatprep.subr.bf16.mxu0 0
      %3540 = vmatpush1.bf16.msra.mxu0 0
      %3541 = vmatprep.mubr.bf16.mxu0 0
      %3542 = vmatmul.mubr.bf16.gmra.mrb[0].mxu0 %v2764
      %v3543 = vpop.f32.mrb[0].mxu0
      %v3544 = vadd.f32 %v3504, %v3543
      %v3545 = vpop.f32.mrb[0].mxu0
      %v3546 = vpop.f32.mrb[0].mxu0
      %v3547 = vpop.f32.mrb[0].mxu0
      %3548 = vdwg.mxu0
      %v3549 = vmax.f32 %v3544, 0.0
      %v3550 = vpack.c.bf16 %v3549, %v3549
      %v3552 = vunpack.c.l.b16 %v3550
      %v3553 = vpack.c.b16 %v3552, %v3552
      %v3554 = vrot.slane %v3553, 6
      %3556 = vst [vmem:[%s217 + $0x4] sm:$0xc] %v3554
      %p3557 = scmp.lt.s32.totalorder %s15, 1
      %s3558 = scalar_select %p3557, %s15, 1
      %s3559 = smul.addr %s3558, 2
      %s3560 = smul.addr %s3559, 4
      %s3561 = scalar_lea.vmem %s4, %s3560
      // Predicated region
      $region37: #{_lambda_.8} parent=35 // pred_check
        %p3562 = pneg %p127
      $region38: #{_lambda_.8} parent=35 // pred_check_branch
        %3564 = sbr.rel (%p3562) target = $region40
      $region39: #{_lambda_.8} parent=35 // pred_region
        _
      $region40: #{_lambda_.8} parent=35 // pred_fallthru
        _
    $region36: #{_lambda_.8} parent=5 // pred_fallthru
      _
    %p3565 = scmp.le.s32.totalorder 2, %s10
    // Predicated region
    $region41: #{_lambda_.8} parent=5 // pred_check
      %p3566 = pneg %p3565
    $region42: #{_lambda_.8} parent=5 // pred_check_branch
      %3568 = sbr.rel (%p3566) target = $region44
    $region43: #{_lambda_.8} parent=5 // pred_region
      %s3569 = ssub.s32 %s10, 2
      // Predicated region
      $region45: #{_lambda_.8} parent=43 // pred_check
        %p3570 = pneg %p133
      $region46: #{_lambda_.8} parent=43 // pred_check_branch
        %3572 = sbr.rel (%p3570) target = $region48
      $region47: #{_lambda_.8} parent=43 // pred_region
        %p3573 = scmp.lt.s32.totalorder %s16, 1
        %s3574 = scalar_select %p3573, %s16, 1
        %s3575 = smul.addr %s3574, 2
        %s3576 = smul.addr %s3575, 4
        %s3577 = scalar_lea.vmem %s4, %s3576
      $region48: #{_lambda_.8} parent=43 // pred_fallthru
        _
    $region44: #{_lambda_.8} parent=5 // pred_fallthru
      _
  $region6: #{_lambda_.8} parent=0 // loop_footer
    %s14 = sadd.s32 1, %s10
  $region7: #{_lambda_.8} parent=0 // loop_footer_branch
    %9 = sbr.rel target = $region3
  $region8: #{_lambda_.8} parent=0 // loop_exit
    _

// kernel: _lambda_.10
$region0: #{_lambda_.10}
  #allocation0 [shape = 'u32[]', space=smem, size = 0x4, offset = 0x4, fixed_abs, tag = 'smem constant byte address 0x4 - core index']
  #allocation1 [shape = 'u32[144,128]{1,0:T(1,128)}', space=vmem, size = 0x12000, scoped, tag = 'internal scratch']
  #allocation2 [shape = 'bf16[16,128]{1,0:T(16,128)(2,1)}', space=vmem, size = 0x1000, scoped, tag = 'scratch operand']
  #allocation3 [shape = 'bf16[6,6,128]{2,1,0:T(8,128)(2,1)}', space=vmem, size = 0x3000, scoped, tag = 'scratch operand']
  #allocation4 [shape = 'bf16[16,128]{1,0:T(16,128)(2,1)}', space=vmem, size = 0x1000, scoped, tag = 'scratch operand']
  %s0 = inlined_call_operand.vmem [shape: bf16[2,16,512], index: 0, kind: input, shape index: {}]
  %s1 = inlined_call_operand.vmem [shape: bf16[512,128], index: 1, kind: input, shape index: {}]
  %s2 = inlined_call_operand.vmem [shape: f32[1,128], index: 2, kind: input, shape index: {}, may-alias: {2,4}]
  %s3 = inlined_call_operand.vmem [shape: bf16[1152,128], index: 3, kind: input, shape index: {}]
  %s4 = inlined_call_operand.vmem [shape: f32[1,128], index: 4, kind: input, shape index: {}, may-alias: {2,4}]
  %s5 = inlined_call_operand.vmem [shape: bf16[128,512], index: 5, kind: input, shape index: {}]
  %s6 = inlined_call_operand.vmem [shape: f32[1,512], index: 6, kind: input, shape index: {}]
  %s7 = inlined_call_operand.vmem [shape: bf16[2,16,512], index: 7, kind: output, shape index: {}]
  %s8 = sld [smem:[#allocation0]]
  $region61: #{_lambda_.10} parent=0
    _
  %s10 = ssub.s32 1, %s8
  %s11 = scalar_select 0, %s10, %s8
  loop: start=0, step=1, limit=4
  $region2: #{_lambda_.10} parent=0 // loop_pre_header
    _
  $region3: #{_lambda_.10} parent=0 // loop_header
    %s13 = sphi 0, %s17
    %p14 = scmp.ge.s32.totalorder %s13, 4
    %s23 = sphi 0, %s25
    %s26 = sphi 0, %s23
    %s27 = sphi 0, %s26
    %s43 = sphi 0, %s27
    %s47 = sphi 0, %s47
    %s49 = sphi 0, %s47
    %s50 = sphi 0, %s49
    %s64 = sphi 0, %s50
    %s68 = sphi 0, %s68
    %s70 = sphi 0, %s68
    %s71 = sphi 0, %s70
    %s85 = sphi 0, %s71
    %s89 = sphi 0, %s89
    %s91 = sphi 0, %s89
    %s92 = sphi 0, %s91
    %s106 = sphi 0, %s92
    %s110 = sphi 0, %s110
    %s112 = sphi 0, %s110
    %s113 = sphi 0, %s112
    %s127 = sphi 0, %s113
    %s131 = sphi 0, %s131
    %s133 = sphi 0, %s131
    %s134 = sphi 0, %s133
    %s148 = sphi 0, %s134
    %s152 = sphi 0, %s152
    %s154 = sphi 0, %s152
    %s155 = sphi 0, %s154
    %s169 = sphi 0, %s155
    %s175 = sphi 0, %s177
    %s178 = sphi 0, %s175
    %s179 = sphi 0, %s178
    %s195 = sphi 0, %s179
  $region4: #{_lambda_.10} parent=0 // loop_header_branch
    %16 = sbr.rel (%p14) target = $region8
  $region5: #{_lambda_.10} parent=0 // loop_body
    %s18 = ssub.s32 %s13, 1
    %s19 = ssub.s32 %s13, 2
    %s20 = sadd.s32 %s13, 1
    %s21 = ssub.s32 %s13, %s20
    %p22 = scmp.eq.s32.totalorder %s21, 0
    %s24 = sadd.s32 %s23, 1
    %s25 = scalar_select %p22, %s23, %s24
    %p28 = pneg %p22
    %p29 = scmp.eq.s32.totalorder %s13, 1
    %p30 = por %p28, %p29
    %p31 = scmp.ne.s32.totalorder %s23, %s26
    %p32 = scmp.eq.s32.totalorder %s13, 0
    %p33 = por %p31, %p32
    %p34 = scmp.ne.s32.totalorder %s23, %s26
    %p35 = scmp.eq.s32.totalorder %s18, 1
    %p36 = por %p34, %p35
    %p37 = scmp.ne.s32.totalorder %s26, %s27
    %p38 = scmp.eq.s32.totalorder %s18, 0
    %p39 = por %p37, %p38
    %p40 = scmp.ne.s32.totalorder %s26, %s27
    %p41 = scmp.eq.s32.totalorder %s19, 1
    %p42 = por %p40, %p41
    %p44 = scmp.ne.s32.totalorder %s27, %s43
    %p45 = scmp.eq.s32.totalorder %s19, 0
    %p46 = por %p44, %p45
    %s48 = sadd.s32 %s47, 1
    %p51 = scmp.eq.s32.totalorder %s13, 1
    %p52 = scmp.ne.s32.totalorder %s47, %s49
    %p53 = scmp.eq.s32.totalorder %s13, 0
    %p54 = por %p52, %p53
    %p55 = scmp.ne.s32.totalorder %s47, %s49
    %p56 = scmp.eq.s32.totalorder %s18, 1
    %p57 = por %p55, %p56
    %p58 = scmp.ne.s32.totalorder %s49, %s50
    %p59 = scmp.eq.s32.totalorder %s18, 0
    %p60 = por %p58, %p59
    %p61 = scmp.ne.s32.totalorder %s49, %s50
    %p62 = scmp.eq.s32.totalorder %s19, 1
    %p63 = por %p61, %p62
    %p65 = scmp.ne.s32.totalorder %s50, %s64
    %p66 = scmp.eq.s32.totalorder %s19, 0
    %p67 = por %p65, %p66
    %s69 = sadd.s32 %s68, 1
    %p72 = scmp.eq.s32.totalorder %s13, 1
    %p73 = scmp.ne.s32.totalorder %s68, %s70
    %p74 = scmp.eq.s32.totalorder %s13, 0
    %p75 = por %p73, %p74
    %p76 = scmp.ne.s32.totalorder %s68, %s70
    %p77 = scmp.eq.s32.totalorder %s18, 1
    %p78 = por %p76, %p77
    %p79 = scmp.ne.s32.totalorder %s70, %s71
    %p80 = scmp.eq.s32.totalorder %s18, 0
    %p81 = por %p79, %p80
    %p82 = scmp.ne.s32.totalorder %s70, %s71
    %p83 = scmp.eq.s32.totalorder %s19, 1
    %p84 = por %p82, %p83
    %p86 = scmp.ne.s32.totalorder %s71, %s85
    %p87 = scmp.eq.s32.totalorder %s19, 0
    %p88 = por %p86, %p87
    %s90 = sadd.s32 %s89, 1
    %p93 = scmp.eq.s32.totalorder %s13, 1
    %p94 = scmp.ne.s32.totalorder %s89, %s91
    %p95 = scmp.eq.s32.totalorder %s13, 0
    %p96 = por %p94, %p95
    %p97 = scmp.ne.s32.totalorder %s89, %s91
    %p98 = scmp.eq.s32.totalorder %s18, 1
    %p99 = por %p97, %p98
    %p100 = scmp.ne.s32.totalorder %s91, %s92
    %p101 = scmp.eq.s32.totalorder %s18, 0
    %p102 = por %p100, %p101
    %p103 = scmp.ne.s32.totalorder %s91, %s92
    %p104 = scmp.eq.s32.totalorder %s19, 1
    %p105 = por %p103, %p104
    %p107 = scmp.ne.s32.totalorder %s92, %s106
    %p108 = scmp.eq.s32.totalorder %s19, 0
    %p109 = por %p107, %p108
    %s111 = sadd.s32 %s110, 1
    %p114 = scmp.eq.s32.totalorder %s13, 1
    %p115 = scmp.ne.s32.totalorder %s110, %s112
    %p116 = scmp.eq.s32.totalorder %s13, 0
    %p117 = por %p115, %p116
    %p118 = scmp.ne.s32.totalorder %s110, %s112
    %p119 = scmp.eq.s32.totalorder %s18, 1
    %p120 = por %p118, %p119
    %p121 = scmp.ne.s32.totalorder %s112, %s113
    %p122 = scmp.eq.s32.totalorder %s18, 0
    %p123 = por %p121, %p122
    %p124 = scmp.ne.s32.totalorder %s112, %s113
    %p125 = scmp.eq.s32.totalorder %s19, 1
    %p126 = por %p124, %p125
    %p128 = scmp.ne.s32.totalorder %s113, %s127
    %p129 = scmp.eq.s32.totalorder %s19, 0
    %p130 = por %p128, %p129
    %s132 = sadd.s32 %s131, 1
    %p135 = scmp.eq.s32.totalorder %s13, 1
    %p136 = scmp.ne.s32.totalorder %s131, %s133
    %p137 = scmp.eq.s32.totalorder %s13, 0
    %p138 = por %p136, %p137
    %p139 = scmp.ne.s32.totalorder %s131, %s133
    %p140 = scmp.eq.s32.totalorder %s18, 1
    %p141 = por %p139, %p140
    %p142 = scmp.ne.s32.totalorder %s133, %s134
    %p143 = scmp.eq.s32.totalorder %s18, 0
    %p144 = por %p142, %p143
    %p145 = scmp.ne.s32.totalorder %s133, %s134
    %p146 = scmp.eq.s32.totalorder %s19, 1
    %p147 = por %p145, %p146
    %p149 = scmp.ne.s32.totalorder %s134, %s148
    %p150 = scmp.eq.s32.totalorder %s19, 0
    %p151 = por %p149, %p150
    %s153 = sadd.s32 %s152, 1
    %p156 = scmp.eq.s32.totalorder %s13, 1
    %p157 = scmp.ne.s32.totalorder %s152, %s154
    %p158 = scmp.eq.s32.totalorder %s13, 0
    %p159 = por %p157, %p158
    %p160 = scmp.ne.s32.totalorder %s152, %s154
    %p161 = scmp.eq.s32.totalorder %s18, 1
    %p162 = por %p160, %p161
    %p163 = scmp.ne.s32.totalorder %s154, %s155
    %p164 = scmp.eq.s32.totalorder %s18, 0
    %p165 = por %p163, %p164
    %p166 = scmp.ne.s32.totalorder %s154, %s155
    %p167 = scmp.eq.s32.totalorder %s19, 1
    %p168 = por %p166, %p167
    %p170 = scmp.ne.s32.totalorder %s155, %s169
    %p171 = scmp.eq.s32.totalorder %s19, 0
    %p172 = por %p170, %p171
    %s173 = ssub.s32 %s13, %s20
    %p174 = scmp.eq.s32.totalorder %s173, 0
    %s176 = sadd.s32 %s175, 1
    %s177 = scalar_select %p174, %s175, %s176
    %p180 = pneg %p174
    %p181 = scmp.eq.s32.totalorder %s13, 1
    %p182 = por %p180, %p181
    %p183 = scmp.ne.s32.totalorder %s175, %s178
    %p184 = scmp.eq.s32.totalorder %s13, 0
    %p185 = por %p183, %p184
    %p186 = scmp.ne.s32.totalorder %s175, %s178
    %p187 = scmp.eq.s32.totalorder %s18, 1
    %p188 = por %p186, %p187
    %p189 = scmp.ne.s32.totalorder %s178, %s179
    %p190 = scmp.eq.s32.totalorder %s18, 0
    %p191 = por %p189, %p190
    %p192 = scmp.ne.s32.totalorder %s178, %s179
    %p193 = scmp.eq.s32.totalorder %s19, 1
    %p194 = por %p192, %p193
    %p196 = scmp.ne.s32.totalorder %s179, %s195
    %p197 = scmp.eq.s32.totalorder %s19, 0
    %p198 = por %p196, %p197
    %p199 = scmp.le.s32.totalorder 1, %s13
    %p200 = scmp.lt.s32.totalorder %s13, 3
    %p201 = pnand %p199, %p200
    %p202 = pneg %p201
    // Predicated region
    $region9: #{_lambda_.10} parent=5 // pred_check
      _
    $region10: #{_lambda_.10} parent=5 // pred_check_branch
      %204 = sbr.rel (%p201) target = $region12
    $region11: #{_lambda_.10} parent=5 // pred_region
      %s205 = ssub.s32 %s13, 1
      // Predicated region
      $region13: #{_lambda_.10} parent=11 // pred_check
        %p206 = pneg %p60
      $region14: #{_lambda_.10} parent=11 // pred_check_branch
        %208 = sbr.rel (%p206) target = $region16
      $region15: #{_lambda_.10} parent=11 // pred_region
        _
      $region16: #{_lambda_.10} parent=11 // pred_fallthru
        _
      // Predicated region
      $region17: #{_lambda_.10} parent=11 // pred_check
        %p209 = pneg %p81
      $region18: #{_lambda_.10} parent=11 // pred_check_branch
        %211 = sbr.rel (%p209) target = $region20
      $region19: #{_lambda_.10} parent=11 // pred_region
        _
      $region20: #{_lambda_.10} parent=11 // pred_fallthru
        _
      // Predicated region
      $region21: #{_lambda_.10} parent=11 // pred_check
        %p212 = pneg %p102
      $region22: #{_lambda_.10} parent=11 // pred_check_branch
        %214 = sbr.rel (%p212) target = $region24
      $region23: #{_lambda_.10} parent=11 // pred_region
        _
      $region24: #{_lambda_.10} parent=11 // pred_fallthru
        _
      // Predicated region
      $region25: #{_lambda_.10} parent=11 // pred_check
        %p215 = pneg %p123
      $region26: #{_lambda_.10} parent=11 // pred_check_branch
        %217 = sbr.rel (%p215) target = $region28
      $region27: #{_lambda_.10} parent=11 // pred_region
        _
      $region28: #{_lambda_.10} parent=11 // pred_fallthru
        _
      // Predicated region
      $region29: #{_lambda_.10} parent=11 // pred_check
        %p218 = pneg %p144
      $region30: #{_lambda_.10} parent=11 // pred_check_branch
        %220 = sbr.rel (%p218) target = $region32
      $region31: #{_lambda_.10} parent=11 // pred_region
        _
      $region32: #{_lambda_.10} parent=11 // pred_fallthru
        _
      // Predicated region
      $region33: #{_lambda_.10} parent=11 // pred_check
        %p221 = pneg %p165
      $region34: #{_lambda_.10} parent=11 // pred_check_branch
        %223 = sbr.rel (%p221) target = $region36
      $region35: #{_lambda_.10} parent=11 // pred_region
        _
      $region36: #{_lambda_.10} parent=11 // pred_fallthru
        _
    $region12: #{_lambda_.10} parent=5 // pred_fallthru
      _
    %p224 = scmp.lt.s32.totalorder %s13, 2
    // Predicated region
    $region37: #{_lambda_.10} parent=5 // pred_check
      %p225 = pneg %p224
    $region38: #{_lambda_.10} parent=5 // pred_check_branch
      %227 = sbr.rel (%p225) target = $region40
    $region39: #{_lambda_.10} parent=5 // pred_region
      // Predicated region
      $region41: #{_lambda_.10} parent=39 // pred_check
        %p228 = pneg %p33
      $region42: #{_lambda_.10} parent=39 // pred_check_branch
        %230 = sbr.rel (%p228) target = $region44
      $region43: #{_lambda_.10} parent=39 // pred_region
        %p231 = scmp.lt.s32.totalorder %s13, 1
        %s232 = scalar_select %p231, %s13, 1
        %s233 = smul.addr %s232, 8
        %s234 = smul.addr %s233, 4
        %s235 = scalar_lea.vmem %s0, %s234
      $region44: #{_lambda_.10} parent=39 // pred_fallthru
        _
    $region40: #{_lambda_.10} parent=5 // pred_fallthru
      _
    %p236 = scmp.le.s32.totalorder 1, %s13
    %p237 = scmp.lt.s32.totalorder %s13, 3
    %p238 = pnand %p236, %p237
    %p239 = pneg %p238
    // Predicated region
    $region45: #{_lambda_.10} parent=5 // pred_check
      _
    $region46: #{_lambda_.10} parent=5 // pred_check_branch
      %241 = sbr.rel (%p238) target = $region48
    $region47: #{_lambda_.10} parent=5 // pred_region
      %s242 = ssub.s32 %s13, 1
      %p243 = scmp.lt.s32.totalorder %s18, 1
      %s244 = scalar_select %p243, %s18, 1
      %s245 = smul.addr %s244, 8
      %s246 = smul.addr %s245, 4
      %s247 = scalar_lea.vmem %s0, %s246
      %p248 = pneg %p39
      %p249 = pneg %p36
      %p250 = pneg %p60
      %p251 = pneg %p57
      %p252 = pneg %p81
      %p253 = pneg %p78
      %p254 = pneg %p102
      %p255 = pneg %p99
      %p256 = pneg %p123
      %p257 = pneg %p120
      %p258 = pneg %p144
      %p259 = pneg %p141
      %p260 = pneg %p165
      %p261 = pneg %p162
      %p262 = pneg %p191
      %p263 = pneg %p188
      %p264 = scmp.lt.s32.totalorder %s18, 1
      %s265 = scalar_select %p264, %s18, 1
      %s266 = smul.addr %s265, 8
      %s267 = smul.addr %s266, 4
      %s268 = scalar_lea.vmem %s7, %s267
      %p269 = scmp.lt.s32.totalorder %s18, 1
      %s270 = scalar_select %p269, %s18, 1
      %s271 = smul.addr %s270, 8
      %s272 = smul.addr %s271, 4
      %s273 = scalar_lea.vmem %s0, %s272
      %p274 = scmp.lt.s32.totalorder %s18, 1
      %s275 = scalar_select %p274, %s18, 1
      %s276 = smul.addr %s275, 8
      %s277 = smul.addr %s276, 4
      %s278 = scalar_lea.vmem %s7, %s277
      %v280 = vld [vmem:[%s273] sm:$0xff]
      %v281 = vld [vmem:[%s273 + $0x8] sm:$0xff]
      %v282 = vld [vmem:[%s273 + $0x10] sm:$0xff]
      %v283 = vld [vmem:[%s273 + $0x18] sm:$0xff]
      %v284 = vld [vmem:[%s1] sm:$0xf]
      %v285 = vld [vmem:[%s1 + $0x4] sm:$0xf]
      %v286 = vld [vmem:[%s1 + $0x8] sm:$0xf]
      %v287 = vld [vmem:[%s1 + $0xc] sm:$0xf]
      %v288 = vld [vmem:[%s1 + $0x10] sm:$0xf]
      %v289 = vld [vmem:[%s1 + $0x14] sm:$0xf]
      %v290 = vld [vmem:[%s1 + $0x18] sm:$0xf]
      %v291 = vld [vmem:[%s1 + $0x1c] sm:$0xf]
      %v292 = vld [vmem:[%s1 + $0x20] sm:$0xf]
      %v293 = vld [vmem:[%s1 + $0x24] sm:$0xf]
      %v294 = vld [vmem:[%s1 + $0x28] sm:$0xf]
      %v295 = vld [vmem:[%s1 + $0x2c] sm:$0xf]
      %v296 = vld [vmem:[%s1 + $0x30] sm:$0xf]
      %v297 = vld [vmem:[%s1 + $0x34] sm:$0xf]
      %v298 = vld [vmem:[%s1 + $0x38] sm:$0xf]
      %v299 = vld [vmem:[%s1 + $0x3c] sm:$0xf]
      %v300 = vld [vmem:[%s1 + $0x40] sm:$0xf]
      %v301 = vld [vmem:[%s1 + $0x44] sm:$0xf]
      %v302 = vld [vmem:[%s1 + $0x48] sm:$0xf]
      %v303 = vld [vmem:[%s1 + $0x4c] sm:$0xf]
      %v304 = vld [vmem:[%s1 + $0x50] sm:$0xf]
      %v305 = vld [vmem:[%s1 + $0x54] sm:$0xf]
      %v306 = vld [vmem:[%s1 + $0x58] sm:$0xf]
      %v307 = vld [vmem:[%s1 + $0x5c] sm:$0xf]
      %v308 = vld [vmem:[%s1 + $0x60] sm:$0xf]
      %v309 = vld [vmem:[%s1 + $0x64] sm:$0xf]
      %v310 = vld [vmem:[%s1 + $0x68] sm:$0xf]
      %v311 = vld [vmem:[%s1 + $0x6c] sm:$0xf]
      %v312 = vld [vmem:[%s1 + $0x70] sm:$0xf]
      %v313 = vld [vmem:[%s1 + $0x74] sm:$0xf]
      %v314 = vld [vmem:[%s1 + $0x78] sm:$0xf]
      %v315 = vld [vmem:[%s1 + $0x7c] sm:$0xf]
      %v316 = vld [vmem:[%s1 + $0x80] sm:$0xf]
      %v317 = vld [vmem:[%s1 + $0x84] sm:$0xf]
      %v318 = vld [vmem:[%s1 + $0x88] sm:$0xf]
      %v319 = vld [vmem:[%s1 + $0x8c] sm:$0xf]
      %v320 = vld [vmem:[%s1 + $0x90] sm:$0xf]
      %v321 = vld [vmem:[%s1 + $0x94] sm:$0xf]
      %v322 = vld [vmem:[%s1 + $0x98] sm:$0xf]
      %v323 = vld [vmem:[%s1 + $0x9c] sm:$0xf]
      %v324 = vld [vmem:[%s1 + $0xa0] sm:$0xf]
      %v325 = vld [vmem:[%s1 + $0xa4] sm:$0xf]
      %v326 = vld [vmem:[%s1 + $0xa8] sm:$0xf]
      %v327 = vld [vmem:[%s1 + $0xac] sm:$0xf]
      %v328 = vld [vmem:[%s1 + $0xb0] sm:$0xf]
      %v329 = vld [vmem:[%s1 + $0xb4] sm:$0xf]
      %v330 = vld [vmem:[%s1 + $0xb8] sm:$0xf]
      %v331 = vld [vmem:[%s1 + $0xbc] sm:$0xf]
      %v332 = vld [vmem:[%s1 + $0xc0] sm:$0xf]
      %v333 = vld [vmem:[%s1 + $0xc4] sm:$0xf]
      %v334 = vld [vmem:[%s1 + $0xc8] sm:$0xf]
      %v335 = vld [vmem:[%s1 + $0xcc] sm:$0xf]
      %v336 = vld [vmem:[%s1 + $0xd0] sm:$0xf]
      %v337 = vld [vmem:[%s1 + $0xd4] sm:$0xf]
      %v338 = vld [vmem:[%s1 + $0xd8] sm:$0xf]
      %v339 = vld [vmem:[%s1 + $0xdc] sm:$0xf]
      %v340 = vld [vmem:[%s1 + $0xe0] sm:$0xf]
      %v341 = vld [vmem:[%s1 + $0xe4] sm:$0xf]
      %v342 = vld [vmem:[%s1 + $0xe8] sm:$0xf]
      %v343 = vld [vmem:[%s1 + $0xec] sm:$0xf]
      %v344 = vld [vmem:[%s1 + $0xf0] sm:$0xf]
      %v345 = vld [vmem:[%s1 + $0xf4] sm:$0xf]
      %v346 = vld [vmem:[%s1 + $0xf8] sm:$0xf]
      %v347 = vld [vmem:[%s1 + $0xfc] sm:$0xf]
      %v348 = vld [vmem:[%s2] sm:$0x1]
      %v350 = vlaneseq
      %v351 = vshrl.u32 %v350, 7
      %v352 = vsub.s32 0, %v351
      %v353 = vrot.slane %v348, %v352
      %v359 = vunpack.c.l.b16 %v280
      %v360 = vunpack.c.h.b16 %v280
      %v361 = vunpack.c.l.b16 %v281
      %v362 = vunpack.c.h.b16 %v281
      %v363 = vunpack.c.l.b16 %v282
      %v364 = vunpack.c.h.b16 %v282
      %v365 = vunpack.c.l.b16 %v283
      %v366 = vunpack.c.h.b16 %v283
      %v367 = vpack.c.b16 %v363, %v359
      %v368 = vpack.c.b16 %v364, %v360
      %v369 = vpack.c.b16 %v365, %v361
      %v370 = vpack.c.b16 %v366, %v362
      %v439 = vunpack.c.l.b16 %v284
      %v440 = vunpack.c.l.b16 %v285
      %v441 = vunpack.c.l.b16 %v286
      %v442 = vunpack.c.l.b16 %v287
      %v443 = vunpack.c.l.b16 %v288
      %v444 = vunpack.c.l.b16 %v289
      %v445 = vunpack.c.l.b16 %v290
      %v446 = vunpack.c.l.b16 %v291
      %v447 = vunpack.c.l.b16 %v292
      %v448 = vunpack.c.l.b16 %v293
      %v449 = vunpack.c.l.b16 %v294
      %v450 = vunpack.c.l.b16 %v295
      %v451 = vunpack.c.l.b16 %v296
      %v452 = vunpack.c.l.b16 %v297
      %v453 = vunpack.c.l.b16 %v298
      %v454 = vunpack.c.l.b16 %v299
      %v455 = vunpack.c.l.b16 %v300
      %v456 = vunpack.c.l.b16 %v301
      %v457 = vunpack.c.l.b16 %v302
      %v458 = vunpack.c.l.b16 %v303
      %v459 = vunpack.c.l.b16 %v304
      %v460 = vunpack.c.l.b16 %v305
      %v461 = vunpack.c.l.b16 %v306
      %v462 = vunpack.c.l.b16 %v307
      %v463 = vunpack.c.l.b16 %v308
      %v464 = vunpack.c.l.b16 %v309
      %v465 = vunpack.c.l.b16 %v310
      %v466 = vunpack.c.l.b16 %v311
      %v467 = vunpack.c.l.b16 %v312
      %v468 = vunpack.c.l.b16 %v313
      %v469 = vunpack.c.l.b16 %v314
      %v470 = vunpack.c.l.b16 %v315
      %v471 = vunpack.c.l.b16 %v316
      %v472 = vunpack.c.l.b16 %v317
      %v473 = vunpack.c.l.b16 %v318
      %v474 = vunpack.c.l.b16 %v319
      %v475 = vunpack.c.l.b16 %v320
      %v476 = vunpack.c.l.b16 %v321
      %v477 = vunpack.c.l.b16 %v322
      %v478 = vunpack.c.l.b16 %v323
      %v479 = vunpack.c.l.b16 %v324
      %v480 = vunpack.c.l.b16 %v325
      %v481 = vunpack.c.l.b16 %v326
      %v482 = vunpack.c.l.b16 %v327
      %v483 = vunpack.c.l.b16 %v328
      %v484 = vunpack.c.l.b16 %v329
      %v485 = vunpack.c.l.b16 %v330
      %v486 = vunpack.c.l.b16 %v331
      %v487 = vunpack.c.l.b16 %v332
      %v488 = vunpack.c.l.b16 %v333
      %v489 = vunpack.c.l.b16 %v334
      %v490 = vunpack.c.l.b16 %v335
      %v491 = vunpack.c.l.b16 %v336
      %v492 = vunpack.c.l.b16 %v337
      %v493 = vunpack.c.l.b16 %v338
      %v494 = vunpack.c.l.b16 %v339
      %v495 = vunpack.c.l.b16 %v340
      %v496 = vunpack.c.l.b16 %v341
      %v497 = vunpack.c.l.b16 %v342
      %v498 = vunpack.c.l.b16 %v343
      %v499 = vunpack.c.l.b16 %v344
      %v500 = vunpack.c.l.b16 %v345
      %v501 = vunpack.c.l.b16 %v346
      %v502 = vunpack.c.l.b16 %v347
      %v503 = vpack.c.b16 %v440, %v439
      %v504 = vpack.c.b16 %v442, %v441
      %v505 = vpack.c.b16 %v444, %v443
      %v506 = vpack.c.b16 %v446, %v445
      %v507 = vpack.c.b16 %v448, %v447
      %v508 = vpack.c.b16 %v450, %v449
      %v509 = vpack.c.b16 %v452, %v451
      %v510 = vpack.c.b16 %v454, %v453
      %v511 = vpack.c.b16 %v456, %v455
      %v512 = vpack.c.b16 %v458, %v457
      %v513 = vpack.c.b16 %v460, %v459
      %v514 = vpack.c.b16 %v462, %v461
      %v515 = vpack.c.b16 %v464, %v463
      %v516 = vpack.c.b16 %v466, %v465
      %v517 = vpack.c.b16 %v468, %v467
      %v518 = vpack.c.b16 %v470, %v469
      %v519 = vpack.c.b16 %v472, %v471
      %v520 = vpack.c.b16 %v474, %v473
      %v521 = vpack.c.b16 %v476, %v475
      %v522 = vpack.c.b16 %v478, %v477
      %v523 = vpack.c.b16 %v480, %v479
      %v524 = vpack.c.b16 %v482, %v481
      %v525 = vpack.c.b16 %v484, %v483
      %v526 = vpack.c.b16 %v486, %v485
      %v527 = vpack.c.b16 %v488, %v487
      %v528 = vpack.c.b16 %v490, %v489
      %v529 = vpack.c.b16 %v492, %v491
      %v530 = vpack.c.b16 %v494, %v493
      %v531 = vpack.c.b16 %v496, %v495
      %v532 = vpack.c.b16 %v498, %v497
      %v533 = vpack.c.b16 %v500, %v499
      %v534 = vpack.c.b16 %v502, %v501
      %567 = vmatprep.subr.bf16.mxu0 0
      %568 = vmatpush1.bf16.msra.mxu0 %v503
      %569 = vmatprep.subr.bf16.mxu0 0
      %570 = vmatpush1.bf16.msra.mxu0 %v504
      %571 = vmatprep.subr.bf16.mxu0 0
      %572 = vmatpush1.bf16.msra.mxu0 %v505
      %573 = vmatprep.subr.bf16.mxu0 0
      %574 = vmatpush1.bf16.msra.mxu0 %v506
      %575 = vmatprep.subr.bf16.mxu0 0
      %576 = vmatpush1.bf16.msra.mxu0 %v507
      %577 = vmatprep.subr.bf16.mxu0 0
      %578 = vmatpush1.bf16.msra.mxu0 %v508
      %579 = vmatprep.subr.bf16.mxu0 0
      %580 = vmatpush1.bf16.msra.mxu0 %v509
      %581 = vmatprep.subr.bf16.mxu0 0
      %582 = vmatpush1.bf16.msra.mxu0 %v510
      %583 = vmatprep.subr.bf16.mxu0 0
      %584 = vmatpush1.bf16.msra.mxu0 %v511
      %585 = vmatprep.subr.bf16.mxu0 0
      %586 = vmatpush1.bf16.msra.mxu0 %v512
      %587 = vmatprep.subr.bf16.mxu0 0
      %588 = vmatpush1.bf16.msra.mxu0 %v513
      %589 = vmatprep.subr.bf16.mxu0 0
      %590 = vmatpush1.bf16.msra.mxu0 %v514
      %591 = vmatprep.subr.bf16.mxu0 0
      %592 = vmatpush1.bf16.msra.mxu0 %v515
      %593 = vmatprep.subr.bf16.mxu0 0
      %594 = vmatpush1.bf16.msra.mxu0 %v516
      %595 = vmatprep.subr.bf16.mxu0 0
      %596 = vmatpush1.bf16.msra.mxu0 %v517
      %597 = vmatprep.subr.bf16.mxu0 0
      %598 = vmatpush1.bf16.msra.mxu0 %v518
      %599 = vmatprep.mubr.bf16.mxu0 %v368
      %600 = vmatmul.mubr.bf16.gmra.mrb[0].mxu0 %v367
      %v601 = vpop.f32.mrb[0].mxu0
      %v602 = vadd.f32 %v353, %v601
      %v603 = vpop.f32.mrb[0].mxu0
      %v604 = vpop.f32.mrb[0].mxu0
      %v605 = vadd.f32 %v353, %v604
      %v606 = vpop.f32.mrb[0].mxu0
      %607 = vdwg.mxu0
      %608 = vmatprep.subr.bf16.mxu0 0
      %609 = vmatpush1.bf16.msra.mxu0 %v519
      %610 = vmatprep.subr.bf16.mxu0 0
      %611 = vmatpush1.bf16.msra.mxu0 %v520
      %612 = vmatprep.subr.bf16.mxu0 0
      %613 = vmatpush1.bf16.msra.mxu0 %v521
      %614 = vmatprep.subr.bf16.mxu0 0
      %615 = vmatpush1.bf16.msra.mxu0 %v522
      %616 = vmatprep.subr.bf16.mxu0 0
      %617 = vmatpush1.bf16.msra.mxu0 %v523
      %618 = vmatprep.subr.bf16.mxu0 0
      %619 = vmatpush1.bf16.msra.mxu0 %v524
      %620 = vmatprep.subr.bf16.mxu0 0
      %621 = vmatpush1.bf16.msra.mxu0 %v525
      %622 = vmatprep.subr.bf16.mxu0 0
      %623 = vmatpush1.bf16.msra.mxu0 %v526
      %624 = vmatprep.subr.bf16.mxu0 0
      %625 = vmatpush1.bf16.msra.mxu0 %v527
      %626 = vmatprep.subr.bf16.mxu0 0
      %627 = vmatpush1.bf16.msra.mxu0 %v528
      %628 = vmatprep.subr.bf16.mxu0 0
      %629 = vmatpush1.bf16.msra.mxu0 %v529
      %630 = vmatprep.subr.bf16.mxu0 0
      %631 = vmatpush1.bf16.msra.mxu0 %v530
      %632 = vmatprep.subr.bf16.mxu0 0
      %633 = vmatpush1.bf16.msra.mxu0 %v531
      %634 = vmatprep.subr.bf16.mxu0 0
      %635 = vmatpush1.bf16.msra.mxu0 %v532
      %636 = vmatprep.subr.bf16.mxu0 0
      %637 = vmatpush1.bf16.msra.mxu0 %v533
      %638 = vmatprep.subr.bf16.mxu0 0
      %639 = vmatpush1.bf16.msra.mxu0 %v534
      %640 = vmatprep.mubr.bf16.mxu0 %v370
      %641 = vmatmul.mubr.bf16.gmra.mrb[0].mxu0 %v369
      %v642 = vpop.f32.mrb[0].mxu0
      %v643 = vadd.f32 %v602, %v642
      %v644 = vpop.f32.mrb[0].mxu0
      %v645 = vpop.f32.mrb[0].mxu0
      %v646 = vadd.f32 %v605, %v645
      %v647 = vpop.f32.mrb[0].mxu0
      %648 = vdwg.mxu0
      %v649 = vmax.f32 %v643, 0.0
      %v650 = vmax.f32 %v646, 0.0
      %v651 = vpack.c.bf16 %v650, %v649
      %652 = vst [vmem:[#allocation2] sm:$0xff] %v651
      %653 = vst [vmem:[#allocation3] sm:$0x7] 0
      %654 = vst [vmem:[#allocation3 + $0x4] sm:$0x7] 0
      %655 = vst [vmem:[#allocation3 + $0x8] sm:$0x7] 0
      %656 = vst [vmem:[#allocation3 + $0xc] sm:$0x7] 0
      %657 = vst [vmem:[#allocation3 + $0x10] sm:$0x7] 0
      %658 = vst [vmem:[#allocation3 + $0x14] sm:$0x7] 0
      %v659 = vld [vmem:[#allocation2] sm:$0x3]
      %v661 = vunpack.c.l.b16 %v659
      %v662 = vpack.c.b16 %v661, %v661
      %v664 = vshrl.u32 %v662, 16
      %v666 = vrot.slane %v664, 7
      %v667 = vshll.u32 %v662, 16
      %v669 = vor.u32 %v666, %v667
      %s671 = scalar_lea.vmem [#allocation3], 4
      %vm672 = vcmask 1042432
      %vm673 = vsmask.f32 2306
      %vm674 = vmand %vm672, %vm673
      %v675 = vld [vmem:[%s671] sm:$0x7]
      %v676 = vsel %vm674, %v669, %v675
      %677 = vst [vmem:[%s671] sm:$0x7] %v676
      %v678 = vld [vmem:[#allocation2] sm:$0xc]
      %v680 = vunpack.c.l.b16 %v678
      %v681 = vpack.c.b16 %v680, %v680
      %v683 = vshrl.u32 %v681, 16
      %v685 = vrot.slane %v683, 5
      %v686 = vshll.u32 %v681, 16
      %v688 = vrot.slane %v686, 6
      %v689 = vor.u32 %v685, %v688
      %v690 = vrot.slane %v689, 4
      %s692 = scalar_lea.vmem [#allocation3], 8
      %v693 = vld [vmem:[%s692] sm:$0x7]
      %v694 = vsel %vm674, %v690, %v693
      %695 = vst [vmem:[%s692] sm:$0x7] %v694
      %v696 = vld [vmem:[#allocation2] sm:$0x30]
      %v698 = vunpack.c.h.b16 %v696
      %v699 = vpack.c.b16 %v698, %v698
      %v701 = vshrl.u32 %v699, 16
      %v703 = vrot.slane %v701, 7
      %v704 = vshll.u32 %v699, 16
      %v706 = vor.u32 %v703, %v704
      %s708 = scalar_lea.vmem [#allocation3], 12
      %v709 = vld [vmem:[%s708] sm:$0x7]
      %v710 = vsel %vm674, %v706, %v709
      %711 = vst [vmem:[%s708] sm:$0x7] %v710
      %v712 = vld [vmem:[#allocation2] sm:$0xc0]
      %v714 = vunpack.c.h.b16 %v712
      %v715 = vpack.c.b16 %v714, %v714
      %v717 = vshrl.u32 %v715, 16
      %v719 = vrot.slane %v717, 5
      %v720 = vshll.u32 %v715, 16
      %v722 = vrot.slane %v720, 6
      %v723 = vor.u32 %v719, %v722
      %v724 = vrot.slane %v723, 4
      %s726 = scalar_lea.vmem [#allocation3], 16
      %v727 = vld [vmem:[%s726] sm:$0x7]
      %v728 = vsel %vm674, %v724, %v727
      %729 = vst [vmem:[%s726] sm:$0x7] %v728
      %v730 = vld [vmem:[#allocation3] sm:$0x3]
      %v731 = vld [vmem:[#allocation3] sm:$0x7]
      %v732 = vld [vmem:[#allocation3] sm:$0x6]
      %v733 = vld [vmem:[%s671] sm:$0x3]
      %v734 = vld [vmem:[%s671] sm:$0x7]
      %v735 = vld [vmem:[%s671] sm:$0x6]
      %v736 = vld [vmem:[%s692] sm:$0x3]
      %v737 = vld [vmem:[%s692] sm:$0x7]
      %v738 = vld [vmem:[%s692] sm:$0x6]
      %v740 = vunpack.c.l.b16 %v731
      %v741 = vpack.c.b16 %v740, %v740
      %v743 = vshrl.u32 %v741, 16
      %v745 = vshll.u32 %v741, 16
      %v747 = vrot.slane %v745, 1
      %v748 = vor.u32 %v743, %v747
      %v751 = vunpack.c.l.b16 %v732
      %v752 = vpack.c.b16 %v751, %v751
      %v753 = vrot.slane %v752, 1
      %v756 = vunpack.c.l.b16 %v734
      %v757 = vpack.c.b16 %v756, %v756
      %v759 = vshrl.u32 %v757, 16
      %v761 = vshll.u32 %v757, 16
      %v763 = vrot.slane %v761, 1
      %v764 = vor.u32 %v759, %v763
      %v767 = vunpack.c.l.b16 %v735
      %v768 = vpack.c.b16 %v767, %v767
      %v769 = vrot.slane %v768, 1
      %v772 = vunpack.c.l.b16 %v737
      %v773 = vpack.c.b16 %v772, %v772
      %v775 = vshrl.u32 %v773, 16
      %v777 = vshll.u32 %v773, 16
      %v779 = vrot.slane %v777, 1
      %v780 = vor.u32 %v775, %v779
      %v783 = vunpack.c.l.b16 %v738
      %v784 = vpack.c.b16 %v783, %v783
      %v785 = vrot.slane %v784, 1
      %v787 = vld [vmem:[%s3] sm:$0xf]
      %v788 = vld [vmem:[%s3 + $0x4] sm:$0xf]
      %v789 = vld [vmem:[%s3 + $0x8] sm:$0xf]
      %v790 = vld [vmem:[%s3 + $0xc] sm:$0xf]
      %v791 = vld [vmem:[%s3 + $0x10] sm:$0xf]
      %v792 = vld [vmem:[%s3 + $0x14] sm:$0xf]
      %v793 = vld [vmem:[%s3 + $0x18] sm:$0xf]
      %v794 = vld [vmem:[%s3 + $0x1c] sm:$0xf]
      %v795 = vld [vmem:[%s3 + $0x20] sm:$0xf]
      %v796 = vld [vmem:[%s3 + $0x24] sm:$0xf]
      %v797 = vld [vmem:[%s3 + $0x28] sm:$0xf]
      %v798 = vld [vmem:[%s3 + $0x2c] sm:$0xf]
      %v799 = vld [vmem:[%s3 + $0x30] sm:$0xf]
      %v800 = vld [vmem:[%s3 + $0x34] sm:$0xf]
      %v801 = vld [vmem:[%s3 + $0x38] sm:$0xf]
      %v802 = vld [vmem:[%s3 + $0x3c] sm:$0xf]
      %v803 = vld [vmem:[%s3 + $0x40] sm:$0xf]
      %v804 = vld [vmem:[%s3 + $0x44] sm:$0xf]
      %v805 = vld [vmem:[%s3 + $0x48] sm:$0xf]
      %v806 = vld [vmem:[%s3 + $0x4c] sm:$0xf]
      %v807 = vld [vmem:[%s3 + $0x50] sm:$0xf]
      %v808 = vld [vmem:[%s3 + $0x54] sm:$0xf]
      %v809 = vld [vmem:[%s3 + $0x58] sm:$0xf]
      %v810 = vld [vmem:[%s3 + $0x5c] sm:$0xf]
      %v811 = vld [vmem:[%s3 + $0x60] sm:$0xf]
      %v812 = vld [vmem:[%s3 + $0x64] sm:$0xf]
      %v813 = vld [vmem:[%s3 + $0x68] sm:$0xf]
      %v814 = vld [vmem:[%s3 + $0x6c] sm:$0xf]
      %v815 = vld [vmem:[%s3 + $0x70] sm:$0xf]
      %v816 = vld [vmem:[%s3 + $0x74] sm:$0xf]
      %v817 = vld [vmem:[%s3 + $0x78] sm:$0xf]
      %v818 = vld [vmem:[%s3 + $0x7c] sm:$0xf]
      %v819 = vld [vmem:[%s3 + $0x80] sm:$0xf]
      %v820 = vld [vmem:[%s3 + $0x84] sm:$0xf]
      %v821 = vld [vmem:[%s3 + $0x88] sm:$0xf]
      %v822 = vld [vmem:[%s3 + $0x8c] sm:$0xf]
      %v823 = vld [vmem:[%s3 + $0x90] sm:$0xf]
      %v824 = vld [vmem:[%s3 + $0x94] sm:$0xf]
      %v825 = vld [vmem:[%s3 + $0x98] sm:$0xf]
      %v826 = vld [vmem:[%s3 + $0x9c] sm:$0xf]
      %v827 = vld [vmem:[%s3 + $0xa0] sm:$0xf]
      %v828 = vld [vmem:[%s3 + $0xa4] sm:$0xf]
      %v829 = vld [vmem:[%s3 + $0xa8] sm:$0xf]
      %v830 = vld [vmem:[%s3 + $0xac] sm:$0xf]
      %v831 = vld [vmem:[%s3 + $0xb0] sm:$0xf]
      %v832 = vld [vmem:[%s3 + $0xb4] sm:$0xf]
      %v833 = vld [vmem:[%s3 + $0xb8] sm:$0xf]
      %v834 = vld [vmem:[%s3 + $0xbc] sm:$0xf]
      %v835 = vld [vmem:[%s3 + $0xc0] sm:$0xf]
      %v836 = vld [vmem:[%s3 + $0xc4] sm:$0xf]
      %v837 = vld [vmem:[%s3 + $0xc8] sm:$0xf]
      %v838 = vld [vmem:[%s3 + $0xcc] sm:$0xf]
      %v839 = vld [vmem:[%s3 + $0xd0] sm:$0xf]
      %v840 = vld [vmem:[%s3 + $0xd4] sm:$0xf]
      %v841 = vld [vmem:[%s3 + $0xd8] sm:$0xf]
      %v842 = vld [vmem:[%s3 + $0xdc] sm:$0xf]
      %v843 = vld [vmem:[%s3 + $0xe0] sm:$0xf]
      %v844 = vld [vmem:[%s3 + $0xe4] sm:$0xf]
      %v845 = vld [vmem:[%s3 + $0xe8] sm:$0xf]
      %v846 = vld [vmem:[%s3 + $0xec] sm:$0xf]
      %v847 = vld [vmem:[%s3 + $0xf0] sm:$0xf]
      %v848 = vld [vmem:[%s3 + $0xf4] sm:$0xf]
      %v849 = vld [vmem:[%s3 + $0xf8] sm:$0xf]
      %v850 = vld [vmem:[%s3 + $0xfc] sm:$0xf]
      %v851 = vld [vmem:[%s3 + $0x100] sm:$0xf]
      %v852 = vld [vmem:[%s3 + $0x104] sm:$0xf]
      %v853 = vld [vmem:[%s3 + $0x108] sm:$0xf]
      %v854 = vld [vmem:[%s3 + $0x10c] sm:$0xf]
      %v855 = vld [vmem:[%s3 + $0x110] sm:$0xf]
      %v856 = vld [vmem:[%s3 + $0x114] sm:$0xf]
      %v857 = vld [vmem:[%s3 + $0x118] sm:$0xf]
      %v858 = vld [vmem:[%s3 + $0x11c] sm:$0xf]
      %v859 = vld [vmem:[%s3 + $0x120] sm:$0xf]
      %v860 = vld [vmem:[%s3 + $0x124] sm:$0xf]
      %v861 = vld [vmem:[%s3 + $0x128] sm:$0xf]
      %v862 = vld [vmem:[%s3 + $0x12c] sm:$0xf]
      %v863 = vld [vmem:[%s3 + $0x130] sm:$0xf]
      %v864 = vld [vmem:[%s3 + $0x134] sm:$0xf]
      %v865 = vld [vmem:[%s3 + $0x138] sm:$0xf]
      %v866 = vld [vmem:[%s3 + $0x13c] sm:$0xf]
      %v867 = vld [vmem:[%s3 + $0x140] sm:$0xf]
      %v868 = vld [vmem:[%s3 + $0x144] sm:$0xf]
      %v869 = vld [vmem:[%s3 + $0x148] sm:$0xf]
      %v870 = vld [vmem:[%s3 + $0x14c] sm:$0xf]
      %v871 = vld [vmem:[%s3 + $0x150] sm:$0xf]
      %v872 = vld [vmem:[%s3 + $0x154] sm:$0xf]
      %v873 = vld [vmem:[%s3 + $0x158] sm:$0xf]
      %v874 = vld [vmem:[%s3 + $0x15c] sm:$0xf]
      %v875 = vld [vmem:[%s3 + $0x160] sm:$0xf]
      %v876 = vld [vmem:[%s3 + $0x164] sm:$0xf]
      %v877 = vld [vmem:[%s3 + $0x168] sm:$0xf]
      %v878 = vld [vmem:[%s3 + $0x16c] sm:$0xf]
      %v879 = vld [vmem:[%s3 + $0x170] sm:$0xf]
      %v880 = vld [vmem:[%s3 + $0x174] sm:$0xf]
      %v881 = vld [vmem:[%s3 + $0x178] sm:$0xf]
      %v882 = vld [vmem:[%s3 + $0x17c] sm:$0xf]
      %v883 = vld [vmem:[%s3 + $0x180] sm:$0xf]
      %v884 = vld [vmem:[%s3 + $0x184] sm:$0xf]
      %v885 = vld [vmem:[%s3 + $0x188] sm:$0xf]
      %v886 = vld [vmem:[%s3 + $0x18c] sm:$0xf]
      %v887 = vld [vmem:[%s3 + $0x190] sm:$0xf]
      %v888 = vld [vmem:[%s3 + $0x194] sm:$0xf]
      %v889 = vld [vmem:[%s3 + $0x198] sm:$0xf]
      %v890 = vld [vmem:[%s3 + $0x19c] sm:$0xf]
      %v891 = vld [vmem:[%s3 + $0x1a0] sm:$0xf]
      %v892 = vld [vmem:[%s3 + $0x1a4] sm:$0xf]
      %v893 = vld [vmem:[%s3 + $0x1a8] sm:$0xf]
      %v894 = vld [vmem:[%s3 + $0x1ac] sm:$0xf]
      %v895 = vld [vmem:[%s3 + $0x1b0] sm:$0xf]
      %v896 = vld [vmem:[%s3 + $0x1b4] sm:$0xf]
      %v897 = vld [vmem:[%s3 + $0x1b8] sm:$0xf]
      %v898 = vld [vmem:[%s3 + $0x1bc] sm:$0xf]
      %v899 = vld [vmem:[%s3 + $0x1c0] sm:$0xf]
      %v900 = vld [vmem:[%s3 + $0x1c4] sm:$0xf]
      %v901 = vld [vmem:[%s3 + $0x1c8] sm:$0xf]
      %v902 = vld [vmem:[%s3 + $0x1cc] sm:$0xf]
      %v903 = vld [vmem:[%s3 + $0x1d0] sm:$0xf]
      %v904 = vld [vmem:[%s3 + $0x1d4] sm:$0xf]
      %v905 = vld [vmem:[%s3 + $0x1d8] sm:$0xf]
      %v906 = vld [vmem:[%s3 + $0x1dc] sm:$0xf]
      %v907 = vld [vmem:[%s3 + $0x1e0] sm:$0xf]
      %v908 = vld [vmem:[%s3 + $0x1e4] sm:$0xf]
      %v909 = vld [vmem:[%s3 + $0x1e8] sm:$0xf]
      %v910 = vld [vmem:[%s3 + $0x1ec] sm:$0xf]
      %v911 = vld [vmem:[%s3 + $0x1f0] sm:$0xf]
      %v912 = vld [vmem:[%s3 + $0x1f4] sm:$0xf]
      %v913 = vld [vmem:[%s3 + $0x1f8] sm:$0xf]
      %v914 = vld [vmem:[%s3 + $0x1fc] sm:$0xf]
      %v915 = vld [vmem:[%s3 + $0x200] sm:$0xf]
      %v916 = vld [vmem:[%s3 + $0x204] sm:$0xf]
      %v917 = vld [vmem:[%s3 + $0x208] sm:$0xf]
      %v918 = vld [vmem:[%s3 + $0x20c] sm:$0xf]
      %v919 = vld [vmem:[%s3 + $0x210] sm:$0xf]
      %v920 = vld [vmem:[%s3 + $0x214] sm:$0xf]
      %v921 = vld [vmem:[%s3 + $0x218] sm:$0xf]
      %v922 = vld [vmem:[%s3 + $0x21c] sm:$0xf]
      %v923 = vld [vmem:[%s3 + $0x220] sm:$0xf]
      %v924 = vld [vmem:[%s3 + $0x224] sm:$0xf]
      %v925 = vld [vmem:[%s3 + $0x228] sm:$0xf]
      %v926 = vld [vmem:[%s3 + $0x22c] sm:$0xf]
      %v927 = vld [vmem:[%s3 + $0x230] sm:$0xf]
      %v928 = vld [vmem:[%s3 + $0x234] sm:$0xf]
      %v929 = vld [vmem:[%s3 + $0x238] sm:$0xf]
      %v930 = vld [vmem:[%s3 + $0x23c] sm:$0xf]
      %v931 = vld [vmem:[%s4] sm:$0x1]
      %v933 = vlaneseq
      %v934 = vshrl.u32 %v933, 7
      %v935 = vsub.s32 0, %v934
      %v936 = vrot.slane %v931, %v935
      %v1082 = vunpack.c.l.b16 %v787
      %v1083 = vunpack.c.l.b16 %v788
      %v1084 = vunpack.c.l.b16 %v789
      %v1085 = vunpack.c.l.b16 %v790
      %v1086 = vunpack.c.l.b16 %v791
      %v1087 = vunpack.c.l.b16 %v792
      %v1088 = vunpack.c.l.b16 %v793
      %v1089 = vunpack.c.l.b16 %v794
      %v1090 = vunpack.c.l.b16 %v795
      %v1091 = vunpack.c.l.b16 %v796
      %v1092 = vunpack.c.l.b16 %v797
      %v1093 = vunpack.c.l.b16 %v798
      %v1094 = vunpack.c.l.b16 %v799
      %v1095 = vunpack.c.l.b16 %v800
      %v1096 = vunpack.c.l.b16 %v801
      %v1097 = vunpack.c.l.b16 %v802
      %v1098 = vunpack.c.l.b16 %v803
      %v1099 = vunpack.c.l.b16 %v804
      %v1100 = vunpack.c.l.b16 %v805
      %v1101 = vunpack.c.l.b16 %v806
      %v1102 = vunpack.c.l.b16 %v807
      %v1103 = vunpack.c.l.b16 %v808
      %v1104 = vunpack.c.l.b16 %v809
      %v1105 = vunpack.c.l.b16 %v810
      %v1106 = vunpack.c.l.b16 %v811
      %v1107 = vunpack.c.l.b16 %v812
      %v1108 = vunpack.c.l.b16 %v813
      %v1109 = vunpack.c.l.b16 %v814
      %v1110 = vunpack.c.l.b16 %v815
      %v1111 = vunpack.c.l.b16 %v816
      %v1112 = vunpack.c.l.b16 %v817
      %v1113 = vunpack.c.l.b16 %v818
      %v1114 = vunpack.c.l.b16 %v819
      %v1115 = vunpack.c.l.b16 %v820
      %v1116 = vunpack.c.l.b16 %v821
      %v1117 = vunpack.c.l.b16 %v822
      %v1118 = vunpack.c.l.b16 %v823
      %v1119 = vunpack.c.l.b16 %v824
      %v1120 = vunpack.c.l.b16 %v825
      %v1121 = vunpack.c.l.b16 %v826
      %v1122 = vunpack.c.l.b16 %v827
      %v1123 = vunpack.c.l.b16 %v828
      %v1124 = vunpack.c.l.b16 %v829
      %v1125 = vunpack.c.l.b16 %v830
      %v1126 = vunpack.c.l.b16 %v831
      %v1127 = vunpack.c.l.b16 %v832
      %v1128 = vunpack.c.l.b16 %v833
      %v1129 = vunpack.c.l.b16 %v834
      %v1130 = vunpack.c.l.b16 %v835
      %v1131 = vunpack.c.l.b16 %v836
      %v1132 = vunpack.c.l.b16 %v837
      %v1133 = vunpack.c.l.b16 %v838
      %v1134 = vunpack.c.l.b16 %v839
      %v1135 = vunpack.c.l.b16 %v840
      %v1136 = vunpack.c.l.b16 %v841
      %v1137 = vunpack.c.l.b16 %v842
      %v1138 = vunpack.c.l.b16 %v843
      %v1139 = vunpack.c.l.b16 %v844
      %v1140 = vunpack.c.l.b16 %v845
      %v1141 = vunpack.c.l.b16 %v846
      %v1142 = vunpack.c.l.b16 %v847
      %v1143 = vunpack.c.l.b16 %v848
      %v1144 = vunpack.c.l.b16 %v849
      %v1145 = vunpack.c.l.b16 %v850
      %v1146 = vunpack.c.l.b16 %v851
      %v1147 = vunpack.c.l.b16 %v852
      %v1148 = vunpack.c.l.b16 %v853
      %v1149 = vunpack.c.l.b16 %v854
      %v1150 = vunpack.c.l.b16 %v855
      %v1151 = vunpack.c.l.b16 %v856
      %v1152 = vunpack.c.l.b16 %v857
      %v1153 = vunpack.c.l.b16 %v858
      %v1154 = vunpack.c.l.b16 %v859
      %v1155 = vunpack.c.l.b16 %v860
      %v1156 = vunpack.c.l.b16 %v861
      %v1157 = vunpack.c.l.b16 %v862
      %v1158 = vunpack.c.l.b16 %v863
      %v1159 = vunpack.c.l.b16 %v864
      %v1160 = vunpack.c.l.b16 %v865
      %v1161 = vunpack.c.l.b16 %v866
      %v1162 = vunpack.c.l.b16 %v867
      %v1163 = vunpack.c.l.b16 %v868
      %v1164 = vunpack.c.l.b16 %v869
      %v1165 = vunpack.c.l.b16 %v870
      %v1166 = vunpack.c.l.b16 %v871
      %v1167 = vunpack.c.l.b16 %v872
      %v1168 = vunpack.c.l.b16 %v873
      %v1169 = vunpack.c.l.b16 %v874
      %v1170 = vunpack.c.l.b16 %v875
      %v1171 = vunpack.c.l.b16 %v876
      %v1172 = vunpack.c.l.b16 %v877
      %v1173 = vunpack.c.l.b16 %v878
      %v1174 = vunpack.c.l.b16 %v879
      %v1175 = vunpack.c.l.b16 %v880
      %v1176 = vunpack.c.l.b16 %v881
      %v1177 = vunpack.c.l.b16 %v882
      %v1178 = vunpack.c.l.b16 %v883
      %v1179 = vunpack.c.l.b16 %v884
      %v1180 = vunpack.c.l.b16 %v885
      %v1181 = vunpack.c.l.b16 %v886
      %v1182 = vunpack.c.l.b16 %v887
      %v1183 = vunpack.c.l.b16 %v888
      %v1184 = vunpack.c.l.b16 %v889
      %v1185 = vunpack.c.l.b16 %v890
      %v1186 = vunpack.c.l.b16 %v891
      %v1187 = vunpack.c.l.b16 %v892
      %v1188 = vunpack.c.l.b16 %v893
      %v1189 = vunpack.c.l.b16 %v894
      %v1190 = vunpack.c.l.b16 %v895
      %v1191 = vunpack.c.l.b16 %v896
      %v1192 = vunpack.c.l.b16 %v897
      %v1193 = vunpack.c.l.b16 %v898
      %v1194 = vunpack.c.l.b16 %v899
      %v1195 = vunpack.c.l.b16 %v900
      %v1196 = vunpack.c.l.b16 %v901
      %v1197 = vunpack.c.l.b16 %v902
      %v1198 = vunpack.c.l.b16 %v903
      %v1199 = vunpack.c.l.b16 %v904
      %v1200 = vunpack.c.l.b16 %v905
      %v1201 = vunpack.c.l.b16 %v906
      %v1202 = vunpack.c.l.b16 %v907
      %v1203 = vunpack.c.l.b16 %v908
      %v1204 = vunpack.c.l.b16 %v909
      %v1205 = vunpack.c.l.b16 %v910
      %v1206 = vunpack.c.l.b16 %v911
      %v1207 = vunpack.c.l.b16 %v912
      %v1208 = vunpack.c.l.b16 %v913
      %v1209 = vunpack.c.l.b16 %v914
      %v1210 = vunpack.c.l.b16 %v915
      %v1211 = vunpack.c.l.b16 %v916
      %v1212 = vunpack.c.l.b16 %v917
      %v1213 = vunpack.c.l.b16 %v918
      %v1214 = vunpack.c.l.b16 %v919
      %v1215 = vunpack.c.l.b16 %v920
      %v1216 = vunpack.c.l.b16 %v921
      %v1217 = vunpack.c.l.b16 %v922
      %v1218 = vunpack.c.l.b16 %v923
      %v1219 = vunpack.c.l.b16 %v924
      %v1220 = vunpack.c.l.b16 %v925
      %v1221 = vunpack.c.l.b16 %v926
      %v1222 = vunpack.c.l.b16 %v927
      %v1223 = vunpack.c.l.b16 %v928
      %v1224 = vunpack.c.l.b16 %v929
      %v1225 = vunpack.c.l.b16 %v930
      %v1226 = vpack.c.b16 %v1083, %v1082
      %v1227 = vpack.c.b16 %v1085, %v1084
      %v1228 = vpack.c.b16 %v1087, %v1086
      %v1229 = vpack.c.b16 %v1089, %v1088
      %v1230 = vpack.c.b16 %v1091, %v1090
      %v1231 = vpack.c.b16 %v1093, %v1092
      %v1232 = vpack.c.b16 %v1095, %v1094
      %v1233 = vpack.c.b16 %v1097, %v1096
      %v1234 = vpack.c.b16 %v1099, %v1098
      %v1235 = vpack.c.b16 %v1101, %v1100
      %v1236 = vpack.c.b16 %v1103, %v1102
      %v1237 = vpack.c.b16 %v1105, %v1104
      %v1238 = vpack.c.b16 %v1107, %v1106
      %v1239 = vpack.c.b16 %v1109, %v1108
      %v1240 = vpack.c.b16 %v1111, %v1110
      %v1241 = vpack.c.b16 %v1113, %v1112
      %v1242 = vpack.c.b16 %v1115, %v1114
      %v1243 = vpack.c.b16 %v1117, %v1116
      %v1244 = vpack.c.b16 %v1119, %v1118
      %v1245 = vpack.c.b16 %v1121, %v1120
      %v1246 = vpack.c.b16 %v1123, %v1122
      %v1247 = vpack.c.b16 %v1125, %v1124
      %v1248 = vpack.c.b16 %v1127, %v1126
      %v1249 = vpack.c.b16 %v1129, %v1128
      %v1250 = vpack.c.b16 %v1131, %v1130
      %v1251 = vpack.c.b16 %v1133, %v1132
      %v1252 = vpack.c.b16 %v1135, %v1134
      %v1253 = vpack.c.b16 %v1137, %v1136
      %v1254 = vpack.c.b16 %v1139, %v1138
      %v1255 = vpack.c.b16 %v1141, %v1140
      %v1256 = vpack.c.b16 %v1143, %v1142
      %v1257 = vpack.c.b16 %v1145, %v1144
      %v1258 = vpack.c.b16 %v1147, %v1146
      %v1259 = vpack.c.b16 %v1149, %v1148
      %v1260 = vpack.c.b16 %v1151, %v1150
      %v1261 = vpack.c.b16 %v1153, %v1152
      %v1262 = vpack.c.b16 %v1155, %v1154
      %v1263 = vpack.c.b16 %v1157, %v1156
      %v1264 = vpack.c.b16 %v1159, %v1158
      %v1265 = vpack.c.b16 %v1161, %v1160
      %v1266 = vpack.c.b16 %v1163, %v1162
      %v1267 = vpack.c.b16 %v1165, %v1164
      %v1268 = vpack.c.b16 %v1167, %v1166
      %v1269 = vpack.c.b16 %v1169, %v1168
      %v1270 = vpack.c.b16 %v1171, %v1170
      %v1271 = vpack.c.b16 %v1173, %v1172
      %v1272 = vpack.c.b16 %v1175, %v1174
      %v1273 = vpack.c.b16 %v1177, %v1176
      %v1274 = vpack.c.b16 %v1179, %v1178
      %v1275 = vpack.c.b16 %v1181, %v1180
      %v1276 = vpack.c.b16 %v1183, %v1182
      %v1277 = vpack.c.b16 %v1185, %v1184
      %v1278 = vpack.c.b16 %v1187, %v1186
      %v1279 = vpack.c.b16 %v1189, %v1188
      %v1280 = vpack.c.b16 %v1191, %v1190
      %v1281 = vpack.c.b16 %v1193, %v1192
      %v1282 = vpack.c.b16 %v1195, %v1194
      %v1283 = vpack.c.b16 %v1197, %v1196
      %v1284 = vpack.c.b16 %v1199, %v1198
      %v1285 = vpack.c.b16 %v1201, %v1200
      %v1286 = vpack.c.b16 %v1203, %v1202
      %v1287 = vpack.c.b16 %v1205, %v1204
      %v1288 = vpack.c.b16 %v1207, %v1206
      %v1289 = vpack.c.b16 %v1209, %v1208
      %v1290 = vpack.c.b16 %v1211, %v1210
      %v1291 = vpack.c.b16 %v1213, %v1212
      %v1292 = vpack.c.b16 %v1215, %v1214
      %v1293 = vpack.c.b16 %v1217, %v1216
      %v1294 = vpack.c.b16 %v1219, %v1218
      %v1295 = vpack.c.b16 %v1221, %v1220
      %v1296 = vpack.c.b16 %v1223, %v1222
      %v1297 = vpack.c.b16 %v1225, %v1224
      %1370 = vmatprep.subr.bf16.mxu0 0
      %1371 = vmatpush1.bf16.msra.mxu0 %v1226
      %1372 = vmatprep.subr.bf16.mxu0 0
      %1373 = vmatpush1.bf16.msra.mxu0 %v1227
      %1374 = vmatprep.subr.bf16.mxu0 0
      %1375 = vmatpush1.bf16.msra.mxu0 %v1228
      %1376 = vmatprep.subr.bf16.mxu0 0
      %1377 = vmatpush1.bf16.msra.mxu0 %v1229
      %1378 = vmatprep.subr.bf16.mxu0 0
      %1379 = vmatpush1.bf16.msra.mxu0 %v1230
      %1380 = vmatprep.subr.bf16.mxu0 0
      %1381 = vmatpush1.bf16.msra.mxu0 %v1231
      %1382 = vmatprep.subr.bf16.mxu0 0
      %1383 = vmatpush1.bf16.msra.mxu0 %v1232
      %1384 = vmatprep.subr.bf16.mxu0 0
      %1385 = vmatpush1.bf16.msra.mxu0 %v1233
      %1386 = vmatprep.subr.bf16.mxu0 0
      %1387 = vmatpush1.bf16.msra.mxu0 %v1234
      %1388 = vmatprep.subr.bf16.mxu0 0
      %1389 = vmatpush1.bf16.msra.mxu0 %v1235
      %1390 = vmatprep.subr.bf16.mxu0 0
      %1391 = vmatpush1.bf16.msra.mxu0 %v1236
      %1392 = vmatprep.subr.bf16.mxu0 0
      %1393 = vmatpush1.bf16.msra.mxu0 %v1237
      %1394 = vmatprep.subr.bf16.mxu0 0
      %1395 = vmatpush1.bf16.msra.mxu0 %v1238
      %1396 = vmatprep.subr.bf16.mxu0 0
      %1397 = vmatpush1.bf16.msra.mxu0 %v1239
      %1398 = vmatprep.subr.bf16.mxu0 0
      %1399 = vmatpush1.bf16.msra.mxu0 %v1240
      %1400 = vmatprep.subr.bf16.mxu0 0
      %1401 = vmatpush1.bf16.msra.mxu0 %v1241
      %1402 = vmatprep.mubr.bf16.mxu0 %v748
      %1403 = vmatmul.mubr.bf16.gmra.mrb[0].mxu0 %v730
      %v1404 = vpop.f32.mrb[0].mxu0
      %v1405 = vadd.f32 %v936, %v1404
      %v1406 = vpop.f32.mrb[0].mxu0
      %v1407 = vpop.f32.mrb[0].mxu0
      %v1408 = vpop.f32.mrb[0].mxu0
      %1409 = vdwg.mxu0
      %1410 = vmatprep.subr.bf16.mxu0 0
      %1411 = vmatpush1.bf16.msra.mxu0 %v1242
      %1412 = vmatprep.subr.bf16.mxu0 0
      %1413 = vmatpush1.bf16.msra.mxu0 %v1243
      %1414 = vmatprep.subr.bf16.mxu0 0
      %1415 = vmatpush1.bf16.msra.mxu0 %v1244
      %1416 = vmatprep.subr.bf16.mxu0 0
      %1417 = vmatpush1.bf16.msra.mxu0 %v1245
      %1418 = vmatprep.subr.bf16.mxu0 0
      %1419 = vmatpush1.bf16.msra.mxu0 %v1246
      %1420 = vmatprep.subr.bf16.mxu0 0
      %1421 = vmatpush1.bf16.msra.mxu0 %v1247
      %1422 = vmatprep.subr.bf16.mxu0 0
      %1423 = vmatpush1.bf16.msra.mxu0 %v1248
      %1424 = vmatprep.subr.bf16.mxu0 0
      %1425 = vmatpush1.bf16.msra.mxu0 %v1249
      %1426 = vmatprep.subr.bf16.mxu0 0
      %1427 = vmatpush1.bf16.msra.mxu0 %v1250
      %1428 = vmatprep.subr.bf16.mxu0 0
      %1429 = vmatpush1.bf16.msra.mxu0 %v1251
      %1430 = vmatprep.subr.bf16.mxu0 0
      %1431 = vmatpush1.bf16.msra.mxu0 %v1252
      %1432 = vmatprep.subr.bf16.mxu0 0
      %1433 = vmatpush1.bf16.msra.mxu0 %v1253
      %1434 = vmatprep.subr.bf16.mxu0 0
      %1435 = vmatpush1.bf16.msra.mxu0 %v1254
      %1436 = vmatprep.subr.bf16.mxu0 0
      %1437 = vmatpush1.bf16.msra.mxu0 %v1255
      %1438 = vmatprep.subr.bf16.mxu0 0
      %1439 = vmatpush1.bf16.msra.mxu0 %v1256
      %1440 = vmatprep.subr.bf16.mxu0 0
      %1441 = vmatpush1.bf16.msra.mxu0 %v1257
      %1442 = vmatprep.mubr.bf16.mxu0 %v733
      %1443 = vmatmul.mubr.bf16.gmra.mrb[0].mxu0 %v753
      %v1444 = vpop.f32.mrb[0].mxu0
      %v1445 = vadd.f32 %v1405, %v1444
      %v1446 = vpop.f32.mrb[0].mxu0
      %v1447 = vpop.f32.mrb[0].mxu0
      %v1448 = vpop.f32.mrb[0].mxu0
      %1449 = vdwg.mxu0
      %1450 = vmatprep.subr.bf16.mxu0 0
      %1451 = vmatpush1.bf16.msra.mxu0 %v1258
      %1452 = vmatprep.subr.bf16.mxu0 0
      %1453 = vmatpush1.bf16.msra.mxu0 %v1259
      %1454 = vmatprep.subr.bf16.mxu0 0
      %1455 = vmatpush1.bf16.msra.mxu0 %v1260
      %1456 = vmatprep.subr.bf16.mxu0 0
      %1457 = vmatpush1.bf16.msra.mxu0 %v1261
      %1458 = vmatprep.subr.bf16.mxu0 0
      %1459 = vmatpush1.bf16.msra.mxu0 %v1262
      %1460 = vmatprep.subr.bf16.mxu0 0
      %1461 = vmatpush1.bf16.msra.mxu0 %v1263
      %1462 = vmatprep.subr.bf16.mxu0 0
      %1463 = vmatpush1.bf16.msra.mxu0 %v1264
      %1464 = vmatprep.subr.bf16.mxu0 0
      %1465 = vmatpush1.bf16.msra.mxu0 %v1265
      %1466 = vmatprep.subr.bf16.mxu0 0
      %1467 = vmatpush1.bf16.msra.mxu0 %v1266
      %1468 = vmatprep.subr.bf16.mxu0 0
      %1469 = vmatpush1.bf16.msra.mxu0 %v1267
      %1470 = vmatprep.subr.bf16.mxu0 0
      %1471 = vmatpush1.bf16.msra.mxu0 %v1268
      %1472 = vmatprep.subr.bf16.mxu0 0
      %1473 = vmatpush1.bf16.msra.mxu0 %v1269
      %1474 = vmatprep.subr.bf16.mxu0 0
      %1475 = vmatpush1.bf16.msra.mxu0 %v1270
      %1476 = vmatprep.subr.bf16.mxu0 0
      %1477 = vmatpush1.bf16.msra.mxu0 %v1271
      %1478 = vmatprep.subr.bf16.mxu0 0
      %1479 = vmatpush1.bf16.msra.mxu0 %v1272
      %1480 = vmatprep.subr.bf16.mxu0 0
      %1481 = vmatpush1.bf16.msra.mxu0 %v1273
      %1482 = vmatprep.mubr.bf16.mxu0 %v769
      %1483 = vmatmul.mubr.bf16.gmra.mrb[0].mxu0 %v764
      %v1484 = vpop.f32.mrb[0].mxu0
      %v1485 = vadd.f32 %v1445, %v1484
      %v1486 = vpop.f32.mrb[0].mxu0
      %v1487 = vpop.f32.mrb[0].mxu0
      %v1488 = vpop.f32.mrb[0].mxu0
      %1489 = vdwg.mxu0
      %1490 = vmatprep.subr.bf16.mxu0 0
      %1491 = vmatpush1.bf16.msra.mxu0 %v1274
      %1492 = vmatprep.subr.bf16.mxu0 0
      %1493 = vmatpush1.bf16.msra.mxu0 %v1275
      %1494 = vmatprep.subr.bf16.mxu0 0
      %1495 = vmatpush1.bf16.msra.mxu0 %v1276
      %1496 = vmatprep.subr.bf16.mxu0 0
      %1497 = vmatpush1.bf16.msra.mxu0 %v1277
      %1498 = vmatprep.subr.bf16.mxu0 0
      %1499 = vmatpush1.bf16.msra.mxu0 %v1278
      %1500 = vmatprep.subr.bf16.mxu0 0
      %1501 = vmatpush1.bf16.msra.mxu0 %v1279
      %1502 = vmatprep.subr.bf16.mxu0 0
      %1503 = vmatpush1.bf16.msra.mxu0 %v1280
      %1504 = vmatprep.subr.bf16.mxu0 0
      %1505 = vmatpush1.bf16.msra.mxu0 %v1281
      %1506 = vmatprep.subr.bf16.mxu0 0
      %1507 = vmatpush1.bf16.msra.mxu0 %v1282
      %1508 = vmatprep.subr.bf16.mxu0 0
      %1509 = vmatpush1.bf16.msra.mxu0 %v1283
      %1510 = vmatprep.subr.bf16.mxu0 0
      %1511 = vmatpush1.bf16.msra.mxu0 %v1284
      %1512 = vmatprep.subr.bf16.mxu0 0
      %1513 = vmatpush1.bf16.msra.mxu0 %v1285
      %1514 = vmatprep.subr.bf16.mxu0 0
      %1515 = vmatpush1.bf16.msra.mxu0 %v1286
      %1516 = vmatprep.subr.bf16.mxu0 0
      %1517 = vmatpush1.bf16.msra.mxu0 %v1287
      %1518 = vmatprep.subr.bf16.mxu0 0
      %1519 = vmatpush1.bf16.msra.mxu0 %v1288
      %1520 = vmatprep.subr.bf16.mxu0 0
      %1521 = vmatpush1.bf16.msra.mxu0 %v1289
      %1522 = vmatprep.mubr.bf16.mxu0 %v780
      %1523 = vmatmul.mubr.bf16.gmra.mrb[0].mxu0 %v736
      %v1524 = vpop.f32.mrb[0].mxu0
      %v1525 = vadd.f32 %v1485, %v1524
      %v1526 = vpop.f32.mrb[0].mxu0
      %v1527 = vpop.f32.mrb[0].mxu0
      %v1528 = vpop.f32.mrb[0].mxu0
      %1529 = vdwg.mxu0
      %1530 = vmatprep.subr.bf16.mxu0 0
      %1531 = vmatpush1.bf16.msra.mxu0 %v1290
      %1532 = vmatprep.subr.bf16.mxu0 0
      %1533 = vmatpush1.bf16.msra.mxu0 %v1291
      %1534 = vmatprep.subr.bf16.mxu0 0
      %1535 = vmatpush1.bf16.msra.mxu0 %v1292
      %1536 = vmatprep.subr.bf16.mxu0 0
      %1537 = vmatpush1.bf16.msra.mxu0 %v1293
      %1538 = vmatprep.subr.bf16.mxu0 0
      %1539 = vmatpush1.bf16.msra.mxu0 %v1294
      %1540 = vmatprep.subr.bf16.mxu0 0
      %1541 = vmatpush1.bf16.msra.mxu0 %v1295
      %1542 = vmatprep.subr.bf16.mxu0 0
      %1543 = vmatpush1.bf16.msra.mxu0 %v1296
      %1544 = vmatprep.subr.bf16.mxu0 0
      %1545 = vmatpush1.bf16.msra.mxu0 %v1297
      %1546 = vmatprep.subr.bf16.mxu0 0
      %1547 = vmatpush1.bf16.msra.mxu0 0
      %1548 = vmatprep.subr.bf16.mxu0 0
      %1549 = vmatpush1.bf16.msra.mxu0 0
      %1550 = vmatprep.subr.bf16.mxu0 0
      %1551 = vmatpush1.bf16.msra.mxu0 0
      %1552 = vmatprep.subr.bf16.mxu0 0
      %1553 = vmatpush1.bf16.msra.mxu0 0
      %1554 = vmatprep.subr.bf16.mxu0 0
      %1555 = vmatpush1.bf16.msra.mxu0 0
      %1556 = vmatprep.subr.bf16.mxu0 0
      %1557 = vmatpush1.bf16.msra.mxu0 0
      %1558 = vmatprep.subr.bf16.mxu0 0
      %1559 = vmatpush1.bf16.msra.mxu0 0
      %1560 = vmatprep.subr.bf16.mxu0 0
      %1561 = vmatpush1.bf16.msra.mxu0 0
      %1562 = vmatprep.mubr.bf16.mxu0 0
      %1563 = vmatmul.mubr.bf16.gmra.mrb[0].mxu0 %v785
      %v1564 = vpop.f32.mrb[0].mxu0
      %v1565 = vadd.f32 %v1525, %v1564
      %v1566 = vpop.f32.mrb[0].mxu0
      %v1567 = vpop.f32.mrb[0].mxu0
      %v1568 = vpop.f32.mrb[0].mxu0
      %1569 = vdwg.mxu0
      %v1570 = vmax.f32 %v1565, 0.0
      %v1571 = vpack.c.bf16 %v1570, %v1570
      %1572 = vst [vmem:[#allocation4] sm:$0x3] %v1571
      %v1573 = vld [vmem:[%s671] sm:$0x3]
      %v1574 = vld [vmem:[%s671] sm:$0x7]
      %v1575 = vld [vmem:[%s671] sm:$0x6]
      %v1576 = vld [vmem:[%s692] sm:$0x3]
      %v1577 = vld [vmem:[%s692] sm:$0x7]
      %v1578 = vld [vmem:[%s692] sm:$0x6]
      %v1579 = vld [vmem:[%s708] sm:$0x3]
      %v1580 = vld [vmem:[%s708] sm:$0x7]
      %v1581 = vld [vmem:[%s708] sm:$0x6]
      %v1583 = vunpack.c.l.b16 %v1574
      %v1584 = vpack.c.b16 %v1583, %v1583
      %v1586 = vshrl.u32 %v1584, 16
      %v1588 = vshll.u32 %v1584, 16
      %v1590 = vrot.slane %v1588, 1
      %v1591 = vor.u32 %v1586, %v1590
      %v1594 = vunpack.c.l.b16 %v1575
      %v1595 = vpack.c.b16 %v1594, %v1594
      %v1596 = vrot.slane %v1595, 1
      %v1599 = vunpack.c.l.b16 %v1577
      %v1600 = vpack.c.b16 %v1599, %v1599
      %v1602 = vshrl.u32 %v1600, 16
      %v1604 = vshll.u32 %v1600, 16
      %v1606 = vrot.slane %v1604, 1
      %v1607 = vor.u32 %v1602, %v1606
      %v1610 = vunpack.c.l.b16 %v1578
      %v1611 = vpack.c.b16 %v1610, %v1610
      %v1612 = vrot.slane %v1611, 1
      %v1615 = vunpack.c.l.b16 %v1580
      %v1616 = vpack.c.b16 %v1615, %v1615
      %v1618 = vshrl.u32 %v1616, 16
      %v1620 = vshll.u32 %v1616, 16
      %v1622 = vrot.slane %v1620, 1
      %v1623 = vor.u32 %v1618, %v1622
      %v1626 = vunpack.c.l.b16 %v1581
      %v1627 = vpack.c.b16 %v1626, %v1626
      %v1628 = vrot.slane %v1627, 1
      %v1630 = vld [vmem:[%s3] sm:$0xf]
      %v1631 = vld [vmem:[%s3 + $0x4] sm:$0xf]
      %v1632 = vld [vmem:[%s3 + $0x8] sm:$0xf]
      %v1633 = vld [vmem:[%s3 + $0xc] sm:$0xf]
      %v1634 = vld [vmem:[%s3 + $0x10] sm:$0xf]
      %v1635 = vld [vmem:[%s3 + $0x14] sm:$0xf]
      %v1636 = vld [vmem:[%s3 + $0x18] sm:$0xf]
      %v1637 = vld [vmem:[%s3 + $0x1c] sm:$0xf]
      %v1638 = vld [vmem:[%s3 + $0x20] sm:$0xf]
      %v1639 = vld [vmem:[%s3 + $0x24] sm:$0xf]
      %v1640 = vld [vmem:[%s3 + $0x28] sm:$0xf]
      %v1641 = vld [vmem:[%s3 + $0x2c] sm:$0xf]
      %v1642 = vld [vmem:[%s3 + $0x30] sm:$0xf]
      %v1643 = vld [vmem:[%s3 + $0x34] sm:$0xf]
      %v1644 = vld [vmem:[%s3 + $0x38] sm:$0xf]
      %v1645 = vld [vmem:[%s3 + $0x3c] sm:$0xf]
      %v1646 = vld [vmem:[%s3 + $0x40] sm:$0xf]
      %v1647 = vld [vmem:[%s3 + $0x44] sm:$0xf]
      %v1648 = vld [vmem:[%s3 + $0x48] sm:$0xf]
      %v1649 = vld [vmem:[%s3 + $0x4c] sm:$0xf]
      %v1650 = vld [vmem:[%s3 + $0x50] sm:$0xf]
      %v1651 = vld [vmem:[%s3 + $0x54] sm:$0xf]
      %v1652 = vld [vmem:[%s3 + $0x58] sm:$0xf]
      %v1653 = vld [vmem:[%s3 + $0x5c] sm:$0xf]
      %v1654 = vld [vmem:[%s3 + $0x60] sm:$0xf]
      %v1655 = vld [vmem:[%s3 + $0x64] sm:$0xf]
      %v1656 = vld [vmem:[%s3 + $0x68] sm:$0xf]
      %v1657 = vld [vmem:[%s3 + $0x6c] sm:$0xf]
      %v1658 = vld [vmem:[%s3 + $0x70] sm:$0xf]
      %v1659 = vld [vmem:[%s3 + $0x74] sm:$0xf]
      %v1660 = vld [vmem:[%s3 + $0x78] sm:$0xf]
      %v1661 = vld [vmem:[%s3 + $0x7c] sm:$0xf]
      %v1662 = vld [vmem:[%s3 + $0x80] sm:$0xf]
      %v1663 = vld [vmem:[%s3 + $0x84] sm:$0xf]
      %v1664 = vld [vmem:[%s3 + $0x88] sm:$0xf]
      %v1665 = vld [vmem:[%s3 + $0x8c] sm:$0xf]
      %v1666 = vld [vmem:[%s3 + $0x90] sm:$0xf]
      %v1667 = vld [vmem:[%s3 + $0x94] sm:$0xf]
      %v1668 = vld [vmem:[%s3 + $0x98] sm:$0xf]
      %v1669 = vld [vmem:[%s3 + $0x9c] sm:$0xf]
      %v1670 = vld [vmem:[%s3 + $0xa0] sm:$0xf]
      %v1671 = vld [vmem:[%s3 + $0xa4] sm:$0xf]
      %v1672 = vld [vmem:[%s3 + $0xa8] sm:$0xf]
      %v1673 = vld [vmem:[%s3 + $0xac] sm:$0xf]
      %v1674 = vld [vmem:[%s3 + $0xb0] sm:$0xf]
      %v1675 = vld [vmem:[%s3 + $0xb4] sm:$0xf]
      %v1676 = vld [vmem:[%s3 + $0xb8] sm:$0xf]
      %v1677 = vld [vmem:[%s3 + $0xbc] sm:$0xf]
      %v1678 = vld [vmem:[%s3 + $0xc0] sm:$0xf]
      %v1679 = vld [vmem:[%s3 + $0xc4] sm:$0xf]
      %v1680 = vld [vmem:[%s3 + $0xc8] sm:$0xf]
      %v1681 = vld [vmem:[%s3 + $0xcc] sm:$0xf]
      %v1682 = vld [vmem:[%s3 + $0xd0] sm:$0xf]
      %v1683 = vld [vmem:[%s3 + $0xd4] sm:$0xf]
      %v1684 = vld [vmem:[%s3 + $0xd8] sm:$0xf]
      %v1685 = vld [vmem:[%s3 + $0xdc] sm:$0xf]
      %v1686 = vld [vmem:[%s3 + $0xe0] sm:$0xf]
      %v1687 = vld [vmem:[%s3 + $0xe4] sm:$0xf]
      %v1688 = vld [vmem:[%s3 + $0xe8] sm:$0xf]
      %v1689 = vld [vmem:[%s3 + $0xec] sm:$0xf]
      %v1690 = vld [vmem:[%s3 + $0xf0] sm:$0xf]
      %v1691 = vld [vmem:[%s3 + $0xf4] sm:$0xf]
      %v1692 = vld [vmem:[%s3 + $0xf8] sm:$0xf]
      %v1693 = vld [vmem:[%s3 + $0xfc] sm:$0xf]
      %v1694 = vld [vmem:[%s3 + $0x100] sm:$0xf]
      %v1695 = vld [vmem:[%s3 + $0x104] sm:$0xf]
      %v1696 = vld [vmem:[%s3 + $0x108] sm:$0xf]
      %v1697 = vld [vmem:[%s3 + $0x10c] sm:$0xf]
      %v1698 = vld [vmem:[%s3 + $0x110] sm:$0xf]
      %v1699 = vld [vmem:[%s3 + $0x114] sm:$0xf]
      %v1700 = vld [vmem:[%s3 + $0x118] sm:$0xf]
      %v1701 = vld [vmem:[%s3 + $0x11c] sm:$0xf]
      %v1702 = vld [vmem:[%s3 + $0x120] sm:$0xf]
      %v1703 = vld [vmem:[%s3 + $0x124] sm:$0xf]
      %v1704 = vld [vmem:[%s3 + $0x128] sm:$0xf]
      %v1705 = vld [vmem:[%s3 + $0x12c] sm:$0xf]
      %v1706 = vld [vmem:[%s3 + $0x130] sm:$0xf]
      %v1707 = vld [vmem:[%s3 + $0x134] sm:$0xf]
      %v1708 = vld [vmem:[%s3 + $0x138] sm:$0xf]
      %v1709 = vld [vmem:[%s3 + $0x13c] sm:$0xf]
      %v1710 = vld [vmem:[%s3 + $0x140] sm:$0xf]
      %v1711 = vld [vmem:[%s3 + $0x144] sm:$0xf]
      %v1712 = vld [vmem:[%s3 + $0x148] sm:$0xf]
      %v1713 = vld [vmem:[%s3 + $0x14c] sm:$0xf]
      %v1714 = vld [vmem:[%s3 + $0x150] sm:$0xf]
      %v1715 = vld [vmem:[%s3 + $0x154] sm:$0xf]
      %v1716 = vld [vmem:[%s3 + $0x158] sm:$0xf]
      %v1717 = vld [vmem:[%s3 + $0x15c] sm:$0xf]
      %v1718 = vld [vmem:[%s3 + $0x160] sm:$0xf]
      %v1719 = vld [vmem:[%s3 + $0x164] sm:$0xf]
      %v1720 = vld [vmem:[%s3 + $0x168] sm:$0xf]
      %v1721 = vld [vmem:[%s3 + $0x16c] sm:$0xf]
      %v1722 = vld [vmem:[%s3 + $0x170] sm:$0xf]
      %v1723 = vld [vmem:[%s3 + $0x174] sm:$0xf]
      %v1724 = vld [vmem:[%s3 + $0x178] sm:$0xf]
      %v1725 = vld [vmem:[%s3 + $0x17c] sm:$0xf]
      %v1726 = vld [vmem:[%s3 + $0x180] sm:$0xf]
      %v1727 = vld [vmem:[%s3 + $0x184] sm:$0xf]
      %v1728 = vld [vmem:[%s3 + $0x188] sm:$0xf]
      %v1729 = vld [vmem:[%s3 + $0x18c] sm:$0xf]
      %v1730 = vld [vmem:[%s3 + $0x190] sm:$0xf]
      %v1731 = vld [vmem:[%s3 + $0x194] sm:$0xf]
      %v1732 = vld [vmem:[%s3 + $0x198] sm:$0xf]
      %v1733 = vld [vmem:[%s3 + $0x19c] sm:$0xf]
      %v1734 = vld [vmem:[%s3 + $0x1a0] sm:$0xf]
      %v1735 = vld [vmem:[%s3 + $0x1a4] sm:$0xf]
      %v1736 = vld [vmem:[%s3 + $0x1a8] sm:$0xf]
      %v1737 = vld [vmem:[%s3 + $0x1ac] sm:$0xf]
      %v1738 = vld [vmem:[%s3 + $0x1b0] sm:$0xf]
      %v1739 = vld [vmem:[%s3 + $0x1b4] sm:$0xf]
      %v1740 = vld [vmem:[%s3 + $0x1b8] sm:$0xf]
      %v1741 = vld [vmem:[%s3 + $0x1bc] sm:$0xf]
      %v1742 = vld [vmem:[%s3 + $0x1c0] sm:$0xf]
      %v1743 = vld [vmem:[%s3 + $0x1c4] sm:$0xf]
      %v1744 = vld [vmem:[%s3 + $0x1c8] sm:$0xf]
      %v1745 = vld [vmem:[%s3 + $0x1cc] sm:$0xf]
      %v1746 = vld [vmem:[%s3 + $0x1d0] sm:$0xf]
      %v1747 = vld [vmem:[%s3 + $0x1d4] sm:$0xf]
      %v1748 = vld [vmem:[%s3 + $0x1d8] sm:$0xf]
      %v1749 = vld [vmem:[%s3 + $0x1dc] sm:$0xf]
      %v1750 = vld [vmem:[%s3 + $0x1e0] sm:$0xf]
      %v1751 = vld [vmem:[%s3 + $0x1e4] sm:$0xf]
      %v1752 = vld [vmem:[%s3 + $0x1e8] sm:$0xf]
      %v1753 = vld [vmem:[%s3 + $0x1ec] sm:$0xf]
      %v1754 = vld [vmem:[%s3 + $0x1f0] sm:$0xf]
      %v1755 = vld [vmem:[%s3 + $0x1f4] sm:$0xf]
      %v1756 = vld [vmem:[%s3 + $0x1f8] sm:$0xf]
      %v1757 = vld [vmem:[%s3 + $0x1fc] sm:$0xf]
      %v1758 = vld [vmem:[%s3 + $0x200] sm:$0xf]
      %v1759 = vld [vmem:[%s3 + $0x204] sm:$0xf]
      %v1760 = vld [vmem:[%s3 + $0x208] sm:$0xf]
      %v1761 = vld [vmem:[%s3 + $0x20c] sm:$0xf]
      %v1762 = vld [vmem:[%s3 + $0x210] sm:$0xf]
      %v1763 = vld [vmem:[%s3 + $0x214] sm:$0xf]
      %v1764 = vld [vmem:[%s3 + $0x218] sm:$0xf]
      %v1765 = vld [vmem:[%s3 + $0x21c] sm:$0xf]
      %v1766 = vld [vmem:[%s3 + $0x220] sm:$0xf]
      %v1767 = vld [vmem:[%s3 + $0x224] sm:$0xf]
      %v1768 = vld [vmem:[%s3 + $0x228] sm:$0xf]
      %v1769 = vld [vmem:[%s3 + $0x22c] sm:$0xf]
      %v1770 = vld [vmem:[%s3 + $0x230] sm:$0xf]
      %v1771 = vld [vmem:[%s3 + $0x234] sm:$0xf]
      %v1772 = vld [vmem:[%s3 + $0x238] sm:$0xf]
      %v1773 = vld [vmem:[%s3 + $0x23c] sm:$0xf]
      %v1774 = vld [vmem:[%s4] sm:$0x1]
      %v1776 = vlaneseq
      %v1777 = vshrl.u32 %v1776, 7
      %v1778 = vsub.s32 0, %v1777
      %v1779 = vrot.slane %v1774, %v1778
      %v1925 = vunpack.c.l.b16 %v1630
      %v1926 = vunpack.c.l.b16 %v1631
      %v1927 = vunpack.c.l.b16 %v1632
      %v1928 = vunpack.c.l.b16 %v1633
      %v1929 = vunpack.c.l.b16 %v1634
      %v1930 = vunpack.c.l.b16 %v1635
      %v1931 = vunpack.c.l.b16 %v1636
      %v1932 = vunpack.c.l.b16 %v1637
      %v1933 = vunpack.c.l.b16 %v1638
      %v1934 = vunpack.c.l.b16 %v1639
      %v1935 = vunpack.c.l.b16 %v1640
      %v1936 = vunpack.c.l.b16 %v1641
      %v1937 = vunpack.c.l.b16 %v1642
      %v1938 = vunpack.c.l.b16 %v1643
      %v1939 = vunpack.c.l.b16 %v1644
      %v1940 = vunpack.c.l.b16 %v1645
      %v1941 = vunpack.c.l.b16 %v1646
      %v1942 = vunpack.c.l.b16 %v1647
      %v1943 = vunpack.c.l.b16 %v1648
      %v1944 = vunpack.c.l.b16 %v1649
      %v1945 = vunpack.c.l.b16 %v1650
      %v1946 = vunpack.c.l.b16 %v1651
      %v1947 = vunpack.c.l.b16 %v1652
      %v1948 = vunpack.c.l.b16 %v1653
      %v1949 = vunpack.c.l.b16 %v1654
      %v1950 = vunpack.c.l.b16 %v1655
      %v1951 = vunpack.c.l.b16 %v1656
      %v1952 = vunpack.c.l.b16 %v1657
      %v1953 = vunpack.c.l.b16 %v1658
      %v1954 = vunpack.c.l.b16 %v1659
      %v1955 = vunpack.c.l.b16 %v1660
      %v1956 = vunpack.c.l.b16 %v1661
      %v1957 = vunpack.c.l.b16 %v1662
      %v1958 = vunpack.c.l.b16 %v1663
      %v1959 = vunpack.c.l.b16 %v1664
      %v1960 = vunpack.c.l.b16 %v1665
      %v1961 = vunpack.c.l.b16 %v1666
      %v1962 = vunpack.c.l.b16 %v1667
      %v1963 = vunpack.c.l.b16 %v1668
      %v1964 = vunpack.c.l.b16 %v1669
      %v1965 = vunpack.c.l.b16 %v1670
      %v1966 = vunpack.c.l.b16 %v1671
      %v1967 = vunpack.c.l.b16 %v1672
      %v1968 = vunpack.c.l.b16 %v1673
      %v1969 = vunpack.c.l.b16 %v1674
      %v1970 = vunpack.c.l.b16 %v1675
      %v1971 = vunpack.c.l.b16 %v1676
      %v1972 = vunpack.c.l.b16 %v1677
      %v1973 = vunpack.c.l.b16 %v1678
      %v1974 = vunpack.c.l.b16 %v1679
      %v1975 = vunpack.c.l.b16 %v1680
      %v1976 = vunpack.c.l.b16 %v1681
      %v1977 = vunpack.c.l.b16 %v1682
      %v1978 = vunpack.c.l.b16 %v1683
      %v1979 = vunpack.c.l.b16 %v1684
      %v1980 = vunpack.c.l.b16 %v1685
      %v1981 = vunpack.c.l.b16 %v1686
      %v1982 = vunpack.c.l.b16 %v1687
      %v1983 = vunpack.c.l.b16 %v1688
      %v1984 = vunpack.c.l.b16 %v1689
      %v1985 = vunpack.c.l.b16 %v1690
      %v1986 = vunpack.c.l.b16 %v1691
      %v1987 = vunpack.c.l.b16 %v1692
      %v1988 = vunpack.c.l.b16 %v1693
      %v1989 = vunpack.c.l.b16 %v1694
      %v1990 = vunpack.c.l.b16 %v1695
      %v1991 = vunpack.c.l.b16 %v1696
      %v1992 = vunpack.c.l.b16 %v1697
      %v1993 = vunpack.c.l.b16 %v1698
      %v1994 = vunpack.c.l.b16 %v1699
      %v1995 = vunpack.c.l.b16 %v1700
      %v1996 = vunpack.c.l.b16 %v1701
      %v1997 = vunpack.c.l.b16 %v1702
      %v1998 = vunpack.c.l.b16 %v1703
      %v1999 = vunpack.c.l.b16 %v1704
      %v2000 = vunpack.c.l.b16 %v1705
      %v2001 = vunpack.c.l.b16 %v1706
      %v2002 = vunpack.c.l.b16 %v1707
      %v2003 = vunpack.c.l.b16 %v1708
      %v2004 = vunpack.c.l.b16 %v1709
      %v2005 = vunpack.c.l.b16 %v1710
      %v2006 = vunpack.c.l.b16 %v1711
      %v2007 = vunpack.c.l.b16 %v1712
      %v2008 = vunpack.c.l.b16 %v1713
      %v2009 = vunpack.c.l.b16 %v1714
      %v2010 = vunpack.c.l.b16 %v1715
      %v2011 = vunpack.c.l.b16 %v1716
      %v2012 = vunpack.c.l.b16 %v1717
      %v2013 = vunpack.c.l.b16 %v1718
      %v2014 = vunpack.c.l.b16 %v1719
      %v2015 = vunpack.c.l.b16 %v1720
      %v2016 = vunpack.c.l.b16 %v1721
      %v2017 = vunpack.c.l.b16 %v1722
      %v2018 = vunpack.c.l.b16 %v1723
      %v2019 = vunpack.c.l.b16 %v1724
      %v2020 = vunpack.c.l.b16 %v1725
      %v2021 = vunpack.c.l.b16 %v1726
      %v2022 = vunpack.c.l.b16 %v1727
      %v2023 = vunpack.c.l.b16 %v1728
      %v2024 = vunpack.c.l.b16 %v1729
      %v2025 = vunpack.c.l.b16 %v1730
      %v2026 = vunpack.c.l.b16 %v1731
      %v2027 = vunpack.c.l.b16 %v1732
      %v2028 = vunpack.c.l.b16 %v1733
      %v2029 = vunpack.c.l.b16 %v1734
      %v2030 = vunpack.c.l.b16 %v1735
      %v2031 = vunpack.c.l.b16 %v1736
      %v2032 = vunpack.c.l.b16 %v1737
      %v2033 = vunpack.c.l.b16 %v1738
      %v2034 = vunpack.c.l.b16 %v1739
      %v2035 = vunpack.c.l.b16 %v1740
      %v2036 = vunpack.c.l.b16 %v1741
      %v2037 = vunpack.c.l.b16 %v1742
      %v2038 = vunpack.c.l.b16 %v1743
      %v2039 = vunpack.c.l.b16 %v1744
      %v2040 = vunpack.c.l.b16 %v1745
      %v2041 = vunpack.c.l.b16 %v1746
      %v2042 = vunpack.c.l.b16 %v1747
      %v2043 = vunpack.c.l.b16 %v1748
      %v2044 = vunpack.c.l.b16 %v1749
      %v2045 = vunpack.c.l.b16 %v1750
      %v2046 = vunpack.c.l.b16 %v1751
      %v2047 = vunpack.c.l.b16 %v1752
      %v2048 = vunpack.c.l.b16 %v1753
      %v2049 = vunpack.c.l.b16 %v1754
      %v2050 = vunpack.c.l.b16 %v1755
      %v2051 = vunpack.c.l.b16 %v1756
      %v2052 = vunpack.c.l.b16 %v1757
      %v2053 = vunpack.c.l.b16 %v1758
      %v2054 = vunpack.c.l.b16 %v1759
      %v2055 = vunpack.c.l.b16 %v1760
      %v2056 = vunpack.c.l.b16 %v1761
      %v2057 = vunpack.c.l.b16 %v1762
      %v2058 = vunpack.c.l.b16 %v1763
      %v2059 = vunpack.c.l.b16 %v1764
      %v2060 = vunpack.c.l.b16 %v1765
      %v2061 = vunpack.c.l.b16 %v1766
      %v2062 = vunpack.c.l.b16 %v1767
      %v2063 = vunpack.c.l.b16 %v1768
      %v2064 = vunpack.c.l.b16 %v1769
      %v2065 = vunpack.c.l.b16 %v1770
      %v2066 = vunpack.c.l.b16 %v1771
      %v2067 = vunpack.c.l.b16 %v1772
      %v2068 = vunpack.c.l.b16 %v1773
      %v2069 = vpack.c.b16 %v1926, %v1925
      %v2070 = vpack.c.b16 %v1928, %v1927
      %v2071 = vpack.c.b16 %v1930, %v1929
      %v2072 = vpack.c.b16 %v1932, %v1931
      %v2073 = vpack.c.b16 %v1934, %v1933
      %v2074 = vpack.c.b16 %v1936, %v1935
      %v2075 = vpack.c.b16 %v1938, %v1937
      %v2076 = vpack.c.b16 %v1940, %v1939
      %v2077 = vpack.c.b16 %v1942, %v1941
      %v2078 = vpack.c.b16 %v1944, %v1943
      %v2079 = vpack.c.b16 %v1946, %v1945
      %v2080 = vpack.c.b16 %v1948, %v1947
      %v2081 = vpack.c.b16 %v1950, %v1949
      %v2082 = vpack.c.b16 %v1952, %v1951
      %v2083 = vpack.c.b16 %v1954, %v1953
      %v2084 = vpack.c.b16 %v1956, %v1955
      %v2085 = vpack.c.b16 %v1958, %v1957
      %v2086 = vpack.c.b16 %v1960, %v1959
      %v2087 = vpack.c.b16 %v1962, %v1961
      %v2088 = vpack.c.b16 %v1964, %v1963
      %v2089 = vpack.c.b16 %v1966, %v1965
      %v2090 = vpack.c.b16 %v1968, %v1967
      %v2091 = vpack.c.b16 %v1970, %v1969
      %v2092 = vpack.c.b16 %v1972, %v1971
      %v2093 = vpack.c.b16 %v1974, %v1973
      %v2094 = vpack.c.b16 %v1976, %v1975
      %v2095 = vpack.c.b16 %v1978, %v1977
      %v2096 = vpack.c.b16 %v1980, %v1979
      %v2097 = vpack.c.b16 %v1982, %v1981
      %v2098 = vpack.c.b16 %v1984, %v1983
      %v2099 = vpack.c.b16 %v1986, %v1985
      %v2100 = vpack.c.b16 %v1988, %v1987
      %v2101 = vpack.c.b16 %v1990, %v1989
      %v2102 = vpack.c.b16 %v1992, %v1991
      %v2103 = vpack.c.b16 %v1994, %v1993
      %v2104 = vpack.c.b16 %v1996, %v1995
      %v2105 = vpack.c.b16 %v1998, %v1997
      %v2106 = vpack.c.b16 %v2000, %v1999
      %v2107 = vpack.c.b16 %v2002, %v2001
      %v2108 = vpack.c.b16 %v2004, %v2003
      %v2109 = vpack.c.b16 %v2006, %v2005
      %v2110 = vpack.c.b16 %v2008, %v2007
      %v2111 = vpack.c.b16 %v2010, %v2009
      %v2112 = vpack.c.b16 %v2012, %v2011
      %v2113 = vpack.c.b16 %v2014, %v2013
      %v2114 = vpack.c.b16 %v2016, %v2015
      %v2115 = vpack.c.b16 %v2018, %v2017
      %v2116 = vpack.c.b16 %v2020, %v2019
      %v2117 = vpack.c.b16 %v2022, %v2021
      %v2118 = vpack.c.b16 %v2024, %v2023
      %v2119 = vpack.c.b16 %v2026, %v2025
      %v2120 = vpack.c.b16 %v2028, %v2027
      %v2121 = vpack.c.b16 %v2030, %v2029
      %v2122 = vpack.c.b16 %v2032, %v2031
      %v2123 = vpack.c.b16 %v2034, %v2033
      %v2124 = vpack.c.b16 %v2036, %v2035
      %v2125 = vpack.c.b16 %v2038, %v2037
      %v2126 = vpack.c.b16 %v2040, %v2039
      %v2127 = vpack.c.b16 %v2042, %v2041
      %v2128 = vpack.c.b16 %v2044, %v2043
      %v2129 = vpack.c.b16 %v2046, %v2045
      %v2130 = vpack.c.b16 %v2048, %v2047
      %v2131 = vpack.c.b16 %v2050, %v2049
      %v2132 = vpack.c.b16 %v2052, %v2051
      %v2133 = vpack.c.b16 %v2054, %v2053
      %v2134 = vpack.c.b16 %v2056, %v2055
      %v2135 = vpack.c.b16 %v2058, %v2057
      %v2136 = vpack.c.b16 %v2060, %v2059
      %v2137 = vpack.c.b16 %v2062, %v2061
      %v2138 = vpack.c.b16 %v2064, %v2063
      %v2139 = vpack.c.b16 %v2066, %v2065
      %v2140 = vpack.c.b16 %v2068, %v2067
      %2213 = vmatprep.subr.bf16.mxu0 0
      %2214 = vmatpush1.bf16.msra.mxu0 %v2069
      %2215 = vmatprep.subr.bf16.mxu0 0
      %2216 = vmatpush1.bf16.msra.mxu0 %v2070
      %2217 = vmatprep.subr.bf16.mxu0 0
      %2218 = vmatpush1.bf16.msra.mxu0 %v2071
      %2219 = vmatprep.subr.bf16.mxu0 0
      %2220 = vmatpush1.bf16.msra.mxu0 %v2072
      %2221 = vmatprep.subr.bf16.mxu0 0
      %2222 = vmatpush1.bf16.msra.mxu0 %v2073
      %2223 = vmatprep.subr.bf16.mxu0 0
      %2224 = vmatpush1.bf16.msra.mxu0 %v2074
      %2225 = vmatprep.subr.bf16.mxu0 0
      %2226 = vmatpush1.bf16.msra.mxu0 %v2075
      %2227 = vmatprep.subr.bf16.mxu0 0
      %2228 = vmatpush1.bf16.msra.mxu0 %v2076
      %2229 = vmatprep.subr.bf16.mxu0 0
      %2230 = vmatpush1.bf16.msra.mxu0 %v2077
      %2231 = vmatprep.subr.bf16.mxu0 0
      %2232 = vmatpush1.bf16.msra.mxu0 %v2078
      %2233 = vmatprep.subr.bf16.mxu0 0
      %2234 = vmatpush1.bf16.msra.mxu0 %v2079
      %2235 = vmatprep.subr.bf16.mxu0 0
      %2236 = vmatpush1.bf16.msra.mxu0 %v2080
      %2237 = vmatprep.subr.bf16.mxu0 0
      %2238 = vmatpush1.bf16.msra.mxu0 %v2081
      %2239 = vmatprep.subr.bf16.mxu0 0
      %2240 = vmatpush1.bf16.msra.mxu0 %v2082
      %2241 = vmatprep.subr.bf16.mxu0 0
      %2242 = vmatpush1.bf16.msra.mxu0 %v2083
      %2243 = vmatprep.subr.bf16.mxu0 0
      %2244 = vmatpush1.bf16.msra.mxu0 %v2084
      %2245 = vmatprep.mubr.bf16.mxu0 %v1591
      %2246 = vmatmul.mubr.bf16.gmra.mrb[0].mxu0 %v1573
      %v2247 = vpop.f32.mrb[0].mxu0
      %v2248 = vadd.f32 %v1779, %v2247
      %v2249 = vpop.f32.mrb[0].mxu0
      %v2250 = vpop.f32.mrb[0].mxu0
      %v2251 = vpop.f32.mrb[0].mxu0
      %2252 = vdwg.mxu0
      %2253 = vmatprep.subr.bf16.mxu0 0
      %2254 = vmatpush1.bf16.msra.mxu0 %v2085
      %2255 = vmatprep.subr.bf16.mxu0 0
      %2256 = vmatpush1.bf16.msra.mxu0 %v2086
      %2257 = vmatprep.subr.bf16.mxu0 0
      %2258 = vmatpush1.bf16.msra.mxu0 %v2087
      %2259 = vmatprep.subr.bf16.mxu0 0
      %2260 = vmatpush1.bf16.msra.mxu0 %v2088
      %2261 = vmatprep.subr.bf16.mxu0 0
      %2262 = vmatpush1.bf16.msra.mxu0 %v2089
      %2263 = vmatprep.subr.bf16.mxu0 0
      %2264 = vmatpush1.bf16.msra.mxu0 %v2090
      %2265 = vmatprep.subr.bf16.mxu0 0
      %2266 = vmatpush1.bf16.msra.mxu0 %v2091
      %2267 = vmatprep.subr.bf16.mxu0 0
      %2268 = vmatpush1.bf16.msra.mxu0 %v2092
      %2269 = vmatprep.subr.bf16.mxu0 0
      %2270 = vmatpush1.bf16.msra.mxu0 %v2093
      %2271 = vmatprep.subr.bf16.mxu0 0
      %2272 = vmatpush1.bf16.msra.mxu0 %v2094
      %2273 = vmatprep.subr.bf16.mxu0 0
      %2274 = vmatpush1.bf16.msra.mxu0 %v2095
      %2275 = vmatprep.subr.bf16.mxu0 0
      %2276 = vmatpush1.bf16.msra.mxu0 %v2096
      %2277 = vmatprep.subr.bf16.mxu0 0
      %2278 = vmatpush1.bf16.msra.mxu0 %v2097
      %2279 = vmatprep.subr.bf16.mxu0 0
      %2280 = vmatpush1.bf16.msra.mxu0 %v2098
      %2281 = vmatprep.subr.bf16.mxu0 0
      %2282 = vmatpush1.bf16.msra.mxu0 %v2099
      %2283 = vmatprep.subr.bf16.mxu0 0
      %2284 = vmatpush1.bf16.msra.mxu0 %v2100
      %2285 = vmatprep.mubr.bf16.mxu0 %v1576
      %2286 = vmatmul.mubr.bf16.gmra.mrb[0].mxu0 %v1596
      %v2287 = vpop.f32.mrb[0].mxu0
      %v2288 = vadd.f32 %v2248, %v2287
      %v2289 = vpop.f32.mrb[0].mxu0
      %v2290 = vpop.f32.mrb[0].mxu0
      %v2291 = vpop.f32.mrb[0].mxu0
      %2292 = vdwg.mxu0
      %2293 = vmatprep.subr.bf16.mxu0 0
      %2294 = vmatpush1.bf16.msra.mxu0 %v2101
      %2295 = vmatprep.subr.bf16.mxu0 0
      %2296 = vmatpush1.bf16.msra.mxu0 %v2102
      %2297 = vmatprep.subr.bf16.mxu0 0
      %2298 = vmatpush1.bf16.msra.mxu0 %v2103
      %2299 = vmatprep.subr.bf16.mxu0 0
      %2300 = vmatpush1.bf16.msra.mxu0 %v2104
      %2301 = vmatprep.subr.bf16.mxu0 0
      %2302 = vmatpush1.bf16.msra.mxu0 %v2105
      %2303 = vmatprep.subr.bf16.mxu0 0
      %2304 = vmatpush1.bf16.msra.mxu0 %v2106
      %2305 = vmatprep.subr.bf16.mxu0 0
      %2306 = vmatpush1.bf16.msra.mxu0 %v2107
      %2307 = vmatprep.subr.bf16.mxu0 0
      %2308 = vmatpush1.bf16.msra.mxu0 %v2108
      %2309 = vmatprep.subr.bf16.mxu0 0
      %2310 = vmatpush1.bf16.msra.mxu0 %v2109
      %2311 = vmatprep.subr.bf16.mxu0 0
      %2312 = vmatpush1.bf16.msra.mxu0 %v2110
      %2313 = vmatprep.subr.bf16.mxu0 0
      %2314 = vmatpush1.bf16.msra.mxu0 %v2111
      %2315 = vmatprep.subr.bf16.mxu0 0
      %2316 = vmatpush1.bf16.msra.mxu0 %v2112
      %2317 = vmatprep.subr.bf16.mxu0 0
      %2318 = vmatpush1.bf16.msra.mxu0 %v2113
      %2319 = vmatprep.subr.bf16.mxu0 0
      %2320 = vmatpush1.bf16.msra.mxu0 %v2114
      %2321 = vmatprep.subr.bf16.mxu0 0
      %2322 = vmatpush1.bf16.msra.mxu0 %v2115
      %2323 = vmatprep.subr.bf16.mxu0 0
      %2324 = vmatpush1.bf16.msra.mxu0 %v2116
      %2325 = vmatprep.mubr.bf16.mxu0 %v1612
      %2326 = vmatmul.mubr.bf16.gmra.mrb[0].mxu0 %v1607
      %v2327 = vpop.f32.mrb[0].mxu0
      %v2328 = vadd.f32 %v2288, %v2327
      %v2329 = vpop.f32.mrb[0].mxu0
      %v2330 = vpop.f32.mrb[0].mxu0
      %v2331 = vpop.f32.mrb[0].mxu0
      %2332 = vdwg.mxu0
      %2333 = vmatprep.subr.bf16.mxu0 0
      %2334 = vmatpush1.bf16.msra.mxu0 %v2117
      %2335 = vmatprep.subr.bf16.mxu0 0
      %2336 = vmatpush1.bf16.msra.mxu0 %v2118
      %2337 = vmatprep.subr.bf16.mxu0 0
      %2338 = vmatpush1.bf16.msra.mxu0 %v2119
      %2339 = vmatprep.subr.bf16.mxu0 0
      %2340 = vmatpush1.bf16.msra.mxu0 %v2120
      %2341 = vmatprep.subr.bf16.mxu0 0
      %2342 = vmatpush1.bf16.msra.mxu0 %v2121
      %2343 = vmatprep.subr.bf16.mxu0 0
      %2344 = vmatpush1.bf16.msra.mxu0 %v2122
      %2345 = vmatprep.subr.bf16.mxu0 0
      %2346 = vmatpush1.bf16.msra.mxu0 %v2123
      %2347 = vmatprep.subr.bf16.mxu0 0
      %2348 = vmatpush1.bf16.msra.mxu0 %v2124
      %2349 = vmatprep.subr.bf16.mxu0 0
      %2350 = vmatpush1.bf16.msra.mxu0 %v2125
      %2351 = vmatprep.subr.bf16.mxu0 0
      %2352 = vmatpush1.bf16.msra.mxu0 %v2126
      %2353 = vmatprep.subr.bf16.mxu0 0
      %2354 = vmatpush1.bf16.msra.mxu0 %v2127
      %2355 = vmatprep.subr.bf16.mxu0 0
      %2356 = vmatpush1.bf16.msra.mxu0 %v2128
      %2357 = vmatprep.subr.bf16.mxu0 0
      %2358 = vmatpush1.bf16.msra.mxu0 %v2129
      %2359 = vmatprep.subr.bf16.mxu0 0
      %2360 = vmatpush1.bf16.msra.mxu0 %v2130
      %2361 = vmatprep.subr.bf16.mxu0 0
      %2362 = vmatpush1.bf16.msra.mxu0 %v2131
      %2363 = vmatprep.subr.bf16.mxu0 0
      %2364 = vmatpush1.bf16.msra.mxu0 %v2132
      %2365 = vmatprep.mubr.bf16.mxu0 %v1623
      %2366 = vmatmul.mubr.bf16.gmra.mrb[0].mxu0 %v1579
      %v2367 = vpop.f32.mrb[0].mxu0
      %v2368 = vadd.f32 %v2328, %v2367
      %v2369 = vpop.f32.mrb[0].mxu0
      %v2370 = vpop.f32.mrb[0].mxu0
      %v2371 = vpop.f32.mrb[0].mxu0
      %2372 = vdwg.mxu0
      %2373 = vmatprep.subr.bf16.mxu0 0
      %2374 = vmatpush1.bf16.msra.mxu0 %v2133
      %2375 = vmatprep.subr.bf16.mxu0 0
      %2376 = vmatpush1.bf16.msra.mxu0 %v2134
      %2377 = vmatprep.subr.bf16.mxu0 0
      %2378 = vmatpush1.bf16.msra.mxu0 %v2135
      %2379 = vmatprep.subr.bf16.mxu0 0
      %2380 = vmatpush1.bf16.msra.mxu0 %v2136
      %2381 = vmatprep.subr.bf16.mxu0 0
      %2382 = vmatpush1.bf16.msra.mxu0 %v2137
      %2383 = vmatprep.subr.bf16.mxu0 0
      %2384 = vmatpush1.bf16.msra.mxu0 %v2138
      %2385 = vmatprep.subr.bf16.mxu0 0
      %2386 = vmatpush1.bf16.msra.mxu0 %v2139
      %2387 = vmatprep.subr.bf16.mxu0 0
      %2388 = vmatpush1.bf16.msra.mxu0 %v2140
      %2389 = vmatprep.subr.bf16.mxu0 0
      %2390 = vmatpush1.bf16.msra.mxu0 0
      %2391 = vmatprep.subr.bf16.mxu0 0
      %2392 = vmatpush1.bf16.msra.mxu0 0
      %2393 = vmatprep.subr.bf16.mxu0 0
      %2394 = vmatpush1.bf16.msra.mxu0 0
      %2395 = vmatprep.subr.bf16.mxu0 0
      %2396 = vmatpush1.bf16.msra.mxu0 0
      %2397 = vmatprep.subr.bf16.mxu0 0
      %2398 = vmatpush1.bf16.msra.mxu0 0
      %2399 = vmatprep.subr.bf16.mxu0 0
      %2400 = vmatpush1.bf16.msra.mxu0 0
      %2401 = vmatprep.subr.bf16.mxu0 0
      %2402 = vmatpush1.bf16.msra.mxu0 0
      %2403 = vmatprep.subr.bf16.mxu0 0
      %2404 = vmatpush1.bf16.msra.mxu0 0
      %2405 = vmatprep.mubr.bf16.mxu0 0
      %2406 = vmatmul.mubr.bf16.gmra.mrb[0].mxu0 %v1628
      %v2407 = vpop.f32.mrb[0].mxu0
      %v2408 = vadd.f32 %v2368, %v2407
      %v2409 = vpop.f32.mrb[0].mxu0
      %v2410 = vpop.f32.mrb[0].mxu0
      %v2411 = vpop.f32.mrb[0].mxu0
      %2412 = vdwg.mxu0
      %v2413 = vmax.f32 %v2408, 0.0
      %v2414 = vpack.c.bf16 %v2413, %v2413
      %v2416 = vrot.slane %v2414, 6
      %2418 = vst [vmem:[#allocation4] sm:$0xc] %v2416
      %v2419 = vld [vmem:[%s692] sm:$0x3]
      %v2420 = vld [vmem:[%s692] sm:$0x7]
      %v2421 = vld [vmem:[%s692] sm:$0x6]
      %v2422 = vld [vmem:[%s708] sm:$0x3]
      %v2423 = vld [vmem:[%s708] sm:$0x7]
      %v2424 = vld [vmem:[%s708] sm:$0x6]
      %v2425 = vld [vmem:[%s726] sm:$0x3]
      %v2426 = vld [vmem:[%s726] sm:$0x7]
      %v2427 = vld [vmem:[%s726] sm:$0x6]
      %v2429 = vunpack.c.l.b16 %v2420
      %v2430 = vpack.c.b16 %v2429, %v2429
      %v2432 = vshrl.u32 %v2430, 16
      %v2434 = vshll.u32 %v2430, 16
      %v2436 = vrot.slane %v2434, 1
      %v2437 = vor.u32 %v2432, %v2436
      %v2440 = vunpack.c.l.b16 %v2421
      %v2441 = vpack.c.b16 %v2440, %v2440
      %v2442 = vrot.slane %v2441, 1
      %v2445 = vunpack.c.l.b16 %v2423
      %v2446 = vpack.c.b16 %v2445, %v2445
      %v2448 = vshrl.u32 %v2446, 16
      %v2450 = vshll.u32 %v2446, 16
      %v2452 = vrot.slane %v2450, 1
      %v2453 = vor.u32 %v2448, %v2452
      %v2456 = vunpack.c.l.b16 %v2424
      %v2457 = vpack.c.b16 %v2456, %v2456
      %v2458 = vrot.slane %v2457, 1
      %v2461 = vunpack.c.l.b16 %v2426
      %v2462 = vpack.c.b16 %v2461, %v2461
      %v2464 = vshrl.u32 %v2462, 16
      %v2466 = vshll.u32 %v2462, 16
      %v2468 = vrot.slane %v2466, 1
      %v2469 = vor.u32 %v2464, %v2468
      %v2472 = vunpack.c.l.b16 %v2427
      %v2473 = vpack.c.b16 %v2472, %v2472
      %v2474 = vrot.slane %v2473, 1
      %v2476 = vld [vmem:[%s3] sm:$0xf]
      %v2477 = vld [vmem:[%s3 + $0x4] sm:$0xf]
      %v2478 = vld [vmem:[%s3 + $0x8] sm:$0xf]
      %v2479 = vld [vmem:[%s3 + $0xc] sm:$0xf]
      %v2480 = vld [vmem:[%s3 + $0x10] sm:$0xf]
      %v2481 = vld [vmem:[%s3 + $0x14] sm:$0xf]
      %v2482 = vld [vmem:[%s3 + $0x18] sm:$0xf]
      %v2483 = vld [vmem:[%s3 + $0x1c] sm:$0xf]
      %v2484 = vld [vmem:[%s3 + $0x20] sm:$0xf]
      %v2485 = vld [vmem:[%s3 + $0x24] sm:$0xf]
      %v2486 = vld [vmem:[%s3 + $0x28] sm:$0xf]
      %v2487 = vld [vmem:[%s3 + $0x2c] sm:$0xf]
      %v2488 = vld [vmem:[%s3 + $0x30] sm:$0xf]
      %v2489 = vld [vmem:[%s3 + $0x34] sm:$0xf]
      %v2490 = vld [vmem:[%s3 + $0x38] sm:$0xf]
      %v2491 = vld [vmem:[%s3 + $0x3c] sm:$0xf]
      %v2492 = vld [vmem:[%s3 + $0x40] sm:$0xf]
      %v2493 = vld [vmem:[%s3 + $0x44] sm:$0xf]
      %v2494 = vld [vmem:[%s3 + $0x48] sm:$0xf]
      %v2495 = vld [vmem:[%s3 + $0x4c] sm:$0xf]
      %v2496 = vld [vmem:[%s3 + $0x50] sm:$0xf]
      %v2497 = vld [vmem:[%s3 + $0x54] sm:$0xf]
      %v2498 = vld [vmem:[%s3 + $0x58] sm:$0xf]
      %v2499 = vld [vmem:[%s3 + $0x5c] sm:$0xf]
      %v2500 = vld [vmem:[%s3 + $0x60] sm:$0xf]
      %v2501 = vld [vmem:[%s3 + $0x64] sm:$0xf]
      %v2502 = vld [vmem:[%s3 + $0x68] sm:$0xf]
      %v2503 = vld [vmem:[%s3 + $0x6c] sm:$0xf]
      %v2504 = vld [vmem:[%s3 + $0x70] sm:$0xf]
      %v2505 = vld [vmem:[%s3 + $0x74] sm:$0xf]
      %v2506 = vld [vmem:[%s3 + $0x78] sm:$0xf]
      %v2507 = vld [vmem:[%s3 + $0x7c] sm:$0xf]
      %v2508 = vld [vmem:[%s3 + $0x80] sm:$0xf]
      %v2509 = vld [vmem:[%s3 + $0x84] sm:$0xf]
      %v2510 = vld [vmem:[%s3 + $0x88] sm:$0xf]
      %v2511 = vld [vmem:[%s3 + $0x8c] sm:$0xf]
      %v2512 = vld [vmem:[%s3 + $0x90] sm:$0xf]
      %v2513 = vld [vmem:[%s3 + $0x94] sm:$0xf]
      %v2514 = vld [vmem:[%s3 + $0x98] sm:$0xf]
      %v2515 = vld [vmem:[%s3 + $0x9c] sm:$0xf]
      %v2516 = vld [vmem:[%s3 + $0xa0] sm:$0xf]
      %v2517 = vld [vmem:[%s3 + $0xa4] sm:$0xf]
      %v2518 = vld [vmem:[%s3 + $0xa8] sm:$0xf]
      %v2519 = vld [vmem:[%s3 + $0xac] sm:$0xf]
      %v2520 = vld [vmem:[%s3 + $0xb0] sm:$0xf]
      %v2521 = vld [vmem:[%s3 + $0xb4] sm:$0xf]
      %v2522 = vld [vmem:[%s3 + $0xb8] sm:$0xf]
      %v2523 = vld [vmem:[%s3 + $0xbc] sm:$0xf]
      %v2524 = vld [vmem:[%s3 + $0xc0] sm:$0xf]
      %v2525 = vld [vmem:[%s3 + $0xc4] sm:$0xf]
      %v2526 = vld [vmem:[%s3 + $0xc8] sm:$0xf]
      %v2527 = vld [vmem:[%s3 + $0xcc] sm:$0xf]
      %v2528 = vld [vmem:[%s3 + $0xd0] sm:$0xf]
      %v2529 = vld [vmem:[%s3 + $0xd4] sm:$0xf]
      %v2530 = vld [vmem:[%s3 + $0xd8] sm:$0xf]
      %v2531 = vld [vmem:[%s3 + $0xdc] sm:$0xf]
      %v2532 = vld [vmem:[%s3 + $0xe0] sm:$0xf]
      %v2533 = vld [vmem:[%s3 + $0xe4] sm:$0xf]
      %v2534 = vld [vmem:[%s3 + $0xe8] sm:$0xf]
      %v2535 = vld [vmem:[%s3 + $0xec] sm:$0xf]
      %v2536 = vld [vmem:[%s3 + $0xf0] sm:$0xf]
      %v2537 = vld [vmem:[%s3 + $0xf4] sm:$0xf]
      %v2538 = vld [vmem:[%s3 + $0xf8] sm:$0xf]
      %v2539 = vld [vmem:[%s3 + $0xfc] sm:$0xf]
      %v2540 = vld [vmem:[%s3 + $0x100] sm:$0xf]
      %v2541 = vld [vmem:[%s3 + $0x104] sm:$0xf]
      %v2542 = vld [vmem:[%s3 + $0x108] sm:$0xf]
      %v2543 = vld [vmem:[%s3 + $0x10c] sm:$0xf]
      %v2544 = vld [vmem:[%s3 + $0x110] sm:$0xf]
      %v2545 = vld [vmem:[%s3 + $0x114] sm:$0xf]
      %v2546 = vld [vmem:[%s3 + $0x118] sm:$0xf]
      %v2547 = vld [vmem:[%s3 + $0x11c] sm:$0xf]
      %v2548 = vld [vmem:[%s3 + $0x120] sm:$0xf]
      %v2549 = vld [vmem:[%s3 + $0x124] sm:$0xf]
      %v2550 = vld [vmem:[%s3 + $0x128] sm:$0xf]
      %v2551 = vld [vmem:[%s3 + $0x12c] sm:$0xf]
      %v2552 = vld [vmem:[%s3 + $0x130] sm:$0xf]
      %v2553 = vld [vmem:[%s3 + $0x134] sm:$0xf]
      %v2554 = vld [vmem:[%s3 + $0x138] sm:$0xf]
      %v2555 = vld [vmem:[%s3 + $0x13c] sm:$0xf]
      %v2556 = vld [vmem:[%s3 + $0x140] sm:$0xf]
      %v2557 = vld [vmem:[%s3 + $0x144] sm:$0xf]
      %v2558 = vld [vmem:[%s3 + $0x148] sm:$0xf]
      %v2559 = vld [vmem:[%s3 + $0x14c] sm:$0xf]
      %v2560 = vld [vmem:[%s3 + $0x150] sm:$0xf]
      %v2561 = vld [vmem:[%s3 + $0x154] sm:$0xf]
      %v2562 = vld [vmem:[%s3 + $0x158] sm:$0xf]
      %v2563 = vld [vmem:[%s3 + $0x15c] sm:$0xf]
      %v2564 = vld [vmem:[%s3 + $0x160] sm:$0xf]
      %v2565 = vld [vmem:[%s3 + $0x164] sm:$0xf]
      %v2566 = vld [vmem:[%s3 + $0x168] sm:$0xf]
      %v2567 = vld [vmem:[%s3 + $0x16c] sm:$0xf]
      %v2568 = vld [vmem:[%s3 + $0x170] sm:$0xf]
      %v2569 = vld [vmem:[%s3 + $0x174] sm:$0xf]
      %v2570 = vld [vmem:[%s3 + $0x178] sm:$0xf]
      %v2571 = vld [vmem:[%s3 + $0x17c] sm:$0xf]
      %v2572 = vld [vmem:[%s3 + $0x180] sm:$0xf]
      %v2573 = vld [vmem:[%s3 + $0x184] sm:$0xf]
      %v2574 = vld [vmem:[%s3 + $0x188] sm:$0xf]
      %v2575 = vld [vmem:[%s3 + $0x18c] sm:$0xf]
      %v2576 = vld [vmem:[%s3 + $0x190] sm:$0xf]
      %v2577 = vld [vmem:[%s3 + $0x194] sm:$0xf]
      %v2578 = vld [vmem:[%s3 + $0x198] sm:$0xf]
      %v2579 = vld [vmem:[%s3 + $0x19c] sm:$0xf]
      %v2580 = vld [vmem:[%s3 + $0x1a0] sm:$0xf]
      %v2581 = vld [vmem:[%s3 + $0x1a4] sm:$0xf]
      %v2582 = vld [vmem:[%s3 + $0x1a8] sm:$0xf]
      %v2583 = vld [vmem:[%s3 + $0x1ac] sm:$0xf]
      %v2584 = vld [vmem:[%s3 + $0x1b0] sm:$0xf]
      %v2585 = vld [vmem:[%s3 + $0x1b4] sm:$0xf]
      %v2586 = vld [vmem:[%s3 + $0x1b8] sm:$0xf]
      %v2587 = vld [vmem:[%s3 + $0x1bc] sm:$0xf]
      %v2588 = vld [vmem:[%s3 + $0x1c0] sm:$0xf]
      %v2589 = vld [vmem:[%s3 + $0x1c4] sm:$0xf]
      %v2590 = vld [vmem:[%s3 + $0x1c8] sm:$0xf]
      %v2591 = vld [vmem:[%s3 + $0x1cc] sm:$0xf]
      %v2592 = vld [vmem:[%s3 + $0x1d0] sm:$0xf]
      %v2593 = vld [vmem:[%s3 + $0x1d4] sm:$0xf]
      %v2594 = vld [vmem:[%s3 + $0x1d8] sm:$0xf]
      %v2595 = vld [vmem:[%s3 + $0x1dc] sm:$0xf]
      %v2596 = vld [vmem:[%s3 + $0x1e0] sm:$0xf]
      %v2597 = vld [vmem:[%s3 + $0x1e4] sm:$0xf]
      %v2598 = vld [vmem:[%s3 + $0x1e8] sm:$0xf]
      %v2599 = vld [vmem:[%s3 + $0x1ec] sm:$0xf]
      %v2600 = vld [vmem:[%s3 + $0x1f0] sm:$0xf]
      %v2601 = vld [vmem:[%s3 + $0x1f4] sm:$0xf]
      %v2602 = vld [vmem:[%s3 + $0x1f8] sm:$0xf]
      %v2603 = vld [vmem:[%s3 + $0x1fc] sm:$0xf]
      %v2604 = vld [vmem:[%s3 + $0x200] sm:$0xf]
      %v2605 = vld [vmem:[%s3 + $0x204] sm:$0xf]
      %v2606 = vld [vmem:[%s3 + $0x208] sm:$0xf]
      %v2607 = vld [vmem:[%s3 + $0x20c] sm:$0xf]
      %v2608 = vld [vmem:[%s3 + $0x210] sm:$0xf]
      %v2609 = vld [vmem:[%s3 + $0x214] sm:$0xf]
      %v2610 = vld [vmem:[%s3 + $0x218] sm:$0xf]
      %v2611 = vld [vmem:[%s3 + $0x21c] sm:$0xf]
      %v2612 = vld [vmem:[%s3 + $0x220] sm:$0xf]
      %v2613 = vld [vmem:[%s3 + $0x224] sm:$0xf]
      %v2614 = vld [vmem:[%s3 + $0x228] sm:$0xf]
      %v2615 = vld [vmem:[%s3 + $0x22c] sm:$0xf]
      %v2616 = vld [vmem:[%s3 + $0x230] sm:$0xf]
      %v2617 = vld [vmem:[%s3 + $0x234] sm:$0xf]
      %v2618 = vld [vmem:[%s3 + $0x238] sm:$0xf]
      %v2619 = vld [vmem:[%s3 + $0x23c] sm:$0xf]
      %v2620 = vld [vmem:[%s4] sm:$0x1]
      %v2622 = vlaneseq
      %v2623 = vshrl.u32 %v2622, 7
      %v2624 = vsub.s32 0, %v2623
      %v2625 = vrot.slane %v2620, %v2624
      %v2771 = vunpack.c.l.b16 %v2476
      %v2772 = vunpack.c.l.b16 %v2477
      %v2773 = vunpack.c.l.b16 %v2478
      %v2774 = vunpack.c.l.b16 %v2479
      %v2775 = vunpack.c.l.b16 %v2480
      %v2776 = vunpack.c.l.b16 %v2481
      %v2777 = vunpack.c.l.b16 %v2482
      %v2778 = vunpack.c.l.b16 %v2483
      %v2779 = vunpack.c.l.b16 %v2484
      %v2780 = vunpack.c.l.b16 %v2485
      %v2781 = vunpack.c.l.b16 %v2486
      %v2782 = vunpack.c.l.b16 %v2487
      %v2783 = vunpack.c.l.b16 %v2488
      %v2784 = vunpack.c.l.b16 %v2489
      %v2785 = vunpack.c.l.b16 %v2490
      %v2786 = vunpack.c.l.b16 %v2491
      %v2787 = vunpack.c.l.b16 %v2492
      %v2788 = vunpack.c.l.b16 %v2493
      %v2789 = vunpack.c.l.b16 %v2494
      %v2790 = vunpack.c.l.b16 %v2495
      %v2791 = vunpack.c.l.b16 %v2496
      %v2792 = vunpack.c.l.b16 %v2497
      %v2793 = vunpack.c.l.b16 %v2498
      %v2794 = vunpack.c.l.b16 %v2499
      %v2795 = vunpack.c.l.b16 %v2500
      %v2796 = vunpack.c.l.b16 %v2501
      %v2797 = vunpack.c.l.b16 %v2502
      %v2798 = vunpack.c.l.b16 %v2503
      %v2799 = vunpack.c.l.b16 %v2504
      %v2800 = vunpack.c.l.b16 %v2505
      %v2801 = vunpack.c.l.b16 %v2506
      %v2802 = vunpack.c.l.b16 %v2507
      %v2803 = vunpack.c.l.b16 %v2508
      %v2804 = vunpack.c.l.b16 %v2509
      %v2805 = vunpack.c.l.b16 %v2510
      %v2806 = vunpack.c.l.b16 %v2511
      %v2807 = vunpack.c.l.b16 %v2512
      %v2808 = vunpack.c.l.b16 %v2513
      %v2809 = vunpack.c.l.b16 %v2514
      %v2810 = vunpack.c.l.b16 %v2515
      %v2811 = vunpack.c.l.b16 %v2516
      %v2812 = vunpack.c.l.b16 %v2517
      %v2813 = vunpack.c.l.b16 %v2518
      %v2814 = vunpack.c.l.b16 %v2519
      %v2815 = vunpack.c.l.b16 %v2520
      %v2816 = vunpack.c.l.b16 %v2521
      %v2817 = vunpack.c.l.b16 %v2522
      %v2818 = vunpack.c.l.b16 %v2523
      %v2819 = vunpack.c.l.b16 %v2524
      %v2820 = vunpack.c.l.b16 %v2525
      %v2821 = vunpack.c.l.b16 %v2526
      %v2822 = vunpack.c.l.b16 %v2527
      %v2823 = vunpack.c.l.b16 %v2528
      %v2824 = vunpack.c.l.b16 %v2529
      %v2825 = vunpack.c.l.b16 %v2530
      %v2826 = vunpack.c.l.b16 %v2531
      %v2827 = vunpack.c.l.b16 %v2532
      %v2828 = vunpack.c.l.b16 %v2533
      %v2829 = vunpack.c.l.b16 %v2534
      %v2830 = vunpack.c.l.b16 %v2535
      %v2831 = vunpack.c.l.b16 %v2536
      %v2832 = vunpack.c.l.b16 %v2537
      %v2833 = vunpack.c.l.b16 %v2538
      %v2834 = vunpack.c.l.b16 %v2539
      %v2835 = vunpack.c.l.b16 %v2540
      %v2836 = vunpack.c.l.b16 %v2541
      %v2837 = vunpack.c.l.b16 %v2542
      %v2838 = vunpack.c.l.b16 %v2543
      %v2839 = vunpack.c.l.b16 %v2544
      %v2840 = vunpack.c.l.b16 %v2545
      %v2841 = vunpack.c.l.b16 %v2546
      %v2842 = vunpack.c.l.b16 %v2547
      %v2843 = vunpack.c.l.b16 %v2548
      %v2844 = vunpack.c.l.b16 %v2549
      %v2845 = vunpack.c.l.b16 %v2550
      %v2846 = vunpack.c.l.b16 %v2551
      %v2847 = vunpack.c.l.b16 %v2552
      %v2848 = vunpack.c.l.b16 %v2553
      %v2849 = vunpack.c.l.b16 %v2554
      %v2850 = vunpack.c.l.b16 %v2555
      %v2851 = vunpack.c.l.b16 %v2556
      %v2852 = vunpack.c.l.b16 %v2557
      %v2853 = vunpack.c.l.b16 %v2558
      %v2854 = vunpack.c.l.b16 %v2559
      %v2855 = vunpack.c.l.b16 %v2560
      %v2856 = vunpack.c.l.b16 %v2561
      %v2857 = vunpack.c.l.b16 %v2562
      %v2858 = vunpack.c.l.b16 %v2563
      %v2859 = vunpack.c.l.b16 %v2564
      %v2860 = vunpack.c.l.b16 %v2565
      %v2861 = vunpack.c.l.b16 %v2566
      %v2862 = vunpack.c.l.b16 %v2567
      %v2863 = vunpack.c.l.b16 %v2568
      %v2864 = vunpack.c.l.b16 %v2569
      %v2865 = vunpack.c.l.b16 %v2570
      %v2866 = vunpack.c.l.b16 %v2571
      %v2867 = vunpack.c.l.b16 %v2572
      %v2868 = vunpack.c.l.b16 %v2573
      %v2869 = vunpack.c.l.b16 %v2574
      %v2870 = vunpack.c.l.b16 %v2575
      %v2871 = vunpack.c.l.b16 %v2576
      %v2872 = vunpack.c.l.b16 %v2577
      %v2873 = vunpack.c.l.b16 %v2578
      %v2874 = vunpack.c.l.b16 %v2579
      %v2875 = vunpack.c.l.b16 %v2580
      %v2876 = vunpack.c.l.b16 %v2581
      %v2877 = vunpack.c.l.b16 %v2582
      %v2878 = vunpack.c.l.b16 %v2583
      %v2879 = vunpack.c.l.b16 %v2584
      %v2880 = vunpack.c.l.b16 %v2585
      %v2881 = vunpack.c.l.b16 %v2586
      %v2882 = vunpack.c.l.b16 %v2587
      %v2883 = vunpack.c.l.b16 %v2588
      %v2884 = vunpack.c.l.b16 %v2589
      %v2885 = vunpack.c.l.b16 %v2590
      %v2886 = vunpack.c.l.b16 %v2591
      %v2887 = vunpack.c.l.b16 %v2592
      %v2888 = vunpack.c.l.b16 %v2593
      %v2889 = vunpack.c.l.b16 %v2594
      %v2890 = vunpack.c.l.b16 %v2595
      %v2891 = vunpack.c.l.b16 %v2596
      %v2892 = vunpack.c.l.b16 %v2597
      %v2893 = vunpack.c.l.b16 %v2598
      %v2894 = vunpack.c.l.b16 %v2599
      %v2895 = vunpack.c.l.b16 %v2600
      %v2896 = vunpack.c.l.b16 %v2601
      %v2897 = vunpack.c.l.b16 %v2602
      %v2898 = vunpack.c.l.b16 %v2603
      %v2899 = vunpack.c.l.b16 %v2604
      %v2900 = vunpack.c.l.b16 %v2605
      %v2901 = vunpack.c.l.b16 %v2606
      %v2902 = vunpack.c.l.b16 %v2607
      %v2903 = vunpack.c.l.b16 %v2608
      %v2904 = vunpack.c.l.b16 %v2609
      %v2905 = vunpack.c.l.b16 %v2610
      %v2906 = vunpack.c.l.b16 %v2611
      %v2907 = vunpack.c.l.b16 %v2612
      %v2908 = vunpack.c.l.b16 %v2613
      %v2909 = vunpack.c.l.b16 %v2614
      %v2910 = vunpack.c.l.b16 %v2615
      %v2911 = vunpack.c.l.b16 %v2616
      %v2912 = vunpack.c.l.b16 %v2617
      %v2913 = vunpack.c.l.b16 %v2618
      %v2914 = vunpack.c.l.b16 %v2619
      %v2915 = vpack.c.b16 %v2772, %v2771
      %v2916 = vpack.c.b16 %v2774, %v2773
      %v2917 = vpack.c.b16 %v2776, %v2775
      %v2918 = vpack.c.b16 %v2778, %v2777
      %v2919 = vpack.c.b16 %v2780, %v2779
      %v2920 = vpack.c.b16 %v2782, %v2781
      %v2921 = vpack.c.b16 %v2784, %v2783
      %v2922 = vpack.c.b16 %v2786, %v2785
      %v2923 = vpack.c.b16 %v2788, %v2787
      %v2924 = vpack.c.b16 %v2790, %v2789
      %v2925 = vpack.c.b16 %v2792, %v2791
      %v2926 = vpack.c.b16 %v2794, %v2793
      %v2927 = vpack.c.b16 %v2796, %v2795
      %v2928 = vpack.c.b16 %v2798, %v2797
      %v2929 = vpack.c.b16 %v2800, %v2799
      %v2930 = vpack.c.b16 %v2802, %v2801
      %v2931 = vpack.c.b16 %v2804, %v2803
      %v2932 = vpack.c.b16 %v2806, %v2805
      %v2933 = vpack.c.b16 %v2808, %v2807
      %v2934 = vpack.c.b16 %v2810, %v2809
      %v2935 = vpack.c.b16 %v2812, %v2811
      %v2936 = vpack.c.b16 %v2814, %v2813
      %v2937 = vpack.c.b16 %v2816, %v2815
      %v2938 = vpack.c.b16 %v2818, %v2817
      %v2939 = vpack.c.b16 %v2820, %v2819
      %v2940 = vpack.c.b16 %v2822, %v2821
      %v2941 = vpack.c.b16 %v2824, %v2823
      %v2942 = vpack.c.b16 %v2826, %v2825
      %v2943 = vpack.c.b16 %v2828, %v2827
      %v2944 = vpack.c.b16 %v2830, %v2829
      %v2945 = vpack.c.b16 %v2832, %v2831
      %v2946 = vpack.c.b16 %v2834, %v2833
      %v2947 = vpack.c.b16 %v2836, %v2835
      %v2948 = vpack.c.b16 %v2838, %v2837
      %v2949 = vpack.c.b16 %v2840, %v2839
      %v2950 = vpack.c.b16 %v2842, %v2841
      %v2951 = vpack.c.b16 %v2844, %v2843
      %v2952 = vpack.c.b16 %v2846, %v2845
      %v2953 = vpack.c.b16 %v2848, %v2847
      %v2954 = vpack.c.b16 %v2850, %v2849
      %v2955 = vpack.c.b16 %v2852, %v2851
      %v2956 = vpack.c.b16 %v2854, %v2853
      %v2957 = vpack.c.b16 %v2856, %v2855
      %v2958 = vpack.c.b16 %v2858, %v2857
      %v2959 = vpack.c.b16 %v2860, %v2859
      %v2960 = vpack.c.b16 %v2862, %v2861
      %v2961 = vpack.c.b16 %v2864, %v2863
      %v2962 = vpack.c.b16 %v2866, %v2865
      %v2963 = vpack.c.b16 %v2868, %v2867
      %v2964 = vpack.c.b16 %v2870, %v2869
      %v2965 = vpack.c.b16 %v2872, %v2871
      %v2966 = vpack.c.b16 %v2874, %v2873
      %v2967 = vpack.c.b16 %v2876, %v2875
      %v2968 = vpack.c.b16 %v2878, %v2877
      %v2969 = vpack.c.b16 %v2880, %v2879
      %v2970 = vpack.c.b16 %v2882, %v2881
      %v2971 = vpack.c.b16 %v2884, %v2883
      %v2972 = vpack.c.b16 %v2886, %v2885
      %v2973 = vpack.c.b16 %v2888, %v2887
      %v2974 = vpack.c.b16 %v2890, %v2889
      %v2975 = vpack.c.b16 %v2892, %v2891
      %v2976 = vpack.c.b16 %v2894, %v2893
      %v2977 = vpack.c.b16 %v2896, %v2895
      %v2978 = vpack.c.b16 %v2898, %v2897
      %v2979 = vpack.c.b16 %v2900, %v2899
      %v2980 = vpack.c.b16 %v2902, %v2901
      %v2981 = vpack.c.b16 %v2904, %v2903
      %v2982 = vpack.c.b16 %v2906, %v2905
      %v2983 = vpack.c.b16 %v2908, %v2907
      %v2984 = vpack.c.b16 %v2910, %v2909
      %v2985 = vpack.c.b16 %v2912, %v2911
      %v2986 = vpack.c.b16 %v2914, %v2913
      %3059 = vmatprep.subr.bf16.mxu0 0
      %3060 = vmatpush1.bf16.msra.mxu0 %v2915
      %3061 = vmatprep.subr.bf16.mxu0 0
      %3062 = vmatpush1.bf16.msra.mxu0 %v2916
      %3063 = vmatprep.subr.bf16.mxu0 0
      %3064 = vmatpush1.bf16.msra.mxu0 %v2917
      %3065 = vmatprep.subr.bf16.mxu0 0
      %3066 = vmatpush1.bf16.msra.mxu0 %v2918
      %3067 = vmatprep.subr.bf16.mxu0 0
      %3068 = vmatpush1.bf16.msra.mxu0 %v2919
      %3069 = vmatprep.subr.bf16.mxu0 0
      %3070 = vmatpush1.bf16.msra.mxu0 %v2920
      %3071 = vmatprep.subr.bf16.mxu0 0
      %3072 = vmatpush1.bf16.msra.mxu0 %v2921
      %3073 = vmatprep.subr.bf16.mxu0 0
      %3074 = vmatpush1.bf16.msra.mxu0 %v2922
      %3075 = vmatprep.subr.bf16.mxu0 0
      %3076 = vmatpush1.bf16.msra.mxu0 %v2923
      %3077 = vmatprep.subr.bf16.mxu0 0
      %3078 = vmatpush1.bf16.msra.mxu0 %v2924
      %3079 = vmatprep.subr.bf16.mxu0 0
      %3080 = vmatpush1.bf16.msra.mxu0 %v2925
      %3081 = vmatprep.subr.bf16.mxu0 0
      %3082 = vmatpush1.bf16.msra.mxu0 %v2926
      %3083 = vmatprep.subr.bf16.mxu0 0
      %3084 = vmatpush1.bf16.msra.mxu0 %v2927
      %3085 = vmatprep.subr.bf16.mxu0 0
      %3086 = vmatpush1.bf16.msra.mxu0 %v2928
      %3087 = vmatprep.subr.bf16.mxu0 0
      %3088 = vmatpush1.bf16.msra.mxu0 %v2929
      %3089 = vmatprep.subr.bf16.mxu0 0
      %3090 = vmatpush1.bf16.msra.mxu0 %v2930
      %3091 = vmatprep.mubr.bf16.mxu0 %v2437
      %3092 = vmatmul.mubr.bf16.gmra.mrb[0].mxu0 %v2419
      %v3093 = vpop.f32.mrb[0].mxu0
      %v3094 = vadd.f32 %v2625, %v3093
      %v3095 = vpop.f32.mrb[0].mxu0
      %v3096 = vpop.f32.mrb[0].mxu0
      %v3097 = vpop.f32.mrb[0].mxu0
      %3098 = vdwg.mxu0
      %3099 = vmatprep.subr.bf16.mxu0 0
      %3100 = vmatpush1.bf16.msra.mxu0 %v2931
      %3101 = vmatprep.subr.bf16.mxu0 0
      %3102 = vmatpush1.bf16.msra.mxu0 %v2932
      %3103 = vmatprep.subr.bf16.mxu0 0
      %3104 = vmatpush1.bf16.msra.mxu0 %v2933
      %3105 = vmatprep.subr.bf16.mxu0 0
      %3106 = vmatpush1.bf16.msra.mxu0 %v2934
      %3107 = vmatprep.subr.bf16.mxu0 0
      %3108 = vmatpush1.bf16.msra.mxu0 %v2935
      %3109 = vmatprep.subr.bf16.mxu0 0
      %3110 = vmatpush1.bf16.msra.mxu0 %v2936
      %3111 = vmatprep.subr.bf16.mxu0 0
      %3112 = vmatpush1.bf16.msra.mxu0 %v2937
      %3113 = vmatprep.subr.bf16.mxu0 0
      %3114 = vmatpush1.bf16.msra.mxu0 %v2938
      %3115 = vmatprep.subr.bf16.mxu0 0
      %3116 = vmatpush1.bf16.msra.mxu0 %v2939
      %3117 = vmatprep.subr.bf16.mxu0 0
      %3118 = vmatpush1.bf16.msra.mxu0 %v2940
      %3119 = vmatprep.subr.bf16.mxu0 0
      %3120 = vmatpush1.bf16.msra.mxu0 %v2941
      %3121 = vmatprep.subr.bf16.mxu0 0
      %3122 = vmatpush1.bf16.msra.mxu0 %v2942
      %3123 = vmatprep.subr.bf16.mxu0 0
      %3124 = vmatpush1.bf16.msra.mxu0 %v2943
      %3125 = vmatprep.subr.bf16.mxu0 0
      %3126 = vmatpush1.bf16.msra.mxu0 %v2944
      %3127 = vmatprep.subr.bf16.mxu0 0
      %3128 = vmatpush1.bf16.msra.mxu0 %v2945
      %3129 = vmatprep.subr.bf16.mxu0 0
      %3130 = vmatpush1.bf16.msra.mxu0 %v2946
      %3131 = vmatprep.mubr.bf16.mxu0 %v2422
      %3132 = vmatmul.mubr.bf16.gmra.mrb[0].mxu0 %v2442
      %v3133 = vpop.f32.mrb[0].mxu0
      %v3134 = vadd.f32 %v3094, %v3133
      %v3135 = vpop.f32.mrb[0].mxu0
      %v3136 = vpop.f32.mrb[0].mxu0
      %v3137 = vpop.f32.mrb[0].mxu0
      %3138 = vdwg.mxu0
      %3139 = vmatprep.subr.bf16.mxu0 0
      %3140 = vmatpush1.bf16.msra.mxu0 %v2947
      %3141 = vmatprep.subr.bf16.mxu0 0
      %3142 = vmatpush1.bf16.msra.mxu0 %v2948
      %3143 = vmatprep.subr.bf16.mxu0 0
      %3144 = vmatpush1.bf16.msra.mxu0 %v2949
      %3145 = vmatprep.subr.bf16.mxu0 0
      %3146 = vmatpush1.bf16.msra.mxu0 %v2950
      %3147 = vmatprep.subr.bf16.mxu0 0
      %3148 = vmatpush1.bf16.msra.mxu0 %v2951
      %3149 = vmatprep.subr.bf16.mxu0 0
      %3150 = vmatpush1.bf16.msra.mxu0 %v2952
      %3151 = vmatprep.subr.bf16.mxu0 0
      %3152 = vmatpush1.bf16.msra.mxu0 %v2953
      %3153 = vmatprep.subr.bf16.mxu0 0
      %3154 = vmatpush1.bf16.msra.mxu0 %v2954
      %3155 = vmatprep.subr.bf16.mxu0 0
      %3156 = vmatpush1.bf16.msra.mxu0 %v2955
      %3157 = vmatprep.subr.bf16.mxu0 0
      %3158 = vmatpush1.bf16.msra.mxu0 %v2956
      %3159 = vmatprep.subr.bf16.mxu0 0
      %3160 = vmatpush1.bf16.msra.mxu0 %v2957
      %3161 = vmatprep.subr.bf16.mxu0 0
      %3162 = vmatpush1.bf16.msra.mxu0 %v2958
      %3163 = vmatprep.subr.bf16.mxu0 0
      %3164 = vmatpush1.bf16.msra.mxu0 %v2959
      %3165 = vmatprep.subr.bf16.mxu0 0
      %3166 = vmatpush1.bf16.msra.mxu0 %v2960
      %3167 = vmatprep.subr.bf16.mxu0 0
      %3168 = vmatpush1.bf16.msra.mxu0 %v2961
      %3169 = vmatprep.subr.bf16.mxu0 0
      %3170 = vmatpush1.bf16.msra.mxu0 %v2962
      %3171 = vmatprep.mubr.bf16.mxu0 %v2458
      %3172 = vmatmul.mubr.bf16.gmra.mrb[0].mxu0 %v2453
      %v3173 = vpop.f32.mrb[0].mxu0
      %v3174 = vadd.f32 %v3134, %v3173
      %v3175 = vpop.f32.mrb[0].mxu0
      %v3176 = vpop.f32.mrb[0].mxu0
      %v3177 = vpop.f32.mrb[0].mxu0
      %3178 = vdwg.mxu0
      %3179 = vmatprep.subr.bf16.mxu0 0
      %3180 = vmatpush1.bf16.msra.mxu0 %v2963
      %3181 = vmatprep.subr.bf16.mxu0 0
      %3182 = vmatpush1.bf16.msra.mxu0 %v2964
      %3183 = vmatprep.subr.bf16.mxu0 0
      %3184 = vmatpush1.bf16.msra.mxu0 %v2965
      %3185 = vmatprep.subr.bf16.mxu0 0
      %3186 = vmatpush1.bf16.msra.mxu0 %v2966
      %3187 = vmatprep.subr.bf16.mxu0 0
      %3188 = vmatpush1.bf16.msra.mxu0 %v2967
      %3189 = vmatprep.subr.bf16.mxu0 0
      %3190 = vmatpush1.bf16.msra.mxu0 %v2968
      %3191 = vmatprep.subr.bf16.mxu0 0
      %3192 = vmatpush1.bf16.msra.mxu0 %v2969
      %3193 = vmatprep.subr.bf16.mxu0 0
      %3194 = vmatpush1.bf16.msra.mxu0 %v2970
      %3195 = vmatprep.subr.bf16.mxu0 0
      %3196 = vmatpush1.bf16.msra.mxu0 %v2971
      %3197 = vmatprep.subr.bf16.mxu0 0
      %3198 = vmatpush1.bf16.msra.mxu0 %v2972
      %3199 = vmatprep.subr.bf16.mxu0 0
      %3200 = vmatpush1.bf16.msra.mxu0 %v2973
      %3201 = vmatprep.subr.bf16.mxu0 0
      %3202 = vmatpush1.bf16.msra.mxu0 %v2974
      %3203 = vmatprep.subr.bf16.mxu0 0
      %3204 = vmatpush1.bf16.msra.mxu0 %v2975
      %3205 = vmatprep.subr.bf16.mxu0 0
      %3206 = vmatpush1.bf16.msra.mxu0 %v2976
      %3207 = vmatprep.subr.bf16.mxu0 0
      %3208 = vmatpush1.bf16.msra.mxu0 %v2977
      %3209 = vmatprep.subr.bf16.mxu0 0
      %3210 = vmatpush1.bf16.msra.mxu0 %v2978
      %3211 = vmatprep.mubr.bf16.mxu0 %v2469
      %3212 = vmatmul.mubr.bf16.gmra.mrb[0].mxu0 %v2425
      %v3213 = vpop.f32.mrb[0].mxu0
      %v3214 = vadd.f32 %v3174, %v3213
      %v3215 = vpop.f32.mrb[0].mxu0
      %v3216 = vpop.f32.mrb[0].mxu0
      %v3217 = vpop.f32.mrb[0].mxu0
      %3218 = vdwg.mxu0
      %3219 = vmatprep.subr.bf16.mxu0 0
      %3220 = vmatpush1.bf16.msra.mxu0 %v2979
      %3221 = vmatprep.subr.bf16.mxu0 0
      %3222 = vmatpush1.bf16.msra.mxu0 %v2980
      %3223 = vmatprep.subr.bf16.mxu0 0
      %3224 = vmatpush1.bf16.msra.mxu0 %v2981
      %3225 = vmatprep.subr.bf16.mxu0 0
      %3226 = vmatpush1.bf16.msra.mxu0 %v2982
      %3227 = vmatprep.subr.bf16.mxu0 0
      %3228 = vmatpush1.bf16.msra.mxu0 %v2983
      %3229 = vmatprep.subr.bf16.mxu0 0
      %3230 = vmatpush1.bf16.msra.mxu0 %v2984
      %3231 = vmatprep.subr.bf16.mxu0 0
      %3232 = vmatpush1.bf16.msra.mxu0 %v2985
      %3233 = vmatprep.subr.bf16.mxu0 0
      %3234 = vmatpush1.bf16.msra.mxu0 %v2986
      %3235 = vmatprep.subr.bf16.mxu0 0
      %3236 = vmatpush1.bf16.msra.mxu0 0
      %3237 = vmatprep.subr.bf16.mxu0 0
      %3238 = vmatpush1.bf16.msra.mxu0 0
      %3239 = vmatprep.subr.bf16.mxu0 0
      %3240 = vmatpush1.bf16.msra.mxu0 0
      %3241 = vmatprep.subr.bf16.mxu0 0
      %3242 = vmatpush1.bf16.msra.mxu0 0
      %3243 = vmatprep.subr.bf16.mxu0 0
      %3244 = vmatpush1.bf16.msra.mxu0 0
      %3245 = vmatprep.subr.bf16.mxu0 0
      %3246 = vmatpush1.bf16.msra.mxu0 0
      %3247 = vmatprep.subr.bf16.mxu0 0
      %3248 = vmatpush1.bf16.msra.mxu0 0
      %3249 = vmatprep.subr.bf16.mxu0 0
      %3250 = vmatpush1.bf16.msra.mxu0 0
      %3251 = vmatprep.mubr.bf16.mxu0 0
      %3252 = vmatmul.mubr.bf16.gmra.mrb[0].mxu0 %v2474
      %v3253 = vpop.f32.mrb[0].mxu0
      %v3254 = vadd.f32 %v3214, %v3253
      %v3255 = vpop.f32.mrb[0].mxu0
      %v3256 = vpop.f32.mrb[0].mxu0
      %v3257 = vpop.f32.mrb[0].mxu0
      %3258 = vdwg.mxu0
      %v3259 = vmax.f32 %v3254, 0.0
      %v3260 = vpack.c.bf16 %v3259, %v3259
      %v3262 = vrot.slane %v3260, 4
      %3264 = vst [vmem:[#allocation4] sm:$0x30] %v3262
      %v3265 = vld [vmem:[%s708] sm:$0x3]
      %v3266 = vld [vmem:[%s708] sm:$0x7]
      %v3267 = vld [vmem:[%s708] sm:$0x6]
      %v3268 = vld [vmem:[%s726] sm:$0x3]
      %v3269 = vld [vmem:[%s726] sm:$0x7]
      %v3270 = vld [vmem:[%s726] sm:$0x6]
      %s3271 = scalar_lea.vmem [#allocation3], 20
      %v3272 = vld [vmem:[%s3271] sm:$0x3]
      %v3273 = vld [vmem:[%s3271] sm:$0x7]
      %v3274 = vld [vmem:[%s3271] sm:$0x6]
      %v3276 = vunpack.c.l.b16 %v3266
      %v3277 = vpack.c.b16 %v3276, %v3276
      %v3279 = vshrl.u32 %v3277, 16
      %v3281 = vshll.u32 %v3277, 16
      %v3283 = vrot.slane %v3281, 1
      %v3284 = vor.u32 %v3279, %v3283
      %v3287 = vunpack.c.l.b16 %v3267
      %v3288 = vpack.c.b16 %v3287, %v3287
      %v3289 = vrot.slane %v3288, 1
      %v3292 = vunpack.c.l.b16 %v3269
      %v3293 = vpack.c.b16 %v3292, %v3292
      %v3295 = vshrl.u32 %v3293, 16
      %v3297 = vshll.u32 %v3293, 16
      %v3299 = vrot.slane %v3297, 1
      %v3300 = vor.u32 %v3295, %v3299
      %v3303 = vunpack.c.l.b16 %v3270
      %v3304 = vpack.c.b16 %v3303, %v3303
      %v3305 = vrot.slane %v3304, 1
      %v3308 = vunpack.c.l.b16 %v3273
      %v3309 = vpack.c.b16 %v3308, %v3308
      %v3311 = vshrl.u32 %v3309, 16
      %v3313 = vshll.u32 %v3309, 16
      %v3315 = vrot.slane %v3313, 1
      %v3316 = vor.u32 %v3311, %v3315
      %v3319 = vunpack.c.l.b16 %v3274
      %v3320 = vpack.c.b16 %v3319, %v3319
      %v3321 = vrot.slane %v3320, 1
      %v3323 = vld [vmem:[%s3] sm:$0xf]
      %v3324 = vld [vmem:[%s3 + $0x4] sm:$0xf]
      %v3325 = vld [vmem:[%s3 + $0x8] sm:$0xf]
      %v3326 = vld [vmem:[%s3 + $0xc] sm:$0xf]
      %v3327 = vld [vmem:[%s3 + $0x10] sm:$0xf]
      %v3328 = vld [vmem:[%s3 + $0x14] sm:$0xf]
      %v3329 = vld [vmem:[%s3 + $0x18] sm:$0xf]
      %v3330 = vld [vmem:[%s3 + $0x1c] sm:$0xf]
      %v3331 = vld [vmem:[%s3 + $0x20] sm:$0xf]
      %v3332 = vld [vmem:[%s3 + $0x24] sm:$0xf]
      %v3333 = vld [vmem:[%s3 + $0x28] sm:$0xf]
      %v3334 = vld [vmem:[%s3 + $0x2c] sm:$0xf]
      %v3335 = vld [vmem:[%s3 + $0x30] sm:$0xf]
      %v3336 = vld [vmem:[%s3 + $0x34] sm:$0xf]
      %v3337 = vld [vmem:[%s3 + $0x38] sm:$0xf]
      %v3338 = vld [vmem:[%s3 + $0x3c] sm:$0xf]
      %v3339 = vld [vmem:[%s3 + $0x40] sm:$0xf]
      %v3340 = vld [vmem:[%s3 + $0x44] sm:$0xf]
      %v3341 = vld [vmem:[%s3 + $0x48] sm:$0xf]
      %v3342 = vld [vmem:[%s3 + $0x4c] sm:$0xf]
      %v3343 = vld [vmem:[%s3 + $0x50] sm:$0xf]
      %v3344 = vld [vmem:[%s3 + $0x54] sm:$0xf]
      %v3345 = vld [vmem:[%s3 + $0x58] sm:$0xf]
      %v3346 = vld [vmem:[%s3 + $0x5c] sm:$0xf]
      %v3347 = vld [vmem:[%s3 + $0x60] sm:$0xf]
      %v3348 = vld [vmem:[%s3 + $0x64] sm:$0xf]
      %v3349 = vld [vmem:[%s3 + $0x68] sm:$0xf]
      %v3350 = vld [vmem:[%s3 + $0x6c] sm:$0xf]
      %v3351 = vld [vmem:[%s3 + $0x70] sm:$0xf]
      %v3352 = vld [vmem:[%s3 + $0x74] sm:$0xf]
      %v3353 = vld [vmem:[%s3 + $0x78] sm:$0xf]
      %v3354 = vld [vmem:[%s3 + $0x7c] sm:$0xf]
      %v3355 = vld [vmem:[%s3 + $0x80] sm:$0xf]
      %v3356 = vld [vmem:[%s3 + $0x84] sm:$0xf]
      %v3357 = vld [vmem:[%s3 + $0x88] sm:$0xf]
      %v3358 = vld [vmem:[%s3 + $0x8c] sm:$0xf]
      %v3359 = vld [vmem:[%s3 + $0x90] sm:$0xf]
      %v3360 = vld [vmem:[%s3 + $0x94] sm:$0xf]
      %v3361 = vld [vmem:[%s3 + $0x98] sm:$0xf]
      %v3362 = vld [vmem:[%s3 + $0x9c] sm:$0xf]
      %v3363 = vld [vmem:[%s3 + $0xa0] sm:$0xf]
      %v3364 = vld [vmem:[%s3 + $0xa4] sm:$0xf]
      %v3365 = vld [vmem:[%s3 + $0xa8] sm:$0xf]
      %v3366 = vld [vmem:[%s3 + $0xac] sm:$0xf]
      %v3367 = vld [vmem:[%s3 + $0xb0] sm:$0xf]
      %v3368 = vld [vmem:[%s3 + $0xb4] sm:$0xf]
      %v3369 = vld [vmem:[%s3 + $0xb8] sm:$0xf]
      %v3370 = vld [vmem:[%s3 + $0xbc] sm:$0xf]
      %v3371 = vld [vmem:[%s3 + $0xc0] sm:$0xf]
      %v3372 = vld [vmem:[%s3 + $0xc4] sm:$0xf]
      %v3373 = vld [vmem:[%s3 + $0xc8] sm:$0xf]
      %v3374 = vld [vmem:[%s3 + $0xcc] sm:$0xf]
      %v3375 = vld [vmem:[%s3 + $0xd0] sm:$0xf]
      %v3376 = vld [vmem:[%s3 + $0xd4] sm:$0xf]
      %v3377 = vld [vmem:[%s3 + $0xd8] sm:$0xf]
      %v3378 = vld [vmem:[%s3 + $0xdc] sm:$0xf]
      %v3379 = vld [vmem:[%s3 + $0xe0] sm:$0xf]
      %v3380 = vld [vmem:[%s3 + $0xe4] sm:$0xf]
      %v3381 = vld [vmem:[%s3 + $0xe8] sm:$0xf]
      %v3382 = vld [vmem:[%s3 + $0xec] sm:$0xf]
      %v3383 = vld [vmem:[%s3 + $0xf0] sm:$0xf]
      %v3384 = vld [vmem:[%s3 + $0xf4] sm:$0xf]
      %v3385 = vld [vmem:[%s3 + $0xf8] sm:$0xf]
      %v3386 = vld [vmem:[%s3 + $0xfc] sm:$0xf]
      %v3387 = vld [vmem:[%s3 + $0x100] sm:$0xf]
      %v3388 = vld [vmem:[%s3 + $0x104] sm:$0xf]
      %v3389 = vld [vmem:[%s3 + $0x108] sm:$0xf]
      %v3390 = vld [vmem:[%s3 + $0x10c] sm:$0xf]
      %v3391 = vld [vmem:[%s3 + $0x110] sm:$0xf]
      %v3392 = vld [vmem:[%s3 + $0x114] sm:$0xf]
      %v3393 = vld [vmem:[%s3 + $0x118] sm:$0xf]
      %v3394 = vld [vmem:[%s3 + $0x11c] sm:$0xf]
      %v3395 = vld [vmem:[%s3 + $0x120] sm:$0xf]
      %v3396 = vld [vmem:[%s3 + $0x124] sm:$0xf]
      %v3397 = vld [vmem:[%s3 + $0x128] sm:$0xf]
      %v3398 = vld [vmem:[%s3 + $0x12c] sm:$0xf]
      %v3399 = vld [vmem:[%s3 + $0x130] sm:$0xf]
      %v3400 = vld [vmem:[%s3 + $0x134] sm:$0xf]
      %v3401 = vld [vmem:[%s3 + $0x138] sm:$0xf]
      %v3402 = vld [vmem:[%s3 + $0x13c] sm:$0xf]
      %v3403 = vld [vmem:[%s3 + $0x140] sm:$0xf]
      %v3404 = vld [vmem:[%s3 + $0x144] sm:$0xf]
      %v3405 = vld [vmem:[%s3 + $0x148] sm:$0xf]
      %v3406 = vld [vmem:[%s3 + $0x14c] sm:$0xf]
      %v3407 = vld [vmem:[%s3 + $0x150] sm:$0xf]
      %v3408 = vld [vmem:[%s3 + $0x154] sm:$0xf]
      %v3409 = vld [vmem:[%s3 + $0x158] sm:$0xf]
      %v3410 = vld [vmem:[%s3 + $0x15c] sm:$0xf]
      %v3411 = vld [vmem:[%s3 + $0x160] sm:$0xf]
      %v3412 = vld [vmem:[%s3 + $0x164] sm:$0xf]
      %v3413 = vld [vmem:[%s3 + $0x168] sm:$0xf]
      %v3414 = vld [vmem:[%s3 + $0x16c] sm:$0xf]
      %v3415 = vld [vmem:[%s3 + $0x170] sm:$0xf]
      %v3416 = vld [vmem:[%s3 + $0x174] sm:$0xf]
      %v3417 = vld [vmem:[%s3 + $0x178] sm:$0xf]
      %v3418 = vld [vmem:[%s3 + $0x17c] sm:$0xf]
      %v3419 = vld [vmem:[%s3 + $0x180] sm:$0xf]
      %v3420 = vld [vmem:[%s3 + $0x184] sm:$0xf]
      %v3421 = vld [vmem:[%s3 + $0x188] sm:$0xf]
      %v3422 = vld [vmem:[%s3 + $0x18c] sm:$0xf]
      %v3423 = vld [vmem:[%s3 + $0x190] sm:$0xf]
      %v3424 = vld [vmem:[%s3 + $0x194] sm:$0xf]
      %v3425 = vld [vmem:[%s3 + $0x198] sm:$0xf]
      %v3426 = vld [vmem:[%s3 + $0x19c] sm:$0xf]
      %v3427 = vld [vmem:[%s3 + $0x1a0] sm:$0xf]
      %v3428 = vld [vmem:[%s3 + $0x1a4] sm:$0xf]
      %v3429 = vld [vmem:[%s3 + $0x1a8] sm:$0xf]
      %v3430 = vld [vmem:[%s3 + $0x1ac] sm:$0xf]
      %v3431 = vld [vmem:[%s3 + $0x1b0] sm:$0xf]
      %v3432 = vld [vmem:[%s3 + $0x1b4] sm:$0xf]
      %v3433 = vld [vmem:[%s3 + $0x1b8] sm:$0xf]
      %v3434 = vld [vmem:[%s3 + $0x1bc] sm:$0xf]
      %v3435 = vld [vmem:[%s3 + $0x1c0] sm:$0xf]
      %v3436 = vld [vmem:[%s3 + $0x1c4] sm:$0xf]
      %v3437 = vld [vmem:[%s3 + $0x1c8] sm:$0xf]
      %v3438 = vld [vmem:[%s3 + $0x1cc] sm:$0xf]
      %v3439 = vld [vmem:[%s3 + $0x1d0] sm:$0xf]
      %v3440 = vld [vmem:[%s3 + $0x1d4] sm:$0xf]
      %v3441 = vld [vmem:[%s3 + $0x1d8] sm:$0xf]
      %v3442 = vld [vmem:[%s3 + $0x1dc] sm:$0xf]
      %v3443 = vld [vmem:[%s3 + $0x1e0] sm:$0xf]
      %v3444 = vld [vmem:[%s3 + $0x1e4] sm:$0xf]
      %v3445 = vld [vmem:[%s3 + $0x1e8] sm:$0xf]
      %v3446 = vld [vmem:[%s3 + $0x1ec] sm:$0xf]
      %v3447 = vld [vmem:[%s3 + $0x1f0] sm:$0xf]
      %v3448 = vld [vmem:[%s3 + $0x1f4] sm:$0xf]
      %v3449 = vld [vmem:[%s3 + $0x1f8] sm:$0xf]
      %v3450 = vld [vmem:[%s3 + $0x1fc] sm:$0xf]
      %v3451 = vld [vmem:[%s3 + $0x200] sm:$0xf]
      %v3452 = vld [vmem:[%s3 + $0x204] sm:$0xf]
      %v3453 = vld [vmem:[%s3 + $0x208] sm:$0xf]
      %v3454 = vld [vmem:[%s3 + $0x20c] sm:$0xf]
      %v3455 = vld [vmem:[%s3 + $0x210] sm:$0xf]
      %v3456 = vld [vmem:[%s3 + $0x214] sm:$0xf]
      %v3457 = vld [vmem:[%s3 + $0x218] sm:$0xf]
      %v3458 = vld [vmem:[%s3 + $0x21c] sm:$0xf]
      %v3459 = vld [vmem:[%s3 + $0x220] sm:$0xf]
      %v3460 = vld [vmem:[%s3 + $0x224] sm:$0xf]
      %v3461 = vld [vmem:[%s3 + $0x228] sm:$0xf]
      %v3462 = vld [vmem:[%s3 + $0x22c] sm:$0xf]
      %v3463 = vld [vmem:[%s3 + $0x230] sm:$0xf]
      %v3464 = vld [vmem:[%s3 + $0x234] sm:$0xf]
      %v3465 = vld [vmem:[%s3 + $0x238] sm:$0xf]
      %v3466 = vld [vmem:[%s3 + $0x23c] sm:$0xf]
      %v3467 = vld [vmem:[%s4] sm:$0x1]
      %v3469 = vlaneseq
      %v3470 = vshrl.u32 %v3469, 7
      %v3471 = vsub.s32 0, %v3470
      %v3472 = vrot.slane %v3467, %v3471
      %v3618 = vunpack.c.l.b16 %v3323
      %v3619 = vunpack.c.l.b16 %v3324
      %v3620 = vunpack.c.l.b16 %v3325
      %v3621 = vunpack.c.l.b16 %v3326
      %v3622 = vunpack.c.l.b16 %v3327
      %v3623 = vunpack.c.l.b16 %v3328
      %v3624 = vunpack.c.l.b16 %v3329
      %v3625 = vunpack.c.l.b16 %v3330
      %v3626 = vunpack.c.l.b16 %v3331
      %v3627 = vunpack.c.l.b16 %v3332
      %v3628 = vunpack.c.l.b16 %v3333
      %v3629 = vunpack.c.l.b16 %v3334
      %v3630 = vunpack.c.l.b16 %v3335
      %v3631 = vunpack.c.l.b16 %v3336
      %v3632 = vunpack.c.l.b16 %v3337
      %v3633 = vunpack.c.l.b16 %v3338
      %v3634 = vunpack.c.l.b16 %v3339
      %v3635 = vunpack.c.l.b16 %v3340
      %v3636 = vunpack.c.l.b16 %v3341
      %v3637 = vunpack.c.l.b16 %v3342
      %v3638 = vunpack.c.l.b16 %v3343
      %v3639 = vunpack.c.l.b16 %v3344
      %v3640 = vunpack.c.l.b16 %v3345
      %v3641 = vunpack.c.l.b16 %v3346
      %v3642 = vunpack.c.l.b16 %v3347
      %v3643 = vunpack.c.l.b16 %v3348
      %v3644 = vunpack.c.l.b16 %v3349
      %v3645 = vunpack.c.l.b16 %v3350
      %v3646 = vunpack.c.l.b16 %v3351
      %v3647 = vunpack.c.l.b16 %v3352
      %v3648 = vunpack.c.l.b16 %v3353
      %v3649 = vunpack.c.l.b16 %v3354
      %v3650 = vunpack.c.l.b16 %v3355
      %v3651 = vunpack.c.l.b16 %v3356
      %v3652 = vunpack.c.l.b16 %v3357
      %v3653 = vunpack.c.l.b16 %v3358
      %v3654 = vunpack.c.l.b16 %v3359
      %v3655 = vunpack.c.l.b16 %v3360
      %v3656 = vunpack.c.l.b16 %v3361
      %v3657 = vunpack.c.l.b16 %v3362
      %v3658 = vunpack.c.l.b16 %v3363
      %v3659 = vunpack.c.l.b16 %v3364
      %v3660 = vunpack.c.l.b16 %v3365
      %v3661 = vunpack.c.l.b16 %v3366
      %v3662 = vunpack.c.l.b16 %v3367
      %v3663 = vunpack.c.l.b16 %v3368
      %v3664 = vunpack.c.l.b16 %v3369
      %v3665 = vunpack.c.l.b16 %v3370
      %v3666 = vunpack.c.l.b16 %v3371
      %v3667 = vunpack.c.l.b16 %v3372
      %v3668 = vunpack.c.l.b16 %v3373
      %v3669 = vunpack.c.l.b16 %v3374
      %v3670 = vunpack.c.l.b16 %v3375
      %v3671 = vunpack.c.l.b16 %v3376
      %v3672 = vunpack.c.l.b16 %v3377
      %v3673 = vunpack.c.l.b16 %v3378
      %v3674 = vunpack.c.l.b16 %v3379
      %v3675 = vunpack.c.l.b16 %v3380
      %v3676 = vunpack.c.l.b16 %v3381
      %v3677 = vunpack.c.l.b16 %v3382
      %v3678 = vunpack.c.l.b16 %v3383
      %v3679 = vunpack.c.l.b16 %v3384
      %v3680 = vunpack.c.l.b16 %v3385
      %v3681 = vunpack.c.l.b16 %v3386
      %v3682 = vunpack.c.l.b16 %v3387
      %v3683 = vunpack.c.l.b16 %v3388
      %v3684 = vunpack.c.l.b16 %v3389
      %v3685 = vunpack.c.l.b16 %v3390
      %v3686 = vunpack.c.l.b16 %v3391
      %v3687 = vunpack.c.l.b16 %v3392
      %v3688 = vunpack.c.l.b16 %v3393
      %v3689 = vunpack.c.l.b16 %v3394
      %v3690 = vunpack.c.l.b16 %v3395
      %v3691 = vunpack.c.l.b16 %v3396
      %v3692 = vunpack.c.l.b16 %v3397
      %v3693 = vunpack.c.l.b16 %v3398
      %v3694 = vunpack.c.l.b16 %v3399
      %v3695 = vunpack.c.l.b16 %v3400
      %v3696 = vunpack.c.l.b16 %v3401
      %v3697 = vunpack.c.l.b16 %v3402
      %v3698 = vunpack.c.l.b16 %v3403
      %v3699 = vunpack.c.l.b16 %v3404
      %v3700 = vunpack.c.l.b16 %v3405
      %v3701 = vunpack.c.l.b16 %v3406
      %v3702 = vunpack.c.l.b16 %v3407
      %v3703 = vunpack.c.l.b16 %v3408
      %v3704 = vunpack.c.l.b16 %v3409
      %v3705 = vunpack.c.l.b16 %v3410
      %v3706 = vunpack.c.l.b16 %v3411
      %v3707 = vunpack.c.l.b16 %v3412
      %v3708 = vunpack.c.l.b16 %v3413
      %v3709 = vunpack.c.l.b16 %v3414
      %v3710 = vunpack.c.l.b16 %v3415
      %v3711 = vunpack.c.l.b16 %v3416
      %v3712 = vunpack.c.l.b16 %v3417
      %v3713 = vunpack.c.l.b16 %v3418
      %v3714 = vunpack.c.l.b16 %v3419
      %v3715 = vunpack.c.l.b16 %v3420
      %v3716 = vunpack.c.l.b16 %v3421
      %v3717 = vunpack.c.l.b16 %v3422
      %v3718 = vunpack.c.l.b16 %v3423
      %v3719 = vunpack.c.l.b16 %v3424
      %v3720 = vunpack.c.l.b16 %v3425
      %v3721 = vunpack.c.l.b16 %v3426
      %v3722 = vunpack.c.l.b16 %v3427
      %v3723 = vunpack.c.l.b16 %v3428
      %v3724 = vunpack.c.l.b16 %v3429
      %v3725 = vunpack.c.l.b16 %v3430
      %v3726 = vunpack.c.l.b16 %v3431
      %v3727 = vunpack.c.l.b16 %v3432
      %v3728 = vunpack.c.l.b16 %v3433
      %v3729 = vunpack.c.l.b16 %v3434
      %v3730 = vunpack.c.l.b16 %v3435
      %v3731 = vunpack.c.l.b16 %v3436
      %v3732 = vunpack.c.l.b16 %v3437
      %v3733 = vunpack.c.l.b16 %v3438
      %v3734 = vunpack.c.l.b16 %v3439
      %v3735 = vunpack.c.l.b16 %v3440
      %v3736 = vunpack.c.l.b16 %v3441
      %v3737 = vunpack.c.l.b16 %v3442
      %v3738 = vunpack.c.l.b16 %v3443
      %v3739 = vunpack.c.l.b16 %v3444
      %v3740 = vunpack.c.l.b16 %v3445
      %v3741 = vunpack.c.l.b16 %v3446
      %v3742 = vunpack.c.l.b16 %v3447
      %v3743 = vunpack.c.l.b16 %v3448
      %v3744 = vunpack.c.l.b16 %v3449
      %v3745 = vunpack.c.l.b16 %v3450
      %v3746 = vunpack.c.l.b16 %v3451
      %v3747 = vunpack.c.l.b16 %v3452
      %v3748 = vunpack.c.l.b16 %v3453
      %v3749 = vunpack.c.l.b16 %v3454
      %v3750 = vunpack.c.l.b16 %v3455
      %v3751 = vunpack.c.l.b16 %v3456
      %v3752 = vunpack.c.l.b16 %v3457
      %v3753 = vunpack.c.l.b16 %v3458
      %v3754 = vunpack.c.l.b16 %v3459
      %v3755 = vunpack.c.l.b16 %v3460
      %v3756 = vunpack.c.l.b16 %v3461
      %v3757 = vunpack.c.l.b16 %v3462
      %v3758 = vunpack.c.l.b16 %v3463
      %v3759 = vunpack.c.l.b16 %v3464
      %v3760 = vunpack.c.l.b16 %v3465
      %v3761 = vunpack.c.l.b16 %v3466
      %v3762 = vpack.c.b16 %v3619, %v3618
      %v3763 = vpack.c.b16 %v3621, %v3620
      %v3764 = vpack.c.b16 %v3623, %v3622
      %v3765 = vpack.c.b16 %v3625, %v3624
      %v3766 = vpack.c.b16 %v3627, %v3626
      %v3767 = vpack.c.b16 %v3629, %v3628
      %v3768 = vpack.c.b16 %v3631, %v3630
      %v3769 = vpack.c.b16 %v3633, %v3632
      %v3770 = vpack.c.b16 %v3635, %v3634
      %v3771 = vpack.c.b16 %v3637, %v3636
      %v3772 = vpack.c.b16 %v3639, %v3638
      %v3773 = vpack.c.b16 %v3641, %v3640
      %v3774 = vpack.c.b16 %v3643, %v3642
      %v3775 = vpack.c.b16 %v3645, %v3644
      %v3776 = vpack.c.b16 %v3647, %v3646
      %v3777 = vpack.c.b16 %v3649, %v3648
      %v3778 = vpack.c.b16 %v3651, %v3650
      %v3779 = vpack.c.b16 %v3653, %v3652
      %v3780 = vpack.c.b16 %v3655, %v3654
      %v3781 = vpack.c.b16 %v3657, %v3656
      %v3782 = vpack.c.b16 %v3659, %v3658
      %v3783 = vpack.c.b16 %v3661, %v3660
      %v3784 = vpack.c.b16 %v3663, %v3662
      %v3785 = vpack.c.b16 %v3665, %v3664
      %v3786 = vpack.c.b16 %v3667, %v3666
      %v3787 = vpack.c.b16 %v3669, %v3668
      %v3788 = vpack.c.b16 %v3671, %v3670
      %v3789 = vpack.c.b16 %v3673, %v3672
      %v3790 = vpack.c.b16 %v3675, %v3674
      %v3791 = vpack.c.b16 %v3677, %v3676
      %v3792 = vpack.c.b16 %v3679, %v3678
      %v3793 = vpack.c.b16 %v3681, %v3680
      %v3794 = vpack.c.b16 %v3683, %v3682
      %v3795 = vpack.c.b16 %v3685, %v3684
      %v3796 = vpack.c.b16 %v3687, %v3686
      %v3797 = vpack.c.b16 %v3689, %v3688
      %v3798 = vpack.c.b16 %v3691, %v3690
      %v3799 = vpack.c.b16 %v3693, %v3692
      %v3800 = vpack.c.b16 %v3695, %v3694
      %v3801 = vpack.c.b16 %v3697, %v3696
      %v3802 = vpack.c.b16 %v3699, %v3698
      %v3803 = vpack.c.b16 %v3701, %v3700
      %v3804 = vpack.c.b16 %v3703, %v3702
      %v3805 = vpack.c.b16 %v3705, %v3704
      %v3806 = vpack.c.b16 %v3707, %v3706
      %v3807 = vpack.c.b16 %v3709, %v3708
      %v3808 = vpack.c.b16 %v3711, %v3710
      %v3809 = vpack.c.b16 %v3713, %v3712
      %v3810 = vpack.c.b16 %v3715, %v3714
      %v3811 = vpack.c.b16 %v3717, %v3716
      %v3812 = vpack.c.b16 %v3719, %v3718
      %v3813 = vpack.c.b16 %v3721, %v3720
      %v3814 = vpack.c.b16 %v3723, %v3722
      %v3815 = vpack.c.b16 %v3725, %v3724
      %v3816 = vpack.c.b16 %v3727, %v3726
      %v3817 = vpack.c.b16 %v3729, %v3728
      %v3818 = vpack.c.b16 %v3731, %v3730
      %v3819 = vpack.c.b16 %v3733, %v3732
      %v3820 = vpack.c.b16 %v3735, %v3734
      %v3821 = vpack.c.b16 %v3737, %v3736
      %v3822 = vpack.c.b16 %v3739, %v3738
      %v3823 = vpack.c.b16 %v3741, %v3740
      %v3824 = vpack.c.b16 %v3743, %v3742
      %v3825 = vpack.c.b16 %v3745, %v3744
      %v3826 = vpack.c.b16 %v3747, %v3746
      %v3827 = vpack.c.b16 %v3749, %v3748
      %v3828 = vpack.c.b16 %v3751, %v3750
      %v3829 = vpack.c.b16 %v3753, %v3752
      %v3830 = vpack.c.b16 %v3755, %v3754
      %v3831 = vpack.c.b16 %v3757, %v3756
      %v3832 = vpack.c.b16 %v3759, %v3758
      %v3833 = vpack.c.b16 %v3761, %v3760
      %3906 = vmatprep.subr.bf16.mxu0 0
      %3907 = vmatpush1.bf16.msra.mxu0 %v3762
      %3908 = vmatprep.subr.bf16.mxu0 0
      %3909 = vmatpush1.bf16.msra.mxu0 %v3763
      %3910 = vmatprep.subr.bf16.mxu0 0
      %3911 = vmatpush1.bf16.msra.mxu0 %v3764
      %3912 = vmatprep.subr.bf16.mxu0 0
      %3913 = vmatpush1.bf16.msra.mxu0 %v3765
      %3914 = vmatprep.subr.bf16.mxu0 0
      %3915 = vmatpush1.bf16.msra.mxu0 %v3766
      %3916 = vmatprep.subr.bf16.mxu0 0
      %3917 = vmatpush1.bf16.msra.mxu0 %v3767
      %3918 = vmatprep.subr.bf16.mxu0 0
      %3919 = vmatpush1.bf16.msra.mxu0 %v3768
      %3920 = vmatprep.subr.bf16.mxu0 0
      %3921 = vmatpush1.bf16.msra.mxu0 %v3769
      %3922 = vmatprep.subr.bf16.mxu0 0
      %3923 = vmatpush1.bf16.msra.mxu0 %v3770
      %3924 = vmatprep.subr.bf16.mxu0 0
      %3925 = vmatpush1.bf16.msra.mxu0 %v3771
      %3926 = vmatprep.subr.bf16.mxu0 0
      %3927 = vmatpush1.bf16.msra.mxu0 %v3772
      %3928 = vmatprep.subr.bf16.mxu0 0
      %3929 = vmatpush1.bf16.msra.mxu0 %v3773
      %3930 = vmatprep.subr.bf16.mxu0 0
      %3931 = vmatpush1.bf16.msra.mxu0 %v3774
      %3932 = vmatprep.subr.bf16.mxu0 0
      %3933 = vmatpush1.bf16.msra.mxu0 %v3775
      %3934 = vmatprep.subr.bf16.mxu0 0
      %3935 = vmatpush1.bf16.msra.mxu0 %v3776
      %3936 = vmatprep.subr.bf16.mxu0 0
      %3937 = vmatpush1.bf16.msra.mxu0 %v3777
      %3938 = vmatprep.mubr.bf16.mxu0 %v3284
      %3939 = vmatmul.mubr.bf16.gmra.mrb[0].mxu0 %v3265
      %v3940 = vpop.f32.mrb[0].mxu0
      %v3941 = vadd.f32 %v3472, %v3940
      %v3942 = vpop.f32.mrb[0].mxu0
      %v3943 = vpop.f32.mrb[0].mxu0
      %v3944 = vpop.f32.mrb[0].mxu0
      %3945 = vdwg.mxu0
      %3946 = vmatprep.subr.bf16.mxu0 0
      %3947 = vmatpush1.bf16.msra.mxu0 %v3778
      %3948 = vmatprep.subr.bf16.mxu0 0
      %3949 = vmatpush1.bf16.msra.mxu0 %v3779
      %3950 = vmatprep.subr.bf16.mxu0 0
      %3951 = vmatpush1.bf16.msra.mxu0 %v3780
      %3952 = vmatprep.subr.bf16.mxu0 0
      %3953 = vmatpush1.bf16.msra.mxu0 %v3781
      %3954 = vmatprep.subr.bf16.mxu0 0
      %3955 = vmatpush1.bf16.msra.mxu0 %v3782
      %3956 = vmatprep.subr.bf16.mxu0 0
      %3957 = vmatpush1.bf16.msra.mxu0 %v3783
      %3958 = vmatprep.subr.bf16.mxu0 0
      %3959 = vmatpush1.bf16.msra.mxu0 %v3784
      %3960 = vmatprep.subr.bf16.mxu0 0
      %3961 = vmatpush1.bf16.msra.mxu0 %v3785
      %3962 = vmatprep.subr.bf16.mxu0 0
      %3963 = vmatpush1.bf16.msra.mxu0 %v3786
      %3964 = vmatprep.subr.bf16.mxu0 0
      %3965 = vmatpush1.bf16.msra.mxu0 %v3787
      %3966 = vmatprep.subr.bf16.mxu0 0
      %3967 = vmatpush1.bf16.msra.mxu0 %v3788
      %3968 = vmatprep.subr.bf16.mxu0 0
      %3969 = vmatpush1.bf16.msra.mxu0 %v3789
      %3970 = vmatprep.subr.bf16.mxu0 0
      %3971 = vmatpush1.bf16.msra.mxu0 %v3790
      %3972 = vmatprep.subr.bf16.mxu0 0
      %3973 = vmatpush1.bf16.msra.mxu0 %v3791
      %3974 = vmatprep.subr.bf16.mxu0 0
      %3975 = vmatpush1.bf16.msra.mxu0 %v3792
      %3976 = vmatprep.subr.bf16.mxu0 0
      %3977 = vmatpush1.bf16.msra.mxu0 %v3793
      %3978 = vmatprep.mubr.bf16.mxu0 %v3268
      %3979 = vmatmul.mubr.bf16.gmra.mrb[0].mxu0 %v3289
      %v3980 = vpop.f32.mrb[0].mxu0
      %v3981 = vadd.f32 %v3941, %v3980
      %v3982 = vpop.f32.mrb[0].mxu0
      %v3983 = vpop.f32.mrb[0].mxu0
      %v3984 = vpop.f32.mrb[0].mxu0
      %3985 = vdwg.mxu0
      %3986 = vmatprep.subr.bf16.mxu0 0
      %3987 = vmatpush1.bf16.msra.mxu0 %v3794
      %3988 = vmatprep.subr.bf16.mxu0 0
      %3989 = vmatpush1.bf16.msra.mxu0 %v3795
      %3990 = vmatprep.subr.bf16.mxu0 0
      %3991 = vmatpush1.bf16.msra.mxu0 %v3796
      %3992 = vmatprep.subr.bf16.mxu0 0
      %3993 = vmatpush1.bf16.msra.mxu0 %v3797
      %3994 = vmatprep.subr.bf16.mxu0 0
      %3995 = vmatpush1.bf16.msra.mxu0 %v3798
      %3996 = vmatprep.subr.bf16.mxu0 0
      %3997 = vmatpush1.bf16.msra.mxu0 %v3799
      %3998 = vmatprep.subr.bf16.mxu0 0
      %3999 = vmatpush1.bf16.msra.mxu0 %v3800
      %4000 = vmatprep.subr.bf16.mxu0 0
      %4001 = vmatpush1.bf16.msra.mxu0 %v3801
      %4002 = vmatprep.subr.bf16.mxu0 0
      %4003 = vmatpush1.bf16.msra.mxu0 %v3802
      %4004 = vmatprep.subr.bf16.mxu0 0
      %4005 = vmatpush1.bf16.msra.mxu0 %v3803
      %4006 = vmatprep.subr.bf16.mxu0 0
      %4007 = vmatpush1.bf16.msra.mxu0 %v3804
      %4008 = vmatprep.subr.bf16.mxu0 0
      %4009 = vmatpush1.bf16.msra.mxu0 %v3805
      %4010 = vmatprep.subr.bf16.mxu0 0
      %4011 = vmatpush1.bf16.msra.mxu0 %v3806
      %4012 = vmatprep.subr.bf16.mxu0 0
      %4013 = vmatpush1.bf16.msra.mxu0 %v3807
      %4014 = vmatprep.subr.bf16.mxu0 0
      %4015 = vmatpush1.bf16.msra.mxu0 %v3808
      %4016 = vmatprep.subr.bf16.mxu0 0
      %4017 = vmatpush1.bf16.msra.mxu0 %v3809
      %4018 = vmatprep.mubr.bf16.mxu0 %v3305
      %4019 = vmatmul.mubr.bf16.gmra.mrb[0].mxu0 %v3300
      %v4020 = vpop.f32.mrb[0].mxu0
      %v4021 = vadd.f32 %v3981, %v4020
      %v4022 = vpop.f32.mrb[0].mxu0
      %v4023 = vpop.f32.mrb[0].mxu0
      %v4024 = vpop.f32.mrb[0].mxu0
      %4025 = vdwg.mxu0
      %4026 = vmatprep.subr.bf16.mxu0 0
      %4027 = vmatpush1.bf16.msra.mxu0 %v3810
      %4028 = vmatprep.subr.bf16.mxu0 0
      %4029 = vmatpush1.bf16.msra.mxu0 %v3811
      %4030 = vmatprep.subr.bf16.mxu0 0
      %4031 = vmatpush1.bf16.msra.mxu0 %v3812
      %4032 = vmatprep.subr.bf16.mxu0 0
      %4033 = vmatpush1.bf16.msra.mxu0 %v3813
      %4034 = vmatprep.subr.bf16.mxu0 0
      %4035 = vmatpush1.bf16.msra.mxu0 %v3814
      %4036 = vmatprep.subr.bf16.mxu0 0
      %4037 = vmatpush1.bf16.msra.mxu0 %v3815
      %4038 = vmatprep.subr.bf16.mxu0 0
      %4039 = vmatpush1.bf16.msra.mxu0 %v3816
      %4040 = vmatprep.subr.bf16.mxu0 0
      %4041 = vmatpush1.bf16.msra.mxu0 %v3817
      %4042 = vmatprep.subr.bf16.mxu0 0
      %4043 = vmatpush1.bf16.msra.mxu0 %v3818
      %4044 = vmatprep.subr.bf16.mxu0 0
      %4045 = vmatpush1.bf16.msra.mxu0 %v3819
      %4046 = vmatprep.subr.bf16.mxu0 0
      %4047 = vmatpush1.bf16.msra.mxu0 %v3820
      %4048 = vmatprep.subr.bf16.mxu0 0
      %4049 = vmatpush1.bf16.msra.mxu0 %v3821
      %4050 = vmatprep.subr.bf16.mxu0 0
      %4051 = vmatpush1.bf16.msra.mxu0 %v3822
      %4052 = vmatprep.subr.bf16.mxu0 0
      %4053 = vmatpush1.bf16.msra.mxu0 %v3823
      %4054 = vmatprep.subr.bf16.mxu0 0
      %4055 = vmatpush1.bf16.msra.mxu0 %v3824
      %4056 = vmatprep.subr.bf16.mxu0 0
      %4057 = vmatpush1.bf16.msra.mxu0 %v3825
      %4058 = vmatprep.mubr.bf16.mxu0 %v3316
      %4059 = vmatmul.mubr.bf16.gmra.mrb[0].mxu0 %v3272
      %v4060 = vpop.f32.mrb[0].mxu0
      %v4061 = vadd.f32 %v4021, %v4060
      %v4062 = vpop.f32.mrb[0].mxu0
      %v4063 = vpop.f32.mrb[0].mxu0
      %v4064 = vpop.f32.mrb[0].mxu0
      %4065 = vdwg.mxu0
      %4066 = vmatprep.subr.bf16.mxu0 0
      %4067 = vmatpush1.bf16.msra.mxu0 %v3826
      %4068 = vmatprep.subr.bf16.mxu0 0
      %4069 = vmatpush1.bf16.msra.mxu0 %v3827
      %4070 = vmatprep.subr.bf16.mxu0 0
      %4071 = vmatpush1.bf16.msra.mxu0 %v3828
      %4072 = vmatprep.subr.bf16.mxu0 0
      %4073 = vmatpush1.bf16.msra.mxu0 %v3829
      %4074 = vmatprep.subr.bf16.mxu0 0
      %4075 = vmatpush1.bf16.msra.mxu0 %v3830
      %4076 = vmatprep.subr.bf16.mxu0 0
      %4077 = vmatpush1.bf16.msra.mxu0 %v3831
      %4078 = vmatprep.subr.bf16.mxu0 0
      %4079 = vmatpush1.bf16.msra.mxu0 %v3832
      %4080 = vmatprep.subr.bf16.mxu0 0
      %4081 = vmatpush1.bf16.msra.mxu0 %v3833
      %4082 = vmatprep.subr.bf16.mxu0 0
      %4083 = vmatpush1.bf16.msra.mxu0 0
      %4084 = vmatprep.subr.bf16.mxu0 0
      %4085 = vmatpush1.bf16.msra.mxu0 0
      %4086 = vmatprep.subr.bf16.mxu0 0
      %4087 = vmatpush1.bf16.msra.mxu0 0
      %4088 = vmatprep.subr.bf16.mxu0 0
      %4089 = vmatpush1.bf16.msra.mxu0 0
      %4090 = vmatprep.subr.bf16.mxu0 0
      %4091 = vmatpush1.bf16.msra.mxu0 0
      %4092 = vmatprep.subr.bf16.mxu0 0
      %4093 = vmatpush1.bf16.msra.mxu0 0
      %4094 = vmatprep.subr.bf16.mxu0 0
      %4095 = vmatpush1.bf16.msra.mxu0 0
      %4096 = vmatprep.subr.bf16.mxu0 0
      %4097 = vmatpush1.bf16.msra.mxu0 0
      %4098 = vmatprep.mubr.bf16.mxu0 0
      %4099 = vmatmul.mubr.bf16.gmra.mrb[0].mxu0 %v3321
      %v4100 = vpop.f32.mrb[0].mxu0
      %v4101 = vadd.f32 %v4061, %v4100
      %v4102 = vpop.f32.mrb[0].mxu0
      %v4103 = vpop.f32.mrb[0].mxu0
      %v4104 = vpop.f32.mrb[0].mxu0
      %4105 = vdwg.mxu0
      %v4106 = vmax.f32 %v4101, 0.0
      %v4107 = vpack.c.bf16 %v4106, %v4106
      %v4109 = vrot.slane %v4107, 2
      %4111 = vst [vmem:[#allocation4] sm:$0xc0] %v4109
      %v4112 = vld [vmem:[#allocation4] sm:$0xff]
      %v4113 = vld [vmem:[%s5] sm:$0xff]
      %v4114 = vld [vmem:[%s5 + $0x8] sm:$0xff]
      %v4115 = vld [vmem:[%s5 + $0x10] sm:$0xff]
      %v4116 = vld [vmem:[%s5 + $0x18] sm:$0xff]
      %v4117 = vld [vmem:[%s5 + $0x20] sm:$0xff]
      %v4118 = vld [vmem:[%s5 + $0x28] sm:$0xff]
      %v4119 = vld [vmem:[%s5 + $0x30] sm:$0xff]
      %v4120 = vld [vmem:[%s5 + $0x38] sm:$0xff]
      %v4121 = vld [vmem:[%s5 + $0x40] sm:$0xff]
      %v4122 = vld [vmem:[%s5 + $0x48] sm:$0xff]
      %v4123 = vld [vmem:[%s5 + $0x50] sm:$0xff]
      %v4124 = vld [vmem:[%s5 + $0x58] sm:$0xff]
      %v4125 = vld [vmem:[%s5 + $0x60] sm:$0xff]
      %v4126 = vld [vmem:[%s5 + $0x68] sm:$0xff]
      %v4127 = vld [vmem:[%s5 + $0x70] sm:$0xff]
      %v4128 = vld [vmem:[%s5 + $0x78] sm:$0xff]
      %v4129 = vld [vmem:[%s5 + $0x80] sm:$0xff]
      %v4130 = vld [vmem:[%s5 + $0x88] sm:$0xff]
      %v4131 = vld [vmem:[%s5 + $0x90] sm:$0xff]
      %v4132 = vld [vmem:[%s5 + $0x98] sm:$0xff]
      %v4133 = vld [vmem:[%s5 + $0xa0] sm:$0xff]
      %v4134 = vld [vmem:[%s5 + $0xa8] sm:$0xff]
      %v4135 = vld [vmem:[%s5 + $0xb0] sm:$0xff]
      %v4136 = vld [vmem:[%s5 + $0xb8] sm:$0xff]
      %v4137 = vld [vmem:[%s5 + $0xc0] sm:$0xff]
      %v4138 = vld [vmem:[%s5 + $0xc8] sm:$0xff]
      %v4139 = vld [vmem:[%s5 + $0xd0] sm:$0xff]
      %v4140 = vld [vmem:[%s5 + $0xd8] sm:$0xff]
      %v4141 = vld [vmem:[%s5 + $0xe0] sm:$0xff]
      %v4142 = vld [vmem:[%s5 + $0xe8] sm:$0xff]
      %v4143 = vld [vmem:[%s5 + $0xf0] sm:$0xff]
      %v4144 = vld [vmem:[%s5 + $0xf8] sm:$0xff]
      %v4145 = vld [vmem:[%s6] sm:$0xf]
      %v4147 = vlaneseq
      %v4148 = vshrl.u32 %v4147, 7
      %v4149 = vsub.s32 0, %v4148
      %v4150 = vrot.slane %v4145, %v4149
      %v4151 = vlaneseq
      %v4152 = vshrl.u32 %v4151, 7
      %v4153 = vsub.s32 1, %v4152
      %v4154 = vrot.slane %v4145, %v4153
      %v4155 = vlaneseq
      %v4156 = vshrl.u32 %v4155, 7
      %v4157 = vsub.s32 2, %v4156
      %v4158 = vrot.slane %v4145, %v4157
      %v4159 = vlaneseq
      %v4160 = vshrl.u32 %v4159, 7
      %v4161 = vsub.s32 3, %v4160
      %v4162 = vrot.slane %v4145, %v4161
      %v4199 = vunpack.c.l.b16 %v4113
      %v4200 = vunpack.c.h.b16 %v4113
      %v4201 = vunpack.c.l.b16 %v4114
      %v4202 = vunpack.c.h.b16 %v4114
      %v4203 = vunpack.c.l.b16 %v4115
      %v4204 = vunpack.c.h.b16 %v4115
      %v4205 = vunpack.c.l.b16 %v4116
      %v4206 = vunpack.c.h.b16 %v4116
      %v4207 = vunpack.c.l.b16 %v4117
      %v4208 = vunpack.c.h.b16 %v4117
      %v4209 = vunpack.c.l.b16 %v4118
      %v4210 = vunpack.c.h.b16 %v4118
      %v4211 = vunpack.c.l.b16 %v4119
      %v4212 = vunpack.c.h.b16 %v4119
      %v4213 = vunpack.c.l.b16 %v4120
      %v4214 = vunpack.c.h.b16 %v4120
      %v4215 = vunpack.c.l.b16 %v4121
      %v4216 = vunpack.c.h.b16 %v4121
      %v4217 = vunpack.c.l.b16 %v4122
      %v4218 = vunpack.c.h.b16 %v4122
      %v4219 = vunpack.c.l.b16 %v4123
      %v4220 = vunpack.c.h.b16 %v4123
      %v4221 = vunpack.c.l.b16 %v4124
      %v4222 = vunpack.c.h.b16 %v4124
      %v4223 = vunpack.c.l.b16 %v4125
      %v4224 = vunpack.c.h.b16 %v4125
      %v4225 = vunpack.c.l.b16 %v4126
      %v4226 = vunpack.c.h.b16 %v4126
      %v4227 = vunpack.c.l.b16 %v4127
      %v4228 = vunpack.c.h.b16 %v4127
      %v4229 = vunpack.c.l.b16 %v4128
      %v4230 = vunpack.c.h.b16 %v4128
      %v4231 = vunpack.c.l.b16 %v4129
      %v4232 = vunpack.c.h.b16 %v4129
      %v4233 = vunpack.c.l.b16 %v4130
      %v4234 = vunpack.c.h.b16 %v4130
      %v4235 = vunpack.c.l.b16 %v4131
      %v4236 = vunpack.c.h.b16 %v4131
      %v4237 = vunpack.c.l.b16 %v4132
      %v4238 = vunpack.c.h.b16 %v4132
      %v4239 = vunpack.c.l.b16 %v4133
      %v4240 = vunpack.c.h.b16 %v4133
      %v4241 = vunpack.c.l.b16 %v4134
      %v4242 = vunpack.c.h.b16 %v4134
      %v4243 = vunpack.c.l.b16 %v4135
      %v4244 = vunpack.c.h.b16 %v4135
      %v4245 = vunpack.c.l.b16 %v4136
      %v4246 = vunpack.c.h.b16 %v4136
      %v4247 = vunpack.c.l.b16 %v4137
      %v4248 = vunpack.c.h.b16 %v4137
      %v4249 = vunpack.c.l.b16 %v4138
      %v4250 = vunpack.c.h.b16 %v4138
      %v4251 = vunpack.c.l.b16 %v4139
      %v4252 = vunpack.c.h.b16 %v4139
      %v4253 = vunpack.c.l.b16 %v4140
      %v4254 = vunpack.c.h.b16 %v4140
      %v4255 = vunpack.c.l.b16 %v4141
      %v4256 = vunpack.c.h.b16 %v4141
      %v4257 = vunpack.c.l.b16 %v4142
      %v4258 = vunpack.c.h.b16 %v4142
      %v4259 = vunpack.c.l.b16 %v4143
      %v4260 = vunpack.c.h.b16 %v4143
      %v4261 = vunpack.c.l.b16 %v4144
      %v4262 = vunpack.c.h.b16 %v4144
      %v4263 = vpack.c.b16 %v4203, %v4199
      %v4264 = vpack.c.b16 %v4204, %v4200
      %v4265 = vpack.c.b16 %v4205, %v4201
      %v4266 = vpack.c.b16 %v4206, %v4202
      %v4267 = vpack.c.b16 %v4211, %v4207
      %v4268 = vpack.c.b16 %v4212, %v4208
      %v4269 = vpack.c.b16 %v4213, %v4209
      %v4270 = vpack.c.b16 %v4214, %v4210
      %v4271 = vpack.c.b16 %v4219, %v4215
      %v4272 = vpack.c.b16 %v4220, %v4216
      %v4273 = vpack.c.b16 %v4221, %v4217
      %v4274 = vpack.c.b16 %v4222, %v4218
      %v4275 = vpack.c.b16 %v4227, %v4223
      %v4276 = vpack.c.b16 %v4228, %v4224
      %v4277 = vpack.c.b16 %v4229, %v4225
      %v4278 = vpack.c.b16 %v4230, %v4226
      %v4279 = vpack.c.b16 %v4235, %v4231
      %v4280 = vpack.c.b16 %v4236, %v4232
      %v4281 = vpack.c.b16 %v4237, %v4233
      %v4282 = vpack.c.b16 %v4238, %v4234
      %v4283 = vpack.c.b16 %v4243, %v4239
      %v4284 = vpack.c.b16 %v4244, %v4240
      %v4285 = vpack.c.b16 %v4245, %v4241
      %v4286 = vpack.c.b16 %v4246, %v4242
      %v4287 = vpack.c.b16 %v4251, %v4247
      %v4288 = vpack.c.b16 %v4252, %v4248
      %v4289 = vpack.c.b16 %v4253, %v4249
      %v4290 = vpack.c.b16 %v4254, %v4250
      %v4291 = vpack.c.b16 %v4259, %v4255
      %v4292 = vpack.c.b16 %v4260, %v4256
      %v4293 = vpack.c.b16 %v4261, %v4257
      %v4294 = vpack.c.b16 %v4262, %v4258
      %4327 = vmatprep.subr.bf16.mxu0 %v4264
      %4328 = vmatpush1.bf16.msra.mxu0 %v4263
      %4329 = vmatprep.subr.bf16.mxu0 %v4268
      %4330 = vmatpush1.bf16.msra.mxu0 %v4267
      %4331 = vmatprep.subr.bf16.mxu0 %v4272
      %4332 = vmatpush1.bf16.msra.mxu0 %v4271
      %4333 = vmatprep.subr.bf16.mxu0 %v4276
      %4334 = vmatpush1.bf16.msra.mxu0 %v4275
      %4335 = vmatprep.subr.bf16.mxu0 %v4280
      %4336 = vmatpush1.bf16.msra.mxu0 %v4279
      %4337 = vmatprep.subr.bf16.mxu0 %v4284
      %4338 = vmatpush1.bf16.msra.mxu0 %v4283
      %4339 = vmatprep.subr.bf16.mxu0 %v4288
      %4340 = vmatpush1.bf16.msra.mxu0 %v4287
      %4341 = vmatprep.subr.bf16.mxu0 %v4292
      %4342 = vmatpush1.bf16.msra.mxu0 %v4291
      %4343 = vmatprep.subr.bf16.mxu0 0
      %4344 = vmatpush1.bf16.msra.mxu0 0
      %4345 = vmatprep.subr.bf16.mxu0 0
      %4346 = vmatpush1.bf16.msra.mxu0 0
      %4347 = vmatprep.subr.bf16.mxu0 0
      %4348 = vmatpush1.bf16.msra.mxu0 0
      %4349 = vmatprep.subr.bf16.mxu0 0
      %4350 = vmatpush1.bf16.msra.mxu0 0
      %4351 = vmatprep.subr.bf16.mxu0 0
      %4352 = vmatpush1.bf16.msra.mxu0 0
      %4353 = vmatprep.subr.bf16.mxu0 0
      %4354 = vmatpush1.bf16.msra.mxu0 0
      %4355 = vmatprep.subr.bf16.mxu0 0
      %4356 = vmatpush1.bf16.msra.mxu0 0
      %4357 = vmatprep.subr.bf16.mxu0 0
      %4358 = vmatpush1.bf16.msra.mxu0 0
      %4359 = vmatprep.mubr.bf16.mxu0 0
      %4360 = vmatmul.mubr.bf16.gmra.mrb[0].mxu0 %v4112
      %v4361 = vpop.f32.mrb[0].mxu0
      %v4362 = vadd.f32 %v4150, %v4361
      %v4363 = vpop.f32.mrb[0].mxu0
      %v4364 = vadd.f32 %v4154, %v4363
      %v4365 = vpop.f32.mrb[0].mxu0
      %v4366 = vadd.f32 %v4150, %v4365
      %v4367 = vpop.f32.mrb[0].mxu0
      %v4368 = vadd.f32 %v4154, %v4367
      %4369 = vdwg.mxu0
      %4370 = vmatprep.subr.bf16.mxu0 %v4266
      %4371 = vmatpush1.bf16.msra.mxu0 %v4265
      %4372 = vmatprep.subr.bf16.mxu0 %v4270
      %4373 = vmatpush1.bf16.msra.mxu0 %v4269
      %4374 = vmatprep.subr.bf16.mxu0 %v4274
      %4375 = vmatpush1.bf16.msra.mxu0 %v4273
      %4376 = vmatprep.subr.bf16.mxu0 %v4278
      %4377 = vmatpush1.bf16.msra.mxu0 %v4277
      %4378 = vmatprep.subr.bf16.mxu0 %v4282
      %4379 = vmatpush1.bf16.msra.mxu0 %v4281
      %4380 = vmatprep.subr.bf16.mxu0 %v4286
      %4381 = vmatpush1.bf16.msra.mxu0 %v4285
      %4382 = vmatprep.subr.bf16.mxu0 %v4290
      %4383 = vmatpush1.bf16.msra.mxu0 %v4289
      %4384 = vmatprep.subr.bf16.mxu0 %v4294
      %4385 = vmatpush1.bf16.msra.mxu0 %v4293
      %4386 = vmatprep.subr.bf16.mxu0 0
      %4387 = vmatpush1.bf16.msra.mxu0 0
      %4388 = vmatprep.subr.bf16.mxu0 0
      %4389 = vmatpush1.bf16.msra.mxu0 0
      %4390 = vmatprep.subr.bf16.mxu0 0
      %4391 = vmatpush1.bf16.msra.mxu0 0
      %4392 = vmatprep.subr.bf16.mxu0 0
      %4393 = vmatpush1.bf16.msra.mxu0 0
      %4394 = vmatprep.subr.bf16.mxu0 0
      %4395 = vmatpush1.bf16.msra.mxu0 0
      %4396 = vmatprep.subr.bf16.mxu0 0
      %4397 = vmatpush1.bf16.msra.mxu0 0
      %4398 = vmatprep.subr.bf16.mxu0 0
      %4399 = vmatpush1.bf16.msra.mxu0 0
      %4400 = vmatprep.subr.bf16.mxu0 0
      %4401 = vmatpush1.bf16.msra.mxu0 0
      %4402 = vmatprep.mubr.bf16.mxu0 0
      %4403 = vmatmul.mubr.bf16.gmra.mrb[0].mxu0 %v4112
      %v4404 = vpop.f32.mrb[0].mxu0
      %v4405 = vadd.f32 %v4158, %v4404
      %v4406 = vpop.f32.mrb[0].mxu0
      %v4407 = vadd.f32 %v4162, %v4406
      %v4408 = vpop.f32.mrb[0].mxu0
      %v4409 = vadd.f32 %v4158, %v4408
      %v4410 = vpop.f32.mrb[0].mxu0
      %v4411 = vadd.f32 %v4162, %v4410
      %4412 = vdwg.mxu0
      %v4413 = vunpack.c.l.bf16 %v280
      %v4414 = vunpack.c.h.bf16 %v280
      %v4415 = vunpack.c.l.bf16 %v281
      %v4416 = vunpack.c.h.bf16 %v281
      %v4417 = vunpack.c.l.bf16 %v282
      %v4418 = vunpack.c.h.bf16 %v282
      %v4419 = vunpack.c.l.bf16 %v283
      %v4420 = vunpack.c.h.bf16 %v283
      %v4421 = vadd.f32 %v4362, %v4413
      %v4422 = vadd.f32 %v4364, %v4414
      %v4423 = vadd.f32 %v4405, %v4415
      %v4424 = vadd.f32 %v4407, %v4416
      %v4425 = vadd.f32 %v4366, %v4417
      %v4426 = vadd.f32 %v4368, %v4418
      %v4427 = vadd.f32 %v4409, %v4419
      %v4428 = vadd.f32 %v4411, %v4420
      %v4429 = vmax.f32 %v4421, 0.0
      %v4430 = vmax.f32 %v4422, 0.0
      %v4431 = vmax.f32 %v4423, 0.0
      %v4432 = vmax.f32 %v4424, 0.0
      %v4433 = vmax.f32 %v4425, 0.0
      %v4434 = vmax.f32 %v4426, 0.0
      %v4435 = vmax.f32 %v4427, 0.0
      %v4436 = vmax.f32 %v4428, 0.0
      %v4437 = vpack.c.bf16 %v4433, %v4429
      %v4438 = vpack.c.bf16 %v4434, %v4430
      %v4439 = vpack.c.bf16 %v4435, %v4431
      %v4440 = vpack.c.bf16 %v4436, %v4432
      %v4445 = vunpack.c.l.b16 %v4437
      %v4446 = vunpack.c.l.b16 %v4438
      %v4447 = vunpack.c.l.b16 %v4439
      %v4448 = vunpack.c.l.b16 %v4440
      %v4449 = vunpack.c.h.b16 %v4437
      %v4450 = vunpack.c.h.b16 %v4438
      %v4451 = vunpack.c.h.b16 %v4439
      %v4452 = vunpack.c.h.b16 %v4440
      %v4453 = vpack.c.b16 %v4446, %v4445
      %v4454 = vpack.c.b16 %v4448, %v4447
      %v4455 = vpack.c.b16 %v4450, %v4449
      %v4456 = vpack.c.b16 %v4452, %v4451
      %4461 = vst [vmem:[%s278] sm:$0xff] %v4453
      %4462 = vst [vmem:[%s278 + $0x8] sm:$0xff] %v4454
      %4463 = vst [vmem:[%s278 + $0x10] sm:$0xff] %v4455
      %4464 = vst [vmem:[%s278 + $0x18] sm:$0xff] %v4456
      %p4465 = scmp.lt.s32.totalorder %s18, 1
      %s4466 = scalar_select %p4465, %s18, 1
      %s4467 = smul.addr %s4466, 8
      %s4468 = smul.addr %s4467, 4
      %s4469 = scalar_lea.vmem %s7, %s4468
      // Predicated region
      $region49: #{_lambda_.10} parent=47 // pred_check
        %p4470 = pneg %p188
      $region50: #{_lambda_.10} parent=47 // pred_check_branch
        %4472 = sbr.rel (%p4470) target = $region52
      $region51: #{_lambda_.10} parent=47 // pred_region
        _
      $region52: #{_lambda_.10} parent=47 // pred_fallthru
        _
    $region48: #{_lambda_.10} parent=5 // pred_fallthru
      _
    %p4473 = scmp.le.s32.totalorder 2, %s13
    // Predicated region
    $region53: #{_lambda_.10} parent=5 // pred_check
      %p4474 = pneg %p4473
    $region54: #{_lambda_.10} parent=5 // pred_check_branch
      %4476 = sbr.rel (%p4474) target = $region56
    $region55: #{_lambda_.10} parent=5 // pred_region
      %s4477 = ssub.s32 %s13, 2
      // Predicated region
      $region57: #{_lambda_.10} parent=55 // pred_check
        %p4478 = pneg %p194
      $region58: #{_lambda_.10} parent=55 // pred_check_branch
        %4480 = sbr.rel (%p4478) target = $region60
      $region59: #{_lambda_.10} parent=55 // pred_region
        %p4481 = scmp.lt.s32.totalorder %s19, 1
        %s4482 = scalar_select %p4481, %s19, 1
        %s4483 = smul.addr %s4482, 8
        %s4484 = smul.addr %s4483, 4
        %s4485 = scalar_lea.vmem %s7, %s4484
      $region60: #{_lambda_.10} parent=55 // pred_fallthru
        _
    $region56: #{_lambda_.10} parent=5 // pred_fallthru
      _
  $region6: #{_lambda_.10} parent=0 // loop_footer
    %s17 = sadd.s32 1, %s13
  $region7: #{_lambda_.10} parent=0 // loop_footer_branch
    %12 = sbr.rel target = $region3
  $region8: #{_lambda_.10} parent=0 // loop_exit
    _

</llo_original>
